<compile_context>
chip_gen: v5e
topology: v5e:2x2
jax: 0.10.0
libtpu: 0.0.40
codegen_flags: <defaults>
</compile_context>

<pallas_src>
import math

import jax
import jax.numpy as jnp
from jax.experimental import pallas as pl
from jax.experimental.pallas import tpu as pltpu


def _gelu_exact(x):
    # nn.GELU() default: exact erf-based GELU (kept for semantic fidelity).
    return 0.5 * x * (1.0 + jax.lax.erf(x * (1.0 / math.sqrt(2.0))))


def _round_up(x, m):
    return (x + m - 1) // m * m


def _pick_tile_b(batch, desired):
    """Largest multiple of 8 that divides round_up(batch, 8) and is <= desired."""
    b8 = _round_up(batch, 8)
    desired = max(8, min(desired, b8))
    best = 8
    for t in range(8, desired + 1, 8):
        if b8 % t == 0:
            best = t
    return best


def chess_network_kernel(
    x_ref,      # [TB, E]   bf16  shared embedding tile (pipelined)
    wtr_ref,    # [E, 2T]   bf16  fused trunk weights   [policy | value]
    btr_ref,    # [1, 2T]   f32   fused trunk biases
    wh_ref,     # [2T, Pp]  bf16  fused head weights: policy cols 0..P-1 from
                #                 policy-trunk rows, value col P from value-trunk rows
    bh_ref,     # [1, Pp]   f32   fused head biases (bph | bvh in col P)
    out_ref,    # [TB, Pp]  out   policy logits (cols < P) + value pre-tanh (col P)
):
    x = x_ref[...]                                                    # bf16

    # Fused policy+value trunk: one MXU matmul, f32 accumulate, f32 GELU.
    y = jnp.dot(x, wtr_ref[...], preferred_element_type=jnp.float32)
    y = _gelu_exact(y + btr_ref[...])                                 # [TB, 2T] f32

    # Fused policy+value head: single K=2T MXU matmul, f32 accumulate,
    # cast on the lane-dense store (bf16 by default -> half the HBM writeback).
    head = jnp.dot(y.astype(jnp.bfloat16), wh_ref[...],
                   preferred_element_type=jnp.float32) + bh_ref[...]
    out_ref[...] = head.astype(out_ref.dtype)


def chess_network_forward(shared_embed, params, *, tile_b=128,
                          out_dtype=jnp.bfloat16):
    B, E = shared_embed.shape
    T = params["wpt"].shape[1]
    P = params["wph"].shape[1]
    Tt = 2 * T

    # ---- pack / pad parameters for the kernel ------------------------------
    w_trunk = jnp.concatenate(
        [params["wpt"], params["wvt"]], axis=1).astype(jnp.bfloat16)          # [E, 2T]
    b_trunk = jnp.concatenate(
        [params["bpt"], params["bvt"]], axis=1).astype(jnp.float32)           # [1, 2T]

    # Lane-padded fused head; the value head lives in padding column P.
    Pp = _round_up(P + 1, 128)
    w_head = jnp.zeros((Tt, Pp), jnp.bfloat16)
    w_head = w_head.at[:T, :P].set(params["wph"].astype(jnp.bfloat16))
    w_head = w_head.at[T:, P].set(params["wvh"].reshape(T).astype(jnp.bfloat16))
    b_head = jnp.zeros((1, Pp), jnp.float32)
    b_head = b_head.at[0, :P].set(params["bph"].reshape(P).astype(jnp.float32))
    b_head = b_head.at[0, P].set(params["bvh"].reshape(()).astype(jnp.float32))

    # ---- batch tiling (no over-padding: tile_b divides round_up(B, 8)) -----
    tile_b = _pick_tile_b(B, tile_b)
    B_pad = _round_up(B, 8)
    nb = B_pad // tile_b

    x = shared_embed.astype(jnp.bfloat16)
    if B_pad != B:
        x = jnp.pad(x, ((0, B_pad - B), (0, 0)))

    out_itemsize = jnp.dtype(out_dtype).itemsize
    flops = 2 * B_pad * (E * Tt + Tt * Pp)
    transcendentals = B_pad * Tt                       # erf per trunk element
    bytes_accessed = (
        x.size * 2 + w_trunk.size * 2 + w_head.size * 2
        + b_trunk.size * 4 + b_head.size * 4
        + B_pad * Pp * out_itemsize
    )

    weight_spec = lambda shape: pl.BlockSpec(shape, lambda i: (0, 0))

    out = pl.pallas_call(
        chess_network_kernel,
        out_shape=jax.ShapeDtypeStruct((B_pad, Pp), out_dtype),
        grid=(nb,),
        in_specs=[
            pl.BlockSpec((tile_b, E), lambda i: (i, 0)),   # x tile (pipelined)
            weight_spec((E, Tt)),                          # fused trunk W
            weight_spec((1, Tt)),                          # fused trunk b
            weight_spec((Tt, Pp)),                         # fused head W
            weight_spec((1, Pp)),                          # fused head b
        ],
        out_specs=pl.BlockSpec((tile_b, Pp), lambda i: (i, 0)),
        compiler_params=pltpu.CompilerParams(
            dimension_semantics=("parallel",),
        ),
        cost_estimate=pl.CostEstimate(
            flops=flops,
            transcendentals=transcendentals,
            bytes_accessed=bytes_accessed,
        ),
    )(x, w_trunk, b_trunk, w_head, b_head)

    policy_logits = out[:B, :P]
    value_estimate = jnp.tanh(out[:B, P:P + 1].astype(jnp.float32))
    return policy_logits, value_estimate


def init_params(key, embed_dim, trunk_dim, policy_size):
    """Deterministic synthetic parameter init (PyTorch-Linear-like uniform)."""
    ks = jax.random.split(key, 8)

    def lin(kw, kb, fan_in, fan_out):
        bound = 1.0 / math.sqrt(fan_in)
        w = jax.random.uniform(kw, (fan_in, fan_out), jnp.float32, -bound, bound)
        b = jax.random.uniform(kb, (1, fan_out), jnp.float32, -bound, bound)
        return w, b

    wpt, bpt = lin(ks[0], ks[1], embed_dim, trunk_dim)
    wvt, bvt = lin(ks[2], ks[3], embed_dim, trunk_dim)
    wph, bph = lin(ks[4], ks[5], trunk_dim, policy_size)
    wvh, bvh = lin(ks[6], ks[7], trunk_dim, 1)
    return dict(wpt=wpt, bpt=bpt, wvt=wvt, bvt=bvt,
                wph=wph, bph=bph, wvh=wvh, bvh=bvh)


def reference_forward(shared_embed, params):
    """Plain-JAX reference of the same math (bf16 MXU operands, f32 accumulate)."""
    x = shared_embed.astype(jnp.bfloat16)

    def mm(a, w):
        return jnp.dot(a.astype(jnp.bfloat16), w.astype(jnp.bfloat16),
                       preferred_element_type=jnp.float32)

    p = _gelu_exact(mm(x, params["wpt"]) + params["bpt"])
    v = _gelu_exact(mm(x, params["wvt"]) + params["bvt"])
    policy_logits = mm(p, params["wph"]) + params["bph"]
    value_estimate = jnp.tanh(
        jnp.sum(v * params["wvh"].reshape(1, -1), axis=-1, keepdims=True)
        + params["bvh"].reshape(1, 1))
    return policy_logits, value_estimate


if __name__ == "__main__":
    # Shapes consistent with the module defaults:
    #   embed_dim=256 -> trunk_dim = embed_dim // 2 = 128
    #   policy space 4672 moves (padded to 4736 lanes; value sits in lane 4672)
    # B=384 exercises the batch grid: tile_b=128 -> 3 steps, zero batch padding.
    B, EMBED = 384, 256
    TRUNK = EMBED // 2
    POLICY = 4672

    key = jax.random.PRNGKey(0)
    k_x, k_p = jax.random.split(key)
    shared_embed = jax.random.normal(k_x, (B, EMBED), jnp.float32)
    params = init_params(k_p, EMBED, TRUNK, POLICY)

    policy_logits, value_estimate = chess_network_forward(shared_embed, params)
    jax.block_until_ready((policy_logits, value_estimate))

    ref_policy, ref_value = reference_forward(shared_embed, params)
    assert policy_logits.shape == (B, POLICY)
    assert value_estimate.shape == (B, 1)
    assert jnp.allclose(policy_logits.astype(jnp.float32), ref_policy,
                        atol=1e-2, rtol=1e-2)
    assert jnp.allclose(value_estimate, ref_value, atol=1e-2, rtol=1e-2)

    print("KERNEL_OK")
</pallas_src>

<mosaic_0001>
module attributes {stable_mosaic.version = 11 : i64} {
  func.func @chess_network_kernel(%arg0: i32, %arg1: memref<128x256xbf16, #tpu.memory_space<vmem>>, %arg2: memref<256x256xbf16, #tpu.memory_space<vmem>>, %arg3: memref<1x256xf32, #tpu.memory_space<vmem>>, %arg4: memref<256x4736xbf16, #tpu.memory_space<vmem>>, %arg5: memref<1x4736xf32, #tpu.memory_space<vmem>>, %arg6: memref<128x4736xbf16, #tpu.memory_space<vmem>>) attributes {dimension_semantics = [#tpu.dimension_semantics<parallel>], iteration_bounds = array<i64: 3>, scalar_prefetch = 0 : i64, scratch_operands = 0 : i64, tpu.core_type = #tpu.core_type<tc>, window_params = [{transform_indices = @transform_0, window_bounds = array<i64: 128, 256>}, {pipeline_mode = #tpu.pipeline_mode<synchronous>, transform_indices = @transform_1, window_bounds = array<i64: 256, 256>}, {pipeline_mode = #tpu.pipeline_mode<synchronous>, transform_indices = @transform_2, window_bounds = array<i64: 1, 256>}, {pipeline_mode = #tpu.pipeline_mode<synchronous>, transform_indices = @transform_3, window_bounds = array<i64: 256, 4736>}, {pipeline_mode = #tpu.pipeline_mode<synchronous>, transform_indices = @transform_4, window_bounds = array<i64: 1, 4736>}, {transform_indices = @transform_5, window_bounds = array<i64: 128, 4736>}]} {
    %c0 = arith.constant 0 : index
    %c0_0 = arith.constant 0 : index
    %0 = vector.load %arg1[%c0, %c0_0] : memref<128x256xbf16, #tpu.memory_space<vmem>>, vector<128x256xbf16>
    %c0_1 = arith.constant 0 : index
    %c0_2 = arith.constant 0 : index
    %1 = vector.load %arg2[%c0_1, %c0_2] : memref<256x256xbf16, #tpu.memory_space<vmem>>, vector<256x256xbf16>
    %cst = arith.constant dense<0.000000e+00> : vector<128x256xf32>
    %2 = tpu.matmul %0, %1, %cst {dimension_numbers = #tpu.dot_dimension_numbers<[1], [0], [0], [1], [0, 0, 1, 1], [], []>} : vector<128x256xbf16>, vector<256x256xbf16>, vector<128x256xf32> -> vector<128x256xf32>
    %c0_3 = arith.constant 0 : index
    %c0_4 = arith.constant 0 : index
    %3 = vector.load %arg3[%c0_3, %c0_4] : memref<1x256xf32, #tpu.memory_space<vmem>>, vector<1x256xf32>
    %4 = vector.broadcast %3 : vector<1x256xf32> to vector<128x256xf32>
    %5 = arith.addf %2, %4 : vector<128x256xf32>
    %cst_5 = arith.constant 5.000000e-01 : f32
    %6 = vector.broadcast %cst_5 : f32 to vector<128x256xf32>
    %7 = arith.mulf %6, %5 : vector<128x256xf32>
    %cst_6 = arith.constant 0.707106769 : f32
    %8 = vector.broadcast %cst_6 : f32 to vector<128x256xf32>
    %9 = arith.mulf %5, %8 : vector<128x256xf32>
    %10 = math.erf %9 : vector<128x256xf32>
    %cst_7 = arith.constant 1.000000e+00 : f32
    %11 = vector.broadcast %cst_7 : f32 to vector<128x256xf32>
    %12 = arith.addf %11, %10 : vector<128x256xf32>
    %13 = arith.mulf %7, %12 : vector<128x256xf32>
    %14 = arith.truncf %13 : vector<128x256xf32> to vector<128x256xbf16>
    %c0_8 = arith.constant 0 : index
    %c0_9 = arith.constant 0 : index
    %15 = vector.load %arg4[%c0_8, %c0_9] : memref<256x4736xbf16, #tpu.memory_space<vmem>>, vector<256x4736xbf16>
    %cst_10 = arith.constant dense<0.000000e+00> : vector<128x4736xf32>
    %16 = tpu.matmul %14, %15, %cst_10 {dimension_numbers = #tpu.dot_dimension_numbers<[1], [0], [0], [1], [0, 0, 1, 1], [], []>} : vector<128x256xbf16>, vector<256x4736xbf16>, vector<128x4736xf32> -> vector<128x4736xf32>
    %c0_11 = arith.constant 0 : index
    %c0_12 = arith.constant 0 : index
    %17 = vector.load %arg5[%c0_11, %c0_12] : memref<1x4736xf32, #tpu.memory_space<vmem>>, vector<1x4736xf32>
    %18 = vector.broadcast %17 : vector<1x4736xf32> to vector<128x4736xf32>
    %19 = arith.addf %16, %18 : vector<128x4736xf32>
    %20 = arith.truncf %19 : vector<128x4736xf32> to vector<128x4736xbf16>
    %c0_13 = arith.constant 0 : index
    %c0_14 = arith.constant 0 : index
    %21 = vector.load %arg6[%c0_13, %c0_14] : memref<128x4736xbf16, #tpu.memory_space<vmem>>, vector<128x4736xbf16>
    tpu.vector_store %arg6[%c0_13, %c0_14], %20 {strides = array<i32>} : memref<128x4736xbf16, #tpu.memory_space<vmem>>, vector<128x4736xbf16>,
    return
  }
  func.func @transform_0(%arg0: i32) -> (i32, i32) {
    %c0_i32 = arith.constant 0 : i32
    %c0_i32_0 = arith.constant 0 : i32
    return %arg0, %c0_i32 : i32, i32
  }
  func.func @transform_1(%arg0: i32) -> (i32, i32) {
    %c0_i32 = arith.constant 0 : i32
    %c0_i32_0 = arith.constant 0 : i32
    %c0_i32_1 = arith.constant 0 : i32
    return %c0_i32, %c0_i32_0 : i32, i32
  }
  func.func @transform_2(%arg0: i32) -> (i32, i32) {
    %c0_i32 = arith.constant 0 : i32
    %c0_i32_0 = arith.constant 0 : i32
    %c0_i32_1 = arith.constant 0 : i32
    return %c0_i32, %c0_i32_0 : i32, i32
  }
  func.func @transform_3(%arg0: i32) -> (i32, i32) {
    %c0_i32 = arith.constant 0 : i32
    %c0_i32_0 = arith.constant 0 : i32
    %c0_i32_1 = arith.constant 0 : i32
    return %c0_i32, %c0_i32_0 : i32, i32
  }
  func.func @transform_4(%arg0: i32) -> (i32, i32) {
    %c0_i32 = arith.constant 0 : i32
    %c0_i32_0 = arith.constant 0 : i32
    %c0_i32_1 = arith.constant 0 : i32
    return %c0_i32, %c0_i32_0 : i32, i32
  }
  func.func @transform_5(%arg0: i32) -> (i32, i32) {
    %c0_i32 = arith.constant 0 : i32
    %c0_i32_0 = arith.constant 0 : i32
    return %arg0, %c0_i32 : i32, i32
  }
}

</mosaic_0001>

<llo_original>
// kernel: tpu_custom_call.1
$region0: #{tpu_custom_call.1}
  #allocation0 [shape = 'u32[]', space=smem, size = 0x4, offset = 0x4, fixed_abs, tag = 'smem constant byte address 0x4 - core index']
  #allocation1 [shape = 'u32[72,128]{1,0:T(1,128)}', space=vmem, size = 0x9000, scoped, tag = 'internal scratch']
  %s0 = inlined_call_operand.hbm [shape: bf16[384,256], index: 0, kind: input, shape index: {}]
  %s1 = inlined_call_operand.hbm [shape: bf16[256,256], index: 1, kind: input, shape index: {}]
  %s2 = inlined_call_operand.hbm [shape: f32[1,256], index: 2, kind: input, shape index: {}]
  %s3 = inlined_call_operand.hbm [shape: bf16[256,4736], index: 3, kind: input, shape index: {}]
  %s4 = inlined_call_operand.hbm [shape: f32[1,4736], index: 4, kind: input, shape index: {}]
  %s5 = inlined_call_operand.hbm [shape: bf16[384,4736], index: 5, kind: output, shape index: {}]
  %s6 = sld [smem:[#allocation0]]
  $region73: #{tpu_custom_call.1} parent=0
    _
  %s8 = ssub.s32 1, %s6
  %s9 = scalar_select 0, %s8, %s6
  $region1: #{tpu_custom_call.1} parent=0
    #allocation2 [shape = 'u8[131072]{0}', space=vmem, size = 0x20000, scoped, tag = 'input window, operand 0']
    #allocation3 [shape = 's32[2]{0}', space=sflag, size = 0x8, scoped, tag = 'scoped memory for tpu_custom_call.1']
    #allocation4 [shape = 's32[2]{0}', space=sflag, size = 0x8, scoped, tag = 'scoped memory for tpu_custom_call.1']
    #allocation5 [shape = 'u8[131072]{0}', space=vmem, size = 0x20000, scoped, tag = 'input window, operand 1, single buffered']
    #allocation6 [shape = 's32[1]{0}', space=sflag, size = 0x4, scoped, tag = 'scoped memory for tpu_custom_call.1']
    #allocation7 [shape = 'u8[1024]{0}', space=vmem, size = 0x400, scoped, tag = 'input window, operand 2, single buffered']
    #allocation8 [shape = 'u8[2424832]{0}', space=vmem, size = 0x250000, scoped, tag = 'input window, operand 3, single buffered']
    #allocation9 [shape = 's32[1]{0}', space=sflag, size = 0x4, scoped, tag = 'scoped memory for tpu_custom_call.1']
    #allocation10 [shape = 'u8[18944]{0}', space=vmem, size = 0x4c00, scoped, tag = 'input window, operand 4, single buffered']
    #allocation11 [shape = 'u8[2424832]{0}', space=vmem, size = 0x250000, scoped, tag = 'output window, operand 0']
    %10 = vsyncpa [#allocation3], 0
    %s11 = scalar_lea.sflag [#allocation3], 1
    %12 = vsyncpa %s11, 0
    %13 = vsyncpa [#allocation6], 0
    %14 = vsyncpa [#allocation9], 0
    %15 = vsyncpa [#allocation4], 0
    %s16 = scalar_lea.sflag [#allocation4], 1
    %17 = vsyncpa %s16, 0
    loop: start=0, step=1, limit=5
    $region2: #{tpu_custom_call.1} parent=1 // loop_pre_header
      _
    $region3: #{tpu_custom_call.1} parent=1 // loop_header
      %s19 = sphi 0, %s23
      %p20 = scmp.ge.s32.totalorder %s19, 5
      %s29 = sphi 0, %s31
      %s32 = sphi 0, %s29
      %s33 = sphi 0, %s32
      %s49 = sphi 0, %s33
      %s53 = sphi 0, %s53
      %s55 = sphi 0, %s53
      %s56 = sphi 0, %s55
      %s70 = sphi 0, %s56
      %s74 = sphi 0, %s74
      %s76 = sphi 0, %s74
      %s77 = sphi 0, %s76
      %s91 = sphi 0, %s77
      %s95 = sphi 0, %s95
      %s97 = sphi 0, %s95
      %s98 = sphi 0, %s97
      %s112 = sphi 0, %s98
      %s116 = sphi 0, %s116
      %s118 = sphi 0, %s116
      %s119 = sphi 0, %s118
      %s133 = sphi 0, %s119
      %s139 = sphi 0, %s141
      %s142 = sphi 0, %s139
      %s143 = sphi 0, %s142
      %s159 = sphi 0, %s143
    $region4: #{tpu_custom_call.1} parent=1 // loop_header_branch
      %22 = sbr.rel (%p20) target = $region8
    $region5: #{tpu_custom_call.1} parent=1 // loop_body
      %s24 = ssub.s32 %s19, 1
      %s25 = ssub.s32 %s19, 2
      %s26 = sadd.s32 %s19, 1
      %s27 = ssub.s32 %s19, %s26
      %p28 = scmp.eq.s32.totalorder %s27, 0
      %s30 = sadd.s32 %s29, 1
      %s31 = scalar_select %p28, %s29, %s30
      %p34 = pneg %p28
      %p35 = scmp.eq.s32.totalorder %s19, 2
      %p36 = por %p34, %p35
      %p37 = scmp.ne.s32.totalorder %s29, %s32
      %p38 = scmp.eq.s32.totalorder %s19, 0
      %p39 = por %p37, %p38
      %p40 = scmp.ne.s32.totalorder %s29, %s32
      %p41 = scmp.eq.s32.totalorder %s24, 2
      %p42 = por %p40, %p41
      %p43 = scmp.ne.s32.totalorder %s32, %s33
      %p44 = scmp.eq.s32.totalorder %s24, 0
      %p45 = por %p43, %p44
      %p46 = scmp.ne.s32.totalorder %s32, %s33
      %p47 = scmp.eq.s32.totalorder %s25, 2
      %p48 = por %p46, %p47
      %p50 = scmp.ne.s32.totalorder %s33, %s49
      %p51 = scmp.eq.s32.totalorder %s25, 0
      %p52 = por %p50, %p51
      %s54 = sadd.s32 %s53, 1
      %p57 = scmp.eq.s32.totalorder %s19, 2
      %p58 = scmp.ne.s32.totalorder %s53, %s55
      %p59 = scmp.eq.s32.totalorder %s19, 0
      %p60 = por %p58, %p59
      %p61 = scmp.ne.s32.totalorder %s53, %s55
      %p62 = scmp.eq.s32.totalorder %s24, 2
      %p63 = por %p61, %p62
      %p64 = scmp.ne.s32.totalorder %s55, %s56
      %p65 = scmp.eq.s32.totalorder %s24, 0
      %p66 = por %p64, %p65
      %p67 = scmp.ne.s32.totalorder %s55, %s56
      %p68 = scmp.eq.s32.totalorder %s25, 2
      %p69 = por %p67, %p68
      %p71 = scmp.ne.s32.totalorder %s56, %s70
      %p72 = scmp.eq.s32.totalorder %s25, 0
      %p73 = por %p71, %p72
      %s75 = sadd.s32 %s74, 1
      %p78 = scmp.eq.s32.totalorder %s19, 2
      %p79 = scmp.ne.s32.totalorder %s74, %s76
      %p80 = scmp.eq.s32.totalorder %s19, 0
      %p81 = por %p79, %p80
      %p82 = scmp.ne.s32.totalorder %s74, %s76
      %p83 = scmp.eq.s32.totalorder %s24, 2
      %p84 = por %p82, %p83
      %p85 = scmp.ne.s32.totalorder %s76, %s77
      %p86 = scmp.eq.s32.totalorder %s24, 0
      %p87 = por %p85, %p86
      %p88 = scmp.ne.s32.totalorder %s76, %s77
      %p89 = scmp.eq.s32.totalorder %s25, 2
      %p90 = por %p88, %p89
      %p92 = scmp.ne.s32.totalorder %s77, %s91
      %p93 = scmp.eq.s32.totalorder %s25, 0
      %p94 = por %p92, %p93
      %s96 = sadd.s32 %s95, 1
      %p99 = scmp.eq.s32.totalorder %s19, 2
      %p100 = scmp.ne.s32.totalorder %s95, %s97
      %p101 = scmp.eq.s32.totalorder %s19, 0
      %p102 = por %p100, %p101
      %p103 = scmp.ne.s32.totalorder %s95, %s97
      %p104 = scmp.eq.s32.totalorder %s24, 2
      %p105 = por %p103, %p104
      %p106 = scmp.ne.s32.totalorder %s97, %s98
      %p107 = scmp.eq.s32.totalorder %s24, 0
      %p108 = por %p106, %p107
      %p109 = scmp.ne.s32.totalorder %s97, %s98
      %p110 = scmp.eq.s32.totalorder %s25, 2
      %p111 = por %p109, %p110
      %p113 = scmp.ne.s32.totalorder %s98, %s112
      %p114 = scmp.eq.s32.totalorder %s25, 0
      %p115 = por %p113, %p114
      %s117 = sadd.s32 %s116, 1
      %p120 = scmp.eq.s32.totalorder %s19, 2
      %p121 = scmp.ne.s32.totalorder %s116, %s118
      %p122 = scmp.eq.s32.totalorder %s19, 0
      %p123 = por %p121, %p122
      %p124 = scmp.ne.s32.totalorder %s116, %s118
      %p125 = scmp.eq.s32.totalorder %s24, 2
      %p126 = por %p124, %p125
      %p127 = scmp.ne.s32.totalorder %s118, %s119
      %p128 = scmp.eq.s32.totalorder %s24, 0
      %p129 = por %p127, %p128
      %p130 = scmp.ne.s32.totalorder %s118, %s119
      %p131 = scmp.eq.s32.totalorder %s25, 2
      %p132 = por %p130, %p131
      %p134 = scmp.ne.s32.totalorder %s119, %s133
      %p135 = scmp.eq.s32.totalorder %s25, 0
      %p136 = por %p134, %p135
      %s137 = ssub.s32 %s19, %s26
      %p138 = scmp.eq.s32.totalorder %s137, 0
      %s140 = sadd.s32 %s139, 1
      %s141 = scalar_select %p138, %s139, %s140
      %p144 = pneg %p138
      %p145 = scmp.eq.s32.totalorder %s19, 2
      %p146 = por %p144, %p145
      %p147 = scmp.ne.s32.totalorder %s139, %s142
      %p148 = scmp.eq.s32.totalorder %s19, 0
      %p149 = por %p147, %p148
      %p150 = scmp.ne.s32.totalorder %s139, %s142
      %p151 = scmp.eq.s32.totalorder %s24, 2
      %p152 = por %p150, %p151
      %p153 = scmp.ne.s32.totalorder %s142, %s143
      %p154 = scmp.eq.s32.totalorder %s24, 0
      %p155 = por %p153, %p154
      %p156 = scmp.ne.s32.totalorder %s142, %s143
      %p157 = scmp.eq.s32.totalorder %s25, 2
      %p158 = por %p156, %p157
      %p160 = scmp.ne.s32.totalorder %s143, %s159
      %p161 = scmp.eq.s32.totalorder %s25, 0
      %p162 = por %p160, %p161
      %p163 = scmp.le.s32.totalorder 1, %s19
      %p164 = scmp.lt.s32.totalorder %s19, 4
      %p165 = pnand %p163, %p164
      %p166 = pneg %p165
      // Predicated region
      $region9: #{tpu_custom_call.1} parent=5 // pred_check
        _
      $region10: #{tpu_custom_call.1} parent=5 // pred_check_branch
        %168 = sbr.rel (%p165) target = $region12
      $region11: #{tpu_custom_call.1} parent=5 // pred_region
        %s169 = ssub.s32 %s19, 1
        // Predicated region
        $region13: #{tpu_custom_call.1} parent=11 // pred_check
          %p170 = pneg %p66
        $region14: #{tpu_custom_call.1} parent=11 // pred_check_branch
          %172 = sbr.rel (%p170) target = $region16
        $region15: #{tpu_custom_call.1} parent=11 // pred_region
          %174 = vsyncadd [#allocation6], 0
          %s175 = sshll.u32 %s1, 4
          %s176 = int_to_ptr.hbm [resolvable:$true] %s175
          %s177 = sshll.u32 [#allocation5], 4
          %s178 = int_to_ptr.vmem [resolvable:$true] %s177
          %183 = dma.hbm_to_vmem [thread:$0]  %s176, 4096, %s178, [#allocation6], 128, 128, 8
        $region16: #{tpu_custom_call.1} parent=11 // pred_fallthru
          _
        // Predicated region
        $region17: #{tpu_custom_call.1} parent=11 // pred_check
          %p184 = pneg %p87
        $region18: #{tpu_custom_call.1} parent=11 // pred_check_branch
          %186 = sbr.rel (%p184) target = $region20
        $region19: #{tpu_custom_call.1} parent=11 // pred_region
          %188 = vsyncadd [#allocation6], 0
          %s190 = sshll.u32 %s2, 4
          %s191 = int_to_ptr.hbm [resolvable:$true] %s190
          %s192 = sshll.u32 [#allocation7], 4
          %s193 = int_to_ptr.vmem [resolvable:$true] %s192
          %195 = dma.hbm_to_vmem [thread:$0]  %s191, 32, %s193, [#allocation6]
        $region20: #{tpu_custom_call.1} parent=11 // pred_fallthru
          _
        // Predicated region
        $region21: #{tpu_custom_call.1} parent=11 // pred_check
          %p196 = pneg %p108
        $region22: #{tpu_custom_call.1} parent=11 // pred_check_branch
          %198 = sbr.rel (%p196) target = $region24
        $region23: #{tpu_custom_call.1} parent=11 // pred_region
          %200 = vsyncadd [#allocation9], 0
          %s201 = sshll.u32 %s3, 4
          %s202 = int_to_ptr.hbm [resolvable:$true] %s201
          %s203 = sshll.u32 [#allocation8], 4
          %s204 = int_to_ptr.vmem [resolvable:$true] %s203
          %209 = dma.hbm_to_vmem [thread:$0]  %s202, 75776, %s204, [#allocation9], 2368, 2368, 148
        $region24: #{tpu_custom_call.1} parent=11 // pred_fallthru
          _
        // Predicated region
        $region25: #{tpu_custom_call.1} parent=11 // pred_check
          %p210 = pneg %p129
        $region26: #{tpu_custom_call.1} parent=11 // pred_check_branch
          %212 = sbr.rel (%p210) target = $region28
        $region27: #{tpu_custom_call.1} parent=11 // pred_region
          %214 = vsyncadd [#allocation9], 0
          %s216 = sshll.u32 %s4, 4
          %s217 = int_to_ptr.hbm [resolvable:$true] %s216
          %s218 = sshll.u32 [#allocation10], 4
          %s219 = int_to_ptr.vmem [resolvable:$true] %s218
          %221 = dma.hbm_to_vmem [thread:$0]  %s217, 592, %s219, [#allocation9]
        $region28: #{tpu_custom_call.1} parent=11 // pred_fallthru
          _
      $region12: #{tpu_custom_call.1} parent=5 // pred_fallthru
        _
      %p222 = scmp.lt.s32.totalorder %s19, 3
      // Predicated region
      $region29: #{tpu_custom_call.1} parent=5 // pred_check
        %p223 = pneg %p222
      $region30: #{tpu_custom_call.1} parent=5 // pred_check_branch
        %225 = sbr.rel (%p223) target = $region32
      $region31: #{tpu_custom_call.1} parent=5 // pred_region
        // Predicated region
        $region33: #{tpu_custom_call.1} parent=31 // pred_check
          %p226 = pneg %p39
        $region34: #{tpu_custom_call.1} parent=31 // pred_check_branch
          %228 = sbr.rel (%p226) target = $region36
        $region35: #{tpu_custom_call.1} parent=31 // pred_region
          %s229 = sand.u32 %s29, 1
          %s230 = scalar_lea.sflag [#allocation3], %s229
          %s231 = sand.u32 %s29, 1
          %s232 = smul.addr %s231, 128
          %s233 = scalar_lea.vmem [#allocation2], %s232
          %s234 = smul.u32 16, %s19
          %236 = vsyncadd %s230, 0
          %s237 = smul.addr %s234, 2
          %s238 = smul.addr %s237, 4
          %s239 = scalar_lea.hbm %s0, %s238
          %s240 = sshll.u32 %s239, 4
          %s241 = int_to_ptr.hbm [resolvable:$true] %s240
          %s242 = sshll.u32 %s233, 4
          %s243 = int_to_ptr.vmem [resolvable:$true] %s242
          %248 = dma.hbm_to_vmem [thread:$0]  %s241, 2048, %s243, %s230, 128, 128, 8
        $region36: #{tpu_custom_call.1} parent=31 // pred_fallthru
          _
      $region32: #{tpu_custom_call.1} parent=5 // pred_fallthru
        _
      %p249 = scmp.le.s32.totalorder 1, %s19
      %p250 = scmp.lt.s32.totalorder %s19, 4
      %p251 = pnand %p249, %p250
      %p252 = pneg %p251
      // Predicated region
      $region37: #{tpu_custom_call.1} parent=5 // pred_check
        _
      $region38: #{tpu_custom_call.1} parent=5 // pred_check_branch
        %254 = sbr.rel (%p251) target = $region40
      $region39: #{tpu_custom_call.1} parent=5 // pred_region
        %s255 = ssub.s32 %s19, 1
        %s256 = sand.u32 %s32, 1
        %s257 = scalar_lea.sflag [#allocation3], %s256
        %s258 = sand.u32 %s32, 1
        %s259 = smul.addr %s258, 128
        %s260 = scalar_lea.vmem [#allocation2], %s259
        // Predicated region
        $region41: #{tpu_custom_call.1} parent=39 // pred_check
          %p261 = pneg %p45
        $region42: #{tpu_custom_call.1} parent=39 // pred_check_branch
          %263 = sbr.rel (%p261) target = $region44
        $region43: #{tpu_custom_call.1} parent=39 // pred_region
          %265 = dma.done %s257, 2048
        $region44: #{tpu_custom_call.1} parent=39 // pred_fallthru
          _
        // Predicated region
        $region45: #{tpu_custom_call.1} parent=39 // pred_check
          %p266 = pneg %p66
        $region46: #{tpu_custom_call.1} parent=39 // pred_check_branch
          %268 = sbr.rel (%p266) target = $region48
        $region47: #{tpu_custom_call.1} parent=39 // pred_region
          %270 = dma.done [#allocation6], 4096
        $region48: #{tpu_custom_call.1} parent=39 // pred_fallthru
          _
        // Predicated region
        $region49: #{tpu_custom_call.1} parent=39 // pred_check
          %p271 = pneg %p87
        $region50: #{tpu_custom_call.1} parent=39 // pred_check_branch
          %273 = sbr.rel (%p271) target = $region52
        $region51: #{tpu_custom_call.1} parent=39 // pred_region
          %275 = dma.done [#allocation6], 32
        $region52: #{tpu_custom_call.1} parent=39 // pred_fallthru
          _
        // Predicated region
        $region53: #{tpu_custom_call.1} parent=39 // pred_check
          %p276 = pneg %p108
        $region54: #{tpu_custom_call.1} parent=39 // pred_check_branch
          %278 = sbr.rel (%p276) target = $region56
        $region55: #{tpu_custom_call.1} parent=39 // pred_region
          %280 = dma.done [#allocation9], 75776
        $region56: #{tpu_custom_call.1} parent=39 // pred_fallthru
          _
        // Predicated region
        $region57: #{tpu_custom_call.1} parent=39 // pred_check
          %p281 = pneg %p129
        $region58: #{tpu_custom_call.1} parent=39 // pred_check_branch
          %283 = sbr.rel (%p281) target = $region60
        $region59: #{tpu_custom_call.1} parent=39 // pred_region
          %285 = dma.done [#allocation9], 592
        $region60: #{tpu_custom_call.1} parent=39 // pred_fallthru
          _
        %s286 = sand.u32 %s32, 1
        %s287 = scalar_lea.sflag [#allocation3], %s286
        %s288 = sand.u32 %s32, 1
        %s289 = smul.addr %s288, 128
        %s290 = scalar_lea.vmem [#allocation2], %s289
        %p291 = pneg %p45
        %p292 = pneg %p42
        %p293 = pneg %p66
        %p294 = pneg %p63
        %p295 = pneg %p87
        %p296 = pneg %p84
        %p297 = pneg %p108
        %p298 = pneg %p105
        %p299 = pneg %p129
        %p300 = pneg %p126
        %p301 = pneg %p155
        %p302 = pneg %p152
        %s303 = sand.u32 %s142, 1
        %s304 = scalar_lea.sflag [#allocation4], %s303
        %s305 = sand.u32 %s142, 1
        %s306 = smul.addr %s305, 2368
        %s307 = scalar_lea.vmem [#allocation11], %s306
        %s308 = smul.u32 16, %s24
        %s309 = smul.u32 16, %s24
        %v310 = vld [vmem:[%s260] sm:$0xff]
        %v311 = vld [vmem:[%s260 + $0x8] sm:$0xff]
        %v312 = vld [vmem:[%s260 + $0x10] sm:$0xff]
        %v313 = vld [vmem:[%s260 + $0x18] sm:$0xff]
        %v314 = vld [vmem:[%s260 + $0x20] sm:$0xff]
        %v315 = vld [vmem:[%s260 + $0x28] sm:$0xff]
        %v316 = vld [vmem:[%s260 + $0x30] sm:$0xff]
        %v317 = vld [vmem:[%s260 + $0x38] sm:$0xff]
        %v318 = vld [vmem:[%s260 + $0x40] sm:$0xff]
        %v319 = vld [vmem:[%s260 + $0x48] sm:$0xff]
        %v320 = vld [vmem:[%s260 + $0x50] sm:$0xff]
        %v321 = vld [vmem:[%s260 + $0x58] sm:$0xff]
        %v322 = vld [vmem:[%s260 + $0x60] sm:$0xff]
        %v323 = vld [vmem:[%s260 + $0x68] sm:$0xff]
        %v324 = vld [vmem:[%s260 + $0x70] sm:$0xff]
        %v325 = vld [vmem:[%s260 + $0x78] sm:$0xff]
        %v326 = vld [vmem:[#allocation5] sm:$0xff]
        %v327 = vld [vmem:[#allocation5 + $0x8] sm:$0xff]
        %v328 = vld [vmem:[#allocation5 + $0x10] sm:$0xff]
        %v329 = vld [vmem:[#allocation5 + $0x18] sm:$0xff]
        %v330 = vld [vmem:[#allocation5 + $0x20] sm:$0xff]
        %v331 = vld [vmem:[#allocation5 + $0x28] sm:$0xff]
        %v332 = vld [vmem:[#allocation5 + $0x30] sm:$0xff]
        %v333 = vld [vmem:[#allocation5 + $0x38] sm:$0xff]
        %v334 = vld [vmem:[#allocation5 + $0x40] sm:$0xff]
        %v335 = vld [vmem:[#allocation5 + $0x48] sm:$0xff]
        %v336 = vld [vmem:[#allocation5 + $0x50] sm:$0xff]
        %v337 = vld [vmem:[#allocation5 + $0x58] sm:$0xff]
        %v338 = vld [vmem:[#allocation5 + $0x60] sm:$0xff]
        %v339 = vld [vmem:[#allocation5 + $0x68] sm:$0xff]
        %v340 = vld [vmem:[#allocation5 + $0x70] sm:$0xff]
        %v341 = vld [vmem:[#allocation5 + $0x78] sm:$0xff]
        %v342 = vld [vmem:[#allocation5 + $0x80] sm:$0xff]
        %v343 = vld [vmem:[#allocation5 + $0x88] sm:$0xff]
        %v344 = vld [vmem:[#allocation5 + $0x90] sm:$0xff]
        %v345 = vld [vmem:[#allocation5 + $0x98] sm:$0xff]
        %v346 = vld [vmem:[#allocation5 + $0xa0] sm:$0xff]
        %v347 = vld [vmem:[#allocation5 + $0xa8] sm:$0xff]
        %v348 = vld [vmem:[#allocation5 + $0xb0] sm:$0xff]
        %v349 = vld [vmem:[#allocation5 + $0xb8] sm:$0xff]
        %v350 = vld [vmem:[#allocation5 + $0xc0] sm:$0xff]
        %v351 = vld [vmem:[#allocation5 + $0xc8] sm:$0xff]
        %v352 = vld [vmem:[#allocation5 + $0xd0] sm:$0xff]
        %v353 = vld [vmem:[#allocation5 + $0xd8] sm:$0xff]
        %v354 = vld [vmem:[#allocation5 + $0xe0] sm:$0xff]
        %v355 = vld [vmem:[#allocation5 + $0xe8] sm:$0xff]
        %v356 = vld [vmem:[#allocation5 + $0xf0] sm:$0xff]
        %v357 = vld [vmem:[#allocation5 + $0xf8] sm:$0xff]
        %v358 = vld [vmem:[#allocation7] sm:$0x3]
        %v360 = vperm.slane %v358, 0
        %v361 = vperm.slane %v358, 1
        %v380 = vunpack.c.l.b16 %v310
        %v381 = vunpack.c.h.b16 %v310
        %v382 = vunpack.c.l.b16 %v311
        %v383 = vunpack.c.h.b16 %v311
        %v384 = vunpack.c.l.b16 %v312
        %v385 = vunpack.c.h.b16 %v312
        %v386 = vunpack.c.l.b16 %v313
        %v387 = vunpack.c.h.b16 %v313
        %v388 = vunpack.c.l.b16 %v314
        %v389 = vunpack.c.h.b16 %v314
        %v390 = vunpack.c.l.b16 %v315
        %v391 = vunpack.c.h.b16 %v315
        %v392 = vunpack.c.l.b16 %v316
        %v393 = vunpack.c.h.b16 %v316
        %v394 = vunpack.c.l.b16 %v317
        %v395 = vunpack.c.h.b16 %v317
        %v396 = vunpack.c.l.b16 %v318
        %v397 = vunpack.c.h.b16 %v318
        %v398 = vunpack.c.l.b16 %v319
        %v399 = vunpack.c.h.b16 %v319
        %v400 = vunpack.c.l.b16 %v320
        %v401 = vunpack.c.h.b16 %v320
        %v402 = vunpack.c.l.b16 %v321
        %v403 = vunpack.c.h.b16 %v321
        %v404 = vunpack.c.l.b16 %v322
        %v405 = vunpack.c.h.b16 %v322
        %v406 = vunpack.c.l.b16 %v323
        %v407 = vunpack.c.h.b16 %v323
        %v408 = vunpack.c.l.b16 %v324
        %v409 = vunpack.c.h.b16 %v324
        %v410 = vunpack.c.l.b16 %v325
        %v411 = vunpack.c.h.b16 %v325
        %v412 = vpack.c.b16 %v382, %v380
        %v413 = vpack.c.b16 %v383, %v381
        %v414 = vpack.c.b16 %v386, %v384
        %v415 = vpack.c.b16 %v387, %v385
        %v416 = vpack.c.b16 %v390, %v388
        %v417 = vpack.c.b16 %v391, %v389
        %v418 = vpack.c.b16 %v394, %v392
        %v419 = vpack.c.b16 %v395, %v393
        %v420 = vpack.c.b16 %v398, %v396
        %v421 = vpack.c.b16 %v399, %v397
        %v422 = vpack.c.b16 %v402, %v400
        %v423 = vpack.c.b16 %v403, %v401
        %v424 = vpack.c.b16 %v406, %v404
        %v425 = vpack.c.b16 %v407, %v405
        %v426 = vpack.c.b16 %v410, %v408
        %v427 = vpack.c.b16 %v411, %v409
        %v476 = vunpack.c.l.b16 %v326
        %v477 = vunpack.c.h.b16 %v326
        %v478 = vunpack.c.l.b16 %v327
        %v479 = vunpack.c.h.b16 %v327
        %v480 = vunpack.c.l.b16 %v328
        %v481 = vunpack.c.h.b16 %v328
        %v482 = vunpack.c.l.b16 %v329
        %v483 = vunpack.c.h.b16 %v329
        %v484 = vunpack.c.l.b16 %v330
        %v485 = vunpack.c.h.b16 %v330
        %v486 = vunpack.c.l.b16 %v331
        %v487 = vunpack.c.h.b16 %v331
        %v488 = vunpack.c.l.b16 %v332
        %v489 = vunpack.c.h.b16 %v332
        %v490 = vunpack.c.l.b16 %v333
        %v491 = vunpack.c.h.b16 %v333
        %v492 = vunpack.c.l.b16 %v334
        %v493 = vunpack.c.h.b16 %v334
        %v494 = vunpack.c.l.b16 %v335
        %v495 = vunpack.c.h.b16 %v335
        %v496 = vunpack.c.l.b16 %v336
        %v497 = vunpack.c.h.b16 %v336
        %v498 = vunpack.c.l.b16 %v337
        %v499 = vunpack.c.h.b16 %v337
        %v500 = vunpack.c.l.b16 %v338
        %v501 = vunpack.c.h.b16 %v338
        %v502 = vunpack.c.l.b16 %v339
        %v503 = vunpack.c.h.b16 %v339
        %v504 = vunpack.c.l.b16 %v340
        %v505 = vunpack.c.h.b16 %v340
        %v506 = vunpack.c.l.b16 %v341
        %v507 = vunpack.c.h.b16 %v341
        %v508 = vunpack.c.l.b16 %v342
        %v509 = vunpack.c.h.b16 %v342
        %v510 = vunpack.c.l.b16 %v343
        %v511 = vunpack.c.h.b16 %v343
        %v512 = vunpack.c.l.b16 %v344
        %v513 = vunpack.c.h.b16 %v344
        %v514 = vunpack.c.l.b16 %v345
        %v515 = vunpack.c.h.b16 %v345
        %v516 = vunpack.c.l.b16 %v346
        %v517 = vunpack.c.h.b16 %v346
        %v518 = vunpack.c.l.b16 %v347
        %v519 = vunpack.c.h.b16 %v347
        %v520 = vunpack.c.l.b16 %v348
        %v521 = vunpack.c.h.b16 %v348
        %v522 = vunpack.c.l.b16 %v349
        %v523 = vunpack.c.h.b16 %v349
        %v524 = vunpack.c.l.b16 %v350
        %v525 = vunpack.c.h.b16 %v350
        %v526 = vunpack.c.l.b16 %v351
        %v527 = vunpack.c.h.b16 %v351
        %v528 = vunpack.c.l.b16 %v352
        %v529 = vunpack.c.h.b16 %v352
        %v530 = vunpack.c.l.b16 %v353
        %v531 = vunpack.c.h.b16 %v353
        %v532 = vunpack.c.l.b16 %v354
        %v533 = vunpack.c.h.b16 %v354
        %v534 = vunpack.c.l.b16 %v355
        %v535 = vunpack.c.h.b16 %v355
        %v536 = vunpack.c.l.b16 %v356
        %v537 = vunpack.c.h.b16 %v356
        %v538 = vunpack.c.l.b16 %v357
        %v539 = vunpack.c.h.b16 %v357
        %v540 = vpack.c.b16 %v478, %v476
        %v541 = vpack.c.b16 %v479, %v477
        %v542 = vpack.c.b16 %v482, %v480
        %v543 = vpack.c.b16 %v483, %v481
        %v544 = vpack.c.b16 %v486, %v484
        %v545 = vpack.c.b16 %v487, %v485
        %v546 = vpack.c.b16 %v490, %v488
        %v547 = vpack.c.b16 %v491, %v489
        %v548 = vpack.c.b16 %v494, %v492
        %v549 = vpack.c.b16 %v495, %v493
        %v550 = vpack.c.b16 %v498, %v496
        %v551 = vpack.c.b16 %v499, %v497
        %v552 = vpack.c.b16 %v502, %v500
        %v553 = vpack.c.b16 %v503, %v501
        %v554 = vpack.c.b16 %v506, %v504
        %v555 = vpack.c.b16 %v507, %v505
        %v556 = vpack.c.b16 %v510, %v508
        %v557 = vpack.c.b16 %v511, %v509
        %v558 = vpack.c.b16 %v514, %v512
        %v559 = vpack.c.b16 %v515, %v513
        %v560 = vpack.c.b16 %v518, %v516
        %v561 = vpack.c.b16 %v519, %v517
        %v562 = vpack.c.b16 %v522, %v520
        %v563 = vpack.c.b16 %v523, %v521
        %v564 = vpack.c.b16 %v526, %v524
        %v565 = vpack.c.b16 %v527, %v525
        %v566 = vpack.c.b16 %v530, %v528
        %v567 = vpack.c.b16 %v531, %v529
        %v568 = vpack.c.b16 %v534, %v532
        %v569 = vpack.c.b16 %v535, %v533
        %v570 = vpack.c.b16 %v538, %v536
        %v571 = vpack.c.b16 %v539, %v537
        %604 = vmatpush.bf16.msra.mxu0 %v554
        %605 = vmatpush.bf16.msra.mxu0 %v552
        %606 = vmatpush.bf16.msra.mxu0 %v550
        %607 = vmatpush.bf16.msra.mxu0 %v548
        %608 = vmatpush.bf16.msra.mxu0 %v546
        %609 = vmatpush.bf16.msra.mxu0 %v544
        %610 = vmatpush.bf16.msra.mxu0 %v542
        %611 = vmatpush.bf16.msra.mxu0 %v540
        %612 = vmatmul.bf16.gmra.mxu0 %v412
        %v613 = vpop.f32.mrf.mxu0
        %v614 = vadd.f32 %v360, %v613
        %v615 = vpop.f32.mrf.mxu0
        %v616 = vadd.f32 %v360, %v615
        %617 = vmatmul.bf16.gmra.mxu0 %v414
        %v618 = vpop.f32.mrf.mxu0
        %v619 = vadd.f32 %v360, %v618
        %v620 = vpop.f32.mrf.mxu0
        %v621 = vadd.f32 %v360, %v620
        %622 = vmatmul.bf16.gmra.mxu0 %v416
        %v623 = vpop.f32.mrf.mxu0
        %v624 = vadd.f32 %v360, %v623
        %v625 = vpop.f32.mrf.mxu0
        %v626 = vadd.f32 %v360, %v625
        %627 = vmatmul.bf16.gmra.mxu0 %v418
        %v628 = vpop.f32.mrf.mxu0
        %v629 = vadd.f32 %v360, %v628
        %v630 = vpop.f32.mrf.mxu0
        %v631 = vadd.f32 %v360, %v630
        %632 = vmatmul.bf16.gmra.mxu0 %v420
        %v633 = vpop.f32.mrf.mxu0
        %v634 = vadd.f32 %v360, %v633
        %v635 = vpop.f32.mrf.mxu0
        %v636 = vadd.f32 %v360, %v635
        %637 = vmatmul.bf16.gmra.mxu0 %v422
        %v638 = vpop.f32.mrf.mxu0
        %v639 = vadd.f32 %v360, %v638
        %v640 = vpop.f32.mrf.mxu0
        %v641 = vadd.f32 %v360, %v640
        %642 = vmatmul.bf16.gmra.mxu0 %v424
        %v643 = vpop.f32.mrf.mxu0
        %v644 = vadd.f32 %v360, %v643
        %v645 = vpop.f32.mrf.mxu0
        %v646 = vadd.f32 %v360, %v645
        %647 = vmatmul.bf16.gmra.mxu0 %v426
        %v648 = vpop.f32.mrf.mxu0
        %v649 = vadd.f32 %v360, %v648
        %v650 = vpop.f32.mrf.mxu0
        %v651 = vadd.f32 %v360, %v650
        %652 = vdwg.mxu0
        %653 = vmatpush.bf16.msra.mxu0 %v570
        %654 = vmatpush.bf16.msra.mxu0 %v568
        %655 = vmatpush.bf16.msra.mxu0 %v566
        %656 = vmatpush.bf16.msra.mxu0 %v564
        %657 = vmatpush.bf16.msra.mxu0 %v562
        %658 = vmatpush.bf16.msra.mxu0 %v560
        %659 = vmatpush.bf16.msra.mxu0 %v558
        %660 = vmatpush.bf16.msra.mxu0 %v556
        %661 = vmatmul.bf16.gmra.mxu0 %v413
        %v662 = vpop.f32.mrf.mxu0
        %v663 = vadd.f32 %v614, %v662
        %v664 = vpop.f32.mrf.mxu0
        %v665 = vadd.f32 %v616, %v664
        %666 = vmatmul.bf16.gmra.mxu0 %v415
        %v667 = vpop.f32.mrf.mxu0
        %v668 = vadd.f32 %v619, %v667
        %v669 = vpop.f32.mrf.mxu0
        %v670 = vadd.f32 %v621, %v669
        %671 = vmatmul.bf16.gmra.mxu0 %v417
        %v672 = vpop.f32.mrf.mxu0
        %v673 = vadd.f32 %v624, %v672
        %v674 = vpop.f32.mrf.mxu0
        %v675 = vadd.f32 %v626, %v674
        %676 = vmatmul.bf16.gmra.mxu0 %v419
        %v677 = vpop.f32.mrf.mxu0
        %v678 = vadd.f32 %v629, %v677
        %v679 = vpop.f32.mrf.mxu0
        %v680 = vadd.f32 %v631, %v679
        %681 = vmatmul.bf16.gmra.mxu0 %v421
        %v682 = vpop.f32.mrf.mxu0
        %v683 = vadd.f32 %v634, %v682
        %v684 = vpop.f32.mrf.mxu0
        %v685 = vadd.f32 %v636, %v684
        %686 = vmatmul.bf16.gmra.mxu0 %v423
        %v687 = vpop.f32.mrf.mxu0
        %v688 = vadd.f32 %v639, %v687
        %v689 = vpop.f32.mrf.mxu0
        %v690 = vadd.f32 %v641, %v689
        %691 = vmatmul.bf16.gmra.mxu0 %v425
        %v692 = vpop.f32.mrf.mxu0
        %v693 = vadd.f32 %v644, %v692
        %v694 = vpop.f32.mrf.mxu0
        %v695 = vadd.f32 %v646, %v694
        %696 = vmatmul.bf16.gmra.mxu0 %v427
        %v697 = vpop.f32.mrf.mxu0
        %v698 = vadd.f32 %v649, %v697
        %v699 = vpop.f32.mrf.mxu0
        %v700 = vadd.f32 %v651, %v699
        %701 = vdwg.mxu0
        %702 = vmatpush.bf16.msra.mxu0 %v555
        %703 = vmatpush.bf16.msra.mxu0 %v553
        %704 = vmatpush.bf16.msra.mxu0 %v551
        %705 = vmatpush.bf16.msra.mxu0 %v549
        %706 = vmatpush.bf16.msra.mxu0 %v547
        %707 = vmatpush.bf16.msra.mxu0 %v545
        %708 = vmatpush.bf16.msra.mxu0 %v543
        %709 = vmatpush.bf16.msra.mxu0 %v541
        %710 = vmatmul.bf16.gmra.mxu0 %v412
        %v711 = vpop.f32.mrf.mxu0
        %v712 = vadd.f32 %v361, %v711
        %v713 = vpop.f32.mrf.mxu0
        %v714 = vadd.f32 %v361, %v713
        %715 = vmatmul.bf16.gmra.mxu0 %v414
        %v716 = vpop.f32.mrf.mxu0
        %v717 = vadd.f32 %v361, %v716
        %v718 = vpop.f32.mrf.mxu0
        %v719 = vadd.f32 %v361, %v718
        %720 = vmatmul.bf16.gmra.mxu0 %v416
        %v721 = vpop.f32.mrf.mxu0
        %v722 = vadd.f32 %v361, %v721
        %v723 = vpop.f32.mrf.mxu0
        %v724 = vadd.f32 %v361, %v723
        %725 = vmatmul.bf16.gmra.mxu0 %v418
        %v726 = vpop.f32.mrf.mxu0
        %v727 = vadd.f32 %v361, %v726
        %v728 = vpop.f32.mrf.mxu0
        %v729 = vadd.f32 %v361, %v728
        %730 = vmatmul.bf16.gmra.mxu0 %v420
        %v731 = vpop.f32.mrf.mxu0
        %v732 = vadd.f32 %v361, %v731
        %v733 = vpop.f32.mrf.mxu0
        %v734 = vadd.f32 %v361, %v733
        %735 = vmatmul.bf16.gmra.mxu0 %v422
        %v736 = vpop.f32.mrf.mxu0
        %v737 = vadd.f32 %v361, %v736
        %v738 = vpop.f32.mrf.mxu0
        %v739 = vadd.f32 %v361, %v738
        %740 = vmatmul.bf16.gmra.mxu0 %v424
        %v741 = vpop.f32.mrf.mxu0
        %v742 = vadd.f32 %v361, %v741
        %v743 = vpop.f32.mrf.mxu0
        %v744 = vadd.f32 %v361, %v743
        %745 = vmatmul.bf16.gmra.mxu0 %v426
        %v746 = vpop.f32.mrf.mxu0
        %v747 = vadd.f32 %v361, %v746
        %v748 = vpop.f32.mrf.mxu0
        %v749 = vadd.f32 %v361, %v748
        %750 = vdwg.mxu0
        %751 = vmatpush.bf16.msra.mxu0 %v571
        %752 = vmatpush.bf16.msra.mxu0 %v569
        %753 = vmatpush.bf16.msra.mxu0 %v567
        %754 = vmatpush.bf16.msra.mxu0 %v565
        %755 = vmatpush.bf16.msra.mxu0 %v563
        %756 = vmatpush.bf16.msra.mxu0 %v561
        %757 = vmatpush.bf16.msra.mxu0 %v559
        %758 = vmatpush.bf16.msra.mxu0 %v557
        %759 = vmatmul.bf16.gmra.mxu0 %v413
        %v760 = vpop.f32.mrf.mxu0
        %v761 = vadd.f32 %v712, %v760
        %v762 = vpop.f32.mrf.mxu0
        %v763 = vadd.f32 %v714, %v762
        %764 = vmatmul.bf16.gmra.mxu0 %v415
        %v765 = vpop.f32.mrf.mxu0
        %v766 = vadd.f32 %v717, %v765
        %v767 = vpop.f32.mrf.mxu0
        %v768 = vadd.f32 %v719, %v767
        %769 = vmatmul.bf16.gmra.mxu0 %v417
        %v770 = vpop.f32.mrf.mxu0
        %v771 = vadd.f32 %v722, %v770
        %v772 = vpop.f32.mrf.mxu0
        %v773 = vadd.f32 %v724, %v772
        %774 = vmatmul.bf16.gmra.mxu0 %v419
        %v775 = vpop.f32.mrf.mxu0
        %v776 = vadd.f32 %v727, %v775
        %v777 = vpop.f32.mrf.mxu0
        %v778 = vadd.f32 %v729, %v777
        %779 = vmatmul.bf16.gmra.mxu0 %v421
        %v780 = vpop.f32.mrf.mxu0
        %v781 = vadd.f32 %v732, %v780
        %v782 = vpop.f32.mrf.mxu0
        %v783 = vadd.f32 %v734, %v782
        %784 = vmatmul.bf16.gmra.mxu0 %v423
        %v785 = vpop.f32.mrf.mxu0
        %v786 = vadd.f32 %v737, %v785
        %v787 = vpop.f32.mrf.mxu0
        %v788 = vadd.f32 %v739, %v787
        %789 = vmatmul.bf16.gmra.mxu0 %v425
        %v790 = vpop.f32.mrf.mxu0
        %v791 = vadd.f32 %v742, %v790
        %v792 = vpop.f32.mrf.mxu0
        %v793 = vadd.f32 %v744, %v792
        %794 = vmatmul.bf16.gmra.mxu0 %v427
        %v795 = vpop.f32.mrf.mxu0
        %v796 = vadd.f32 %v747, %v795
        %v797 = vpop.f32.mrf.mxu0
        %v798 = vadd.f32 %v749, %v797
        %799 = vdwg.mxu0
        %v800 = vmul.f32 %v663, 0.5
        %v801 = vmul.f32 %v761, 0.5
        %v802 = vmul.f32 %v665, 0.5
        %v803 = vmul.f32 %v763, 0.5
        %v804 = vmul.f32 %v668, 0.5
        %v805 = vmul.f32 %v766, 0.5
        %v806 = vmul.f32 %v670, 0.5
        %v807 = vmul.f32 %v768, 0.5
        %v808 = vmul.f32 %v673, 0.5
        %v809 = vmul.f32 %v771, 0.5
        %v810 = vmul.f32 %v675, 0.5
        %v811 = vmul.f32 %v773, 0.5
        %v812 = vmul.f32 %v678, 0.5
        %v813 = vmul.f32 %v776, 0.5
        %v814 = vmul.f32 %v680, 0.5
        %v815 = vmul.f32 %v778, 0.5
        %v816 = vmul.f32 %v683, 0.5
        %v817 = vmul.f32 %v781, 0.5
        %v818 = vmul.f32 %v685, 0.5
        %v819 = vmul.f32 %v783, 0.5
        %v820 = vmul.f32 %v688, 0.5
        %v821 = vmul.f32 %v786, 0.5
        %v822 = vmul.f32 %v690, 0.5
        %v823 = vmul.f32 %v788, 0.5
        %v824 = vmul.f32 %v693, 0.5
        %v825 = vmul.f32 %v791, 0.5
        %v826 = vmul.f32 %v695, 0.5
        %v827 = vmul.f32 %v793, 0.5
        %v828 = vmul.f32 %v698, 0.5
        %v829 = vmul.f32 %v796, 0.5
        %v830 = vmul.f32 %v700, 0.5
        %v831 = vmul.f32 %v798, 0.5
        %v832 = vmul.f32 %v663, 0.70710677
        %v833 = vmul.f32 %v761, 0.70710677
        %v834 = vmul.f32 %v665, 0.70710677
        %v835 = vmul.f32 %v763, 0.70710677
        %v836 = vmul.f32 %v668, 0.70710677
        %v837 = vmul.f32 %v766, 0.70710677
        %v838 = vmul.f32 %v670, 0.70710677
        %v839 = vmul.f32 %v768, 0.70710677
        %v840 = vmul.f32 %v673, 0.70710677
        %v841 = vmul.f32 %v771, 0.70710677
        %v842 = vmul.f32 %v675, 0.70710677
        %v843 = vmul.f32 %v773, 0.70710677
        %v844 = vmul.f32 %v678, 0.70710677
        %v845 = vmul.f32 %v776, 0.70710677
        %v846 = vmul.f32 %v680, 0.70710677
        %v847 = vmul.f32 %v778, 0.70710677
        %v848 = vmul.f32 %v683, 0.70710677
        %v849 = vmul.f32 %v781, 0.70710677
        %v850 = vmul.f32 %v685, 0.70710677
        %v851 = vmul.f32 %v783, 0.70710677
        %v852 = vmul.f32 %v688, 0.70710677
        %v853 = vmul.f32 %v786, 0.70710677
        %v854 = vmul.f32 %v690, 0.70710677
        %v855 = vmul.f32 %v788, 0.70710677
        %v856 = vmul.f32 %v693, 0.70710677
        %v857 = vmul.f32 %v791, 0.70710677
        %v858 = vmul.f32 %v695, 0.70710677
        %v859 = vmul.f32 %v793, 0.70710677
        %v860 = vmul.f32 %v698, 0.70710677
        %v861 = vmul.f32 %v796, 0.70710677
        %v862 = vmul.f32 %v700, 0.70710677
        %v863 = vmul.f32 %v798, 0.70710677
        %v864 = vmul.f32 %v832, %v832
        %v865 = vmin.f32 16.0, %v864
        %v866 = vmul.f32 %v865, 2.1237322e-06
        %v867 = vadd.f32 %v866, 0.00028619796
        %v868 = vmul.f32 %v865, %v867
        %v869 = vadd.f32 %v868, 0.0036580483
        %v870 = vmul.f32 %v865, %v869
        %v871 = vadd.f32 %v870, 0.05243302
        %v872 = vmul.f32 %v865, %v871
        %v873 = vadd.f32 %v872, 0.18741608
        %v874 = vmul.f32 %v865, %v873
        %v875 = vadd.f32 %v874, 1.1283791
        %v876 = vmul.f32 %v832, %v875
        %v877 = vmul.f32 %v865, 3.8918573e-05
        %v878 = vadd.f32 %v877, 0.001143296
        %v879 = vmul.f32 %v865, %v878
        %v880 = vadd.f32 %v879, 0.014752088
        %v881 = vmul.f32 %v865, %v880
        %v882 = vadd.f32 %v881, 0.112945676
        %v883 = vmul.f32 %v865, %v882
        %v884 = vadd.f32 %v883, 0.4994258
        %v885 = vmul.f32 %v865, %v884
        %v886 = vadd.f32 %v885, 1.0
        %v887 = vrcp.pop %v886
        %v888 = vmul.f32 %v886, %v887
        %v889 = vsub.f32 1.0, %v888
        %v890 = vmul.f32 %v887, %v889
        %v891 = vadd.f32 %v887, %v890
        %vm892 = vweird.f32 %v886
        %vm893 = vweird.f32 %v887
        %vm894 = vmor %vm892, %vm893
        %v895 = vsel %vm894, %v887, %v891
        %v896 = vand.u32 2147483647, %v886
        %vm897 = vcmp.eq.f32.partialorder %v896, 8.507059e+37
        %v898 = vand.u32 %v886, 2147483648
        %v899 = vor.u32 1.1754944e-38, %v898
        %v900 = vsel %vm897, %v899, %v895
        %v901 = vmul.f32 %v876, %v900
        %v902 = vmin.f32 %v901, 1.0
        %v903 = vmax.f32 %v902, -1.0
        %v904 = vmul.f32 %v833, %v833
        %v905 = vmin.f32 16.0, %v904
        %v906 = vmul.f32 %v905, 2.1237322e-06
        %v907 = vadd.f32 %v906, 0.00028619796
        %v908 = vmul.f32 %v905, %v907
        %v909 = vadd.f32 %v908, 0.0036580483
        %v910 = vmul.f32 %v905, %v909
        %v911 = vadd.f32 %v910, 0.05243302
        %v912 = vmul.f32 %v905, %v911
        %v913 = vadd.f32 %v912, 0.18741608
        %v914 = vmul.f32 %v905, %v913
        %v915 = vadd.f32 %v914, 1.1283791
        %v916 = vmul.f32 %v833, %v915
        %v917 = vmul.f32 %v905, 3.8918573e-05
        %v918 = vadd.f32 %v917, 0.001143296
        %v919 = vmul.f32 %v905, %v918
        %v920 = vadd.f32 %v919, 0.014752088
        %v921 = vmul.f32 %v905, %v920
        %v922 = vadd.f32 %v921, 0.112945676
        %v923 = vmul.f32 %v905, %v922
        %v924 = vadd.f32 %v923, 0.4994258
        %v925 = vmul.f32 %v905, %v924
        %v926 = vadd.f32 %v925, 1.0
        %v927 = vrcp.pop %v926
        %v928 = vmul.f32 %v926, %v927
        %v929 = vsub.f32 1.0, %v928
        %v930 = vmul.f32 %v927, %v929
        %v931 = vadd.f32 %v927, %v930
        %vm932 = vweird.f32 %v926
        %vm933 = vweird.f32 %v927
        %vm934 = vmor %vm932, %vm933
        %v935 = vsel %vm934, %v927, %v931
        %v936 = vand.u32 2147483647, %v926
        %vm937 = vcmp.eq.f32.partialorder %v936, 8.507059e+37
        %v938 = vand.u32 %v926, 2147483648
        %v939 = vor.u32 1.1754944e-38, %v938
        %v940 = vsel %vm937, %v939, %v935
        %v941 = vmul.f32 %v916, %v940
        %v942 = vmin.f32 %v941, 1.0
        %v943 = vmax.f32 %v942, -1.0
        %v944 = vmul.f32 %v834, %v834
        %v945 = vmin.f32 16.0, %v944
        %v946 = vmul.f32 %v945, 2.1237322e-06
        %v947 = vadd.f32 %v946, 0.00028619796
        %v948 = vmul.f32 %v945, %v947
        %v949 = vadd.f32 %v948, 0.0036580483
        %v950 = vmul.f32 %v945, %v949
        %v951 = vadd.f32 %v950, 0.05243302
        %v952 = vmul.f32 %v945, %v951
        %v953 = vadd.f32 %v952, 0.18741608
        %v954 = vmul.f32 %v945, %v953
        %v955 = vadd.f32 %v954, 1.1283791
        %v956 = vmul.f32 %v834, %v955
        %v957 = vmul.f32 %v945, 3.8918573e-05
        %v958 = vadd.f32 %v957, 0.001143296
        %v959 = vmul.f32 %v945, %v958
        %v960 = vadd.f32 %v959, 0.014752088
        %v961 = vmul.f32 %v945, %v960
        %v962 = vadd.f32 %v961, 0.112945676
        %v963 = vmul.f32 %v945, %v962
        %v964 = vadd.f32 %v963, 0.4994258
        %v965 = vmul.f32 %v945, %v964
        %v966 = vadd.f32 %v965, 1.0
        %v967 = vrcp.pop %v966
        %v968 = vmul.f32 %v966, %v967
        %v969 = vsub.f32 1.0, %v968
        %v970 = vmul.f32 %v967, %v969
        %v971 = vadd.f32 %v967, %v970
        %vm972 = vweird.f32 %v966
        %vm973 = vweird.f32 %v967
        %vm974 = vmor %vm972, %vm973
        %v975 = vsel %vm974, %v967, %v971
        %v976 = vand.u32 2147483647, %v966
        %vm977 = vcmp.eq.f32.partialorder %v976, 8.507059e+37
        %v978 = vand.u32 %v966, 2147483648
        %v979 = vor.u32 1.1754944e-38, %v978
        %v980 = vsel %vm977, %v979, %v975
        %v981 = vmul.f32 %v956, %v980
        %v982 = vmin.f32 %v981, 1.0
        %v983 = vmax.f32 %v982, -1.0
        %v984 = vmul.f32 %v835, %v835
        %v985 = vmin.f32 16.0, %v984
        %v986 = vmul.f32 %v985, 2.1237322e-06
        %v987 = vadd.f32 %v986, 0.00028619796
        %v988 = vmul.f32 %v985, %v987
        %v989 = vadd.f32 %v988, 0.0036580483
        %v990 = vmul.f32 %v985, %v989
        %v991 = vadd.f32 %v990, 0.05243302
        %v992 = vmul.f32 %v985, %v991
        %v993 = vadd.f32 %v992, 0.18741608
        %v994 = vmul.f32 %v985, %v993
        %v995 = vadd.f32 %v994, 1.1283791
        %v996 = vmul.f32 %v835, %v995
        %v997 = vmul.f32 %v985, 3.8918573e-05
        %v998 = vadd.f32 %v997, 0.001143296
        %v999 = vmul.f32 %v985, %v998
        %v1000 = vadd.f32 %v999, 0.014752088
        %v1001 = vmul.f32 %v985, %v1000
        %v1002 = vadd.f32 %v1001, 0.112945676
        %v1003 = vmul.f32 %v985, %v1002
        %v1004 = vadd.f32 %v1003, 0.4994258
        %v1005 = vmul.f32 %v985, %v1004
        %v1006 = vadd.f32 %v1005, 1.0
        %v1007 = vrcp.pop %v1006
        %v1008 = vmul.f32 %v1006, %v1007
        %v1009 = vsub.f32 1.0, %v1008
        %v1010 = vmul.f32 %v1007, %v1009
        %v1011 = vadd.f32 %v1007, %v1010
        %vm1012 = vweird.f32 %v1006
        %vm1013 = vweird.f32 %v1007
        %vm1014 = vmor %vm1012, %vm1013
        %v1015 = vsel %vm1014, %v1007, %v1011
        %v1016 = vand.u32 2147483647, %v1006
        %vm1017 = vcmp.eq.f32.partialorder %v1016, 8.507059e+37
        %v1018 = vand.u32 %v1006, 2147483648
        %v1019 = vor.u32 1.1754944e-38, %v1018
        %v1020 = vsel %vm1017, %v1019, %v1015
        %v1021 = vmul.f32 %v996, %v1020
        %v1022 = vmin.f32 %v1021, 1.0
        %v1023 = vmax.f32 %v1022, -1.0
        %v1024 = vmul.f32 %v836, %v836
        %v1025 = vmin.f32 16.0, %v1024
        %v1026 = vmul.f32 %v1025, 2.1237322e-06
        %v1027 = vadd.f32 %v1026, 0.00028619796
        %v1028 = vmul.f32 %v1025, %v1027
        %v1029 = vadd.f32 %v1028, 0.0036580483
        %v1030 = vmul.f32 %v1025, %v1029
        %v1031 = vadd.f32 %v1030, 0.05243302
        %v1032 = vmul.f32 %v1025, %v1031
        %v1033 = vadd.f32 %v1032, 0.18741608
        %v1034 = vmul.f32 %v1025, %v1033
        %v1035 = vadd.f32 %v1034, 1.1283791
        %v1036 = vmul.f32 %v836, %v1035
        %v1037 = vmul.f32 %v1025, 3.8918573e-05
        %v1038 = vadd.f32 %v1037, 0.001143296
        %v1039 = vmul.f32 %v1025, %v1038
        %v1040 = vadd.f32 %v1039, 0.014752088
        %v1041 = vmul.f32 %v1025, %v1040
        %v1042 = vadd.f32 %v1041, 0.112945676
        %v1043 = vmul.f32 %v1025, %v1042
        %v1044 = vadd.f32 %v1043, 0.4994258
        %v1045 = vmul.f32 %v1025, %v1044
        %v1046 = vadd.f32 %v1045, 1.0
        %v1047 = vrcp.pop %v1046
        %v1048 = vmul.f32 %v1046, %v1047
        %v1049 = vsub.f32 1.0, %v1048
        %v1050 = vmul.f32 %v1047, %v1049
        %v1051 = vadd.f32 %v1047, %v1050
        %vm1052 = vweird.f32 %v1046
        %vm1053 = vweird.f32 %v1047
        %vm1054 = vmor %vm1052, %vm1053
        %v1055 = vsel %vm1054, %v1047, %v1051
        %v1056 = vand.u32 2147483647, %v1046
        %vm1057 = vcmp.eq.f32.partialorder %v1056, 8.507059e+37
        %v1058 = vand.u32 %v1046, 2147483648
        %v1059 = vor.u32 1.1754944e-38, %v1058
        %v1060 = vsel %vm1057, %v1059, %v1055
        %v1061 = vmul.f32 %v1036, %v1060
        %v1062 = vmin.f32 %v1061, 1.0
        %v1063 = vmax.f32 %v1062, -1.0
        %v1064 = vmul.f32 %v837, %v837
        %v1065 = vmin.f32 16.0, %v1064
        %v1066 = vmul.f32 %v1065, 2.1237322e-06
        %v1067 = vadd.f32 %v1066, 0.00028619796
        %v1068 = vmul.f32 %v1065, %v1067
        %v1069 = vadd.f32 %v1068, 0.0036580483
        %v1070 = vmul.f32 %v1065, %v1069
        %v1071 = vadd.f32 %v1070, 0.05243302
        %v1072 = vmul.f32 %v1065, %v1071
        %v1073 = vadd.f32 %v1072, 0.18741608
        %v1074 = vmul.f32 %v1065, %v1073
        %v1075 = vadd.f32 %v1074, 1.1283791
        %v1076 = vmul.f32 %v837, %v1075
        %v1077 = vmul.f32 %v1065, 3.8918573e-05
        %v1078 = vadd.f32 %v1077, 0.001143296
        %v1079 = vmul.f32 %v1065, %v1078
        %v1080 = vadd.f32 %v1079, 0.014752088
        %v1081 = vmul.f32 %v1065, %v1080
        %v1082 = vadd.f32 %v1081, 0.112945676
        %v1083 = vmul.f32 %v1065, %v1082
        %v1084 = vadd.f32 %v1083, 0.4994258
        %v1085 = vmul.f32 %v1065, %v1084
        %v1086 = vadd.f32 %v1085, 1.0
        %v1087 = vrcp.pop %v1086
        %v1088 = vmul.f32 %v1086, %v1087
        %v1089 = vsub.f32 1.0, %v1088
        %v1090 = vmul.f32 %v1087, %v1089
        %v1091 = vadd.f32 %v1087, %v1090
        %vm1092 = vweird.f32 %v1086
        %vm1093 = vweird.f32 %v1087
        %vm1094 = vmor %vm1092, %vm1093
        %v1095 = vsel %vm1094, %v1087, %v1091
        %v1096 = vand.u32 2147483647, %v1086
        %vm1097 = vcmp.eq.f32.partialorder %v1096, 8.507059e+37
        %v1098 = vand.u32 %v1086, 2147483648
        %v1099 = vor.u32 1.1754944e-38, %v1098
        %v1100 = vsel %vm1097, %v1099, %v1095
        %v1101 = vmul.f32 %v1076, %v1100
        %v1102 = vmin.f32 %v1101, 1.0
        %v1103 = vmax.f32 %v1102, -1.0
        %v1104 = vmul.f32 %v838, %v838
        %v1105 = vmin.f32 16.0, %v1104
        %v1106 = vmul.f32 %v1105, 2.1237322e-06
        %v1107 = vadd.f32 %v1106, 0.00028619796
        %v1108 = vmul.f32 %v1105, %v1107
        %v1109 = vadd.f32 %v1108, 0.0036580483
        %v1110 = vmul.f32 %v1105, %v1109
        %v1111 = vadd.f32 %v1110, 0.05243302
        %v1112 = vmul.f32 %v1105, %v1111
        %v1113 = vadd.f32 %v1112, 0.18741608
        %v1114 = vmul.f32 %v1105, %v1113
        %v1115 = vadd.f32 %v1114, 1.1283791
        %v1116 = vmul.f32 %v838, %v1115
        %v1117 = vmul.f32 %v1105, 3.8918573e-05
        %v1118 = vadd.f32 %v1117, 0.001143296
        %v1119 = vmul.f32 %v1105, %v1118
        %v1120 = vadd.f32 %v1119, 0.014752088
        %v1121 = vmul.f32 %v1105, %v1120
        %v1122 = vadd.f32 %v1121, 0.112945676
        %v1123 = vmul.f32 %v1105, %v1122
        %v1124 = vadd.f32 %v1123, 0.4994258
        %v1125 = vmul.f32 %v1105, %v1124
        %v1126 = vadd.f32 %v1125, 1.0
        %v1127 = vrcp.pop %v1126
        %v1128 = vmul.f32 %v1126, %v1127
        %v1129 = vsub.f32 1.0, %v1128
        %v1130 = vmul.f32 %v1127, %v1129
        %v1131 = vadd.f32 %v1127, %v1130
        %vm1132 = vweird.f32 %v1126
        %vm1133 = vweird.f32 %v1127
        %vm1134 = vmor %vm1132, %vm1133
        %v1135 = vsel %vm1134, %v1127, %v1131
        %v1136 = vand.u32 2147483647, %v1126
        %vm1137 = vcmp.eq.f32.partialorder %v1136, 8.507059e+37
        %v1138 = vand.u32 %v1126, 2147483648
        %v1139 = vor.u32 1.1754944e-38, %v1138
        %v1140 = vsel %vm1137, %v1139, %v1135
        %v1141 = vmul.f32 %v1116, %v1140
        %v1142 = vmin.f32 %v1141, 1.0
        %v1143 = vmax.f32 %v1142, -1.0
        %v1144 = vmul.f32 %v839, %v839
        %v1145 = vmin.f32 16.0, %v1144
        %v1146 = vmul.f32 %v1145, 2.1237322e-06
        %v1147 = vadd.f32 %v1146, 0.00028619796
        %v1148 = vmul.f32 %v1145, %v1147
        %v1149 = vadd.f32 %v1148, 0.0036580483
        %v1150 = vmul.f32 %v1145, %v1149
        %v1151 = vadd.f32 %v1150, 0.05243302
        %v1152 = vmul.f32 %v1145, %v1151
        %v1153 = vadd.f32 %v1152, 0.18741608
        %v1154 = vmul.f32 %v1145, %v1153
        %v1155 = vadd.f32 %v1154, 1.1283791
        %v1156 = vmul.f32 %v839, %v1155
        %v1157 = vmul.f32 %v1145, 3.8918573e-05
        %v1158 = vadd.f32 %v1157, 0.001143296
        %v1159 = vmul.f32 %v1145, %v1158
        %v1160 = vadd.f32 %v1159, 0.014752088
        %v1161 = vmul.f32 %v1145, %v1160
        %v1162 = vadd.f32 %v1161, 0.112945676
        %v1163 = vmul.f32 %v1145, %v1162
        %v1164 = vadd.f32 %v1163, 0.4994258
        %v1165 = vmul.f32 %v1145, %v1164
        %v1166 = vadd.f32 %v1165, 1.0
        %v1167 = vrcp.pop %v1166
        %v1168 = vmul.f32 %v1166, %v1167
        %v1169 = vsub.f32 1.0, %v1168
        %v1170 = vmul.f32 %v1167, %v1169
        %v1171 = vadd.f32 %v1167, %v1170
        %vm1172 = vweird.f32 %v1166
        %vm1173 = vweird.f32 %v1167
        %vm1174 = vmor %vm1172, %vm1173
        %v1175 = vsel %vm1174, %v1167, %v1171
        %v1176 = vand.u32 2147483647, %v1166
        %vm1177 = vcmp.eq.f32.partialorder %v1176, 8.507059e+37
        %v1178 = vand.u32 %v1166, 2147483648
        %v1179 = vor.u32 1.1754944e-38, %v1178
        %v1180 = vsel %vm1177, %v1179, %v1175
        %v1181 = vmul.f32 %v1156, %v1180
        %v1182 = vmin.f32 %v1181, 1.0
        %v1183 = vmax.f32 %v1182, -1.0
        %v1184 = vmul.f32 %v840, %v840
        %v1185 = vmin.f32 16.0, %v1184
        %v1186 = vmul.f32 %v1185, 2.1237322e-06
        %v1187 = vadd.f32 %v1186, 0.00028619796
        %v1188 = vmul.f32 %v1185, %v1187
        %v1189 = vadd.f32 %v1188, 0.0036580483
        %v1190 = vmul.f32 %v1185, %v1189
        %v1191 = vadd.f32 %v1190, 0.05243302
        %v1192 = vmul.f32 %v1185, %v1191
        %v1193 = vadd.f32 %v1192, 0.18741608
        %v1194 = vmul.f32 %v1185, %v1193
        %v1195 = vadd.f32 %v1194, 1.1283791
        %v1196 = vmul.f32 %v840, %v1195
        %v1197 = vmul.f32 %v1185, 3.8918573e-05
        %v1198 = vadd.f32 %v1197, 0.001143296
        %v1199 = vmul.f32 %v1185, %v1198
        %v1200 = vadd.f32 %v1199, 0.014752088
        %v1201 = vmul.f32 %v1185, %v1200
        %v1202 = vadd.f32 %v1201, 0.112945676
        %v1203 = vmul.f32 %v1185, %v1202
        %v1204 = vadd.f32 %v1203, 0.4994258
        %v1205 = vmul.f32 %v1185, %v1204
        %v1206 = vadd.f32 %v1205, 1.0
        %v1207 = vrcp.pop %v1206
        %v1208 = vmul.f32 %v1206, %v1207
        %v1209 = vsub.f32 1.0, %v1208
        %v1210 = vmul.f32 %v1207, %v1209
        %v1211 = vadd.f32 %v1207, %v1210
        %vm1212 = vweird.f32 %v1206
        %vm1213 = vweird.f32 %v1207
        %vm1214 = vmor %vm1212, %vm1213
        %v1215 = vsel %vm1214, %v1207, %v1211
        %v1216 = vand.u32 2147483647, %v1206
        %vm1217 = vcmp.eq.f32.partialorder %v1216, 8.507059e+37
        %v1218 = vand.u32 %v1206, 2147483648
        %v1219 = vor.u32 1.1754944e-38, %v1218
        %v1220 = vsel %vm1217, %v1219, %v1215
        %v1221 = vmul.f32 %v1196, %v1220
        %v1222 = vmin.f32 %v1221, 1.0
        %v1223 = vmax.f32 %v1222, -1.0
        %v1224 = vmul.f32 %v841, %v841
        %v1225 = vmin.f32 16.0, %v1224
        %v1226 = vmul.f32 %v1225, 2.1237322e-06
        %v1227 = vadd.f32 %v1226, 0.00028619796
        %v1228 = vmul.f32 %v1225, %v1227
        %v1229 = vadd.f32 %v1228, 0.0036580483
        %v1230 = vmul.f32 %v1225, %v1229
        %v1231 = vadd.f32 %v1230, 0.05243302
        %v1232 = vmul.f32 %v1225, %v1231
        %v1233 = vadd.f32 %v1232, 0.18741608
        %v1234 = vmul.f32 %v1225, %v1233
        %v1235 = vadd.f32 %v1234, 1.1283791
        %v1236 = vmul.f32 %v841, %v1235
        %v1237 = vmul.f32 %v1225, 3.8918573e-05
        %v1238 = vadd.f32 %v1237, 0.001143296
        %v1239 = vmul.f32 %v1225, %v1238
        %v1240 = vadd.f32 %v1239, 0.014752088
        %v1241 = vmul.f32 %v1225, %v1240
        %v1242 = vadd.f32 %v1241, 0.112945676
        %v1243 = vmul.f32 %v1225, %v1242
        %v1244 = vadd.f32 %v1243, 0.4994258
        %v1245 = vmul.f32 %v1225, %v1244
        %v1246 = vadd.f32 %v1245, 1.0
        %v1247 = vrcp.pop %v1246
        %v1248 = vmul.f32 %v1246, %v1247
        %v1249 = vsub.f32 1.0, %v1248
        %v1250 = vmul.f32 %v1247, %v1249
        %v1251 = vadd.f32 %v1247, %v1250
        %vm1252 = vweird.f32 %v1246
        %vm1253 = vweird.f32 %v1247
        %vm1254 = vmor %vm1252, %vm1253
        %v1255 = vsel %vm1254, %v1247, %v1251
        %v1256 = vand.u32 2147483647, %v1246
        %vm1257 = vcmp.eq.f32.partialorder %v1256, 8.507059e+37
        %v1258 = vand.u32 %v1246, 2147483648
        %v1259 = vor.u32 1.1754944e-38, %v1258
        %v1260 = vsel %vm1257, %v1259, %v1255
        %v1261 = vmul.f32 %v1236, %v1260
        %v1262 = vmin.f32 %v1261, 1.0
        %v1263 = vmax.f32 %v1262, -1.0
        %v1264 = vmul.f32 %v842, %v842
        %v1265 = vmin.f32 16.0, %v1264
        %v1266 = vmul.f32 %v1265, 2.1237322e-06
        %v1267 = vadd.f32 %v1266, 0.00028619796
        %v1268 = vmul.f32 %v1265, %v1267
        %v1269 = vadd.f32 %v1268, 0.0036580483
        %v1270 = vmul.f32 %v1265, %v1269
        %v1271 = vadd.f32 %v1270, 0.05243302
        %v1272 = vmul.f32 %v1265, %v1271
        %v1273 = vadd.f32 %v1272, 0.18741608
        %v1274 = vmul.f32 %v1265, %v1273
        %v1275 = vadd.f32 %v1274, 1.1283791
        %v1276 = vmul.f32 %v842, %v1275
        %v1277 = vmul.f32 %v1265, 3.8918573e-05
        %v1278 = vadd.f32 %v1277, 0.001143296
        %v1279 = vmul.f32 %v1265, %v1278
        %v1280 = vadd.f32 %v1279, 0.014752088
        %v1281 = vmul.f32 %v1265, %v1280
        %v1282 = vadd.f32 %v1281, 0.112945676
        %v1283 = vmul.f32 %v1265, %v1282
        %v1284 = vadd.f32 %v1283, 0.4994258
        %v1285 = vmul.f32 %v1265, %v1284
        %v1286 = vadd.f32 %v1285, 1.0
        %v1287 = vrcp.pop %v1286
        %v1288 = vmul.f32 %v1286, %v1287
        %v1289 = vsub.f32 1.0, %v1288
        %v1290 = vmul.f32 %v1287, %v1289
        %v1291 = vadd.f32 %v1287, %v1290
        %vm1292 = vweird.f32 %v1286
        %vm1293 = vweird.f32 %v1287
        %vm1294 = vmor %vm1292, %vm1293
        %v1295 = vsel %vm1294, %v1287, %v1291
        %v1296 = vand.u32 2147483647, %v1286
        %vm1297 = vcmp.eq.f32.partialorder %v1296, 8.507059e+37
        %v1298 = vand.u32 %v1286, 2147483648
        %v1299 = vor.u32 1.1754944e-38, %v1298
        %v1300 = vsel %vm1297, %v1299, %v1295
        %v1301 = vmul.f32 %v1276, %v1300
        %v1302 = vmin.f32 %v1301, 1.0
        %v1303 = vmax.f32 %v1302, -1.0
        %v1304 = vmul.f32 %v843, %v843
        %v1305 = vmin.f32 16.0, %v1304
        %v1306 = vmul.f32 %v1305, 2.1237322e-06
        %v1307 = vadd.f32 %v1306, 0.00028619796
        %v1308 = vmul.f32 %v1305, %v1307
        %v1309 = vadd.f32 %v1308, 0.0036580483
        %v1310 = vmul.f32 %v1305, %v1309
        %v1311 = vadd.f32 %v1310, 0.05243302
        %v1312 = vmul.f32 %v1305, %v1311
        %v1313 = vadd.f32 %v1312, 0.18741608
        %v1314 = vmul.f32 %v1305, %v1313
        %v1315 = vadd.f32 %v1314, 1.1283791
        %v1316 = vmul.f32 %v843, %v1315
        %v1317 = vmul.f32 %v1305, 3.8918573e-05
        %v1318 = vadd.f32 %v1317, 0.001143296
        %v1319 = vmul.f32 %v1305, %v1318
        %v1320 = vadd.f32 %v1319, 0.014752088
        %v1321 = vmul.f32 %v1305, %v1320
        %v1322 = vadd.f32 %v1321, 0.112945676
        %v1323 = vmul.f32 %v1305, %v1322
        %v1324 = vadd.f32 %v1323, 0.4994258
        %v1325 = vmul.f32 %v1305, %v1324
        %v1326 = vadd.f32 %v1325, 1.0
        %v1327 = vrcp.pop %v1326
        %v1328 = vmul.f32 %v1326, %v1327
        %v1329 = vsub.f32 1.0, %v1328
        %v1330 = vmul.f32 %v1327, %v1329
        %v1331 = vadd.f32 %v1327, %v1330
        %vm1332 = vweird.f32 %v1326
        %vm1333 = vweird.f32 %v1327
        %vm1334 = vmor %vm1332, %vm1333
        %v1335 = vsel %vm1334, %v1327, %v1331
        %v1336 = vand.u32 2147483647, %v1326
        %vm1337 = vcmp.eq.f32.partialorder %v1336, 8.507059e+37
        %v1338 = vand.u32 %v1326, 2147483648
        %v1339 = vor.u32 1.1754944e-38, %v1338
        %v1340 = vsel %vm1337, %v1339, %v1335
        %v1341 = vmul.f32 %v1316, %v1340
        %v1342 = vmin.f32 %v1341, 1.0
        %v1343 = vmax.f32 %v1342, -1.0
        %v1344 = vmul.f32 %v844, %v844
        %v1345 = vmin.f32 16.0, %v1344
        %v1346 = vmul.f32 %v1345, 2.1237322e-06
        %v1347 = vadd.f32 %v1346, 0.00028619796
        %v1348 = vmul.f32 %v1345, %v1347
        %v1349 = vadd.f32 %v1348, 0.0036580483
        %v1350 = vmul.f32 %v1345, %v1349
        %v1351 = vadd.f32 %v1350, 0.05243302
        %v1352 = vmul.f32 %v1345, %v1351
        %v1353 = vadd.f32 %v1352, 0.18741608
        %v1354 = vmul.f32 %v1345, %v1353
        %v1355 = vadd.f32 %v1354, 1.1283791
        %v1356 = vmul.f32 %v844, %v1355
        %v1357 = vmul.f32 %v1345, 3.8918573e-05
        %v1358 = vadd.f32 %v1357, 0.001143296
        %v1359 = vmul.f32 %v1345, %v1358
        %v1360 = vadd.f32 %v1359, 0.014752088
        %v1361 = vmul.f32 %v1345, %v1360
        %v1362 = vadd.f32 %v1361, 0.112945676
        %v1363 = vmul.f32 %v1345, %v1362
        %v1364 = vadd.f32 %v1363, 0.4994258
        %v1365 = vmul.f32 %v1345, %v1364
        %v1366 = vadd.f32 %v1365, 1.0
        %v1367 = vrcp.pop %v1366
        %v1368 = vmul.f32 %v1366, %v1367
        %v1369 = vsub.f32 1.0, %v1368
        %v1370 = vmul.f32 %v1367, %v1369
        %v1371 = vadd.f32 %v1367, %v1370
        %vm1372 = vweird.f32 %v1366
        %vm1373 = vweird.f32 %v1367
        %vm1374 = vmor %vm1372, %vm1373
        %v1375 = vsel %vm1374, %v1367, %v1371
        %v1376 = vand.u32 2147483647, %v1366
        %vm1377 = vcmp.eq.f32.partialorder %v1376, 8.507059e+37
        %v1378 = vand.u32 %v1366, 2147483648
        %v1379 = vor.u32 1.1754944e-38, %v1378
        %v1380 = vsel %vm1377, %v1379, %v1375
        %v1381 = vmul.f32 %v1356, %v1380
        %v1382 = vmin.f32 %v1381, 1.0
        %v1383 = vmax.f32 %v1382, -1.0
        %v1384 = vmul.f32 %v845, %v845
        %v1385 = vmin.f32 16.0, %v1384
        %v1386 = vmul.f32 %v1385, 2.1237322e-06
        %v1387 = vadd.f32 %v1386, 0.00028619796
        %v1388 = vmul.f32 %v1385, %v1387
        %v1389 = vadd.f32 %v1388, 0.0036580483
        %v1390 = vmul.f32 %v1385, %v1389
        %v1391 = vadd.f32 %v1390, 0.05243302
        %v1392 = vmul.f32 %v1385, %v1391
        %v1393 = vadd.f32 %v1392, 0.18741608
        %v1394 = vmul.f32 %v1385, %v1393
        %v1395 = vadd.f32 %v1394, 1.1283791
        %v1396 = vmul.f32 %v845, %v1395
        %v1397 = vmul.f32 %v1385, 3.8918573e-05
        %v1398 = vadd.f32 %v1397, 0.001143296
        %v1399 = vmul.f32 %v1385, %v1398
        %v1400 = vadd.f32 %v1399, 0.014752088
        %v1401 = vmul.f32 %v1385, %v1400
        %v1402 = vadd.f32 %v1401, 0.112945676
        %v1403 = vmul.f32 %v1385, %v1402
        %v1404 = vadd.f32 %v1403, 0.4994258
        %v1405 = vmul.f32 %v1385, %v1404
        %v1406 = vadd.f32 %v1405, 1.0
        %v1407 = vrcp.pop %v1406
        %v1408 = vmul.f32 %v1406, %v1407
        %v1409 = vsub.f32 1.0, %v1408
        %v1410 = vmul.f32 %v1407, %v1409
        %v1411 = vadd.f32 %v1407, %v1410
        %vm1412 = vweird.f32 %v1406
        %vm1413 = vweird.f32 %v1407
        %vm1414 = vmor %vm1412, %vm1413
        %v1415 = vsel %vm1414, %v1407, %v1411
        %v1416 = vand.u32 2147483647, %v1406
        %vm1417 = vcmp.eq.f32.partialorder %v1416, 8.507059e+37
        %v1418 = vand.u32 %v1406, 2147483648
        %v1419 = vor.u32 1.1754944e-38, %v1418
        %v1420 = vsel %vm1417, %v1419, %v1415
        %v1421 = vmul.f32 %v1396, %v1420
        %v1422 = vmin.f32 %v1421, 1.0
        %v1423 = vmax.f32 %v1422, -1.0
        %v1424 = vmul.f32 %v846, %v846
        %v1425 = vmin.f32 16.0, %v1424
        %v1426 = vmul.f32 %v1425, 2.1237322e-06
        %v1427 = vadd.f32 %v1426, 0.00028619796
        %v1428 = vmul.f32 %v1425, %v1427
        %v1429 = vadd.f32 %v1428, 0.0036580483
        %v1430 = vmul.f32 %v1425, %v1429
        %v1431 = vadd.f32 %v1430, 0.05243302
        %v1432 = vmul.f32 %v1425, %v1431
        %v1433 = vadd.f32 %v1432, 0.18741608
        %v1434 = vmul.f32 %v1425, %v1433
        %v1435 = vadd.f32 %v1434, 1.1283791
        %v1436 = vmul.f32 %v846, %v1435
        %v1437 = vmul.f32 %v1425, 3.8918573e-05
        %v1438 = vadd.f32 %v1437, 0.001143296
        %v1439 = vmul.f32 %v1425, %v1438
        %v1440 = vadd.f32 %v1439, 0.014752088
        %v1441 = vmul.f32 %v1425, %v1440
        %v1442 = vadd.f32 %v1441, 0.112945676
        %v1443 = vmul.f32 %v1425, %v1442
        %v1444 = vadd.f32 %v1443, 0.4994258
        %v1445 = vmul.f32 %v1425, %v1444
        %v1446 = vadd.f32 %v1445, 1.0
        %v1447 = vrcp.pop %v1446
        %v1448 = vmul.f32 %v1446, %v1447
        %v1449 = vsub.f32 1.0, %v1448
        %v1450 = vmul.f32 %v1447, %v1449
        %v1451 = vadd.f32 %v1447, %v1450
        %vm1452 = vweird.f32 %v1446
        %vm1453 = vweird.f32 %v1447
        %vm1454 = vmor %vm1452, %vm1453
        %v1455 = vsel %vm1454, %v1447, %v1451
        %v1456 = vand.u32 2147483647, %v1446
        %vm1457 = vcmp.eq.f32.partialorder %v1456, 8.507059e+37
        %v1458 = vand.u32 %v1446, 2147483648
        %v1459 = vor.u32 1.1754944e-38, %v1458
        %v1460 = vsel %vm1457, %v1459, %v1455
        %v1461 = vmul.f32 %v1436, %v1460
        %v1462 = vmin.f32 %v1461, 1.0
        %v1463 = vmax.f32 %v1462, -1.0
        %v1464 = vmul.f32 %v847, %v847
        %v1465 = vmin.f32 16.0, %v1464
        %v1466 = vmul.f32 %v1465, 2.1237322e-06
        %v1467 = vadd.f32 %v1466, 0.00028619796
        %v1468 = vmul.f32 %v1465, %v1467
        %v1469 = vadd.f32 %v1468, 0.0036580483
        %v1470 = vmul.f32 %v1465, %v1469
        %v1471 = vadd.f32 %v1470, 0.05243302
        %v1472 = vmul.f32 %v1465, %v1471
        %v1473 = vadd.f32 %v1472, 0.18741608
        %v1474 = vmul.f32 %v1465, %v1473
        %v1475 = vadd.f32 %v1474, 1.1283791
        %v1476 = vmul.f32 %v847, %v1475
        %v1477 = vmul.f32 %v1465, 3.8918573e-05
        %v1478 = vadd.f32 %v1477, 0.001143296
        %v1479 = vmul.f32 %v1465, %v1478
        %v1480 = vadd.f32 %v1479, 0.014752088
        %v1481 = vmul.f32 %v1465, %v1480
        %v1482 = vadd.f32 %v1481, 0.112945676
        %v1483 = vmul.f32 %v1465, %v1482
        %v1484 = vadd.f32 %v1483, 0.4994258
        %v1485 = vmul.f32 %v1465, %v1484
        %v1486 = vadd.f32 %v1485, 1.0
        %v1487 = vrcp.pop %v1486
        %v1488 = vmul.f32 %v1486, %v1487
        %v1489 = vsub.f32 1.0, %v1488
        %v1490 = vmul.f32 %v1487, %v1489
        %v1491 = vadd.f32 %v1487, %v1490
        %vm1492 = vweird.f32 %v1486
        %vm1493 = vweird.f32 %v1487
        %vm1494 = vmor %vm1492, %vm1493
        %v1495 = vsel %vm1494, %v1487, %v1491
        %v1496 = vand.u32 2147483647, %v1486
        %vm1497 = vcmp.eq.f32.partialorder %v1496, 8.507059e+37
        %v1498 = vand.u32 %v1486, 2147483648
        %v1499 = vor.u32 1.1754944e-38, %v1498
        %v1500 = vsel %vm1497, %v1499, %v1495
        %v1501 = vmul.f32 %v1476, %v1500
        %v1502 = vmin.f32 %v1501, 1.0
        %v1503 = vmax.f32 %v1502, -1.0
        %v1504 = vmul.f32 %v848, %v848
        %v1505 = vmin.f32 16.0, %v1504
        %v1506 = vmul.f32 %v1505, 2.1237322e-06
        %v1507 = vadd.f32 %v1506, 0.00028619796
        %v1508 = vmul.f32 %v1505, %v1507
        %v1509 = vadd.f32 %v1508, 0.0036580483
        %v1510 = vmul.f32 %v1505, %v1509
        %v1511 = vadd.f32 %v1510, 0.05243302
        %v1512 = vmul.f32 %v1505, %v1511
        %v1513 = vadd.f32 %v1512, 0.18741608
        %v1514 = vmul.f32 %v1505, %v1513
        %v1515 = vadd.f32 %v1514, 1.1283791
        %v1516 = vmul.f32 %v848, %v1515
        %v1517 = vmul.f32 %v1505, 3.8918573e-05
        %v1518 = vadd.f32 %v1517, 0.001143296
        %v1519 = vmul.f32 %v1505, %v1518
        %v1520 = vadd.f32 %v1519, 0.014752088
        %v1521 = vmul.f32 %v1505, %v1520
        %v1522 = vadd.f32 %v1521, 0.112945676
        %v1523 = vmul.f32 %v1505, %v1522
        %v1524 = vadd.f32 %v1523, 0.4994258
        %v1525 = vmul.f32 %v1505, %v1524
        %v1526 = vadd.f32 %v1525, 1.0
        %v1527 = vrcp.pop %v1526
        %v1528 = vmul.f32 %v1526, %v1527
        %v1529 = vsub.f32 1.0, %v1528
        %v1530 = vmul.f32 %v1527, %v1529
        %v1531 = vadd.f32 %v1527, %v1530
        %vm1532 = vweird.f32 %v1526
        %vm1533 = vweird.f32 %v1527
        %vm1534 = vmor %vm1532, %vm1533
        %v1535 = vsel %vm1534, %v1527, %v1531
        %v1536 = vand.u32 2147483647, %v1526
        %vm1537 = vcmp.eq.f32.partialorder %v1536, 8.507059e+37
        %v1538 = vand.u32 %v1526, 2147483648
        %v1539 = vor.u32 1.1754944e-38, %v1538
        %v1540 = vsel %vm1537, %v1539, %v1535
        %v1541 = vmul.f32 %v1516, %v1540
        %v1542 = vmin.f32 %v1541, 1.0
        %v1543 = vmax.f32 %v1542, -1.0
        %v1544 = vmul.f32 %v849, %v849
        %v1545 = vmin.f32 16.0, %v1544
        %v1546 = vmul.f32 %v1545, 2.1237322e-06
        %v1547 = vadd.f32 %v1546, 0.00028619796
        %v1548 = vmul.f32 %v1545, %v1547
        %v1549 = vadd.f32 %v1548, 0.0036580483
        %v1550 = vmul.f32 %v1545, %v1549
        %v1551 = vadd.f32 %v1550, 0.05243302
        %v1552 = vmul.f32 %v1545, %v1551
        %v1553 = vadd.f32 %v1552, 0.18741608
        %v1554 = vmul.f32 %v1545, %v1553
        %v1555 = vadd.f32 %v1554, 1.1283791
        %v1556 = vmul.f32 %v849, %v1555
        %v1557 = vmul.f32 %v1545, 3.8918573e-05
        %v1558 = vadd.f32 %v1557, 0.001143296
        %v1559 = vmul.f32 %v1545, %v1558
        %v1560 = vadd.f32 %v1559, 0.014752088
        %v1561 = vmul.f32 %v1545, %v1560
        %v1562 = vadd.f32 %v1561, 0.112945676
        %v1563 = vmul.f32 %v1545, %v1562
        %v1564 = vadd.f32 %v1563, 0.4994258
        %v1565 = vmul.f32 %v1545, %v1564
        %v1566 = vadd.f32 %v1565, 1.0
        %v1567 = vrcp.pop %v1566
        %v1568 = vmul.f32 %v1566, %v1567
        %v1569 = vsub.f32 1.0, %v1568
        %v1570 = vmul.f32 %v1567, %v1569
        %v1571 = vadd.f32 %v1567, %v1570
        %vm1572 = vweird.f32 %v1566
        %vm1573 = vweird.f32 %v1567
        %vm1574 = vmor %vm1572, %vm1573
        %v1575 = vsel %vm1574, %v1567, %v1571
        %v1576 = vand.u32 2147483647, %v1566
        %vm1577 = vcmp.eq.f32.partialorder %v1576, 8.507059e+37
        %v1578 = vand.u32 %v1566, 2147483648
        %v1579 = vor.u32 1.1754944e-38, %v1578
        %v1580 = vsel %vm1577, %v1579, %v1575
        %v1581 = vmul.f32 %v1556, %v1580
        %v1582 = vmin.f32 %v1581, 1.0
        %v1583 = vmax.f32 %v1582, -1.0
        %v1584 = vmul.f32 %v850, %v850
        %v1585 = vmin.f32 16.0, %v1584
        %v1586 = vmul.f32 %v1585, 2.1237322e-06
        %v1587 = vadd.f32 %v1586, 0.00028619796
        %v1588 = vmul.f32 %v1585, %v1587
        %v1589 = vadd.f32 %v1588, 0.0036580483
        %v1590 = vmul.f32 %v1585, %v1589
        %v1591 = vadd.f32 %v1590, 0.05243302
        %v1592 = vmul.f32 %v1585, %v1591
        %v1593 = vadd.f32 %v1592, 0.18741608
        %v1594 = vmul.f32 %v1585, %v1593
        %v1595 = vadd.f32 %v1594, 1.1283791
        %v1596 = vmul.f32 %v850, %v1595
        %v1597 = vmul.f32 %v1585, 3.8918573e-05
        %v1598 = vadd.f32 %v1597, 0.001143296
        %v1599 = vmul.f32 %v1585, %v1598
        %v1600 = vadd.f32 %v1599, 0.014752088
        %v1601 = vmul.f32 %v1585, %v1600
        %v1602 = vadd.f32 %v1601, 0.112945676
        %v1603 = vmul.f32 %v1585, %v1602
        %v1604 = vadd.f32 %v1603, 0.4994258
        %v1605 = vmul.f32 %v1585, %v1604
        %v1606 = vadd.f32 %v1605, 1.0
        %v1607 = vrcp.pop %v1606
        %v1608 = vmul.f32 %v1606, %v1607
        %v1609 = vsub.f32 1.0, %v1608
        %v1610 = vmul.f32 %v1607, %v1609
        %v1611 = vadd.f32 %v1607, %v1610
        %vm1612 = vweird.f32 %v1606
        %vm1613 = vweird.f32 %v1607
        %vm1614 = vmor %vm1612, %vm1613
        %v1615 = vsel %vm1614, %v1607, %v1611
        %v1616 = vand.u32 2147483647, %v1606
        %vm1617 = vcmp.eq.f32.partialorder %v1616, 8.507059e+37
        %v1618 = vand.u32 %v1606, 2147483648
        %v1619 = vor.u32 1.1754944e-38, %v1618
        %v1620 = vsel %vm1617, %v1619, %v1615
        %v1621 = vmul.f32 %v1596, %v1620
        %v1622 = vmin.f32 %v1621, 1.0
        %v1623 = vmax.f32 %v1622, -1.0
        %v1624 = vmul.f32 %v851, %v851
        %v1625 = vmin.f32 16.0, %v1624
        %v1626 = vmul.f32 %v1625, 2.1237322e-06
        %v1627 = vadd.f32 %v1626, 0.00028619796
        %v1628 = vmul.f32 %v1625, %v1627
        %v1629 = vadd.f32 %v1628, 0.0036580483
        %v1630 = vmul.f32 %v1625, %v1629
        %v1631 = vadd.f32 %v1630, 0.05243302
        %v1632 = vmul.f32 %v1625, %v1631
        %v1633 = vadd.f32 %v1632, 0.18741608
        %v1634 = vmul.f32 %v1625, %v1633
        %v1635 = vadd.f32 %v1634, 1.1283791
        %v1636 = vmul.f32 %v851, %v1635
        %v1637 = vmul.f32 %v1625, 3.8918573e-05
        %v1638 = vadd.f32 %v1637, 0.001143296
        %v1639 = vmul.f32 %v1625, %v1638
        %v1640 = vadd.f32 %v1639, 0.014752088
        %v1641 = vmul.f32 %v1625, %v1640
        %v1642 = vadd.f32 %v1641, 0.112945676
        %v1643 = vmul.f32 %v1625, %v1642
        %v1644 = vadd.f32 %v1643, 0.4994258
        %v1645 = vmul.f32 %v1625, %v1644
        %v1646 = vadd.f32 %v1645, 1.0
        %v1647 = vrcp.pop %v1646
        %v1648 = vmul.f32 %v1646, %v1647
        %v1649 = vsub.f32 1.0, %v1648
        %v1650 = vmul.f32 %v1647, %v1649
        %v1651 = vadd.f32 %v1647, %v1650
        %vm1652 = vweird.f32 %v1646
        %vm1653 = vweird.f32 %v1647
        %vm1654 = vmor %vm1652, %vm1653
        %v1655 = vsel %vm1654, %v1647, %v1651
        %v1656 = vand.u32 2147483647, %v1646
        %vm1657 = vcmp.eq.f32.partialorder %v1656, 8.507059e+37
        %v1658 = vand.u32 %v1646, 2147483648
        %v1659 = vor.u32 1.1754944e-38, %v1658
        %v1660 = vsel %vm1657, %v1659, %v1655
        %v1661 = vmul.f32 %v1636, %v1660
        %v1662 = vmin.f32 %v1661, 1.0
        %v1663 = vmax.f32 %v1662, -1.0
        %v1664 = vmul.f32 %v852, %v852
        %v1665 = vmin.f32 16.0, %v1664
        %v1666 = vmul.f32 %v1665, 2.1237322e-06
        %v1667 = vadd.f32 %v1666, 0.00028619796
        %v1668 = vmul.f32 %v1665, %v1667
        %v1669 = vadd.f32 %v1668, 0.0036580483
        %v1670 = vmul.f32 %v1665, %v1669
        %v1671 = vadd.f32 %v1670, 0.05243302
        %v1672 = vmul.f32 %v1665, %v1671
        %v1673 = vadd.f32 %v1672, 0.18741608
        %v1674 = vmul.f32 %v1665, %v1673
        %v1675 = vadd.f32 %v1674, 1.1283791
        %v1676 = vmul.f32 %v852, %v1675
        %v1677 = vmul.f32 %v1665, 3.8918573e-05
        %v1678 = vadd.f32 %v1677, 0.001143296
        %v1679 = vmul.f32 %v1665, %v1678
        %v1680 = vadd.f32 %v1679, 0.014752088
        %v1681 = vmul.f32 %v1665, %v1680
        %v1682 = vadd.f32 %v1681, 0.112945676
        %v1683 = vmul.f32 %v1665, %v1682
        %v1684 = vadd.f32 %v1683, 0.4994258
        %v1685 = vmul.f32 %v1665, %v1684
        %v1686 = vadd.f32 %v1685, 1.0
        %v1687 = vrcp.pop %v1686
        %v1688 = vmul.f32 %v1686, %v1687
        %v1689 = vsub.f32 1.0, %v1688
        %v1690 = vmul.f32 %v1687, %v1689
        %v1691 = vadd.f32 %v1687, %v1690
        %vm1692 = vweird.f32 %v1686
        %vm1693 = vweird.f32 %v1687
        %vm1694 = vmor %vm1692, %vm1693
        %v1695 = vsel %vm1694, %v1687, %v1691
        %v1696 = vand.u32 2147483647, %v1686
        %vm1697 = vcmp.eq.f32.partialorder %v1696, 8.507059e+37
        %v1698 = vand.u32 %v1686, 2147483648
        %v1699 = vor.u32 1.1754944e-38, %v1698
        %v1700 = vsel %vm1697, %v1699, %v1695
        %v1701 = vmul.f32 %v1676, %v1700
        %v1702 = vmin.f32 %v1701, 1.0
        %v1703 = vmax.f32 %v1702, -1.0
        %v1704 = vmul.f32 %v853, %v853
        %v1705 = vmin.f32 16.0, %v1704
        %v1706 = vmul.f32 %v1705, 2.1237322e-06
        %v1707 = vadd.f32 %v1706, 0.00028619796
        %v1708 = vmul.f32 %v1705, %v1707
        %v1709 = vadd.f32 %v1708, 0.0036580483
        %v1710 = vmul.f32 %v1705, %v1709
        %v1711 = vadd.f32 %v1710, 0.05243302
        %v1712 = vmul.f32 %v1705, %v1711
        %v1713 = vadd.f32 %v1712, 0.18741608
        %v1714 = vmul.f32 %v1705, %v1713
        %v1715 = vadd.f32 %v1714, 1.1283791
        %v1716 = vmul.f32 %v853, %v1715
        %v1717 = vmul.f32 %v1705, 3.8918573e-05
        %v1718 = vadd.f32 %v1717, 0.001143296
        %v1719 = vmul.f32 %v1705, %v1718
        %v1720 = vadd.f32 %v1719, 0.014752088
        %v1721 = vmul.f32 %v1705, %v1720
        %v1722 = vadd.f32 %v1721, 0.112945676
        %v1723 = vmul.f32 %v1705, %v1722
        %v1724 = vadd.f32 %v1723, 0.4994258
        %v1725 = vmul.f32 %v1705, %v1724
        %v1726 = vadd.f32 %v1725, 1.0
        %v1727 = vrcp.pop %v1726
        %v1728 = vmul.f32 %v1726, %v1727
        %v1729 = vsub.f32 1.0, %v1728
        %v1730 = vmul.f32 %v1727, %v1729
        %v1731 = vadd.f32 %v1727, %v1730
        %vm1732 = vweird.f32 %v1726
        %vm1733 = vweird.f32 %v1727
        %vm1734 = vmor %vm1732, %vm1733
        %v1735 = vsel %vm1734, %v1727, %v1731
        %v1736 = vand.u32 2147483647, %v1726
        %vm1737 = vcmp.eq.f32.partialorder %v1736, 8.507059e+37
        %v1738 = vand.u32 %v1726, 2147483648
        %v1739 = vor.u32 1.1754944e-38, %v1738
        %v1740 = vsel %vm1737, %v1739, %v1735
        %v1741 = vmul.f32 %v1716, %v1740
        %v1742 = vmin.f32 %v1741, 1.0
        %v1743 = vmax.f32 %v1742, -1.0
        %v1744 = vmul.f32 %v854, %v854
        %v1745 = vmin.f32 16.0, %v1744
        %v1746 = vmul.f32 %v1745, 2.1237322e-06
        %v1747 = vadd.f32 %v1746, 0.00028619796
        %v1748 = vmul.f32 %v1745, %v1747
        %v1749 = vadd.f32 %v1748, 0.0036580483
        %v1750 = vmul.f32 %v1745, %v1749
        %v1751 = vadd.f32 %v1750, 0.05243302
        %v1752 = vmul.f32 %v1745, %v1751
        %v1753 = vadd.f32 %v1752, 0.18741608
        %v1754 = vmul.f32 %v1745, %v1753
        %v1755 = vadd.f32 %v1754, 1.1283791
        %v1756 = vmul.f32 %v854, %v1755
        %v1757 = vmul.f32 %v1745, 3.8918573e-05
        %v1758 = vadd.f32 %v1757, 0.001143296
        %v1759 = vmul.f32 %v1745, %v1758
        %v1760 = vadd.f32 %v1759, 0.014752088
        %v1761 = vmul.f32 %v1745, %v1760
        %v1762 = vadd.f32 %v1761, 0.112945676
        %v1763 = vmul.f32 %v1745, %v1762
        %v1764 = vadd.f32 %v1763, 0.4994258
        %v1765 = vmul.f32 %v1745, %v1764
        %v1766 = vadd.f32 %v1765, 1.0
        %v1767 = vrcp.pop %v1766
        %v1768 = vmul.f32 %v1766, %v1767
        %v1769 = vsub.f32 1.0, %v1768
        %v1770 = vmul.f32 %v1767, %v1769
        %v1771 = vadd.f32 %v1767, %v1770
        %vm1772 = vweird.f32 %v1766
        %vm1773 = vweird.f32 %v1767
        %vm1774 = vmor %vm1772, %vm1773
        %v1775 = vsel %vm1774, %v1767, %v1771
        %v1776 = vand.u32 2147483647, %v1766
        %vm1777 = vcmp.eq.f32.partialorder %v1776, 8.507059e+37
        %v1778 = vand.u32 %v1766, 2147483648
        %v1779 = vor.u32 1.1754944e-38, %v1778
        %v1780 = vsel %vm1777, %v1779, %v1775
        %v1781 = vmul.f32 %v1756, %v1780
        %v1782 = vmin.f32 %v1781, 1.0
        %v1783 = vmax.f32 %v1782, -1.0
        %v1784 = vmul.f32 %v855, %v855
        %v1785 = vmin.f32 16.0, %v1784
        %v1786 = vmul.f32 %v1785, 2.1237322e-06
        %v1787 = vadd.f32 %v1786, 0.00028619796
        %v1788 = vmul.f32 %v1785, %v1787
        %v1789 = vadd.f32 %v1788, 0.0036580483
        %v1790 = vmul.f32 %v1785, %v1789
        %v1791 = vadd.f32 %v1790, 0.05243302
        %v1792 = vmul.f32 %v1785, %v1791
        %v1793 = vadd.f32 %v1792, 0.18741608
        %v1794 = vmul.f32 %v1785, %v1793
        %v1795 = vadd.f32 %v1794, 1.1283791
        %v1796 = vmul.f32 %v855, %v1795
        %v1797 = vmul.f32 %v1785, 3.8918573e-05
        %v1798 = vadd.f32 %v1797, 0.001143296
        %v1799 = vmul.f32 %v1785, %v1798
        %v1800 = vadd.f32 %v1799, 0.014752088
        %v1801 = vmul.f32 %v1785, %v1800
        %v1802 = vadd.f32 %v1801, 0.112945676
        %v1803 = vmul.f32 %v1785, %v1802
        %v1804 = vadd.f32 %v1803, 0.4994258
        %v1805 = vmul.f32 %v1785, %v1804
        %v1806 = vadd.f32 %v1805, 1.0
        %v1807 = vrcp.pop %v1806
        %v1808 = vmul.f32 %v1806, %v1807
        %v1809 = vsub.f32 1.0, %v1808
        %v1810 = vmul.f32 %v1807, %v1809
        %v1811 = vadd.f32 %v1807, %v1810
        %vm1812 = vweird.f32 %v1806
        %vm1813 = vweird.f32 %v1807
        %vm1814 = vmor %vm1812, %vm1813
        %v1815 = vsel %vm1814, %v1807, %v1811
        %v1816 = vand.u32 2147483647, %v1806
        %vm1817 = vcmp.eq.f32.partialorder %v1816, 8.507059e+37
        %v1818 = vand.u32 %v1806, 2147483648
        %v1819 = vor.u32 1.1754944e-38, %v1818
        %v1820 = vsel %vm1817, %v1819, %v1815
        %v1821 = vmul.f32 %v1796, %v1820
        %v1822 = vmin.f32 %v1821, 1.0
        %v1823 = vmax.f32 %v1822, -1.0
        %v1824 = vmul.f32 %v856, %v856
        %v1825 = vmin.f32 16.0, %v1824
        %v1826 = vmul.f32 %v1825, 2.1237322e-06
        %v1827 = vadd.f32 %v1826, 0.00028619796
        %v1828 = vmul.f32 %v1825, %v1827
        %v1829 = vadd.f32 %v1828, 0.0036580483
        %v1830 = vmul.f32 %v1825, %v1829
        %v1831 = vadd.f32 %v1830, 0.05243302
        %v1832 = vmul.f32 %v1825, %v1831
        %v1833 = vadd.f32 %v1832, 0.18741608
        %v1834 = vmul.f32 %v1825, %v1833
        %v1835 = vadd.f32 %v1834, 1.1283791
        %v1836 = vmul.f32 %v856, %v1835
        %v1837 = vmul.f32 %v1825, 3.8918573e-05
        %v1838 = vadd.f32 %v1837, 0.001143296
        %v1839 = vmul.f32 %v1825, %v1838
        %v1840 = vadd.f32 %v1839, 0.014752088
        %v1841 = vmul.f32 %v1825, %v1840
        %v1842 = vadd.f32 %v1841, 0.112945676
        %v1843 = vmul.f32 %v1825, %v1842
        %v1844 = vadd.f32 %v1843, 0.4994258
        %v1845 = vmul.f32 %v1825, %v1844
        %v1846 = vadd.f32 %v1845, 1.0
        %v1847 = vrcp.pop %v1846
        %v1848 = vmul.f32 %v1846, %v1847
        %v1849 = vsub.f32 1.0, %v1848
        %v1850 = vmul.f32 %v1847, %v1849
        %v1851 = vadd.f32 %v1847, %v1850
        %vm1852 = vweird.f32 %v1846
        %vm1853 = vweird.f32 %v1847
        %vm1854 = vmor %vm1852, %vm1853
        %v1855 = vsel %vm1854, %v1847, %v1851
        %v1856 = vand.u32 2147483647, %v1846
        %vm1857 = vcmp.eq.f32.partialorder %v1856, 8.507059e+37
        %v1858 = vand.u32 %v1846, 2147483648
        %v1859 = vor.u32 1.1754944e-38, %v1858
        %v1860 = vsel %vm1857, %v1859, %v1855
        %v1861 = vmul.f32 %v1836, %v1860
        %v1862 = vmin.f32 %v1861, 1.0
        %v1863 = vmax.f32 %v1862, -1.0
        %v1864 = vmul.f32 %v857, %v857
        %v1865 = vmin.f32 16.0, %v1864
        %v1866 = vmul.f32 %v1865, 2.1237322e-06
        %v1867 = vadd.f32 %v1866, 0.00028619796
        %v1868 = vmul.f32 %v1865, %v1867
        %v1869 = vadd.f32 %v1868, 0.0036580483
        %v1870 = vmul.f32 %v1865, %v1869
        %v1871 = vadd.f32 %v1870, 0.05243302
        %v1872 = vmul.f32 %v1865, %v1871
        %v1873 = vadd.f32 %v1872, 0.18741608
        %v1874 = vmul.f32 %v1865, %v1873
        %v1875 = vadd.f32 %v1874, 1.1283791
        %v1876 = vmul.f32 %v857, %v1875
        %v1877 = vmul.f32 %v1865, 3.8918573e-05
        %v1878 = vadd.f32 %v1877, 0.001143296
        %v1879 = vmul.f32 %v1865, %v1878
        %v1880 = vadd.f32 %v1879, 0.014752088
        %v1881 = vmul.f32 %v1865, %v1880
        %v1882 = vadd.f32 %v1881, 0.112945676
        %v1883 = vmul.f32 %v1865, %v1882
        %v1884 = vadd.f32 %v1883, 0.4994258
        %v1885 = vmul.f32 %v1865, %v1884
        %v1886 = vadd.f32 %v1885, 1.0
        %v1887 = vrcp.pop %v1886
        %v1888 = vmul.f32 %v1886, %v1887
        %v1889 = vsub.f32 1.0, %v1888
        %v1890 = vmul.f32 %v1887, %v1889
        %v1891 = vadd.f32 %v1887, %v1890
        %vm1892 = vweird.f32 %v1886
        %vm1893 = vweird.f32 %v1887
        %vm1894 = vmor %vm1892, %vm1893
        %v1895 = vsel %vm1894, %v1887, %v1891
        %v1896 = vand.u32 2147483647, %v1886
        %vm1897 = vcmp.eq.f32.partialorder %v1896, 8.507059e+37
        %v1898 = vand.u32 %v1886, 2147483648
        %v1899 = vor.u32 1.1754944e-38, %v1898
        %v1900 = vsel %vm1897, %v1899, %v1895
        %v1901 = vmul.f32 %v1876, %v1900
        %v1902 = vmin.f32 %v1901, 1.0
        %v1903 = vmax.f32 %v1902, -1.0
        %v1904 = vmul.f32 %v858, %v858
        %v1905 = vmin.f32 16.0, %v1904
        %v1906 = vmul.f32 %v1905, 2.1237322e-06
        %v1907 = vadd.f32 %v1906, 0.00028619796
        %v1908 = vmul.f32 %v1905, %v1907
        %v1909 = vadd.f32 %v1908, 0.0036580483
        %v1910 = vmul.f32 %v1905, %v1909
        %v1911 = vadd.f32 %v1910, 0.05243302
        %v1912 = vmul.f32 %v1905, %v1911
        %v1913 = vadd.f32 %v1912, 0.18741608
        %v1914 = vmul.f32 %v1905, %v1913
        %v1915 = vadd.f32 %v1914, 1.1283791
        %v1916 = vmul.f32 %v858, %v1915
        %v1917 = vmul.f32 %v1905, 3.8918573e-05
        %v1918 = vadd.f32 %v1917, 0.001143296
        %v1919 = vmul.f32 %v1905, %v1918
        %v1920 = vadd.f32 %v1919, 0.014752088
        %v1921 = vmul.f32 %v1905, %v1920
        %v1922 = vadd.f32 %v1921, 0.112945676
        %v1923 = vmul.f32 %v1905, %v1922
        %v1924 = vadd.f32 %v1923, 0.4994258
        %v1925 = vmul.f32 %v1905, %v1924
        %v1926 = vadd.f32 %v1925, 1.0
        %v1927 = vrcp.pop %v1926
        %v1928 = vmul.f32 %v1926, %v1927
        %v1929 = vsub.f32 1.0, %v1928
        %v1930 = vmul.f32 %v1927, %v1929
        %v1931 = vadd.f32 %v1927, %v1930
        %vm1932 = vweird.f32 %v1926
        %vm1933 = vweird.f32 %v1927
        %vm1934 = vmor %vm1932, %vm1933
        %v1935 = vsel %vm1934, %v1927, %v1931
        %v1936 = vand.u32 2147483647, %v1926
        %vm1937 = vcmp.eq.f32.partialorder %v1936, 8.507059e+37
        %v1938 = vand.u32 %v1926, 2147483648
        %v1939 = vor.u32 1.1754944e-38, %v1938
        %v1940 = vsel %vm1937, %v1939, %v1935
        %v1941 = vmul.f32 %v1916, %v1940
        %v1942 = vmin.f32 %v1941, 1.0
        %v1943 = vmax.f32 %v1942, -1.0
        %v1944 = vmul.f32 %v859, %v859
        %v1945 = vmin.f32 16.0, %v1944
        %v1946 = vmul.f32 %v1945, 2.1237322e-06
        %v1947 = vadd.f32 %v1946, 0.00028619796
        %v1948 = vmul.f32 %v1945, %v1947
        %v1949 = vadd.f32 %v1948, 0.0036580483
        %v1950 = vmul.f32 %v1945, %v1949
        %v1951 = vadd.f32 %v1950, 0.05243302
        %v1952 = vmul.f32 %v1945, %v1951
        %v1953 = vadd.f32 %v1952, 0.18741608
        %v1954 = vmul.f32 %v1945, %v1953
        %v1955 = vadd.f32 %v1954, 1.1283791
        %v1956 = vmul.f32 %v859, %v1955
        %v1957 = vmul.f32 %v1945, 3.8918573e-05
        %v1958 = vadd.f32 %v1957, 0.001143296
        %v1959 = vmul.f32 %v1945, %v1958
        %v1960 = vadd.f32 %v1959, 0.014752088
        %v1961 = vmul.f32 %v1945, %v1960
        %v1962 = vadd.f32 %v1961, 0.112945676
        %v1963 = vmul.f32 %v1945, %v1962
        %v1964 = vadd.f32 %v1963, 0.4994258
        %v1965 = vmul.f32 %v1945, %v1964
        %v1966 = vadd.f32 %v1965, 1.0
        %v1967 = vrcp.pop %v1966
        %v1968 = vmul.f32 %v1966, %v1967
        %v1969 = vsub.f32 1.0, %v1968
        %v1970 = vmul.f32 %v1967, %v1969
        %v1971 = vadd.f32 %v1967, %v1970
        %vm1972 = vweird.f32 %v1966
        %vm1973 = vweird.f32 %v1967
        %vm1974 = vmor %vm1972, %vm1973
        %v1975 = vsel %vm1974, %v1967, %v1971
        %v1976 = vand.u32 2147483647, %v1966
        %vm1977 = vcmp.eq.f32.partialorder %v1976, 8.507059e+37
        %v1978 = vand.u32 %v1966, 2147483648
        %v1979 = vor.u32 1.1754944e-38, %v1978
        %v1980 = vsel %vm1977, %v1979, %v1975
        %v1981 = vmul.f32 %v1956, %v1980
        %v1982 = vmin.f32 %v1981, 1.0
        %v1983 = vmax.f32 %v1982, -1.0
        %v1984 = vmul.f32 %v860, %v860
        %v1985 = vmin.f32 16.0, %v1984
        %v1986 = vmul.f32 %v1985, 2.1237322e-06
        %v1987 = vadd.f32 %v1986, 0.00028619796
        %v1988 = vmul.f32 %v1985, %v1987
        %v1989 = vadd.f32 %v1988, 0.0036580483
        %v1990 = vmul.f32 %v1985, %v1989
        %v1991 = vadd.f32 %v1990, 0.05243302
        %v1992 = vmul.f32 %v1985, %v1991
        %v1993 = vadd.f32 %v1992, 0.18741608
        %v1994 = vmul.f32 %v1985, %v1993
        %v1995 = vadd.f32 %v1994, 1.1283791
        %v1996 = vmul.f32 %v860, %v1995
        %v1997 = vmul.f32 %v1985, 3.8918573e-05
        %v1998 = vadd.f32 %v1997, 0.001143296
        %v1999 = vmul.f32 %v1985, %v1998
        %v2000 = vadd.f32 %v1999, 0.014752088
        %v2001 = vmul.f32 %v1985, %v2000
        %v2002 = vadd.f32 %v2001, 0.112945676
        %v2003 = vmul.f32 %v1985, %v2002
        %v2004 = vadd.f32 %v2003, 0.4994258
        %v2005 = vmul.f32 %v1985, %v2004
        %v2006 = vadd.f32 %v2005, 1.0
        %v2007 = vrcp.pop %v2006
        %v2008 = vmul.f32 %v2006, %v2007
        %v2009 = vsub.f32 1.0, %v2008
        %v2010 = vmul.f32 %v2007, %v2009
        %v2011 = vadd.f32 %v2007, %v2010
        %vm2012 = vweird.f32 %v2006
        %vm2013 = vweird.f32 %v2007
        %vm2014 = vmor %vm2012, %vm2013
        %v2015 = vsel %vm2014, %v2007, %v2011
        %v2016 = vand.u32 2147483647, %v2006
        %vm2017 = vcmp.eq.f32.partialorder %v2016, 8.507059e+37
        %v2018 = vand.u32 %v2006, 2147483648
        %v2019 = vor.u32 1.1754944e-38, %v2018
        %v2020 = vsel %vm2017, %v2019, %v2015
        %v2021 = vmul.f32 %v1996, %v2020
        %v2022 = vmin.f32 %v2021, 1.0
        %v2023 = vmax.f32 %v2022, -1.0
        %v2024 = vmul.f32 %v861, %v861
        %v2025 = vmin.f32 16.0, %v2024
        %v2026 = vmul.f32 %v2025, 2.1237322e-06
        %v2027 = vadd.f32 %v2026, 0.00028619796
        %v2028 = vmul.f32 %v2025, %v2027
        %v2029 = vadd.f32 %v2028, 0.0036580483
        %v2030 = vmul.f32 %v2025, %v2029
        %v2031 = vadd.f32 %v2030, 0.05243302
        %v2032 = vmul.f32 %v2025, %v2031
        %v2033 = vadd.f32 %v2032, 0.18741608
        %v2034 = vmul.f32 %v2025, %v2033
        %v2035 = vadd.f32 %v2034, 1.1283791
        %v2036 = vmul.f32 %v861, %v2035
        %v2037 = vmul.f32 %v2025, 3.8918573e-05
        %v2038 = vadd.f32 %v2037, 0.001143296
        %v2039 = vmul.f32 %v2025, %v2038
        %v2040 = vadd.f32 %v2039, 0.014752088
        %v2041 = vmul.f32 %v2025, %v2040
        %v2042 = vadd.f32 %v2041, 0.112945676
        %v2043 = vmul.f32 %v2025, %v2042
        %v2044 = vadd.f32 %v2043, 0.4994258
        %v2045 = vmul.f32 %v2025, %v2044
        %v2046 = vadd.f32 %v2045, 1.0
        %v2047 = vrcp.pop %v2046
        %v2048 = vmul.f32 %v2046, %v2047
        %v2049 = vsub.f32 1.0, %v2048
        %v2050 = vmul.f32 %v2047, %v2049
        %v2051 = vadd.f32 %v2047, %v2050
        %vm2052 = vweird.f32 %v2046
        %vm2053 = vweird.f32 %v2047
        %vm2054 = vmor %vm2052, %vm2053
        %v2055 = vsel %vm2054, %v2047, %v2051
        %v2056 = vand.u32 2147483647, %v2046
        %vm2057 = vcmp.eq.f32.partialorder %v2056, 8.507059e+37
        %v2058 = vand.u32 %v2046, 2147483648
        %v2059 = vor.u32 1.1754944e-38, %v2058
        %v2060 = vsel %vm2057, %v2059, %v2055
        %v2061 = vmul.f32 %v2036, %v2060
        %v2062 = vmin.f32 %v2061, 1.0
        %v2063 = vmax.f32 %v2062, -1.0
        %v2064 = vmul.f32 %v862, %v862
        %v2065 = vmin.f32 16.0, %v2064
        %v2066 = vmul.f32 %v2065, 2.1237322e-06
        %v2067 = vadd.f32 %v2066, 0.00028619796
        %v2068 = vmul.f32 %v2065, %v2067
        %v2069 = vadd.f32 %v2068, 0.0036580483
        %v2070 = vmul.f32 %v2065, %v2069
        %v2071 = vadd.f32 %v2070, 0.05243302
        %v2072 = vmul.f32 %v2065, %v2071
        %v2073 = vadd.f32 %v2072, 0.18741608
        %v2074 = vmul.f32 %v2065, %v2073
        %v2075 = vadd.f32 %v2074, 1.1283791
        %v2076 = vmul.f32 %v862, %v2075
        %v2077 = vmul.f32 %v2065, 3.8918573e-05
        %v2078 = vadd.f32 %v2077, 0.001143296
        %v2079 = vmul.f32 %v2065, %v2078
        %v2080 = vadd.f32 %v2079, 0.014752088
        %v2081 = vmul.f32 %v2065, %v2080
        %v2082 = vadd.f32 %v2081, 0.112945676
        %v2083 = vmul.f32 %v2065, %v2082
        %v2084 = vadd.f32 %v2083, 0.4994258
        %v2085 = vmul.f32 %v2065, %v2084
        %v2086 = vadd.f32 %v2085, 1.0
        %v2087 = vrcp.pop %v2086
        %v2088 = vmul.f32 %v2086, %v2087
        %v2089 = vsub.f32 1.0, %v2088
        %v2090 = vmul.f32 %v2087, %v2089
        %v2091 = vadd.f32 %v2087, %v2090
        %vm2092 = vweird.f32 %v2086
        %vm2093 = vweird.f32 %v2087
        %vm2094 = vmor %vm2092, %vm2093
        %v2095 = vsel %vm2094, %v2087, %v2091
        %v2096 = vand.u32 2147483647, %v2086
        %vm2097 = vcmp.eq.f32.partialorder %v2096, 8.507059e+37
        %v2098 = vand.u32 %v2086, 2147483648
        %v2099 = vor.u32 1.1754944e-38, %v2098
        %v2100 = vsel %vm2097, %v2099, %v2095
        %v2101 = vmul.f32 %v2076, %v2100
        %v2102 = vmin.f32 %v2101, 1.0
        %v2103 = vmax.f32 %v2102, -1.0
        %v2104 = vmul.f32 %v863, %v863
        %v2105 = vmin.f32 16.0, %v2104
        %v2106 = vmul.f32 %v2105, 2.1237322e-06
        %v2107 = vadd.f32 %v2106, 0.00028619796
        %v2108 = vmul.f32 %v2105, %v2107
        %v2109 = vadd.f32 %v2108, 0.0036580483
        %v2110 = vmul.f32 %v2105, %v2109
        %v2111 = vadd.f32 %v2110, 0.05243302
        %v2112 = vmul.f32 %v2105, %v2111
        %v2113 = vadd.f32 %v2112, 0.18741608
        %v2114 = vmul.f32 %v2105, %v2113
        %v2115 = vadd.f32 %v2114, 1.1283791
        %v2116 = vmul.f32 %v863, %v2115
        %v2117 = vmul.f32 %v2105, 3.8918573e-05
        %v2118 = vadd.f32 %v2117, 0.001143296
        %v2119 = vmul.f32 %v2105, %v2118
        %v2120 = vadd.f32 %v2119, 0.014752088
        %v2121 = vmul.f32 %v2105, %v2120
        %v2122 = vadd.f32 %v2121, 0.112945676
        %v2123 = vmul.f32 %v2105, %v2122
        %v2124 = vadd.f32 %v2123, 0.4994258
        %v2125 = vmul.f32 %v2105, %v2124
        %v2126 = vadd.f32 %v2125, 1.0
        %v2127 = vrcp.pop %v2126
        %v2128 = vmul.f32 %v2126, %v2127
        %v2129 = vsub.f32 1.0, %v2128
        %v2130 = vmul.f32 %v2127, %v2129
        %v2131 = vadd.f32 %v2127, %v2130
        %vm2132 = vweird.f32 %v2126
        %vm2133 = vweird.f32 %v2127
        %vm2134 = vmor %vm2132, %vm2133
        %v2135 = vsel %vm2134, %v2127, %v2131
        %v2136 = vand.u32 2147483647, %v2126
        %vm2137 = vcmp.eq.f32.partialorder %v2136, 8.507059e+37
        %v2138 = vand.u32 %v2126, 2147483648
        %v2139 = vor.u32 1.1754944e-38, %v2138
        %v2140 = vsel %vm2137, %v2139, %v2135
        %v2141 = vmul.f32 %v2116, %v2140
        %v2142 = vmin.f32 %v2141, 1.0
        %v2143 = vmax.f32 %v2142, -1.0
        %v2144 = vadd.f32 %v903, 1.0
        %v2145 = vadd.f32 %v943, 1.0
        %v2146 = vadd.f32 %v983, 1.0
        %v2147 = vadd.f32 %v1023, 1.0
        %v2148 = vadd.f32 %v1063, 1.0
        %v2149 = vadd.f32 %v1103, 1.0
        %v2150 = vadd.f32 %v1143, 1.0
        %v2151 = vadd.f32 %v1183, 1.0
        %v2152 = vadd.f32 %v1223, 1.0
        %v2153 = vadd.f32 %v1263, 1.0
        %v2154 = vadd.f32 %v1303, 1.0
        %v2155 = vadd.f32 %v1343, 1.0
        %v2156 = vadd.f32 %v1383, 1.0
        %v2157 = vadd.f32 %v1423, 1.0
        %v2158 = vadd.f32 %v1463, 1.0
        %v2159 = vadd.f32 %v1503, 1.0
        %v2160 = vadd.f32 %v1543, 1.0
        %v2161 = vadd.f32 %v1583, 1.0
        %v2162 = vadd.f32 %v1623, 1.0
        %v2163 = vadd.f32 %v1663, 1.0
        %v2164 = vadd.f32 %v1703, 1.0
        %v2165 = vadd.f32 %v1743, 1.0
        %v2166 = vadd.f32 %v1783, 1.0
        %v2167 = vadd.f32 %v1823, 1.0
        %v2168 = vadd.f32 %v1863, 1.0
        %v2169 = vadd.f32 %v1903, 1.0
        %v2170 = vadd.f32 %v1943, 1.0
        %v2171 = vadd.f32 %v1983, 1.0
        %v2172 = vadd.f32 %v2023, 1.0
        %v2173 = vadd.f32 %v2063, 1.0
        %v2174 = vadd.f32 %v2103, 1.0
        %v2175 = vadd.f32 %v2143, 1.0
        %v2176 = vmul.f32 %v800, %v2144
        %v2177 = vmul.f32 %v801, %v2145
        %v2178 = vmul.f32 %v802, %v2146
        %v2179 = vmul.f32 %v803, %v2147
        %v2180 = vmul.f32 %v804, %v2148
        %v2181 = vmul.f32 %v805, %v2149
        %v2182 = vmul.f32 %v806, %v2150
        %v2183 = vmul.f32 %v807, %v2151
        %v2184 = vmul.f32 %v808, %v2152
        %v2185 = vmul.f32 %v809, %v2153
        %v2186 = vmul.f32 %v810, %v2154
        %v2187 = vmul.f32 %v811, %v2155
        %v2188 = vmul.f32 %v812, %v2156
        %v2189 = vmul.f32 %v813, %v2157
        %v2190 = vmul.f32 %v814, %v2158
        %v2191 = vmul.f32 %v815, %v2159
        %v2192 = vmul.f32 %v816, %v2160
        %v2193 = vmul.f32 %v817, %v2161
        %v2194 = vmul.f32 %v818, %v2162
        %v2195 = vmul.f32 %v819, %v2163
        %v2196 = vmul.f32 %v820, %v2164
        %v2197 = vmul.f32 %v821, %v2165
        %v2198 = vmul.f32 %v822, %v2166
        %v2199 = vmul.f32 %v823, %v2167
        %v2200 = vmul.f32 %v824, %v2168
        %v2201 = vmul.f32 %v825, %v2169
        %v2202 = vmul.f32 %v826, %v2170
        %v2203 = vmul.f32 %v827, %v2171
        %v2204 = vmul.f32 %v828, %v2172
        %v2205 = vmul.f32 %v829, %v2173
        %v2206 = vmul.f32 %v830, %v2174
        %v2207 = vmul.f32 %v831, %v2175
        %v2208 = vpack.c.bf16 %v2178, %v2176
        %v2209 = vpack.c.bf16 %v2179, %v2177
        %v2210 = vpack.c.bf16 %v2182, %v2180
        %v2211 = vpack.c.bf16 %v2183, %v2181
        %v2212 = vpack.c.bf16 %v2186, %v2184
        %v2213 = vpack.c.bf16 %v2187, %v2185
        %v2214 = vpack.c.bf16 %v2190, %v2188
        %v2215 = vpack.c.bf16 %v2191, %v2189
        %v2216 = vpack.c.bf16 %v2194, %v2192
        %v2217 = vpack.c.bf16 %v2195, %v2193
        %v2218 = vpack.c.bf16 %v2198, %v2196
        %v2219 = vpack.c.bf16 %v2199, %v2197
        %v2220 = vpack.c.bf16 %v2202, %v2200
        %v2221 = vpack.c.bf16 %v2203, %v2201
        %v2222 = vpack.c.bf16 %v2206, %v2204
        %v2223 = vpack.c.bf16 %v2207, %v2205
        %v2224 = vld [vmem:[#allocation8] sm:$0xff]
        %v2225 = vld [vmem:[#allocation8 + $0x8] sm:$0xff]
        %v2226 = vld [vmem:[#allocation8 + $0x10] sm:$0xff]
        %v2227 = vld [vmem:[#allocation8 + $0x18] sm:$0xff]
        %v2228 = vld [vmem:[#allocation8 + $0x20] sm:$0xff]
        %v2229 = vld [vmem:[#allocation8 + $0x28] sm:$0xff]
        %v2230 = vld [vmem:[#allocation8 + $0x30] sm:$0xff]
        %v2231 = vld [vmem:[#allocation8 + $0x38] sm:$0xff]
        %v2232 = vld [vmem:[#allocation8 + $0x40] sm:$0xff]
        %v2233 = vld [vmem:[#allocation8 + $0x48] sm:$0xff]
        %v2234 = vld [vmem:[#allocation8 + $0x50] sm:$0xff]
        %v2235 = vld [vmem:[#allocation8 + $0x58] sm:$0xff]
        %v2236 = vld [vmem:[#allocation8 + $0x60] sm:$0xff]
        %v2237 = vld [vmem:[#allocation8 + $0x68] sm:$0xff]
        %v2238 = vld [vmem:[#allocation8 + $0x70] sm:$0xff]
        %v2239 = vld [vmem:[#allocation8 + $0x78] sm:$0xff]
        %v2240 = vld [vmem:[#allocation8 + $0x80] sm:$0xff]
        %v2241 = vld [vmem:[#allocation8 + $0x88] sm:$0xff]
        %v2242 = vld [vmem:[#allocation8 + $0x90] sm:$0xf]
        %v2243 = vld [vmem:[#allocation8 + $0x94] sm:$0xff]
        %v2244 = vld [vmem:[#allocation8 + $0x9c] sm:$0xff]
        %v2245 = vld [vmem:[#allocation8 + $0xa4] sm:$0xff]
        %v2246 = vld [vmem:[#allocation8 + $0xac] sm:$0xff]
        %v2247 = vld [vmem:[#allocation8 + $0xb4] sm:$0xff]
        %v2248 = vld [vmem:[#allocation8 + $0xbc] sm:$0xff]
        %v2249 = vld [vmem:[#allocation8 + $0xc4] sm:$0xff]
        %v2250 = vld [vmem:[#allocation8 + $0xcc] sm:$0xff]
        %v2251 = vld [vmem:[#allocation8 + $0xd4] sm:$0xff]
        %v2252 = vld [vmem:[#allocation8 + $0xdc] sm:$0xff]
        %v2253 = vld [vmem:[#allocation8 + $0xe4] sm:$0xff]
        %v2254 = vld [vmem:[#allocation8 + $0xec] sm:$0xff]
        %v2255 = vld [vmem:[#allocation8 + $0xf4] sm:$0xff]
        %v2256 = vld [vmem:[#allocation8 + $0xfc] sm:$0xff]
        %v2257 = vld [vmem:[#allocation8 + $0x104] sm:$0xff]
        %v2258 = vld [vmem:[#allocation8 + $0x10c] sm:$0xff]
        %v2259 = vld [vmem:[#allocation8 + $0x114] sm:$0xff]
        %v2260 = vld [vmem:[#allocation8 + $0x11c] sm:$0xff]
        %v2261 = vld [vmem:[#allocation8 + $0x124] sm:$0xf]
        %v2262 = vld [vmem:[#allocation8 + $0x128] sm:$0xff]
        %v2263 = vld [vmem:[#allocation8 + $0x130] sm:$0xff]
        %v2264 = vld [vmem:[#allocation8 + $0x138] sm:$0xff]
        %v2265 = vld [vmem:[#allocation8 + $0x140] sm:$0xff]
        %v2266 = vld [vmem:[#allocation8 + $0x148] sm:$0xff]
        %v2267 = vld [vmem:[#allocation8 + $0x150] sm:$0xff]
        %v2268 = vld [vmem:[#allocation8 + $0x158] sm:$0xff]
        %v2269 = vld [vmem:[#allocation8 + $0x160] sm:$0xff]
        %v2270 = vld [vmem:[#allocation8 + $0x168] sm:$0xff]
        %v2271 = vld [vmem:[#allocation8 + $0x170] sm:$0xff]
        %v2272 = vld [vmem:[#allocation8 + $0x178] sm:$0xff]
        %v2273 = vld [vmem:[#allocation8 + $0x180] sm:$0xff]
        %v2274 = vld [vmem:[#allocation8 + $0x188] sm:$0xff]
        %v2275 = vld [vmem:[#allocation8 + $0x190] sm:$0xff]
        %v2276 = vld [vmem:[#allocation8 + $0x198] sm:$0xff]
        %v2277 = vld [vmem:[#allocation8 + $0x1a0] sm:$0xff]
        %v2278 = vld [vmem:[#allocation8 + $0x1a8] sm:$0xff]
        %v2279 = vld [vmem:[#allocation8 + $0x1b0] sm:$0xff]
        %v2280 = vld [vmem:[#allocation8 + $0x1b8] sm:$0xf]
        %v2281 = vld [vmem:[#allocation8 + $0x1bc] sm:$0xff]
        %v2282 = vld [vmem:[#allocation8 + $0x1c4] sm:$0xff]
        %v2283 = vld [vmem:[#allocation8 + $0x1cc] sm:$0xff]
        %v2284 = vld [vmem:[#allocation8 + $0x1d4] sm:$0xff]
        %v2285 = vld [vmem:[#allocation8 + $0x1dc] sm:$0xff]
        %v2286 = vld [vmem:[#allocation8 + $0x1e4] sm:$0xff]
        %v2287 = vld [vmem:[#allocation8 + $0x1ec] sm:$0xff]
        %v2288 = vld [vmem:[#allocation8 + $0x1f4] sm:$0xff]
        %v2289 = vld [vmem:[#allocation8 + $0x1fc] sm:$0xff]
        %v2290 = vld [vmem:[#allocation8 + $0x204] sm:$0xff]
        %v2291 = vld [vmem:[#allocation8 + $0x20c] sm:$0xff]
        %v2292 = vld [vmem:[#allocation8 + $0x214] sm:$0xff]
        %v2293 = vld [vmem:[#allocation8 + $0x21c] sm:$0xff]
        %v2294 = vld [vmem:[#allocation8 + $0x224] sm:$0xff]
        %v2295 = vld [vmem:[#allocation8 + $0x22c] sm:$0xff]
        %v2296 = vld [vmem:[#allocation8 + $0x234] sm:$0xff]
        %v2297 = vld [vmem:[#allocation8 + $0x23c] sm:$0xff]
        %v2298 = vld [vmem:[#allocation8 + $0x244] sm:$0xff]
        %v2299 = vld [vmem:[#allocation8 + $0x24c] sm:$0xf]
        %v2300 = vld [vmem:[#allocation8 + $0x250] sm:$0xff]
        %v2301 = vld [vmem:[#allocation8 + $0x258] sm:$0xff]
        %v2302 = vld [vmem:[#allocation8 + $0x260] sm:$0xff]
        %v2303 = vld [vmem:[#allocation8 + $0x268] sm:$0xff]
        %v2304 = vld [vmem:[#allocation8 + $0x270] sm:$0xff]
        %v2305 = vld [vmem:[#allocation8 + $0x278] sm:$0xff]
        %v2306 = vld [vmem:[#allocation8 + $0x280] sm:$0xff]
        %v2307 = vld [vmem:[#allocation8 + $0x288] sm:$0xff]
        %v2308 = vld [vmem:[#allocation8 + $0x290] sm:$0xff]
        %v2309 = vld [vmem:[#allocation8 + $0x298] sm:$0xff]
        %v2310 = vld [vmem:[#allocation8 + $0x2a0] sm:$0xff]
        %v2311 = vld [vmem:[#allocation8 + $0x2a8] sm:$0xff]
        %v2312 = vld [vmem:[#allocation8 + $0x2b0] sm:$0xff]
        %v2313 = vld [vmem:[#allocation8 + $0x2b8] sm:$0xff]
        %v2314 = vld [vmem:[#allocation8 + $0x2c0] sm:$0xff]
        %v2315 = vld [vmem:[#allocation8 + $0x2c8] sm:$0xff]
        %v2316 = vld [vmem:[#allocation8 + $0x2d0] sm:$0xff]
        %v2317 = vld [vmem:[#allocation8 + $0x2d8] sm:$0xff]
        %v2318 = vld [vmem:[#allocation8 + $0x2e0] sm:$0xf]
        %v2319 = vld [vmem:[#allocation8 + $0x2e4] sm:$0xff]
        %v2320 = vld [vmem:[#allocation8 + $0x2ec] sm:$0xff]
        %v2321 = vld [vmem:[#allocation8 + $0x2f4] sm:$0xff]
        %v2322 = vld [vmem:[#allocation8 + $0x2fc] sm:$0xff]
        %v2323 = vld [vmem:[#allocation8 + $0x304] sm:$0xff]
        %v2324 = vld [vmem:[#allocation8 + $0x30c] sm:$0xff]
        %v2325 = vld [vmem:[#allocation8 + $0x314] sm:$0xff]
        %v2326 = vld [vmem:[#allocation8 + $0x31c] sm:$0xff]
        %v2327 = vld [vmem:[#allocation8 + $0x324] sm:$0xff]
        %v2328 = vld [vmem:[#allocation8 + $0x32c] sm:$0xff]
        %v2329 = vld [vmem:[#allocation8 + $0x334] sm:$0xff]
        %v2330 = vld [vmem:[#allocation8 + $0x33c] sm:$0xff]
        %v2331 = vld [vmem:[#allocation8 + $0x344] sm:$0xff]
        %v2332 = vld [vmem:[#allocation8 + $0x34c] sm:$0xff]
        %v2333 = vld [vmem:[#allocation8 + $0x354] sm:$0xff]
        %v2334 = vld [vmem:[#allocation8 + $0x35c] sm:$0xff]
        %v2335 = vld [vmem:[#allocation8 + $0x364] sm:$0xff]
        %v2336 = vld [vmem:[#allocation8 + $0x36c] sm:$0xff]
        %v2337 = vld [vmem:[#allocation8 + $0x374] sm:$0xf]
        %v2338 = vld [vmem:[#allocation8 + $0x378] sm:$0xff]
        %v2339 = vld [vmem:[#allocation8 + $0x380] sm:$0xff]
        %v2340 = vld [vmem:[#allocation8 + $0x388] sm:$0xff]
        %v2341 = vld [vmem:[#allocation8 + $0x390] sm:$0xff]
        %v2342 = vld [vmem:[#allocation8 + $0x398] sm:$0xff]
        %v2343 = vld [vmem:[#allocation8 + $0x3a0] sm:$0xff]
        %v2344 = vld [vmem:[#allocation8 + $0x3a8] sm:$0xff]
        %v2345 = vld [vmem:[#allocation8 + $0x3b0] sm:$0xff]
        %v2346 = vld [vmem:[#allocation8 + $0x3b8] sm:$0xff]
        %v2347 = vld [vmem:[#allocation8 + $0x3c0] sm:$0xff]
        %v2348 = vld [vmem:[#allocation8 + $0x3c8] sm:$0xff]
        %v2349 = vld [vmem:[#allocation8 + $0x3d0] sm:$0xff]
        %v2350 = vld [vmem:[#allocation8 + $0x3d8] sm:$0xff]
        %v2351 = vld [vmem:[#allocation8 + $0x3e0] sm:$0xff]
        %v2352 = vld [vmem:[#allocation8 + $0x3e8] sm:$0xff]
        %v2353 = vld [vmem:[#allocation8 + $0x3f0] sm:$0xff]
        %v2354 = vld [vmem:[#allocation8 + $0x3f8] sm:$0xff]
        %v2355 = vld [vmem:[#allocation8 + $0x400] sm:$0xff]
        %v2356 = vld [vmem:[#allocation8 + $0x408] sm:$0xf]
        %v2357 = vld [vmem:[#allocation8 + $0x40c] sm:$0xff]
        %v2358 = vld [vmem:[#allocation8 + $0x414] sm:$0xff]
        %v2359 = vld [vmem:[#allocation8 + $0x41c] sm:$0xff]
        %v2360 = vld [vmem:[#allocation8 + $0x424] sm:$0xff]
        %v2361 = vld [vmem:[#allocation8 + $0x42c] sm:$0xff]
        %v2362 = vld [vmem:[#allocation8 + $0x434] sm:$0xff]
        %v2363 = vld [vmem:[#allocation8 + $0x43c] sm:$0xff]
        %v2364 = vld [vmem:[#allocation8 + $0x444] sm:$0xff]
        %v2365 = vld [vmem:[#allocation8 + $0x44c] sm:$0xff]
        %v2366 = vld [vmem:[#allocation8 + $0x454] sm:$0xff]
        %v2367 = vld [vmem:[#allocation8 + $0x45c] sm:$0xff]
        %v2368 = vld [vmem:[#allocation8 + $0x464] sm:$0xff]
        %v2369 = vld [vmem:[#allocation8 + $0x46c] sm:$0xff]
        %v2370 = vld [vmem:[#allocation8 + $0x474] sm:$0xff]
        %v2371 = vld [vmem:[#allocation8 + $0x47c] sm:$0xff]
        %v2372 = vld [vmem:[#allocation8 + $0x484] sm:$0xff]
        %v2373 = vld [vmem:[#allocation8 + $0x48c] sm:$0xff]
        %v2374 = vld [vmem:[#allocation8 + $0x494] sm:$0xff]
        %v2375 = vld [vmem:[#allocation8 + $0x49c] sm:$0xf]
        %v2376 = vld [vmem:[#allocation8 + $0x4a0] sm:$0xff]
        %v2377 = vld [vmem:[#allocation8 + $0x4a8] sm:$0xff]
        %v2378 = vld [vmem:[#allocation8 + $0x4b0] sm:$0xff]
        %v2379 = vld [vmem:[#allocation8 + $0x4b8] sm:$0xff]
        %v2380 = vld [vmem:[#allocation8 + $0x4c0] sm:$0xff]
        %v2381 = vld [vmem:[#allocation8 + $0x4c8] sm:$0xff]
        %v2382 = vld [vmem:[#allocation8 + $0x4d0] sm:$0xff]
        %v2383 = vld [vmem:[#allocation8 + $0x4d8] sm:$0xff]
        %v2384 = vld [vmem:[#allocation8 + $0x4e0] sm:$0xff]
        %v2385 = vld [vmem:[#allocation8 + $0x4e8] sm:$0xff]
        %v2386 = vld [vmem:[#allocation8 + $0x4f0] sm:$0xff]
        %v2387 = vld [vmem:[#allocation8 + $0x4f8] sm:$0xff]
        %v2388 = vld [vmem:[#allocation8 + $0x500] sm:$0xff]
        %v2389 = vld [vmem:[#allocation8 + $0x508] sm:$0xff]
        %v2390 = vld [vmem:[#allocation8 + $0x510] sm:$0xff]
        %v2391 = vld [vmem:[#allocation8 + $0x518] sm:$0xff]
        %v2392 = vld [vmem:[#allocation8 + $0x520] sm:$0xff]
        %v2393 = vld [vmem:[#allocation8 + $0x528] sm:$0xff]
        %v2394 = vld [vmem:[#allocation8 + $0x530] sm:$0xf]
        %v2395 = vld [vmem:[#allocation8 + $0x534] sm:$0xff]
        %v2396 = vld [vmem:[#allocation8 + $0x53c] sm:$0xff]
        %v2397 = vld [vmem:[#allocation8 + $0x544] sm:$0xff]
        %v2398 = vld [vmem:[#allocation8 + $0x54c] sm:$0xff]
        %v2399 = vld [vmem:[#allocation8 + $0x554] sm:$0xff]
        %v2400 = vld [vmem:[#allocation8 + $0x55c] sm:$0xff]
        %v2401 = vld [vmem:[#allocation8 + $0x564] sm:$0xff]
        %v2402 = vld [vmem:[#allocation8 + $0x56c] sm:$0xff]
        %v2403 = vld [vmem:[#allocation8 + $0x574] sm:$0xff]
        %v2404 = vld [vmem:[#allocation8 + $0x57c] sm:$0xff]
        %v2405 = vld [vmem:[#allocation8 + $0x584] sm:$0xff]
        %v2406 = vld [vmem:[#allocation8 + $0x58c] sm:$0xff]
        %v2407 = vld [vmem:[#allocation8 + $0x594] sm:$0xff]
        %v2408 = vld [vmem:[#allocation8 + $0x59c] sm:$0xff]
        %v2409 = vld [vmem:[#allocation8 + $0x5a4] sm:$0xff]
        %v2410 = vld [vmem:[#allocation8 + $0x5ac] sm:$0xff]
        %v2411 = vld [vmem:[#allocation8 + $0x5b4] sm:$0xff]
        %v2412 = vld [vmem:[#allocation8 + $0x5bc] sm:$0xff]
        %v2413 = vld [vmem:[#allocation8 + $0x5c4] sm:$0xf]
        %v2414 = vld [vmem:[#allocation8 + $0x5c8] sm:$0xff]
        %v2415 = vld [vmem:[#allocation8 + $0x5d0] sm:$0xff]
        %v2416 = vld [vmem:[#allocation8 + $0x5d8] sm:$0xff]
        %v2417 = vld [vmem:[#allocation8 + $0x5e0] sm:$0xff]
        %v2418 = vld [vmem:[#allocation8 + $0x5e8] sm:$0xff]
        %v2419 = vld [vmem:[#allocation8 + $0x5f0] sm:$0xff]
        %v2420 = vld [vmem:[#allocation8 + $0x5f8] sm:$0xff]
        %v2421 = vld [vmem:[#allocation8 + $0x600] sm:$0xff]
        %v2422 = vld [vmem:[#allocation8 + $0x608] sm:$0xff]
        %v2423 = vld [vmem:[#allocation8 + $0x610] sm:$0xff]
        %v2424 = vld [vmem:[#allocation8 + $0x618] sm:$0xff]
        %v2425 = vld [vmem:[#allocation8 + $0x620] sm:$0xff]
        %v2426 = vld [vmem:[#allocation8 + $0x628] sm:$0xff]
        %v2427 = vld [vmem:[#allocation8 + $0x630] sm:$0xff]
        %v2428 = vld [vmem:[#allocation8 + $0x638] sm:$0xff]
        %v2429 = vld [vmem:[#allocation8 + $0x640] sm:$0xff]
        %v2430 = vld [vmem:[#allocation8 + $0x648] sm:$0xff]
        %v2431 = vld [vmem:[#allocation8 + $0x650] sm:$0xff]
        %v2432 = vld [vmem:[#allocation8 + $0x658] sm:$0xf]
        %v2433 = vld [vmem:[#allocation8 + $0x65c] sm:$0xff]
        %v2434 = vld [vmem:[#allocation8 + $0x664] sm:$0xff]
        %v2435 = vld [vmem:[#allocation8 + $0x66c] sm:$0xff]
        %v2436 = vld [vmem:[#allocation8 + $0x674] sm:$0xff]
        %v2437 = vld [vmem:[#allocation8 + $0x67c] sm:$0xff]
        %v2438 = vld [vmem:[#allocation8 + $0x684] sm:$0xff]
        %v2439 = vld [vmem:[#allocation8 + $0x68c] sm:$0xff]
        %v2440 = vld [vmem:[#allocation8 + $0x694] sm:$0xff]
        %v2441 = vld [vmem:[#allocation8 + $0x69c] sm:$0xff]
        %v2442 = vld [vmem:[#allocation8 + $0x6a4] sm:$0xff]
        %v2443 = vld [vmem:[#allocation8 + $0x6ac] sm:$0xff]
        %v2444 = vld [vmem:[#allocation8 + $0x6b4] sm:$0xff]
        %v2445 = vld [vmem:[#allocation8 + $0x6bc] sm:$0xff]
        %v2446 = vld [vmem:[#allocation8 + $0x6c4] sm:$0xff]
        %v2447 = vld [vmem:[#allocation8 + $0x6cc] sm:$0xff]
        %v2448 = vld [vmem:[#allocation8 + $0x6d4] sm:$0xff]
        %v2449 = vld [vmem:[#allocation8 + $0x6dc] sm:$0xff]
        %v2450 = vld [vmem:[#allocation8 + $0x6e4] sm:$0xff]
        %v2451 = vld [vmem:[#allocation8 + $0x6ec] sm:$0xf]
        %v2452 = vld [vmem:[#allocation8 + $0x6f0] sm:$0xff]
        %v2453 = vld [vmem:[#allocation8 + $0x6f8] sm:$0xff]
        %v2454 = vld [vmem:[#allocation8 + $0x700] sm:$0xff]
        %v2455 = vld [vmem:[#allocation8 + $0x708] sm:$0xff]
        %v2456 = vld [vmem:[#allocation8 + $0x710] sm:$0xff]
        %v2457 = vld [vmem:[#allocation8 + $0x718] sm:$0xff]
        %v2458 = vld [vmem:[#allocation8 + $0x720] sm:$0xff]
        %v2459 = vld [vmem:[#allocation8 + $0x728] sm:$0xff]
        %v2460 = vld [vmem:[#allocation8 + $0x730] sm:$0xff]
        %v2461 = vld [vmem:[#allocation8 + $0x738] sm:$0xff]
        %v2462 = vld [vmem:[#allocation8 + $0x740] sm:$0xff]
        %v2463 = vld [vmem:[#allocation8 + $0x748] sm:$0xff]
        %v2464 = vld [vmem:[#allocation8 + $0x750] sm:$0xff]
        %v2465 = vld [vmem:[#allocation8 + $0x758] sm:$0xff]
        %v2466 = vld [vmem:[#allocation8 + $0x760] sm:$0xff]
        %v2467 = vld [vmem:[#allocation8 + $0x768] sm:$0xff]
        %v2468 = vld [vmem:[#allocation8 + $0x770] sm:$0xff]
        %v2469 = vld [vmem:[#allocation8 + $0x778] sm:$0xff]
        %v2470 = vld [vmem:[#allocation8 + $0x780] sm:$0xf]
        %v2471 = vld [vmem:[#allocation8 + $0x784] sm:$0xff]
        %v2472 = vld [vmem:[#allocation8 + $0x78c] sm:$0xff]
        %v2473 = vld [vmem:[#allocation8 + $0x794] sm:$0xff]
        %v2474 = vld [vmem:[#allocation8 + $0x79c] sm:$0xff]
        %v2475 = vld [vmem:[#allocation8 + $0x7a4] sm:$0xff]
        %v2476 = vld [vmem:[#allocation8 + $0x7ac] sm:$0xff]
        %v2477 = vld [vmem:[#allocation8 + $0x7b4] sm:$0xff]
        %v2478 = vld [vmem:[#allocation8 + $0x7bc] sm:$0xff]
        %v2479 = vld [vmem:[#allocation8 + $0x7c4] sm:$0xff]
        %v2480 = vld [vmem:[#allocation8 + $0x7cc] sm:$0xff]
        %v2481 = vld [vmem:[#allocation8 + $0x7d4] sm:$0xff]
        %v2482 = vld [vmem:[#allocation8 + $0x7dc] sm:$0xff]
        %v2483 = vld [vmem:[#allocation8 + $0x7e4] sm:$0xff]
        %v2484 = vld [vmem:[#allocation8 + $0x7ec] sm:$0xff]
        %v2485 = vld [vmem:[#allocation8 + $0x7f4] sm:$0xff]
        %v2486 = vld [vmem:[#allocation8 + $0x7fc] sm:$0xff]
        %v2487 = vld [vmem:[#allocation8 + $0x804] sm:$0xff]
        %v2488 = vld [vmem:[#allocation8 + $0x80c] sm:$0xff]
        %v2489 = vld [vmem:[#allocation8 + $0x814] sm:$0xf]
        %v2490 = vld [vmem:[#allocation8 + $0x818] sm:$0xff]
        %v2491 = vld [vmem:[#allocation8 + $0x820] sm:$0xff]
        %v2492 = vld [vmem:[#allocation8 + $0x828] sm:$0xff]
        %v2493 = vld [vmem:[#allocation8 + $0x830] sm:$0xff]
        %v2494 = vld [vmem:[#allocation8 + $0x838] sm:$0xff]
        %v2495 = vld [vmem:[#allocation8 + $0x840] sm:$0xff]
        %v2496 = vld [vmem:[#allocation8 + $0x848] sm:$0xff]
        %v2497 = vld [vmem:[#allocation8 + $0x850] sm:$0xff]
        %v2498 = vld [vmem:[#allocation8 + $0x858] sm:$0xff]
        %v2499 = vld [vmem:[#allocation8 + $0x860] sm:$0xff]
        %v2500 = vld [vmem:[#allocation8 + $0x868] sm:$0xff]
        %v2501 = vld [vmem:[#allocation8 + $0x870] sm:$0xff]
        %v2502 = vld [vmem:[#allocation8 + $0x878] sm:$0xff]
        %v2503 = vld [vmem:[#allocation8 + $0x880] sm:$0xff]
        %v2504 = vld [vmem:[#allocation8 + $0x888] sm:$0xff]
        %v2505 = vld [vmem:[#allocation8 + $0x890] sm:$0xff]
        %v2506 = vld [vmem:[#allocation8 + $0x898] sm:$0xff]
        %v2507 = vld [vmem:[#allocation8 + $0x8a0] sm:$0xff]
        %v2508 = vld [vmem:[#allocation8 + $0x8a8] sm:$0xf]
        %v2509 = vld [vmem:[#allocation8 + $0x8ac] sm:$0xff]
        %v2510 = vld [vmem:[#allocation8 + $0x8b4] sm:$0xff]
        %v2511 = vld [vmem:[#allocation8 + $0x8bc] sm:$0xff]
        %v2512 = vld [vmem:[#allocation8 + $0x8c4] sm:$0xff]
        %v2513 = vld [vmem:[#allocation8 + $0x8cc] sm:$0xff]
        %v2514 = vld [vmem:[#allocation8 + $0x8d4] sm:$0xff]
        %v2515 = vld [vmem:[#allocation8 + $0x8dc] sm:$0xff]
        %v2516 = vld [vmem:[#allocation8 + $0x8e4] sm:$0xff]
        %v2517 = vld [vmem:[#allocation8 + $0x8ec] sm:$0xff]
        %v2518 = vld [vmem:[#allocation8 + $0x8f4] sm:$0xff]
        %v2519 = vld [vmem:[#allocation8 + $0x8fc] sm:$0xff]
        %v2520 = vld [vmem:[#allocation8 + $0x904] sm:$0xff]
        %v2521 = vld [vmem:[#allocation8 + $0x90c] sm:$0xff]
        %v2522 = vld [vmem:[#allocation8 + $0x914] sm:$0xff]
        %v2523 = vld [vmem:[#allocation8 + $0x91c] sm:$0xff]
        %v2524 = vld [vmem:[#allocation8 + $0x924] sm:$0xff]
        %v2525 = vld [vmem:[#allocation8 + $0x92c] sm:$0xff]
        %v2526 = vld [vmem:[#allocation8 + $0x934] sm:$0xff]
        %v2527 = vld [vmem:[#allocation8 + $0x93c] sm:$0xf]
        %v2528 = vld [vmem:[#allocation8 + $0x940] sm:$0xff]
        %v2529 = vld [vmem:[#allocation8 + $0x948] sm:$0xff]
        %v2530 = vld [vmem:[#allocation8 + $0x950] sm:$0xff]
        %v2531 = vld [vmem:[#allocation8 + $0x958] sm:$0xff]
        %v2532 = vld [vmem:[#allocation8 + $0x960] sm:$0xff]
        %v2533 = vld [vmem:[#allocation8 + $0x968] sm:$0xff]
        %v2534 = vld [vmem:[#allocation8 + $0x970] sm:$0xff]
        %v2535 = vld [vmem:[#allocation8 + $0x978] sm:$0xff]
        %v2536 = vld [vmem:[#allocation8 + $0x980] sm:$0xff]
        %v2537 = vld [vmem:[#allocation8 + $0x988] sm:$0xff]
        %v2538 = vld [vmem:[#allocation8 + $0x990] sm:$0xff]
        %v2539 = vld [vmem:[#allocation8 + $0x998] sm:$0xff]
        %v2540 = vld [vmem:[#allocation8 + $0x9a0] sm:$0xff]
        %v2541 = vld [vmem:[#allocation8 + $0x9a8] sm:$0xff]
        %v2542 = vld [vmem:[#allocation8 + $0x9b0] sm:$0xff]
        %v2543 = vld [vmem:[#allocation8 + $0x9b8] sm:$0xff]
        %v2544 = vld [vmem:[#allocation8 + $0x9c0] sm:$0xff]
        %v2545 = vld [vmem:[#allocation8 + $0x9c8] sm:$0xff]
        %v2546 = vld [vmem:[#allocation8 + $0x9d0] sm:$0xf]
        %v2547 = vld [vmem:[#allocation8 + $0x9d4] sm:$0xff]
        %v2548 = vld [vmem:[#allocation8 + $0x9dc] sm:$0xff]
        %v2549 = vld [vmem:[#allocation8 + $0x9e4] sm:$0xff]
        %v2550 = vld [vmem:[#allocation8 + $0x9ec] sm:$0xff]
        %v2551 = vld [vmem:[#allocation8 + $0x9f4] sm:$0xff]
        %v2552 = vld [vmem:[#allocation8 + $0x9fc] sm:$0xff]
        %v2553 = vld [vmem:[#allocation8 + $0xa04] sm:$0xff]
        %v2554 = vld [vmem:[#allocation8 + $0xa0c] sm:$0xff]
        %v2555 = vld [vmem:[#allocation8 + $0xa14] sm:$0xff]
        %v2556 = vld [vmem:[#allocation8 + $0xa1c] sm:$0xff]
        %v2557 = vld [vmem:[#allocation8 + $0xa24] sm:$0xff]
        %v2558 = vld [vmem:[#allocation8 + $0xa2c] sm:$0xff]
        %v2559 = vld [vmem:[#allocation8 + $0xa34] sm:$0xff]
        %v2560 = vld [vmem:[#allocation8 + $0xa3c] sm:$0xff]
        %v2561 = vld [vmem:[#allocation8 + $0xa44] sm:$0xff]
        %v2562 = vld [vmem:[#allocation8 + $0xa4c] sm:$0xff]
        %v2563 = vld [vmem:[#allocation8 + $0xa54] sm:$0xff]
        %v2564 = vld [vmem:[#allocation8 + $0xa5c] sm:$0xff]
        %v2565 = vld [vmem:[#allocation8 + $0xa64] sm:$0xf]
        %v2566 = vld [vmem:[#allocation8 + $0xa68] sm:$0xff]
        %v2567 = vld [vmem:[#allocation8 + $0xa70] sm:$0xff]
        %v2568 = vld [vmem:[#allocation8 + $0xa78] sm:$0xff]
        %v2569 = vld [vmem:[#allocation8 + $0xa80] sm:$0xff]
        %v2570 = vld [vmem:[#allocation8 + $0xa88] sm:$0xff]
        %v2571 = vld [vmem:[#allocation8 + $0xa90] sm:$0xff]
        %v2572 = vld [vmem:[#allocation8 + $0xa98] sm:$0xff]
        %v2573 = vld [vmem:[#allocation8 + $0xaa0] sm:$0xff]
        %v2574 = vld [vmem:[#allocation8 + $0xaa8] sm:$0xff]
        %v2575 = vld [vmem:[#allocation8 + $0xab0] sm:$0xff]
        %v2576 = vld [vmem:[#allocation8 + $0xab8] sm:$0xff]
        %v2577 = vld [vmem:[#allocation8 + $0xac0] sm:$0xff]
        %v2578 = vld [vmem:[#allocation8 + $0xac8] sm:$0xff]
        %v2579 = vld [vmem:[#allocation8 + $0xad0] sm:$0xff]
        %v2580 = vld [vmem:[#allocation8 + $0xad8] sm:$0xff]
        %v2581 = vld [vmem:[#allocation8 + $0xae0] sm:$0xff]
        %v2582 = vld [vmem:[#allocation8 + $0xae8] sm:$0xff]
        %v2583 = vld [vmem:[#allocation8 + $0xaf0] sm:$0xff]
        %v2584 = vld [vmem:[#allocation8 + $0xaf8] sm:$0xf]
        %v2585 = vld [vmem:[#allocation8 + $0xafc] sm:$0xff]
        %v2586 = vld [vmem:[#allocation8 + $0xb04] sm:$0xff]
        %v2587 = vld [vmem:[#allocation8 + $0xb0c] sm:$0xff]
        %v2588 = vld [vmem:[#allocation8 + $0xb14] sm:$0xff]
        %v2589 = vld [vmem:[#allocation8 + $0xb1c] sm:$0xff]
        %v2590 = vld [vmem:[#allocation8 + $0xb24] sm:$0xff]
        %v2591 = vld [vmem:[#allocation8 + $0xb2c] sm:$0xff]
        %v2592 = vld [vmem:[#allocation8 + $0xb34] sm:$0xff]
        %v2593 = vld [vmem:[#allocation8 + $0xb3c] sm:$0xff]
        %v2594 = vld [vmem:[#allocation8 + $0xb44] sm:$0xff]
        %v2595 = vld [vmem:[#allocation8 + $0xb4c] sm:$0xff]
        %v2596 = vld [vmem:[#allocation8 + $0xb54] sm:$0xff]
        %v2597 = vld [vmem:[#allocation8 + $0xb5c] sm:$0xff]
        %v2598 = vld [vmem:[#allocation8 + $0xb64] sm:$0xff]
        %v2599 = vld [vmem:[#allocation8 + $0xb6c] sm:$0xff]
        %v2600 = vld [vmem:[#allocation8 + $0xb74] sm:$0xff]
        %v2601 = vld [vmem:[#allocation8 + $0xb7c] sm:$0xff]
        %v2602 = vld [vmem:[#allocation8 + $0xb84] sm:$0xff]
        %v2603 = vld [vmem:[#allocation8 + $0xb8c] sm:$0xf]
        %v2604 = vld [vmem:[#allocation8 + $0xb90] sm:$0xff]
        %v2605 = vld [vmem:[#allocation8 + $0xb98] sm:$0xff]
        %v2606 = vld [vmem:[#allocation8 + $0xba0] sm:$0xff]
        %v2607 = vld [vmem:[#allocation8 + $0xba8] sm:$0xff]
        %v2608 = vld [vmem:[#allocation8 + $0xbb0] sm:$0xff]
        %v2609 = vld [vmem:[#allocation8 + $0xbb8] sm:$0xff]
        %v2610 = vld [vmem:[#allocation8 + $0xbc0] sm:$0xff]
        %v2611 = vld [vmem:[#allocation8 + $0xbc8] sm:$0xff]
        %v2612 = vld [vmem:[#allocation8 + $0xbd0] sm:$0xff]
        %v2613 = vld [vmem:[#allocation8 + $0xbd8] sm:$0xff]
        %v2614 = vld [vmem:[#allocation8 + $0xbe0] sm:$0xff]
        %v2615 = vld [vmem:[#allocation8 + $0xbe8] sm:$0xff]
        %v2616 = vld [vmem:[#allocation8 + $0xbf0] sm:$0xff]
        %v2617 = vld [vmem:[#allocation8 + $0xbf8] sm:$0xff]
        %v2618 = vld [vmem:[#allocation8 + $0xc00] sm:$0xff]
        %v2619 = vld [vmem:[#allocation8 + $0xc08] sm:$0xff]
        %v2620 = vld [vmem:[#allocation8 + $0xc10] sm:$0xff]
        %v2621 = vld [vmem:[#allocation8 + $0xc18] sm:$0xff]
        %v2622 = vld [vmem:[#allocation8 + $0xc20] sm:$0xf]
        %v2623 = vld [vmem:[#allocation8 + $0xc24] sm:$0xff]
        %v2624 = vld [vmem:[#allocation8 + $0xc2c] sm:$0xff]
        %v2625 = vld [vmem:[#allocation8 + $0xc34] sm:$0xff]
        %v2626 = vld [vmem:[#allocation8 + $0xc3c] sm:$0xff]
        %v2627 = vld [vmem:[#allocation8 + $0xc44] sm:$0xff]
        %v2628 = vld [vmem:[#allocation8 + $0xc4c] sm:$0xff]
        %v2629 = vld [vmem:[#allocation8 + $0xc54] sm:$0xff]
        %v2630 = vld [vmem:[#allocation8 + $0xc5c] sm:$0xff]
        %v2631 = vld [vmem:[#allocation8 + $0xc64] sm:$0xff]
        %v2632 = vld [vmem:[#allocation8 + $0xc6c] sm:$0xff]
        %v2633 = vld [vmem:[#allocation8 + $0xc74] sm:$0xff]
        %v2634 = vld [vmem:[#allocation8 + $0xc7c] sm:$0xff]
        %v2635 = vld [vmem:[#allocation8 + $0xc84] sm:$0xff]
        %v2636 = vld [vmem:[#allocation8 + $0xc8c] sm:$0xff]
        %v2637 = vld [vmem:[#allocation8 + $0xc94] sm:$0xff]
        %v2638 = vld [vmem:[#allocation8 + $0xc9c] sm:$0xff]
        %v2639 = vld [vmem:[#allocation8 + $0xca4] sm:$0xff]
        %v2640 = vld [vmem:[#allocation8 + $0xcac] sm:$0xff]
        %v2641 = vld [vmem:[#allocation8 + $0xcb4] sm:$0xf]
        %v2642 = vld [vmem:[#allocation8 + $0xcb8] sm:$0xff]
        %v2643 = vld [vmem:[#allocation8 + $0xcc0] sm:$0xff]
        %v2644 = vld [vmem:[#allocation8 + $0xcc8] sm:$0xff]
        %v2645 = vld [vmem:[#allocation8 + $0xcd0] sm:$0xff]
        %v2646 = vld [vmem:[#allocation8 + $0xcd8] sm:$0xff]
        %v2647 = vld [vmem:[#allocation8 + $0xce0] sm:$0xff]
        %v2648 = vld [vmem:[#allocation8 + $0xce8] sm:$0xff]
        %v2649 = vld [vmem:[#allocation8 + $0xcf0] sm:$0xff]
        %v2650 = vld [vmem:[#allocation8 + $0xcf8] sm:$0xff]
        %v2651 = vld [vmem:[#allocation8 + $0xd00] sm:$0xff]
        %v2652 = vld [vmem:[#allocation8 + $0xd08] sm:$0xff]
        %v2653 = vld [vmem:[#allocation8 + $0xd10] sm:$0xff]
        %v2654 = vld [vmem:[#allocation8 + $0xd18] sm:$0xff]
        %v2655 = vld [vmem:[#allocation8 + $0xd20] sm:$0xff]
        %v2656 = vld [vmem:[#allocation8 + $0xd28] sm:$0xff]
        %v2657 = vld [vmem:[#allocation8 + $0xd30] sm:$0xff]
        %v2658 = vld [vmem:[#allocation8 + $0xd38] sm:$0xff]
        %v2659 = vld [vmem:[#allocation8 + $0xd40] sm:$0xff]
        %v2660 = vld [vmem:[#allocation8 + $0xd48] sm:$0xf]
        %v2661 = vld [vmem:[#allocation8 + $0xd4c] sm:$0xff]
        %v2662 = vld [vmem:[#allocation8 + $0xd54] sm:$0xff]
        %v2663 = vld [vmem:[#allocation8 + $0xd5c] sm:$0xff]
        %v2664 = vld [vmem:[#allocation8 + $0xd64] sm:$0xff]
        %v2665 = vld [vmem:[#allocation8 + $0xd6c] sm:$0xff]
        %v2666 = vld [vmem:[#allocation8 + $0xd74] sm:$0xff]
        %v2667 = vld [vmem:[#allocation8 + $0xd7c] sm:$0xff]
        %v2668 = vld [vmem:[#allocation8 + $0xd84] sm:$0xff]
        %v2669 = vld [vmem:[#allocation8 + $0xd8c] sm:$0xff]
        %v2670 = vld [vmem:[#allocation8 + $0xd94] sm:$0xff]
        %v2671 = vld [vmem:[#allocation8 + $0xd9c] sm:$0xff]
        %v2672 = vld [vmem:[#allocation8 + $0xda4] sm:$0xff]
        %v2673 = vld [vmem:[#allocation8 + $0xdac] sm:$0xff]
        %v2674 = vld [vmem:[#allocation8 + $0xdb4] sm:$0xff]
        %v2675 = vld [vmem:[#allocation8 + $0xdbc] sm:$0xff]
        %v2676 = vld [vmem:[#allocation8 + $0xdc4] sm:$0xff]
        %v2677 = vld [vmem:[#allocation8 + $0xdcc] sm:$0xff]
        %v2678 = vld [vmem:[#allocation8 + $0xdd4] sm:$0xff]
        %v2679 = vld [vmem:[#allocation8 + $0xddc] sm:$0xf]
        %v2680 = vld [vmem:[#allocation8 + $0xde0] sm:$0xff]
        %v2681 = vld [vmem:[#allocation8 + $0xde8] sm:$0xff]
        %v2682 = vld [vmem:[#allocation8 + $0xdf0] sm:$0xff]
        %v2683 = vld [vmem:[#allocation8 + $0xdf8] sm:$0xff]
        %v2684 = vld [vmem:[#allocation8 + $0xe00] sm:$0xff]
        %v2685 = vld [vmem:[#allocation8 + $0xe08] sm:$0xff]
        %v2686 = vld [vmem:[#allocation8 + $0xe10] sm:$0xff]
        %v2687 = vld [vmem:[#allocation8 + $0xe18] sm:$0xff]
        %v2688 = vld [vmem:[#allocation8 + $0xe20] sm:$0xff]
        %v2689 = vld [vmem:[#allocation8 + $0xe28] sm:$0xff]
        %v2690 = vld [vmem:[#allocation8 + $0xe30] sm:$0xff]
        %v2691 = vld [vmem:[#allocation8 + $0xe38] sm:$0xff]
        %v2692 = vld [vmem:[#allocation8 + $0xe40] sm:$0xff]
        %v2693 = vld [vmem:[#allocation8 + $0xe48] sm:$0xff]
        %v2694 = vld [vmem:[#allocation8 + $0xe50] sm:$0xff]
        %v2695 = vld [vmem:[#allocation8 + $0xe58] sm:$0xff]
        %v2696 = vld [vmem:[#allocation8 + $0xe60] sm:$0xff]
        %v2697 = vld [vmem:[#allocation8 + $0xe68] sm:$0xff]
        %v2698 = vld [vmem:[#allocation8 + $0xe70] sm:$0xf]
        %v2699 = vld [vmem:[#allocation8 + $0xe74] sm:$0xff]
        %v2700 = vld [vmem:[#allocation8 + $0xe7c] sm:$0xff]
        %v2701 = vld [vmem:[#allocation8 + $0xe84] sm:$0xff]
        %v2702 = vld [vmem:[#allocation8 + $0xe8c] sm:$0xff]
        %v2703 = vld [vmem:[#allocation8 + $0xe94] sm:$0xff]
        %v2704 = vld [vmem:[#allocation8 + $0xe9c] sm:$0xff]
        %v2705 = vld [vmem:[#allocation8 + $0xea4] sm:$0xff]
        %v2706 = vld [vmem:[#allocation8 + $0xeac] sm:$0xff]
        %v2707 = vld [vmem:[#allocation8 + $0xeb4] sm:$0xff]
        %v2708 = vld [vmem:[#allocation8 + $0xebc] sm:$0xff]
        %v2709 = vld [vmem:[#allocation8 + $0xec4] sm:$0xff]
        %v2710 = vld [vmem:[#allocation8 + $0xecc] sm:$0xff]
        %v2711 = vld [vmem:[#allocation8 + $0xed4] sm:$0xff]
        %v2712 = vld [vmem:[#allocation8 + $0xedc] sm:$0xff]
        %v2713 = vld [vmem:[#allocation8 + $0xee4] sm:$0xff]
        %v2714 = vld [vmem:[#allocation8 + $0xeec] sm:$0xff]
        %v2715 = vld [vmem:[#allocation8 + $0xef4] sm:$0xff]
        %v2716 = vld [vmem:[#allocation8 + $0xefc] sm:$0xff]
        %v2717 = vld [vmem:[#allocation8 + $0xf04] sm:$0xf]
        %v2718 = vld [vmem:[#allocation8 + $0xf08] sm:$0xff]
        %v2719 = vld [vmem:[#allocation8 + $0xf10] sm:$0xff]
        %v2720 = vld [vmem:[#allocation8 + $0xf18] sm:$0xff]
        %v2721 = vld [vmem:[#allocation8 + $0xf20] sm:$0xff]
        %v2722 = vld [vmem:[#allocation8 + $0xf28] sm:$0xff]
        %v2723 = vld [vmem:[#allocation8 + $0xf30] sm:$0xff]
        %v2724 = vld [vmem:[#allocation8 + $0xf38] sm:$0xff]
        %v2725 = vld [vmem:[#allocation8 + $0xf40] sm:$0xff]
        %v2726 = vld [vmem:[#allocation8 + $0xf48] sm:$0xff]
        %v2727 = vld [vmem:[#allocation8 + $0xf50] sm:$0xff]
        %v2728 = vld [vmem:[#allocation8 + $0xf58] sm:$0xff]
        %v2729 = vld [vmem:[#allocation8 + $0xf60] sm:$0xff]
        %v2730 = vld [vmem:[#allocation8 + $0xf68] sm:$0xff]
        %v2731 = vld [vmem:[#allocation8 + $0xf70] sm:$0xff]
        %v2732 = vld [vmem:[#allocation8 + $0xf78] sm:$0xff]
        %v2733 = vld [vmem:[#allocation8 + $0xf80] sm:$0xff]
        %v2734 = vld [vmem:[#allocation8 + $0xf88] sm:$0xff]
        %v2735 = vld [vmem:[#allocation8 + $0xf90] sm:$0xff]
        %v2736 = vld [vmem:[#allocation8 + $0xf98] sm:$0xf]
        %v2737 = vld [vmem:[#allocation8 + $0xf9c] sm:$0xff]
        %v2738 = vld [vmem:[#allocation8 + $0xfa4] sm:$0xff]
        %v2739 = vld [vmem:[#allocation8 + $0xfac] sm:$0xff]
        %v2740 = vld [vmem:[#allocation8 + $0xfb4] sm:$0xff]
        %v2741 = vld [vmem:[#allocation8 + $0xfbc] sm:$0xff]
        %v2742 = vld [vmem:[#allocation8 + $0xfc4] sm:$0xff]
        %v2743 = vld [vmem:[#allocation8 + $0xfcc] sm:$0xff]
        %v2744 = vld [vmem:[#allocation8 + $0xfd4] sm:$0xff]
        %v2745 = vld [vmem:[#allocation8 + $0xfdc] sm:$0xff]
        %v2746 = vld [vmem:[#allocation8 + $0xfe4] sm:$0xff]
        %v2747 = vld [vmem:[#allocation8 + $0xfec] sm:$0xff]
        %v2748 = vld [vmem:[#allocation8 + $0xff4] sm:$0xff]
        %v2749 = vld [vmem:[#allocation8 + $0xffc] sm:$0xff]
        %v2750 = vld [vmem:[#allocation8 + $0x1004] sm:$0xff]
        %v2751 = vld [vmem:[#allocation8 + $0x100c] sm:$0xff]
        %v2752 = vld [vmem:[#allocation8 + $0x1014] sm:$0xff]
        %v2753 = vld [vmem:[#allocation8 + $0x101c] sm:$0xff]
        %v2754 = vld [vmem:[#allocation8 + $0x1024] sm:$0xff]
        %v2755 = vld [vmem:[#allocation8 + $0x102c] sm:$0xf]
        %v2756 = vld [vmem:[#allocation8 + $0x1030] sm:$0xff]
        %v2757 = vld [vmem:[#allocation8 + $0x1038] sm:$0xff]
        %v2758 = vld [vmem:[#allocation8 + $0x1040] sm:$0xff]
        %v2759 = vld [vmem:[#allocation8 + $0x1048] sm:$0xff]
        %v2760 = vld [vmem:[#allocation8 + $0x1050] sm:$0xff]
        %v2761 = vld [vmem:[#allocation8 + $0x1058] sm:$0xff]
        %v2762 = vld [vmem:[#allocation8 + $0x1060] sm:$0xff]
        %v2763 = vld [vmem:[#allocation8 + $0x1068] sm:$0xff]
        %v2764 = vld [vmem:[#allocation8 + $0x1070] sm:$0xff]
        %v2765 = vld [vmem:[#allocation8 + $0x1078] sm:$0xff]
        %v2766 = vld [vmem:[#allocation8 + $0x1080] sm:$0xff]
        %v2767 = vld [vmem:[#allocation8 + $0x1088] sm:$0xff]
        %v2768 = vld [vmem:[#allocation8 + $0x1090] sm:$0xff]
        %v2769 = vld [vmem:[#allocation8 + $0x1098] sm:$0xff]
        %v2770 = vld [vmem:[#allocation8 + $0x10a0] sm:$0xff]
        %v2771 = vld [vmem:[#allocation8 + $0x10a8] sm:$0xff]
        %v2772 = vld [vmem:[#allocation8 + $0x10b0] sm:$0xff]
        %v2773 = vld [vmem:[#allocation8 + $0x10b8] sm:$0xff]
        %v2774 = vld [vmem:[#allocation8 + $0x10c0] sm:$0xf]
        %v2775 = vld [vmem:[#allocation8 + $0x10c4] sm:$0xff]
        %v2776 = vld [vmem:[#allocation8 + $0x10cc] sm:$0xff]
        %v2777 = vld [vmem:[#allocation8 + $0x10d4] sm:$0xff]
        %v2778 = vld [vmem:[#allocation8 + $0x10dc] sm:$0xff]
        %v2779 = vld [vmem:[#allocation8 + $0x10e4] sm:$0xff]
        %v2780 = vld [vmem:[#allocation8 + $0x10ec] sm:$0xff]
        %v2781 = vld [vmem:[#allocation8 + $0x10f4] sm:$0xff]
        %v2782 = vld [vmem:[#allocation8 + $0x10fc] sm:$0xff]
        %v2783 = vld [vmem:[#allocation8 + $0x1104] sm:$0xff]
        %v2784 = vld [vmem:[#allocation8 + $0x110c] sm:$0xff]
        %v2785 = vld [vmem:[#allocation8 + $0x1114] sm:$0xff]
        %v2786 = vld [vmem:[#allocation8 + $0x111c] sm:$0xff]
        %v2787 = vld [vmem:[#allocation8 + $0x1124] sm:$0xff]
        %v2788 = vld [vmem:[#allocation8 + $0x112c] sm:$0xff]
        %v2789 = vld [vmem:[#allocation8 + $0x1134] sm:$0xff]
        %v2790 = vld [vmem:[#allocation8 + $0x113c] sm:$0xff]
        %v2791 = vld [vmem:[#allocation8 + $0x1144] sm:$0xff]
        %v2792 = vld [vmem:[#allocation8 + $0x114c] sm:$0xff]
        %v2793 = vld [vmem:[#allocation8 + $0x1154] sm:$0xf]
        %v2794 = vld [vmem:[#allocation8 + $0x1158] sm:$0xff]
        %v2795 = vld [vmem:[#allocation8 + $0x1160] sm:$0xff]
        %v2796 = vld [vmem:[#allocation8 + $0x1168] sm:$0xff]
        %v2797 = vld [vmem:[#allocation8 + $0x1170] sm:$0xff]
        %v2798 = vld [vmem:[#allocation8 + $0x1178] sm:$0xff]
        %v2799 = vld [vmem:[#allocation8 + $0x1180] sm:$0xff]
        %v2800 = vld [vmem:[#allocation8 + $0x1188] sm:$0xff]
        %v2801 = vld [vmem:[#allocation8 + $0x1190] sm:$0xff]
        %v2802 = vld [vmem:[#allocation8 + $0x1198] sm:$0xff]
        %v2803 = vld [vmem:[#allocation8 + $0x11a0] sm:$0xff]
        %v2804 = vld [vmem:[#allocation8 + $0x11a8] sm:$0xff]
        %v2805 = vld [vmem:[#allocation8 + $0x11b0] sm:$0xff]
        %v2806 = vld [vmem:[#allocation8 + $0x11b8] sm:$0xff]
        %v2807 = vld [vmem:[#allocation8 + $0x11c0] sm:$0xff]
        %v2808 = vld [vmem:[#allocation8 + $0x11c8] sm:$0xff]
        %v2809 = vld [vmem:[#allocation8 + $0x11d0] sm:$0xff]
        %v2810 = vld [vmem:[#allocation8 + $0x11d8] sm:$0xff]
        %v2811 = vld [vmem:[#allocation8 + $0x11e0] sm:$0xff]
        %v2812 = vld [vmem:[#allocation8 + $0x11e8] sm:$0xf]
        %v2813 = vld [vmem:[#allocation8 + $0x11ec] sm:$0xff]
        %v2814 = vld [vmem:[#allocation8 + $0x11f4] sm:$0xff]
        %v2815 = vld [vmem:[#allocation8 + $0x11fc] sm:$0xff]
        %v2816 = vld [vmem:[#allocation8 + $0x1204] sm:$0xff]
        %v2817 = vld [vmem:[#allocation8 + $0x120c] sm:$0xff]
        %v2818 = vld [vmem:[#allocation8 + $0x1214] sm:$0xff]
        %v2819 = vld [vmem:[#allocation8 + $0x121c] sm:$0xff]
        %v2820 = vld [vmem:[#allocation8 + $0x1224] sm:$0xff]
        %v2821 = vld [vmem:[#allocation8 + $0x122c] sm:$0xff]
        %v2822 = vld [vmem:[#allocation8 + $0x1234] sm:$0xff]
        %v2823 = vld [vmem:[#allocation8 + $0x123c] sm:$0xff]
        %v2824 = vld [vmem:[#allocation8 + $0x1244] sm:$0xff]
        %v2825 = vld [vmem:[#allocation8 + $0x124c] sm:$0xff]
        %v2826 = vld [vmem:[#allocation8 + $0x1254] sm:$0xff]
        %v2827 = vld [vmem:[#allocation8 + $0x125c] sm:$0xff]
        %v2828 = vld [vmem:[#allocation8 + $0x1264] sm:$0xff]
        %v2829 = vld [vmem:[#allocation8 + $0x126c] sm:$0xff]
        %v2830 = vld [vmem:[#allocation8 + $0x1274] sm:$0xff]
        %v2831 = vld [vmem:[#allocation8 + $0x127c] sm:$0xf]
        %v2832 = vld [vmem:[#allocation10] sm:$0xff]
        %v2833 = vld [vmem:[#allocation10 + $0x8] sm:$0xff]
        %v2834 = vld [vmem:[#allocation10 + $0x10] sm:$0xff]
        %v2835 = vld [vmem:[#allocation10 + $0x18] sm:$0xff]
        %v2836 = vld [vmem:[#allocation10 + $0x20] sm:$0x1f]
        %v2842 = vperm.slane %v2832, 0
        %v2843 = vperm.slane %v2832, 1
        %v2844 = vperm.slane %v2832, 2
        %v2845 = vperm.slane %v2832, 3
        %v2846 = vperm.slane %v2832, 4
        %v2847 = vperm.slane %v2832, 5
        %v2848 = vperm.slane %v2832, 6
        %v2849 = vperm.slane %v2832, 7
        %v2850 = vperm.slane %v2833, 0
        %v2851 = vperm.slane %v2833, 1
        %v2852 = vperm.slane %v2833, 2
        %v2853 = vperm.slane %v2833, 3
        %v2854 = vperm.slane %v2833, 4
        %v2855 = vperm.slane %v2833, 5
        %v2856 = vperm.slane %v2833, 6
        %v2857 = vperm.slane %v2833, 7
        %v2858 = vperm.slane %v2834, 0
        %v2859 = vperm.slane %v2834, 1
        %v2860 = vperm.slane %v2834, 2
        %v2861 = vperm.slane %v2834, 3
        %v2862 = vperm.slane %v2834, 4
        %v2863 = vperm.slane %v2834, 5
        %v2864 = vperm.slane %v2834, 6
        %v2865 = vperm.slane %v2834, 7
        %v2866 = vperm.slane %v2835, 0
        %v2867 = vperm.slane %v2835, 1
        %v2868 = vperm.slane %v2835, 2
        %v2869 = vperm.slane %v2835, 3
        %v2870 = vperm.slane %v2835, 4
        %v2871 = vperm.slane %v2835, 5
        %v2872 = vperm.slane %v2835, 6
        %v2873 = vperm.slane %v2835, 7
        %v2874 = vperm.slane %v2836, 0
        %v2875 = vperm.slane %v2836, 1
        %v2876 = vperm.slane %v2836, 2
        %v2877 = vperm.slane %v2836, 3
        %v2878 = vperm.slane %v2836, 4
        %v3524 = vunpack.c.l.b16 %v2224
        %v3525 = vunpack.c.h.b16 %v2224
        %v3526 = vunpack.c.l.b16 %v2225
        %v3527 = vunpack.c.h.b16 %v2225
        %v3528 = vunpack.c.l.b16 %v2226
        %v3529 = vunpack.c.h.b16 %v2226
        %v3530 = vunpack.c.l.b16 %v2227
        %v3531 = vunpack.c.h.b16 %v2227
        %v3532 = vunpack.c.l.b16 %v2228
        %v3533 = vunpack.c.h.b16 %v2228
        %v3534 = vunpack.c.l.b16 %v2229
        %v3535 = vunpack.c.h.b16 %v2229
        %v3536 = vunpack.c.l.b16 %v2230
        %v3537 = vunpack.c.h.b16 %v2230
        %v3538 = vunpack.c.l.b16 %v2231
        %v3539 = vunpack.c.h.b16 %v2231
        %v3540 = vunpack.c.l.b16 %v2232
        %v3541 = vunpack.c.h.b16 %v2232
        %v3542 = vunpack.c.l.b16 %v2233
        %v3543 = vunpack.c.h.b16 %v2233
        %v3544 = vunpack.c.l.b16 %v2234
        %v3545 = vunpack.c.h.b16 %v2234
        %v3546 = vunpack.c.l.b16 %v2235
        %v3547 = vunpack.c.h.b16 %v2235
        %v3548 = vunpack.c.l.b16 %v2236
        %v3549 = vunpack.c.h.b16 %v2236
        %v3550 = vunpack.c.l.b16 %v2237
        %v3551 = vunpack.c.h.b16 %v2237
        %v3552 = vunpack.c.l.b16 %v2238
        %v3553 = vunpack.c.h.b16 %v2238
        %v3554 = vunpack.c.l.b16 %v2239
        %v3555 = vunpack.c.h.b16 %v2239
        %v3556 = vunpack.c.l.b16 %v2240
        %v3557 = vunpack.c.h.b16 %v2240
        %v3558 = vunpack.c.l.b16 %v2241
        %v3559 = vunpack.c.h.b16 %v2241
        %v3560 = vunpack.c.l.b16 %v2242
        %v3561 = vunpack.c.l.b16 %v2243
        %v3562 = vunpack.c.h.b16 %v2243
        %v3563 = vunpack.c.l.b16 %v2244
        %v3564 = vunpack.c.h.b16 %v2244
        %v3565 = vunpack.c.l.b16 %v2245
        %v3566 = vunpack.c.h.b16 %v2245
        %v3567 = vunpack.c.l.b16 %v2246
        %v3568 = vunpack.c.h.b16 %v2246
        %v3569 = vunpack.c.l.b16 %v2247
        %v3570 = vunpack.c.h.b16 %v2247
        %v3571 = vunpack.c.l.b16 %v2248
        %v3572 = vunpack.c.h.b16 %v2248
        %v3573 = vunpack.c.l.b16 %v2249
        %v3574 = vunpack.c.h.b16 %v2249
        %v3575 = vunpack.c.l.b16 %v2250
        %v3576 = vunpack.c.h.b16 %v2250
        %v3577 = vunpack.c.l.b16 %v2251
        %v3578 = vunpack.c.h.b16 %v2251
        %v3579 = vunpack.c.l.b16 %v2252
        %v3580 = vunpack.c.h.b16 %v2252
        %v3581 = vunpack.c.l.b16 %v2253
        %v3582 = vunpack.c.h.b16 %v2253
        %v3583 = vunpack.c.l.b16 %v2254
        %v3584 = vunpack.c.h.b16 %v2254
        %v3585 = vunpack.c.l.b16 %v2255
        %v3586 = vunpack.c.h.b16 %v2255
        %v3587 = vunpack.c.l.b16 %v2256
        %v3588 = vunpack.c.h.b16 %v2256
        %v3589 = vunpack.c.l.b16 %v2257
        %v3590 = vunpack.c.h.b16 %v2257
        %v3591 = vunpack.c.l.b16 %v2258
        %v3592 = vunpack.c.h.b16 %v2258
        %v3593 = vunpack.c.l.b16 %v2259
        %v3594 = vunpack.c.h.b16 %v2259
        %v3595 = vunpack.c.l.b16 %v2260
        %v3596 = vunpack.c.h.b16 %v2260
        %v3597 = vunpack.c.l.b16 %v2261
        %v3598 = vunpack.c.l.b16 %v2262
        %v3599 = vunpack.c.h.b16 %v2262
        %v3600 = vunpack.c.l.b16 %v2263
        %v3601 = vunpack.c.h.b16 %v2263
        %v3602 = vunpack.c.l.b16 %v2264
        %v3603 = vunpack.c.h.b16 %v2264
        %v3604 = vunpack.c.l.b16 %v2265
        %v3605 = vunpack.c.h.b16 %v2265
        %v3606 = vunpack.c.l.b16 %v2266
        %v3607 = vunpack.c.h.b16 %v2266
        %v3608 = vunpack.c.l.b16 %v2267
        %v3609 = vunpack.c.h.b16 %v2267
        %v3610 = vunpack.c.l.b16 %v2268
        %v3611 = vunpack.c.h.b16 %v2268
        %v3612 = vunpack.c.l.b16 %v2269
        %v3613 = vunpack.c.h.b16 %v2269
        %v3614 = vunpack.c.l.b16 %v2270
        %v3615 = vunpack.c.h.b16 %v2270
        %v3616 = vunpack.c.l.b16 %v2271
        %v3617 = vunpack.c.h.b16 %v2271
        %v3618 = vunpack.c.l.b16 %v2272
        %v3619 = vunpack.c.h.b16 %v2272
        %v3620 = vunpack.c.l.b16 %v2273
        %v3621 = vunpack.c.h.b16 %v2273
        %v3622 = vunpack.c.l.b16 %v2274
        %v3623 = vunpack.c.h.b16 %v2274
        %v3624 = vunpack.c.l.b16 %v2275
        %v3625 = vunpack.c.h.b16 %v2275
        %v3626 = vunpack.c.l.b16 %v2276
        %v3627 = vunpack.c.h.b16 %v2276
        %v3628 = vunpack.c.l.b16 %v2277
        %v3629 = vunpack.c.h.b16 %v2277
        %v3630 = vunpack.c.l.b16 %v2278
        %v3631 = vunpack.c.h.b16 %v2278
        %v3632 = vunpack.c.l.b16 %v2279
        %v3633 = vunpack.c.h.b16 %v2279
        %v3634 = vunpack.c.l.b16 %v2280
        %v3635 = vunpack.c.l.b16 %v2281
        %v3636 = vunpack.c.h.b16 %v2281
        %v3637 = vunpack.c.l.b16 %v2282
        %v3638 = vunpack.c.h.b16 %v2282
        %v3639 = vunpack.c.l.b16 %v2283
        %v3640 = vunpack.c.h.b16 %v2283
        %v3641 = vunpack.c.l.b16 %v2284
        %v3642 = vunpack.c.h.b16 %v2284
        %v3643 = vunpack.c.l.b16 %v2285
        %v3644 = vunpack.c.h.b16 %v2285
        %v3645 = vunpack.c.l.b16 %v2286
        %v3646 = vunpack.c.h.b16 %v2286
        %v3647 = vunpack.c.l.b16 %v2287
        %v3648 = vunpack.c.h.b16 %v2287
        %v3649 = vunpack.c.l.b16 %v2288
        %v3650 = vunpack.c.h.b16 %v2288
        %v3651 = vunpack.c.l.b16 %v2289
        %v3652 = vunpack.c.h.b16 %v2289
        %v3653 = vunpack.c.l.b16 %v2290
        %v3654 = vunpack.c.h.b16 %v2290
        %v3655 = vunpack.c.l.b16 %v2291
        %v3656 = vunpack.c.h.b16 %v2291
        %v3657 = vunpack.c.l.b16 %v2292
        %v3658 = vunpack.c.h.b16 %v2292
        %v3659 = vunpack.c.l.b16 %v2293
        %v3660 = vunpack.c.h.b16 %v2293
        %v3661 = vunpack.c.l.b16 %v2294
        %v3662 = vunpack.c.h.b16 %v2294
        %v3663 = vunpack.c.l.b16 %v2295
        %v3664 = vunpack.c.h.b16 %v2295
        %v3665 = vunpack.c.l.b16 %v2296
        %v3666 = vunpack.c.h.b16 %v2296
        %v3667 = vunpack.c.l.b16 %v2297
        %v3668 = vunpack.c.h.b16 %v2297
        %v3669 = vunpack.c.l.b16 %v2298
        %v3670 = vunpack.c.h.b16 %v2298
        %v3671 = vunpack.c.l.b16 %v2299
        %v3672 = vunpack.c.l.b16 %v2300
        %v3673 = vunpack.c.h.b16 %v2300
        %v3674 = vunpack.c.l.b16 %v2301
        %v3675 = vunpack.c.h.b16 %v2301
        %v3676 = vunpack.c.l.b16 %v2302
        %v3677 = vunpack.c.h.b16 %v2302
        %v3678 = vunpack.c.l.b16 %v2303
        %v3679 = vunpack.c.h.b16 %v2303
        %v3680 = vunpack.c.l.b16 %v2304
        %v3681 = vunpack.c.h.b16 %v2304
        %v3682 = vunpack.c.l.b16 %v2305
        %v3683 = vunpack.c.h.b16 %v2305
        %v3684 = vunpack.c.l.b16 %v2306
        %v3685 = vunpack.c.h.b16 %v2306
        %v3686 = vunpack.c.l.b16 %v2307
        %v3687 = vunpack.c.h.b16 %v2307
        %v3688 = vunpack.c.l.b16 %v2308
        %v3689 = vunpack.c.h.b16 %v2308
        %v3690 = vunpack.c.l.b16 %v2309
        %v3691 = vunpack.c.h.b16 %v2309
        %v3692 = vunpack.c.l.b16 %v2310
        %v3693 = vunpack.c.h.b16 %v2310
        %v3694 = vunpack.c.l.b16 %v2311
        %v3695 = vunpack.c.h.b16 %v2311
        %v3696 = vunpack.c.l.b16 %v2312
        %v3697 = vunpack.c.h.b16 %v2312
        %v3698 = vunpack.c.l.b16 %v2313
        %v3699 = vunpack.c.h.b16 %v2313
        %v3700 = vunpack.c.l.b16 %v2314
        %v3701 = vunpack.c.h.b16 %v2314
        %v3702 = vunpack.c.l.b16 %v2315
        %v3703 = vunpack.c.h.b16 %v2315
        %v3704 = vunpack.c.l.b16 %v2316
        %v3705 = vunpack.c.h.b16 %v2316
        %v3706 = vunpack.c.l.b16 %v2317
        %v3707 = vunpack.c.h.b16 %v2317
        %v3708 = vunpack.c.l.b16 %v2318
        %v3709 = vunpack.c.l.b16 %v2319
        %v3710 = vunpack.c.h.b16 %v2319
        %v3711 = vunpack.c.l.b16 %v2320
        %v3712 = vunpack.c.h.b16 %v2320
        %v3713 = vunpack.c.l.b16 %v2321
        %v3714 = vunpack.c.h.b16 %v2321
        %v3715 = vunpack.c.l.b16 %v2322
        %v3716 = vunpack.c.h.b16 %v2322
        %v3717 = vunpack.c.l.b16 %v2323
        %v3718 = vunpack.c.h.b16 %v2323
        %v3719 = vunpack.c.l.b16 %v2324
        %v3720 = vunpack.c.h.b16 %v2324
        %v3721 = vunpack.c.l.b16 %v2325
        %v3722 = vunpack.c.h.b16 %v2325
        %v3723 = vunpack.c.l.b16 %v2326
        %v3724 = vunpack.c.h.b16 %v2326
        %v3725 = vunpack.c.l.b16 %v2327
        %v3726 = vunpack.c.h.b16 %v2327
        %v3727 = vunpack.c.l.b16 %v2328
        %v3728 = vunpack.c.h.b16 %v2328
        %v3729 = vunpack.c.l.b16 %v2329
        %v3730 = vunpack.c.h.b16 %v2329
        %v3731 = vunpack.c.l.b16 %v2330
        %v3732 = vunpack.c.h.b16 %v2330
        %v3733 = vunpack.c.l.b16 %v2331
        %v3734 = vunpack.c.h.b16 %v2331
        %v3735 = vunpack.c.l.b16 %v2332
        %v3736 = vunpack.c.h.b16 %v2332
        %v3737 = vunpack.c.l.b16 %v2333
        %v3738 = vunpack.c.h.b16 %v2333
        %v3739 = vunpack.c.l.b16 %v2334
        %v3740 = vunpack.c.h.b16 %v2334
        %v3741 = vunpack.c.l.b16 %v2335
        %v3742 = vunpack.c.h.b16 %v2335
        %v3743 = vunpack.c.l.b16 %v2336
        %v3744 = vunpack.c.h.b16 %v2336
        %v3745 = vunpack.c.l.b16 %v2337
        %v3746 = vunpack.c.l.b16 %v2338
        %v3747 = vunpack.c.h.b16 %v2338
        %v3748 = vunpack.c.l.b16 %v2339
        %v3749 = vunpack.c.h.b16 %v2339
        %v3750 = vunpack.c.l.b16 %v2340
        %v3751 = vunpack.c.h.b16 %v2340
        %v3752 = vunpack.c.l.b16 %v2341
        %v3753 = vunpack.c.h.b16 %v2341
        %v3754 = vunpack.c.l.b16 %v2342
        %v3755 = vunpack.c.h.b16 %v2342
        %v3756 = vunpack.c.l.b16 %v2343
        %v3757 = vunpack.c.h.b16 %v2343
        %v3758 = vunpack.c.l.b16 %v2344
        %v3759 = vunpack.c.h.b16 %v2344
        %v3760 = vunpack.c.l.b16 %v2345
        %v3761 = vunpack.c.h.b16 %v2345
        %v3762 = vunpack.c.l.b16 %v2346
        %v3763 = vunpack.c.h.b16 %v2346
        %v3764 = vunpack.c.l.b16 %v2347
        %v3765 = vunpack.c.h.b16 %v2347
        %v3766 = vunpack.c.l.b16 %v2348
        %v3767 = vunpack.c.h.b16 %v2348
        %v3768 = vunpack.c.l.b16 %v2349
        %v3769 = vunpack.c.h.b16 %v2349
        %v3770 = vunpack.c.l.b16 %v2350
        %v3771 = vunpack.c.h.b16 %v2350
        %v3772 = vunpack.c.l.b16 %v2351
        %v3773 = vunpack.c.h.b16 %v2351
        %v3774 = vunpack.c.l.b16 %v2352
        %v3775 = vunpack.c.h.b16 %v2352
        %v3776 = vunpack.c.l.b16 %v2353
        %v3777 = vunpack.c.h.b16 %v2353
        %v3778 = vunpack.c.l.b16 %v2354
        %v3779 = vunpack.c.h.b16 %v2354
        %v3780 = vunpack.c.l.b16 %v2355
        %v3781 = vunpack.c.h.b16 %v2355
        %v3782 = vunpack.c.l.b16 %v2356
        %v3783 = vunpack.c.l.b16 %v2357
        %v3784 = vunpack.c.h.b16 %v2357
        %v3785 = vunpack.c.l.b16 %v2358
        %v3786 = vunpack.c.h.b16 %v2358
        %v3787 = vunpack.c.l.b16 %v2359
        %v3788 = vunpack.c.h.b16 %v2359
        %v3789 = vunpack.c.l.b16 %v2360
        %v3790 = vunpack.c.h.b16 %v2360
        %v3791 = vunpack.c.l.b16 %v2361
        %v3792 = vunpack.c.h.b16 %v2361
        %v3793 = vunpack.c.l.b16 %v2362
        %v3794 = vunpack.c.h.b16 %v2362
        %v3795 = vunpack.c.l.b16 %v2363
        %v3796 = vunpack.c.h.b16 %v2363
        %v3797 = vunpack.c.l.b16 %v2364
        %v3798 = vunpack.c.h.b16 %v2364
        %v3799 = vunpack.c.l.b16 %v2365
        %v3800 = vunpack.c.h.b16 %v2365
        %v3801 = vunpack.c.l.b16 %v2366
        %v3802 = vunpack.c.h.b16 %v2366
        %v3803 = vunpack.c.l.b16 %v2367
        %v3804 = vunpack.c.h.b16 %v2367
        %v3805 = vunpack.c.l.b16 %v2368
        %v3806 = vunpack.c.h.b16 %v2368
        %v3807 = vunpack.c.l.b16 %v2369
        %v3808 = vunpack.c.h.b16 %v2369
        %v3809 = vunpack.c.l.b16 %v2370
        %v3810 = vunpack.c.h.b16 %v2370
        %v3811 = vunpack.c.l.b16 %v2371
        %v3812 = vunpack.c.h.b16 %v2371
        %v3813 = vunpack.c.l.b16 %v2372
        %v3814 = vunpack.c.h.b16 %v2372
        %v3815 = vunpack.c.l.b16 %v2373
        %v3816 = vunpack.c.h.b16 %v2373
        %v3817 = vunpack.c.l.b16 %v2374
        %v3818 = vunpack.c.h.b16 %v2374
        %v3819 = vunpack.c.l.b16 %v2375
        %v3820 = vunpack.c.l.b16 %v2376
        %v3821 = vunpack.c.h.b16 %v2376
        %v3822 = vunpack.c.l.b16 %v2377
        %v3823 = vunpack.c.h.b16 %v2377
        %v3824 = vunpack.c.l.b16 %v2378
        %v3825 = vunpack.c.h.b16 %v2378
        %v3826 = vunpack.c.l.b16 %v2379
        %v3827 = vunpack.c.h.b16 %v2379
        %v3828 = vunpack.c.l.b16 %v2380
        %v3829 = vunpack.c.h.b16 %v2380
        %v3830 = vunpack.c.l.b16 %v2381
        %v3831 = vunpack.c.h.b16 %v2381
        %v3832 = vunpack.c.l.b16 %v2382
        %v3833 = vunpack.c.h.b16 %v2382
        %v3834 = vunpack.c.l.b16 %v2383
        %v3835 = vunpack.c.h.b16 %v2383
        %v3836 = vunpack.c.l.b16 %v2384
        %v3837 = vunpack.c.h.b16 %v2384
        %v3838 = vunpack.c.l.b16 %v2385
        %v3839 = vunpack.c.h.b16 %v2385
        %v3840 = vunpack.c.l.b16 %v2386
        %v3841 = vunpack.c.h.b16 %v2386
        %v3842 = vunpack.c.l.b16 %v2387
        %v3843 = vunpack.c.h.b16 %v2387
        %v3844 = vunpack.c.l.b16 %v2388
        %v3845 = vunpack.c.h.b16 %v2388
        %v3846 = vunpack.c.l.b16 %v2389
        %v3847 = vunpack.c.h.b16 %v2389
        %v3848 = vunpack.c.l.b16 %v2390
        %v3849 = vunpack.c.h.b16 %v2390
        %v3850 = vunpack.c.l.b16 %v2391
        %v3851 = vunpack.c.h.b16 %v2391
        %v3852 = vunpack.c.l.b16 %v2392
        %v3853 = vunpack.c.h.b16 %v2392
        %v3854 = vunpack.c.l.b16 %v2393
        %v3855 = vunpack.c.h.b16 %v2393
        %v3856 = vunpack.c.l.b16 %v2394
        %v3857 = vunpack.c.l.b16 %v2395
        %v3858 = vunpack.c.h.b16 %v2395
        %v3859 = vunpack.c.l.b16 %v2396
        %v3860 = vunpack.c.h.b16 %v2396
        %v3861 = vunpack.c.l.b16 %v2397
        %v3862 = vunpack.c.h.b16 %v2397
        %v3863 = vunpack.c.l.b16 %v2398
        %v3864 = vunpack.c.h.b16 %v2398
        %v3865 = vunpack.c.l.b16 %v2399
        %v3866 = vunpack.c.h.b16 %v2399
        %v3867 = vunpack.c.l.b16 %v2400
        %v3868 = vunpack.c.h.b16 %v2400
        %v3869 = vunpack.c.l.b16 %v2401
        %v3870 = vunpack.c.h.b16 %v2401
        %v3871 = vunpack.c.l.b16 %v2402
        %v3872 = vunpack.c.h.b16 %v2402
        %v3873 = vunpack.c.l.b16 %v2403
        %v3874 = vunpack.c.h.b16 %v2403
        %v3875 = vunpack.c.l.b16 %v2404
        %v3876 = vunpack.c.h.b16 %v2404
        %v3877 = vunpack.c.l.b16 %v2405
        %v3878 = vunpack.c.h.b16 %v2405
        %v3879 = vunpack.c.l.b16 %v2406
        %v3880 = vunpack.c.h.b16 %v2406
        %v3881 = vunpack.c.l.b16 %v2407
        %v3882 = vunpack.c.h.b16 %v2407
        %v3883 = vunpack.c.l.b16 %v2408
        %v3884 = vunpack.c.h.b16 %v2408
        %v3885 = vunpack.c.l.b16 %v2409
        %v3886 = vunpack.c.h.b16 %v2409
        %v3887 = vunpack.c.l.b16 %v2410
        %v3888 = vunpack.c.h.b16 %v2410
        %v3889 = vunpack.c.l.b16 %v2411
        %v3890 = vunpack.c.h.b16 %v2411
        %v3891 = vunpack.c.l.b16 %v2412
        %v3892 = vunpack.c.h.b16 %v2412
        %v3893 = vunpack.c.l.b16 %v2413
        %v3894 = vunpack.c.l.b16 %v2414
        %v3895 = vunpack.c.h.b16 %v2414
        %v3896 = vunpack.c.l.b16 %v2415
        %v3897 = vunpack.c.h.b16 %v2415
        %v3898 = vunpack.c.l.b16 %v2416
        %v3899 = vunpack.c.h.b16 %v2416
        %v3900 = vunpack.c.l.b16 %v2417
        %v3901 = vunpack.c.h.b16 %v2417
        %v3902 = vunpack.c.l.b16 %v2418
        %v3903 = vunpack.c.h.b16 %v2418
        %v3904 = vunpack.c.l.b16 %v2419
        %v3905 = vunpack.c.h.b16 %v2419
        %v3906 = vunpack.c.l.b16 %v2420
        %v3907 = vunpack.c.h.b16 %v2420
        %v3908 = vunpack.c.l.b16 %v2421
        %v3909 = vunpack.c.h.b16 %v2421
        %v3910 = vunpack.c.l.b16 %v2422
        %v3911 = vunpack.c.h.b16 %v2422
        %v3912 = vunpack.c.l.b16 %v2423
        %v3913 = vunpack.c.h.b16 %v2423
        %v3914 = vunpack.c.l.b16 %v2424
        %v3915 = vunpack.c.h.b16 %v2424
        %v3916 = vunpack.c.l.b16 %v2425
        %v3917 = vunpack.c.h.b16 %v2425
        %v3918 = vunpack.c.l.b16 %v2426
        %v3919 = vunpack.c.h.b16 %v2426
        %v3920 = vunpack.c.l.b16 %v2427
        %v3921 = vunpack.c.h.b16 %v2427
        %v3922 = vunpack.c.l.b16 %v2428
        %v3923 = vunpack.c.h.b16 %v2428
        %v3924 = vunpack.c.l.b16 %v2429
        %v3925 = vunpack.c.h.b16 %v2429
        %v3926 = vunpack.c.l.b16 %v2430
        %v3927 = vunpack.c.h.b16 %v2430
        %v3928 = vunpack.c.l.b16 %v2431
        %v3929 = vunpack.c.h.b16 %v2431
        %v3930 = vunpack.c.l.b16 %v2432
        %v3931 = vunpack.c.l.b16 %v2433
        %v3932 = vunpack.c.h.b16 %v2433
        %v3933 = vunpack.c.l.b16 %v2434
        %v3934 = vunpack.c.h.b16 %v2434
        %v3935 = vunpack.c.l.b16 %v2435
        %v3936 = vunpack.c.h.b16 %v2435
        %v3937 = vunpack.c.l.b16 %v2436
        %v3938 = vunpack.c.h.b16 %v2436
        %v3939 = vunpack.c.l.b16 %v2437
        %v3940 = vunpack.c.h.b16 %v2437
        %v3941 = vunpack.c.l.b16 %v2438
        %v3942 = vunpack.c.h.b16 %v2438
        %v3943 = vunpack.c.l.b16 %v2439
        %v3944 = vunpack.c.h.b16 %v2439
        %v3945 = vunpack.c.l.b16 %v2440
        %v3946 = vunpack.c.h.b16 %v2440
        %v3947 = vunpack.c.l.b16 %v2441
        %v3948 = vunpack.c.h.b16 %v2441
        %v3949 = vunpack.c.l.b16 %v2442
        %v3950 = vunpack.c.h.b16 %v2442
        %v3951 = vunpack.c.l.b16 %v2443
        %v3952 = vunpack.c.h.b16 %v2443
        %v3953 = vunpack.c.l.b16 %v2444
        %v3954 = vunpack.c.h.b16 %v2444
        %v3955 = vunpack.c.l.b16 %v2445
        %v3956 = vunpack.c.h.b16 %v2445
        %v3957 = vunpack.c.l.b16 %v2446
        %v3958 = vunpack.c.h.b16 %v2446
        %v3959 = vunpack.c.l.b16 %v2447
        %v3960 = vunpack.c.h.b16 %v2447
        %v3961 = vunpack.c.l.b16 %v2448
        %v3962 = vunpack.c.h.b16 %v2448
        %v3963 = vunpack.c.l.b16 %v2449
        %v3964 = vunpack.c.h.b16 %v2449
        %v3965 = vunpack.c.l.b16 %v2450
        %v3966 = vunpack.c.h.b16 %v2450
        %v3967 = vunpack.c.l.b16 %v2451
        %v3968 = vunpack.c.l.b16 %v2452
        %v3969 = vunpack.c.h.b16 %v2452
        %v3970 = vunpack.c.l.b16 %v2453
        %v3971 = vunpack.c.h.b16 %v2453
        %v3972 = vunpack.c.l.b16 %v2454
        %v3973 = vunpack.c.h.b16 %v2454
        %v3974 = vunpack.c.l.b16 %v2455
        %v3975 = vunpack.c.h.b16 %v2455
        %v3976 = vunpack.c.l.b16 %v2456
        %v3977 = vunpack.c.h.b16 %v2456
        %v3978 = vunpack.c.l.b16 %v2457
        %v3979 = vunpack.c.h.b16 %v2457
        %v3980 = vunpack.c.l.b16 %v2458
        %v3981 = vunpack.c.h.b16 %v2458
        %v3982 = vunpack.c.l.b16 %v2459
        %v3983 = vunpack.c.h.b16 %v2459
        %v3984 = vunpack.c.l.b16 %v2460
        %v3985 = vunpack.c.h.b16 %v2460
        %v3986 = vunpack.c.l.b16 %v2461
        %v3987 = vunpack.c.h.b16 %v2461
        %v3988 = vunpack.c.l.b16 %v2462
        %v3989 = vunpack.c.h.b16 %v2462
        %v3990 = vunpack.c.l.b16 %v2463
        %v3991 = vunpack.c.h.b16 %v2463
        %v3992 = vunpack.c.l.b16 %v2464
        %v3993 = vunpack.c.h.b16 %v2464
        %v3994 = vunpack.c.l.b16 %v2465
        %v3995 = vunpack.c.h.b16 %v2465
        %v3996 = vunpack.c.l.b16 %v2466
        %v3997 = vunpack.c.h.b16 %v2466
        %v3998 = vunpack.c.l.b16 %v2467
        %v3999 = vunpack.c.h.b16 %v2467
        %v4000 = vunpack.c.l.b16 %v2468
        %v4001 = vunpack.c.h.b16 %v2468
        %v4002 = vunpack.c.l.b16 %v2469
        %v4003 = vunpack.c.h.b16 %v2469
        %v4004 = vunpack.c.l.b16 %v2470
        %v4005 = vunpack.c.l.b16 %v2471
        %v4006 = vunpack.c.h.b16 %v2471
        %v4007 = vunpack.c.l.b16 %v2472
        %v4008 = vunpack.c.h.b16 %v2472
        %v4009 = vunpack.c.l.b16 %v2473
        %v4010 = vunpack.c.h.b16 %v2473
        %v4011 = vunpack.c.l.b16 %v2474
        %v4012 = vunpack.c.h.b16 %v2474
        %v4013 = vunpack.c.l.b16 %v2475
        %v4014 = vunpack.c.h.b16 %v2475
        %v4015 = vunpack.c.l.b16 %v2476
        %v4016 = vunpack.c.h.b16 %v2476
        %v4017 = vunpack.c.l.b16 %v2477
        %v4018 = vunpack.c.h.b16 %v2477
        %v4019 = vunpack.c.l.b16 %v2478
        %v4020 = vunpack.c.h.b16 %v2478
        %v4021 = vunpack.c.l.b16 %v2479
        %v4022 = vunpack.c.h.b16 %v2479
        %v4023 = vunpack.c.l.b16 %v2480
        %v4024 = vunpack.c.h.b16 %v2480
        %v4025 = vunpack.c.l.b16 %v2481
        %v4026 = vunpack.c.h.b16 %v2481
        %v4027 = vunpack.c.l.b16 %v2482
        %v4028 = vunpack.c.h.b16 %v2482
        %v4029 = vunpack.c.l.b16 %v2483
        %v4030 = vunpack.c.h.b16 %v2483
        %v4031 = vunpack.c.l.b16 %v2484
        %v4032 = vunpack.c.h.b16 %v2484
        %v4033 = vunpack.c.l.b16 %v2485
        %v4034 = vunpack.c.h.b16 %v2485
        %v4035 = vunpack.c.l.b16 %v2486
        %v4036 = vunpack.c.h.b16 %v2486
        %v4037 = vunpack.c.l.b16 %v2487
        %v4038 = vunpack.c.h.b16 %v2487
        %v4039 = vunpack.c.l.b16 %v2488
        %v4040 = vunpack.c.h.b16 %v2488
        %v4041 = vunpack.c.l.b16 %v2489
        %v4042 = vunpack.c.l.b16 %v2490
        %v4043 = vunpack.c.h.b16 %v2490
        %v4044 = vunpack.c.l.b16 %v2491
        %v4045 = vunpack.c.h.b16 %v2491
        %v4046 = vunpack.c.l.b16 %v2492
        %v4047 = vunpack.c.h.b16 %v2492
        %v4048 = vunpack.c.l.b16 %v2493
        %v4049 = vunpack.c.h.b16 %v2493
        %v4050 = vunpack.c.l.b16 %v2494
        %v4051 = vunpack.c.h.b16 %v2494
        %v4052 = vunpack.c.l.b16 %v2495
        %v4053 = vunpack.c.h.b16 %v2495
        %v4054 = vunpack.c.l.b16 %v2496
        %v4055 = vunpack.c.h.b16 %v2496
        %v4056 = vunpack.c.l.b16 %v2497
        %v4057 = vunpack.c.h.b16 %v2497
        %v4058 = vunpack.c.l.b16 %v2498
        %v4059 = vunpack.c.h.b16 %v2498
        %v4060 = vunpack.c.l.b16 %v2499
        %v4061 = vunpack.c.h.b16 %v2499
        %v4062 = vunpack.c.l.b16 %v2500
        %v4063 = vunpack.c.h.b16 %v2500
        %v4064 = vunpack.c.l.b16 %v2501
        %v4065 = vunpack.c.h.b16 %v2501
        %v4066 = vunpack.c.l.b16 %v2502
        %v4067 = vunpack.c.h.b16 %v2502
        %v4068 = vunpack.c.l.b16 %v2503
        %v4069 = vunpack.c.h.b16 %v2503
        %v4070 = vunpack.c.l.b16 %v2504
        %v4071 = vunpack.c.h.b16 %v2504
        %v4072 = vunpack.c.l.b16 %v2505
        %v4073 = vunpack.c.h.b16 %v2505
        %v4074 = vunpack.c.l.b16 %v2506
        %v4075 = vunpack.c.h.b16 %v2506
        %v4076 = vunpack.c.l.b16 %v2507
        %v4077 = vunpack.c.h.b16 %v2507
        %v4078 = vunpack.c.l.b16 %v2508
        %v4079 = vunpack.c.l.b16 %v2509
        %v4080 = vunpack.c.h.b16 %v2509
        %v4081 = vunpack.c.l.b16 %v2510
        %v4082 = vunpack.c.h.b16 %v2510
        %v4083 = vunpack.c.l.b16 %v2511
        %v4084 = vunpack.c.h.b16 %v2511
        %v4085 = vunpack.c.l.b16 %v2512
        %v4086 = vunpack.c.h.b16 %v2512
        %v4087 = vunpack.c.l.b16 %v2513
        %v4088 = vunpack.c.h.b16 %v2513
        %v4089 = vunpack.c.l.b16 %v2514
        %v4090 = vunpack.c.h.b16 %v2514
        %v4091 = vunpack.c.l.b16 %v2515
        %v4092 = vunpack.c.h.b16 %v2515
        %v4093 = vunpack.c.l.b16 %v2516
        %v4094 = vunpack.c.h.b16 %v2516
        %v4095 = vunpack.c.l.b16 %v2517
        %v4096 = vunpack.c.h.b16 %v2517
        %v4097 = vunpack.c.l.b16 %v2518
        %v4098 = vunpack.c.h.b16 %v2518
        %v4099 = vunpack.c.l.b16 %v2519
        %v4100 = vunpack.c.h.b16 %v2519
        %v4101 = vunpack.c.l.b16 %v2520
        %v4102 = vunpack.c.h.b16 %v2520
        %v4103 = vunpack.c.l.b16 %v2521
        %v4104 = vunpack.c.h.b16 %v2521
        %v4105 = vunpack.c.l.b16 %v2522
        %v4106 = vunpack.c.h.b16 %v2522
        %v4107 = vunpack.c.l.b16 %v2523
        %v4108 = vunpack.c.h.b16 %v2523
        %v4109 = vunpack.c.l.b16 %v2524
        %v4110 = vunpack.c.h.b16 %v2524
        %v4111 = vunpack.c.l.b16 %v2525
        %v4112 = vunpack.c.h.b16 %v2525
        %v4113 = vunpack.c.l.b16 %v2526
        %v4114 = vunpack.c.h.b16 %v2526
        %v4115 = vunpack.c.l.b16 %v2527
        %v4116 = vunpack.c.l.b16 %v2528
        %v4117 = vunpack.c.h.b16 %v2528
        %v4118 = vunpack.c.l.b16 %v2529
        %v4119 = vunpack.c.h.b16 %v2529
        %v4120 = vunpack.c.l.b16 %v2530
        %v4121 = vunpack.c.h.b16 %v2530
        %v4122 = vunpack.c.l.b16 %v2531
        %v4123 = vunpack.c.h.b16 %v2531
        %v4124 = vunpack.c.l.b16 %v2532
        %v4125 = vunpack.c.h.b16 %v2532
        %v4126 = vunpack.c.l.b16 %v2533
        %v4127 = vunpack.c.h.b16 %v2533
        %v4128 = vunpack.c.l.b16 %v2534
        %v4129 = vunpack.c.h.b16 %v2534
        %v4130 = vunpack.c.l.b16 %v2535
        %v4131 = vunpack.c.h.b16 %v2535
        %v4132 = vunpack.c.l.b16 %v2536
        %v4133 = vunpack.c.h.b16 %v2536
        %v4134 = vunpack.c.l.b16 %v2537
        %v4135 = vunpack.c.h.b16 %v2537
        %v4136 = vunpack.c.l.b16 %v2538
        %v4137 = vunpack.c.h.b16 %v2538
        %v4138 = vunpack.c.l.b16 %v2539
        %v4139 = vunpack.c.h.b16 %v2539
        %v4140 = vunpack.c.l.b16 %v2540
        %v4141 = vunpack.c.h.b16 %v2540
        %v4142 = vunpack.c.l.b16 %v2541
        %v4143 = vunpack.c.h.b16 %v2541
        %v4144 = vunpack.c.l.b16 %v2542
        %v4145 = vunpack.c.h.b16 %v2542
        %v4146 = vunpack.c.l.b16 %v2543
        %v4147 = vunpack.c.h.b16 %v2543
        %v4148 = vunpack.c.l.b16 %v2544
        %v4149 = vunpack.c.h.b16 %v2544
        %v4150 = vunpack.c.l.b16 %v2545
        %v4151 = vunpack.c.h.b16 %v2545
        %v4152 = vunpack.c.l.b16 %v2546
        %v4153 = vunpack.c.l.b16 %v2547
        %v4154 = vunpack.c.h.b16 %v2547
        %v4155 = vunpack.c.l.b16 %v2548
        %v4156 = vunpack.c.h.b16 %v2548
        %v4157 = vunpack.c.l.b16 %v2549
        %v4158 = vunpack.c.h.b16 %v2549
        %v4159 = vunpack.c.l.b16 %v2550
        %v4160 = vunpack.c.h.b16 %v2550
        %v4161 = vunpack.c.l.b16 %v2551
        %v4162 = vunpack.c.h.b16 %v2551
        %v4163 = vunpack.c.l.b16 %v2552
        %v4164 = vunpack.c.h.b16 %v2552
        %v4165 = vunpack.c.l.b16 %v2553
        %v4166 = vunpack.c.h.b16 %v2553
        %v4167 = vunpack.c.l.b16 %v2554
        %v4168 = vunpack.c.h.b16 %v2554
        %v4169 = vunpack.c.l.b16 %v2555
        %v4170 = vunpack.c.h.b16 %v2555
        %v4171 = vunpack.c.l.b16 %v2556
        %v4172 = vunpack.c.h.b16 %v2556
        %v4173 = vunpack.c.l.b16 %v2557
        %v4174 = vunpack.c.h.b16 %v2557
        %v4175 = vunpack.c.l.b16 %v2558
        %v4176 = vunpack.c.h.b16 %v2558
        %v4177 = vunpack.c.l.b16 %v2559
        %v4178 = vunpack.c.h.b16 %v2559
        %v4179 = vunpack.c.l.b16 %v2560
        %v4180 = vunpack.c.h.b16 %v2560
        %v4181 = vunpack.c.l.b16 %v2561
        %v4182 = vunpack.c.h.b16 %v2561
        %v4183 = vunpack.c.l.b16 %v2562
        %v4184 = vunpack.c.h.b16 %v2562
        %v4185 = vunpack.c.l.b16 %v2563
        %v4186 = vunpack.c.h.b16 %v2563
        %v4187 = vunpack.c.l.b16 %v2564
        %v4188 = vunpack.c.h.b16 %v2564
        %v4189 = vunpack.c.l.b16 %v2565
        %v4190 = vunpack.c.l.b16 %v2566
        %v4191 = vunpack.c.h.b16 %v2566
        %v4192 = vunpack.c.l.b16 %v2567
        %v4193 = vunpack.c.h.b16 %v2567
        %v4194 = vunpack.c.l.b16 %v2568
        %v4195 = vunpack.c.h.b16 %v2568
        %v4196 = vunpack.c.l.b16 %v2569
        %v4197 = vunpack.c.h.b16 %v2569
        %v4198 = vunpack.c.l.b16 %v2570
        %v4199 = vunpack.c.h.b16 %v2570
        %v4200 = vunpack.c.l.b16 %v2571
        %v4201 = vunpack.c.h.b16 %v2571
        %v4202 = vunpack.c.l.b16 %v2572
        %v4203 = vunpack.c.h.b16 %v2572
        %v4204 = vunpack.c.l.b16 %v2573
        %v4205 = vunpack.c.h.b16 %v2573
        %v4206 = vunpack.c.l.b16 %v2574
        %v4207 = vunpack.c.h.b16 %v2574
        %v4208 = vunpack.c.l.b16 %v2575
        %v4209 = vunpack.c.h.b16 %v2575
        %v4210 = vunpack.c.l.b16 %v2576
        %v4211 = vunpack.c.h.b16 %v2576
        %v4212 = vunpack.c.l.b16 %v2577
        %v4213 = vunpack.c.h.b16 %v2577
        %v4214 = vunpack.c.l.b16 %v2578
        %v4215 = vunpack.c.h.b16 %v2578
        %v4216 = vunpack.c.l.b16 %v2579
        %v4217 = vunpack.c.h.b16 %v2579
        %v4218 = vunpack.c.l.b16 %v2580
        %v4219 = vunpack.c.h.b16 %v2580
        %v4220 = vunpack.c.l.b16 %v2581
        %v4221 = vunpack.c.h.b16 %v2581
        %v4222 = vunpack.c.l.b16 %v2582
        %v4223 = vunpack.c.h.b16 %v2582
        %v4224 = vunpack.c.l.b16 %v2583
        %v4225 = vunpack.c.h.b16 %v2583
        %v4226 = vunpack.c.l.b16 %v2584
        %v4227 = vunpack.c.l.b16 %v2585
        %v4228 = vunpack.c.h.b16 %v2585
        %v4229 = vunpack.c.l.b16 %v2586
        %v4230 = vunpack.c.h.b16 %v2586
        %v4231 = vunpack.c.l.b16 %v2587
        %v4232 = vunpack.c.h.b16 %v2587
        %v4233 = vunpack.c.l.b16 %v2588
        %v4234 = vunpack.c.h.b16 %v2588
        %v4235 = vunpack.c.l.b16 %v2589
        %v4236 = vunpack.c.h.b16 %v2589
        %v4237 = vunpack.c.l.b16 %v2590
        %v4238 = vunpack.c.h.b16 %v2590
        %v4239 = vunpack.c.l.b16 %v2591
        %v4240 = vunpack.c.h.b16 %v2591
        %v4241 = vunpack.c.l.b16 %v2592
        %v4242 = vunpack.c.h.b16 %v2592
        %v4243 = vunpack.c.l.b16 %v2593
        %v4244 = vunpack.c.h.b16 %v2593
        %v4245 = vunpack.c.l.b16 %v2594
        %v4246 = vunpack.c.h.b16 %v2594
        %v4247 = vunpack.c.l.b16 %v2595
        %v4248 = vunpack.c.h.b16 %v2595
        %v4249 = vunpack.c.l.b16 %v2596
        %v4250 = vunpack.c.h.b16 %v2596
        %v4251 = vunpack.c.l.b16 %v2597
        %v4252 = vunpack.c.h.b16 %v2597
        %v4253 = vunpack.c.l.b16 %v2598
        %v4254 = vunpack.c.h.b16 %v2598
        %v4255 = vunpack.c.l.b16 %v2599
        %v4256 = vunpack.c.h.b16 %v2599
        %v4257 = vunpack.c.l.b16 %v2600
        %v4258 = vunpack.c.h.b16 %v2600
        %v4259 = vunpack.c.l.b16 %v2601
        %v4260 = vunpack.c.h.b16 %v2601
        %v4261 = vunpack.c.l.b16 %v2602
        %v4262 = vunpack.c.h.b16 %v2602
        %v4263 = vunpack.c.l.b16 %v2603
        %v4264 = vunpack.c.l.b16 %v2604
        %v4265 = vunpack.c.h.b16 %v2604
        %v4266 = vunpack.c.l.b16 %v2605
        %v4267 = vunpack.c.h.b16 %v2605
        %v4268 = vunpack.c.l.b16 %v2606
        %v4269 = vunpack.c.h.b16 %v2606
        %v4270 = vunpack.c.l.b16 %v2607
        %v4271 = vunpack.c.h.b16 %v2607
        %v4272 = vunpack.c.l.b16 %v2608
        %v4273 = vunpack.c.h.b16 %v2608
        %v4274 = vunpack.c.l.b16 %v2609
        %v4275 = vunpack.c.h.b16 %v2609
        %v4276 = vunpack.c.l.b16 %v2610
        %v4277 = vunpack.c.h.b16 %v2610
        %v4278 = vunpack.c.l.b16 %v2611
        %v4279 = vunpack.c.h.b16 %v2611
        %v4280 = vunpack.c.l.b16 %v2612
        %v4281 = vunpack.c.h.b16 %v2612
        %v4282 = vunpack.c.l.b16 %v2613
        %v4283 = vunpack.c.h.b16 %v2613
        %v4284 = vunpack.c.l.b16 %v2614
        %v4285 = vunpack.c.h.b16 %v2614
        %v4286 = vunpack.c.l.b16 %v2615
        %v4287 = vunpack.c.h.b16 %v2615
        %v4288 = vunpack.c.l.b16 %v2616
        %v4289 = vunpack.c.h.b16 %v2616
        %v4290 = vunpack.c.l.b16 %v2617
        %v4291 = vunpack.c.h.b16 %v2617
        %v4292 = vunpack.c.l.b16 %v2618
        %v4293 = vunpack.c.h.b16 %v2618
        %v4294 = vunpack.c.l.b16 %v2619
        %v4295 = vunpack.c.h.b16 %v2619
        %v4296 = vunpack.c.l.b16 %v2620
        %v4297 = vunpack.c.h.b16 %v2620
        %v4298 = vunpack.c.l.b16 %v2621
        %v4299 = vunpack.c.h.b16 %v2621
        %v4300 = vunpack.c.l.b16 %v2622
        %v4301 = vunpack.c.l.b16 %v2623
        %v4302 = vunpack.c.h.b16 %v2623
        %v4303 = vunpack.c.l.b16 %v2624
        %v4304 = vunpack.c.h.b16 %v2624
        %v4305 = vunpack.c.l.b16 %v2625
        %v4306 = vunpack.c.h.b16 %v2625
        %v4307 = vunpack.c.l.b16 %v2626
        %v4308 = vunpack.c.h.b16 %v2626
        %v4309 = vunpack.c.l.b16 %v2627
        %v4310 = vunpack.c.h.b16 %v2627
        %v4311 = vunpack.c.l.b16 %v2628
        %v4312 = vunpack.c.h.b16 %v2628
        %v4313 = vunpack.c.l.b16 %v2629
        %v4314 = vunpack.c.h.b16 %v2629
        %v4315 = vunpack.c.l.b16 %v2630
        %v4316 = vunpack.c.h.b16 %v2630
        %v4317 = vunpack.c.l.b16 %v2631
        %v4318 = vunpack.c.h.b16 %v2631
        %v4319 = vunpack.c.l.b16 %v2632
        %v4320 = vunpack.c.h.b16 %v2632
        %v4321 = vunpack.c.l.b16 %v2633
        %v4322 = vunpack.c.h.b16 %v2633
        %v4323 = vunpack.c.l.b16 %v2634
        %v4324 = vunpack.c.h.b16 %v2634
        %v4325 = vunpack.c.l.b16 %v2635
        %v4326 = vunpack.c.h.b16 %v2635
        %v4327 = vunpack.c.l.b16 %v2636
        %v4328 = vunpack.c.h.b16 %v2636
        %v4329 = vunpack.c.l.b16 %v2637
        %v4330 = vunpack.c.h.b16 %v2637
        %v4331 = vunpack.c.l.b16 %v2638
        %v4332 = vunpack.c.h.b16 %v2638
        %v4333 = vunpack.c.l.b16 %v2639
        %v4334 = vunpack.c.h.b16 %v2639
        %v4335 = vunpack.c.l.b16 %v2640
        %v4336 = vunpack.c.h.b16 %v2640
        %v4337 = vunpack.c.l.b16 %v2641
        %v4338 = vunpack.c.l.b16 %v2642
        %v4339 = vunpack.c.h.b16 %v2642
        %v4340 = vunpack.c.l.b16 %v2643
        %v4341 = vunpack.c.h.b16 %v2643
        %v4342 = vunpack.c.l.b16 %v2644
        %v4343 = vunpack.c.h.b16 %v2644
        %v4344 = vunpack.c.l.b16 %v2645
        %v4345 = vunpack.c.h.b16 %v2645
        %v4346 = vunpack.c.l.b16 %v2646
        %v4347 = vunpack.c.h.b16 %v2646
        %v4348 = vunpack.c.l.b16 %v2647
        %v4349 = vunpack.c.h.b16 %v2647
        %v4350 = vunpack.c.l.b16 %v2648
        %v4351 = vunpack.c.h.b16 %v2648
        %v4352 = vunpack.c.l.b16 %v2649
        %v4353 = vunpack.c.h.b16 %v2649
        %v4354 = vunpack.c.l.b16 %v2650
        %v4355 = vunpack.c.h.b16 %v2650
        %v4356 = vunpack.c.l.b16 %v2651
        %v4357 = vunpack.c.h.b16 %v2651
        %v4358 = vunpack.c.l.b16 %v2652
        %v4359 = vunpack.c.h.b16 %v2652
        %v4360 = vunpack.c.l.b16 %v2653
        %v4361 = vunpack.c.h.b16 %v2653
        %v4362 = vunpack.c.l.b16 %v2654
        %v4363 = vunpack.c.h.b16 %v2654
        %v4364 = vunpack.c.l.b16 %v2655
        %v4365 = vunpack.c.h.b16 %v2655
        %v4366 = vunpack.c.l.b16 %v2656
        %v4367 = vunpack.c.h.b16 %v2656
        %v4368 = vunpack.c.l.b16 %v2657
        %v4369 = vunpack.c.h.b16 %v2657
        %v4370 = vunpack.c.l.b16 %v2658
        %v4371 = vunpack.c.h.b16 %v2658
        %v4372 = vunpack.c.l.b16 %v2659
        %v4373 = vunpack.c.h.b16 %v2659
        %v4374 = vunpack.c.l.b16 %v2660
        %v4375 = vunpack.c.l.b16 %v2661
        %v4376 = vunpack.c.h.b16 %v2661
        %v4377 = vunpack.c.l.b16 %v2662
        %v4378 = vunpack.c.h.b16 %v2662
        %v4379 = vunpack.c.l.b16 %v2663
        %v4380 = vunpack.c.h.b16 %v2663
        %v4381 = vunpack.c.l.b16 %v2664
        %v4382 = vunpack.c.h.b16 %v2664
        %v4383 = vunpack.c.l.b16 %v2665
        %v4384 = vunpack.c.h.b16 %v2665
        %v4385 = vunpack.c.l.b16 %v2666
        %v4386 = vunpack.c.h.b16 %v2666
        %v4387 = vunpack.c.l.b16 %v2667
        %v4388 = vunpack.c.h.b16 %v2667
        %v4389 = vunpack.c.l.b16 %v2668
        %v4390 = vunpack.c.h.b16 %v2668
        %v4391 = vunpack.c.l.b16 %v2669
        %v4392 = vunpack.c.h.b16 %v2669
        %v4393 = vunpack.c.l.b16 %v2670
        %v4394 = vunpack.c.h.b16 %v2670
        %v4395 = vunpack.c.l.b16 %v2671
        %v4396 = vunpack.c.h.b16 %v2671
        %v4397 = vunpack.c.l.b16 %v2672
        %v4398 = vunpack.c.h.b16 %v2672
        %v4399 = vunpack.c.l.b16 %v2673
        %v4400 = vunpack.c.h.b16 %v2673
        %v4401 = vunpack.c.l.b16 %v2674
        %v4402 = vunpack.c.h.b16 %v2674
        %v4403 = vunpack.c.l.b16 %v2675
        %v4404 = vunpack.c.h.b16 %v2675
        %v4405 = vunpack.c.l.b16 %v2676
        %v4406 = vunpack.c.h.b16 %v2676
        %v4407 = vunpack.c.l.b16 %v2677
        %v4408 = vunpack.c.h.b16 %v2677
        %v4409 = vunpack.c.l.b16 %v2678
        %v4410 = vunpack.c.h.b16 %v2678
        %v4411 = vunpack.c.l.b16 %v2679
        %v4412 = vunpack.c.l.b16 %v2680
        %v4413 = vunpack.c.h.b16 %v2680
        %v4414 = vunpack.c.l.b16 %v2681
        %v4415 = vunpack.c.h.b16 %v2681
        %v4416 = vunpack.c.l.b16 %v2682
        %v4417 = vunpack.c.h.b16 %v2682
        %v4418 = vunpack.c.l.b16 %v2683
        %v4419 = vunpack.c.h.b16 %v2683
        %v4420 = vunpack.c.l.b16 %v2684
        %v4421 = vunpack.c.h.b16 %v2684
        %v4422 = vunpack.c.l.b16 %v2685
        %v4423 = vunpack.c.h.b16 %v2685
        %v4424 = vunpack.c.l.b16 %v2686
        %v4425 = vunpack.c.h.b16 %v2686
        %v4426 = vunpack.c.l.b16 %v2687
        %v4427 = vunpack.c.h.b16 %v2687
        %v4428 = vunpack.c.l.b16 %v2688
        %v4429 = vunpack.c.h.b16 %v2688
        %v4430 = vunpack.c.l.b16 %v2689
        %v4431 = vunpack.c.h.b16 %v2689
        %v4432 = vunpack.c.l.b16 %v2690
        %v4433 = vunpack.c.h.b16 %v2690
        %v4434 = vunpack.c.l.b16 %v2691
        %v4435 = vunpack.c.h.b16 %v2691
        %v4436 = vunpack.c.l.b16 %v2692
        %v4437 = vunpack.c.h.b16 %v2692
        %v4438 = vunpack.c.l.b16 %v2693
        %v4439 = vunpack.c.h.b16 %v2693
        %v4440 = vunpack.c.l.b16 %v2694
        %v4441 = vunpack.c.h.b16 %v2694
        %v4442 = vunpack.c.l.b16 %v2695
        %v4443 = vunpack.c.h.b16 %v2695
        %v4444 = vunpack.c.l.b16 %v2696
        %v4445 = vunpack.c.h.b16 %v2696
        %v4446 = vunpack.c.l.b16 %v2697
        %v4447 = vunpack.c.h.b16 %v2697
        %v4448 = vunpack.c.l.b16 %v2698
        %v4449 = vunpack.c.l.b16 %v2699
        %v4450 = vunpack.c.h.b16 %v2699
        %v4451 = vunpack.c.l.b16 %v2700
        %v4452 = vunpack.c.h.b16 %v2700
        %v4453 = vunpack.c.l.b16 %v2701
        %v4454 = vunpack.c.h.b16 %v2701
        %v4455 = vunpack.c.l.b16 %v2702
        %v4456 = vunpack.c.h.b16 %v2702
        %v4457 = vunpack.c.l.b16 %v2703
        %v4458 = vunpack.c.h.b16 %v2703
        %v4459 = vunpack.c.l.b16 %v2704
        %v4460 = vunpack.c.h.b16 %v2704
        %v4461 = vunpack.c.l.b16 %v2705
        %v4462 = vunpack.c.h.b16 %v2705
        %v4463 = vunpack.c.l.b16 %v2706
        %v4464 = vunpack.c.h.b16 %v2706
        %v4465 = vunpack.c.l.b16 %v2707
        %v4466 = vunpack.c.h.b16 %v2707
        %v4467 = vunpack.c.l.b16 %v2708
        %v4468 = vunpack.c.h.b16 %v2708
        %v4469 = vunpack.c.l.b16 %v2709
        %v4470 = vunpack.c.h.b16 %v2709
        %v4471 = vunpack.c.l.b16 %v2710
        %v4472 = vunpack.c.h.b16 %v2710
        %v4473 = vunpack.c.l.b16 %v2711
        %v4474 = vunpack.c.h.b16 %v2711
        %v4475 = vunpack.c.l.b16 %v2712
        %v4476 = vunpack.c.h.b16 %v2712
        %v4477 = vunpack.c.l.b16 %v2713
        %v4478 = vunpack.c.h.b16 %v2713
        %v4479 = vunpack.c.l.b16 %v2714
        %v4480 = vunpack.c.h.b16 %v2714
        %v4481 = vunpack.c.l.b16 %v2715
        %v4482 = vunpack.c.h.b16 %v2715
        %v4483 = vunpack.c.l.b16 %v2716
        %v4484 = vunpack.c.h.b16 %v2716
        %v4485 = vunpack.c.l.b16 %v2717
        %v4486 = vunpack.c.l.b16 %v2718
        %v4487 = vunpack.c.h.b16 %v2718
        %v4488 = vunpack.c.l.b16 %v2719
        %v4489 = vunpack.c.h.b16 %v2719
        %v4490 = vunpack.c.l.b16 %v2720
        %v4491 = vunpack.c.h.b16 %v2720
        %v4492 = vunpack.c.l.b16 %v2721
        %v4493 = vunpack.c.h.b16 %v2721
        %v4494 = vunpack.c.l.b16 %v2722
        %v4495 = vunpack.c.h.b16 %v2722
        %v4496 = vunpack.c.l.b16 %v2723
        %v4497 = vunpack.c.h.b16 %v2723
        %v4498 = vunpack.c.l.b16 %v2724
        %v4499 = vunpack.c.h.b16 %v2724
        %v4500 = vunpack.c.l.b16 %v2725
        %v4501 = vunpack.c.h.b16 %v2725
        %v4502 = vunpack.c.l.b16 %v2726
        %v4503 = vunpack.c.h.b16 %v2726
        %v4504 = vunpack.c.l.b16 %v2727
        %v4505 = vunpack.c.h.b16 %v2727
        %v4506 = vunpack.c.l.b16 %v2728
        %v4507 = vunpack.c.h.b16 %v2728
        %v4508 = vunpack.c.l.b16 %v2729
        %v4509 = vunpack.c.h.b16 %v2729
        %v4510 = vunpack.c.l.b16 %v2730
        %v4511 = vunpack.c.h.b16 %v2730
        %v4512 = vunpack.c.l.b16 %v2731
        %v4513 = vunpack.c.h.b16 %v2731
        %v4514 = vunpack.c.l.b16 %v2732
        %v4515 = vunpack.c.h.b16 %v2732
        %v4516 = vunpack.c.l.b16 %v2733
        %v4517 = vunpack.c.h.b16 %v2733
        %v4518 = vunpack.c.l.b16 %v2734
        %v4519 = vunpack.c.h.b16 %v2734
        %v4520 = vunpack.c.l.b16 %v2735
        %v4521 = vunpack.c.h.b16 %v2735
        %v4522 = vunpack.c.l.b16 %v2736
        %v4523 = vunpack.c.l.b16 %v2737
        %v4524 = vunpack.c.h.b16 %v2737
        %v4525 = vunpack.c.l.b16 %v2738
        %v4526 = vunpack.c.h.b16 %v2738
        %v4527 = vunpack.c.l.b16 %v2739
        %v4528 = vunpack.c.h.b16 %v2739
        %v4529 = vunpack.c.l.b16 %v2740
        %v4530 = vunpack.c.h.b16 %v2740
        %v4531 = vunpack.c.l.b16 %v2741
        %v4532 = vunpack.c.h.b16 %v2741
        %v4533 = vunpack.c.l.b16 %v2742
        %v4534 = vunpack.c.h.b16 %v2742
        %v4535 = vunpack.c.l.b16 %v2743
        %v4536 = vunpack.c.h.b16 %v2743
        %v4537 = vunpack.c.l.b16 %v2744
        %v4538 = vunpack.c.h.b16 %v2744
        %v4539 = vunpack.c.l.b16 %v2745
        %v4540 = vunpack.c.h.b16 %v2745
        %v4541 = vunpack.c.l.b16 %v2746
        %v4542 = vunpack.c.h.b16 %v2746
        %v4543 = vunpack.c.l.b16 %v2747
        %v4544 = vunpack.c.h.b16 %v2747
        %v4545 = vunpack.c.l.b16 %v2748
        %v4546 = vunpack.c.h.b16 %v2748
        %v4547 = vunpack.c.l.b16 %v2749
        %v4548 = vunpack.c.h.b16 %v2749
        %v4549 = vunpack.c.l.b16 %v2750
        %v4550 = vunpack.c.h.b16 %v2750
        %v4551 = vunpack.c.l.b16 %v2751
        %v4552 = vunpack.c.h.b16 %v2751
        %v4553 = vunpack.c.l.b16 %v2752
        %v4554 = vunpack.c.h.b16 %v2752
        %v4555 = vunpack.c.l.b16 %v2753
        %v4556 = vunpack.c.h.b16 %v2753
        %v4557 = vunpack.c.l.b16 %v2754
        %v4558 = vunpack.c.h.b16 %v2754
        %v4559 = vunpack.c.l.b16 %v2755
        %v4560 = vunpack.c.l.b16 %v2756
        %v4561 = vunpack.c.h.b16 %v2756
        %v4562 = vunpack.c.l.b16 %v2757
        %v4563 = vunpack.c.h.b16 %v2757
        %v4564 = vunpack.c.l.b16 %v2758
        %v4565 = vunpack.c.h.b16 %v2758
        %v4566 = vunpack.c.l.b16 %v2759
        %v4567 = vunpack.c.h.b16 %v2759
        %v4568 = vunpack.c.l.b16 %v2760
        %v4569 = vunpack.c.h.b16 %v2760
        %v4570 = vunpack.c.l.b16 %v2761
        %v4571 = vunpack.c.h.b16 %v2761
        %v4572 = vunpack.c.l.b16 %v2762
        %v4573 = vunpack.c.h.b16 %v2762
        %v4574 = vunpack.c.l.b16 %v2763
        %v4575 = vunpack.c.h.b16 %v2763
        %v4576 = vunpack.c.l.b16 %v2764
        %v4577 = vunpack.c.h.b16 %v2764
        %v4578 = vunpack.c.l.b16 %v2765
        %v4579 = vunpack.c.h.b16 %v2765
        %v4580 = vunpack.c.l.b16 %v2766
        %v4581 = vunpack.c.h.b16 %v2766
        %v4582 = vunpack.c.l.b16 %v2767
        %v4583 = vunpack.c.h.b16 %v2767
        %v4584 = vunpack.c.l.b16 %v2768
        %v4585 = vunpack.c.h.b16 %v2768
        %v4586 = vunpack.c.l.b16 %v2769
        %v4587 = vunpack.c.h.b16 %v2769
        %v4588 = vunpack.c.l.b16 %v2770
        %v4589 = vunpack.c.h.b16 %v2770
        %v4590 = vunpack.c.l.b16 %v2771
        %v4591 = vunpack.c.h.b16 %v2771
        %v4592 = vunpack.c.l.b16 %v2772
        %v4593 = vunpack.c.h.b16 %v2772
        %v4594 = vunpack.c.l.b16 %v2773
        %v4595 = vunpack.c.h.b16 %v2773
        %v4596 = vunpack.c.l.b16 %v2774
        %v4597 = vunpack.c.l.b16 %v2775
        %v4598 = vunpack.c.h.b16 %v2775
        %v4599 = vunpack.c.l.b16 %v2776
        %v4600 = vunpack.c.h.b16 %v2776
        %v4601 = vunpack.c.l.b16 %v2777
        %v4602 = vunpack.c.h.b16 %v2777
        %v4603 = vunpack.c.l.b16 %v2778
        %v4604 = vunpack.c.h.b16 %v2778
        %v4605 = vunpack.c.l.b16 %v2779
        %v4606 = vunpack.c.h.b16 %v2779
        %v4607 = vunpack.c.l.b16 %v2780
        %v4608 = vunpack.c.h.b16 %v2780
        %v4609 = vunpack.c.l.b16 %v2781
        %v4610 = vunpack.c.h.b16 %v2781
        %v4611 = vunpack.c.l.b16 %v2782
        %v4612 = vunpack.c.h.b16 %v2782
        %v4613 = vunpack.c.l.b16 %v2783
        %v4614 = vunpack.c.h.b16 %v2783
        %v4615 = vunpack.c.l.b16 %v2784
        %v4616 = vunpack.c.h.b16 %v2784
        %v4617 = vunpack.c.l.b16 %v2785
        %v4618 = vunpack.c.h.b16 %v2785
        %v4619 = vunpack.c.l.b16 %v2786
        %v4620 = vunpack.c.h.b16 %v2786
        %v4621 = vunpack.c.l.b16 %v2787
        %v4622 = vunpack.c.h.b16 %v2787
        %v4623 = vunpack.c.l.b16 %v2788
        %v4624 = vunpack.c.h.b16 %v2788
        %v4625 = vunpack.c.l.b16 %v2789
        %v4626 = vunpack.c.h.b16 %v2789
        %v4627 = vunpack.c.l.b16 %v2790
        %v4628 = vunpack.c.h.b16 %v2790
        %v4629 = vunpack.c.l.b16 %v2791
        %v4630 = vunpack.c.h.b16 %v2791
        %v4631 = vunpack.c.l.b16 %v2792
        %v4632 = vunpack.c.h.b16 %v2792
        %v4633 = vunpack.c.l.b16 %v2793
        %v4634 = vunpack.c.l.b16 %v2794
        %v4635 = vunpack.c.h.b16 %v2794
        %v4636 = vunpack.c.l.b16 %v2795
        %v4637 = vunpack.c.h.b16 %v2795
        %v4638 = vunpack.c.l.b16 %v2796
        %v4639 = vunpack.c.h.b16 %v2796
        %v4640 = vunpack.c.l.b16 %v2797
        %v4641 = vunpack.c.h.b16 %v2797
        %v4642 = vunpack.c.l.b16 %v2798
        %v4643 = vunpack.c.h.b16 %v2798
        %v4644 = vunpack.c.l.b16 %v2799
        %v4645 = vunpack.c.h.b16 %v2799
        %v4646 = vunpack.c.l.b16 %v2800
        %v4647 = vunpack.c.h.b16 %v2800
        %v4648 = vunpack.c.l.b16 %v2801
        %v4649 = vunpack.c.h.b16 %v2801
        %v4650 = vunpack.c.l.b16 %v2802
        %v4651 = vunpack.c.h.b16 %v2802
        %v4652 = vunpack.c.l.b16 %v2803
        %v4653 = vunpack.c.h.b16 %v2803
        %v4654 = vunpack.c.l.b16 %v2804
        %v4655 = vunpack.c.h.b16 %v2804
        %v4656 = vunpack.c.l.b16 %v2805
        %v4657 = vunpack.c.h.b16 %v2805
        %v4658 = vunpack.c.l.b16 %v2806
        %v4659 = vunpack.c.h.b16 %v2806
        %v4660 = vunpack.c.l.b16 %v2807
        %v4661 = vunpack.c.h.b16 %v2807
        %v4662 = vunpack.c.l.b16 %v2808
        %v4663 = vunpack.c.h.b16 %v2808
        %v4664 = vunpack.c.l.b16 %v2809
        %v4665 = vunpack.c.h.b16 %v2809
        %v4666 = vunpack.c.l.b16 %v2810
        %v4667 = vunpack.c.h.b16 %v2810
        %v4668 = vunpack.c.l.b16 %v2811
        %v4669 = vunpack.c.h.b16 %v2811
        %v4670 = vunpack.c.l.b16 %v2812
        %v4671 = vunpack.c.l.b16 %v2813
        %v4672 = vunpack.c.h.b16 %v2813
        %v4673 = vunpack.c.l.b16 %v2814
        %v4674 = vunpack.c.h.b16 %v2814
        %v4675 = vunpack.c.l.b16 %v2815
        %v4676 = vunpack.c.h.b16 %v2815
        %v4677 = vunpack.c.l.b16 %v2816
        %v4678 = vunpack.c.h.b16 %v2816
        %v4679 = vunpack.c.l.b16 %v2817
        %v4680 = vunpack.c.h.b16 %v2817
        %v4681 = vunpack.c.l.b16 %v2818
        %v4682 = vunpack.c.h.b16 %v2818
        %v4683 = vunpack.c.l.b16 %v2819
        %v4684 = vunpack.c.h.b16 %v2819
        %v4685 = vunpack.c.l.b16 %v2820
        %v4686 = vunpack.c.h.b16 %v2820
        %v4687 = vunpack.c.l.b16 %v2821
        %v4688 = vunpack.c.h.b16 %v2821
        %v4689 = vunpack.c.l.b16 %v2822
        %v4690 = vunpack.c.h.b16 %v2822
        %v4691 = vunpack.c.l.b16 %v2823
        %v4692 = vunpack.c.h.b16 %v2823
        %v4693 = vunpack.c.l.b16 %v2824
        %v4694 = vunpack.c.h.b16 %v2824
        %v4695 = vunpack.c.l.b16 %v2825
        %v4696 = vunpack.c.h.b16 %v2825
        %v4697 = vunpack.c.l.b16 %v2826
        %v4698 = vunpack.c.h.b16 %v2826
        %v4699 = vunpack.c.l.b16 %v2827
        %v4700 = vunpack.c.h.b16 %v2827
        %v4701 = vunpack.c.l.b16 %v2828
        %v4702 = vunpack.c.h.b16 %v2828
        %v4703 = vunpack.c.l.b16 %v2829
        %v4704 = vunpack.c.h.b16 %v2829
        %v4705 = vunpack.c.l.b16 %v2830
        %v4706 = vunpack.c.h.b16 %v2830
        %v4707 = vunpack.c.l.b16 %v2831
        %v4708 = vpack.c.b16 %v3561, %v3524
        %v4709 = vpack.c.b16 %v3562, %v3525
        %v4710 = vpack.c.b16 %v3563, %v3526
        %v4711 = vpack.c.b16 %v3564, %v3527
        %v4712 = vpack.c.b16 %v3565, %v3528
        %v4713 = vpack.c.b16 %v3566, %v3529
        %v4714 = vpack.c.b16 %v3567, %v3530
        %v4715 = vpack.c.b16 %v3568, %v3531
        %v4716 = vpack.c.b16 %v3569, %v3532
        %v4717 = vpack.c.b16 %v3570, %v3533
        %v4718 = vpack.c.b16 %v3571, %v3534
        %v4719 = vpack.c.b16 %v3572, %v3535
        %v4720 = vpack.c.b16 %v3573, %v3536
        %v4721 = vpack.c.b16 %v3574, %v3537
        %v4722 = vpack.c.b16 %v3575, %v3538
        %v4723 = vpack.c.b16 %v3576, %v3539
        %v4724 = vpack.c.b16 %v3577, %v3540
        %v4725 = vpack.c.b16 %v3578, %v3541
        %v4726 = vpack.c.b16 %v3579, %v3542
        %v4727 = vpack.c.b16 %v3580, %v3543
        %v4728 = vpack.c.b16 %v3581, %v3544
        %v4729 = vpack.c.b16 %v3582, %v3545
        %v4730 = vpack.c.b16 %v3583, %v3546
        %v4731 = vpack.c.b16 %v3584, %v3547
        %v4732 = vpack.c.b16 %v3585, %v3548
        %v4733 = vpack.c.b16 %v3586, %v3549
        %v4734 = vpack.c.b16 %v3587, %v3550
        %v4735 = vpack.c.b16 %v3588, %v3551
        %v4736 = vpack.c.b16 %v3589, %v3552
        %v4737 = vpack.c.b16 %v3590, %v3553
        %v4738 = vpack.c.b16 %v3591, %v3554
        %v4739 = vpack.c.b16 %v3592, %v3555
        %v4740 = vpack.c.b16 %v3593, %v3556
        %v4741 = vpack.c.b16 %v3594, %v3557
        %v4742 = vpack.c.b16 %v3595, %v3558
        %v4743 = vpack.c.b16 %v3596, %v3559
        %v4744 = vpack.c.b16 %v3597, %v3560
        %v4745 = vpack.c.b16 %v3635, %v3598
        %v4746 = vpack.c.b16 %v3636, %v3599
        %v4747 = vpack.c.b16 %v3637, %v3600
        %v4748 = vpack.c.b16 %v3638, %v3601
        %v4749 = vpack.c.b16 %v3639, %v3602
        %v4750 = vpack.c.b16 %v3640, %v3603
        %v4751 = vpack.c.b16 %v3641, %v3604
        %v4752 = vpack.c.b16 %v3642, %v3605
        %v4753 = vpack.c.b16 %v3643, %v3606
        %v4754 = vpack.c.b16 %v3644, %v3607
        %v4755 = vpack.c.b16 %v3645, %v3608
        %v4756 = vpack.c.b16 %v3646, %v3609
        %v4757 = vpack.c.b16 %v3647, %v3610
        %v4758 = vpack.c.b16 %v3648, %v3611
        %v4759 = vpack.c.b16 %v3649, %v3612
        %v4760 = vpack.c.b16 %v3650, %v3613
        %v4761 = vpack.c.b16 %v3651, %v3614
        %v4762 = vpack.c.b16 %v3652, %v3615
        %v4763 = vpack.c.b16 %v3653, %v3616
        %v4764 = vpack.c.b16 %v3654, %v3617
        %v4765 = vpack.c.b16 %v3655, %v3618
        %v4766 = vpack.c.b16 %v3656, %v3619
        %v4767 = vpack.c.b16 %v3657, %v3620
        %v4768 = vpack.c.b16 %v3658, %v3621
        %v4769 = vpack.c.b16 %v3659, %v3622
        %v4770 = vpack.c.b16 %v3660, %v3623
        %v4771 = vpack.c.b16 %v3661, %v3624
        %v4772 = vpack.c.b16 %v3662, %v3625
        %v4773 = vpack.c.b16 %v3663, %v3626
        %v4774 = vpack.c.b16 %v3664, %v3627
        %v4775 = vpack.c.b16 %v3665, %v3628
        %v4776 = vpack.c.b16 %v3666, %v3629
        %v4777 = vpack.c.b16 %v3667, %v3630
        %v4778 = vpack.c.b16 %v3668, %v3631
        %v4779 = vpack.c.b16 %v3669, %v3632
        %v4780 = vpack.c.b16 %v3670, %v3633
        %v4781 = vpack.c.b16 %v3671, %v3634
        %v4782 = vpack.c.b16 %v3709, %v3672
        %v4783 = vpack.c.b16 %v3710, %v3673
        %v4784 = vpack.c.b16 %v3711, %v3674
        %v4785 = vpack.c.b16 %v3712, %v3675
        %v4786 = vpack.c.b16 %v3713, %v3676
        %v4787 = vpack.c.b16 %v3714, %v3677
        %v4788 = vpack.c.b16 %v3715, %v3678
        %v4789 = vpack.c.b16 %v3716, %v3679
        %v4790 = vpack.c.b16 %v3717, %v3680
        %v4791 = vpack.c.b16 %v3718, %v3681
        %v4792 = vpack.c.b16 %v3719, %v3682
        %v4793 = vpack.c.b16 %v3720, %v3683
        %v4794 = vpack.c.b16 %v3721, %v3684
        %v4795 = vpack.c.b16 %v3722, %v3685
        %v4796 = vpack.c.b16 %v3723, %v3686
        %v4797 = vpack.c.b16 %v3724, %v3687
        %v4798 = vpack.c.b16 %v3725, %v3688
        %v4799 = vpack.c.b16 %v3726, %v3689
        %v4800 = vpack.c.b16 %v3727, %v3690
        %v4801 = vpack.c.b16 %v3728, %v3691
        %v4802 = vpack.c.b16 %v3729, %v3692
        %v4803 = vpack.c.b16 %v3730, %v3693
        %v4804 = vpack.c.b16 %v3731, %v3694
        %v4805 = vpack.c.b16 %v3732, %v3695
        %v4806 = vpack.c.b16 %v3733, %v3696
        %v4807 = vpack.c.b16 %v3734, %v3697
        %v4808 = vpack.c.b16 %v3735, %v3698
        %v4809 = vpack.c.b16 %v3736, %v3699
        %v4810 = vpack.c.b16 %v3737, %v3700
        %v4811 = vpack.c.b16 %v3738, %v3701
        %v4812 = vpack.c.b16 %v3739, %v3702
        %v4813 = vpack.c.b16 %v3740, %v3703
        %v4814 = vpack.c.b16 %v3741, %v3704
        %v4815 = vpack.c.b16 %v3742, %v3705
        %v4816 = vpack.c.b16 %v3743, %v3706
        %v4817 = vpack.c.b16 %v3744, %v3707
        %v4818 = vpack.c.b16 %v3745, %v3708
        %v4819 = vpack.c.b16 %v3783, %v3746
        %v4820 = vpack.c.b16 %v3784, %v3747
        %v4821 = vpack.c.b16 %v3785, %v3748
        %v4822 = vpack.c.b16 %v3786, %v3749
        %v4823 = vpack.c.b16 %v3787, %v3750
        %v4824 = vpack.c.b16 %v3788, %v3751
        %v4825 = vpack.c.b16 %v3789, %v3752
        %v4826 = vpack.c.b16 %v3790, %v3753
        %v4827 = vpack.c.b16 %v3791, %v3754
        %v4828 = vpack.c.b16 %v3792, %v3755
        %v4829 = vpack.c.b16 %v3793, %v3756
        %v4830 = vpack.c.b16 %v3794, %v3757
        %v4831 = vpack.c.b16 %v3795, %v3758
        %v4832 = vpack.c.b16 %v3796, %v3759
        %v4833 = vpack.c.b16 %v3797, %v3760
        %v4834 = vpack.c.b16 %v3798, %v3761
        %v4835 = vpack.c.b16 %v3799, %v3762
        %v4836 = vpack.c.b16 %v3800, %v3763
        %v4837 = vpack.c.b16 %v3801, %v3764
        %v4838 = vpack.c.b16 %v3802, %v3765
        %v4839 = vpack.c.b16 %v3803, %v3766
        %v4840 = vpack.c.b16 %v3804, %v3767
        %v4841 = vpack.c.b16 %v3805, %v3768
        %v4842 = vpack.c.b16 %v3806, %v3769
        %v4843 = vpack.c.b16 %v3807, %v3770
        %v4844 = vpack.c.b16 %v3808, %v3771
        %v4845 = vpack.c.b16 %v3809, %v3772
        %v4846 = vpack.c.b16 %v3810, %v3773
        %v4847 = vpack.c.b16 %v3811, %v3774
        %v4848 = vpack.c.b16 %v3812, %v3775
        %v4849 = vpack.c.b16 %v3813, %v3776
        %v4850 = vpack.c.b16 %v3814, %v3777
        %v4851 = vpack.c.b16 %v3815, %v3778
        %v4852 = vpack.c.b16 %v3816, %v3779
        %v4853 = vpack.c.b16 %v3817, %v3780
        %v4854 = vpack.c.b16 %v3818, %v3781
        %v4855 = vpack.c.b16 %v3819, %v3782
        %v4856 = vpack.c.b16 %v3857, %v3820
        %v4857 = vpack.c.b16 %v3858, %v3821
        %v4858 = vpack.c.b16 %v3859, %v3822
        %v4859 = vpack.c.b16 %v3860, %v3823
        %v4860 = vpack.c.b16 %v3861, %v3824
        %v4861 = vpack.c.b16 %v3862, %v3825
        %v4862 = vpack.c.b16 %v3863, %v3826
        %v4863 = vpack.c.b16 %v3864, %v3827
        %v4864 = vpack.c.b16 %v3865, %v3828
        %v4865 = vpack.c.b16 %v3866, %v3829
        %v4866 = vpack.c.b16 %v3867, %v3830
        %v4867 = vpack.c.b16 %v3868, %v3831
        %v4868 = vpack.c.b16 %v3869, %v3832
        %v4869 = vpack.c.b16 %v3870, %v3833
        %v4870 = vpack.c.b16 %v3871, %v3834
        %v4871 = vpack.c.b16 %v3872, %v3835
        %v4872 = vpack.c.b16 %v3873, %v3836
        %v4873 = vpack.c.b16 %v3874, %v3837
        %v4874 = vpack.c.b16 %v3875, %v3838
        %v4875 = vpack.c.b16 %v3876, %v3839
        %v4876 = vpack.c.b16 %v3877, %v3840
        %v4877 = vpack.c.b16 %v3878, %v3841
        %v4878 = vpack.c.b16 %v3879, %v3842
        %v4879 = vpack.c.b16 %v3880, %v3843
        %v4880 = vpack.c.b16 %v3881, %v3844
        %v4881 = vpack.c.b16 %v3882, %v3845
        %v4882 = vpack.c.b16 %v3883, %v3846
        %v4883 = vpack.c.b16 %v3884, %v3847
        %v4884 = vpack.c.b16 %v3885, %v3848
        %v4885 = vpack.c.b16 %v3886, %v3849
        %v4886 = vpack.c.b16 %v3887, %v3850
        %v4887 = vpack.c.b16 %v3888, %v3851
        %v4888 = vpack.c.b16 %v3889, %v3852
        %v4889 = vpack.c.b16 %v3890, %v3853
        %v4890 = vpack.c.b16 %v3891, %v3854
        %v4891 = vpack.c.b16 %v3892, %v3855
        %v4892 = vpack.c.b16 %v3893, %v3856
        %v4893 = vpack.c.b16 %v3931, %v3894
        %v4894 = vpack.c.b16 %v3932, %v3895
        %v4895 = vpack.c.b16 %v3933, %v3896
        %v4896 = vpack.c.b16 %v3934, %v3897
        %v4897 = vpack.c.b16 %v3935, %v3898
        %v4898 = vpack.c.b16 %v3936, %v3899
        %v4899 = vpack.c.b16 %v3937, %v3900
        %v4900 = vpack.c.b16 %v3938, %v3901
        %v4901 = vpack.c.b16 %v3939, %v3902
        %v4902 = vpack.c.b16 %v3940, %v3903
        %v4903 = vpack.c.b16 %v3941, %v3904
        %v4904 = vpack.c.b16 %v3942, %v3905
        %v4905 = vpack.c.b16 %v3943, %v3906
        %v4906 = vpack.c.b16 %v3944, %v3907
        %v4907 = vpack.c.b16 %v3945, %v3908
        %v4908 = vpack.c.b16 %v3946, %v3909
        %v4909 = vpack.c.b16 %v3947, %v3910
        %v4910 = vpack.c.b16 %v3948, %v3911
        %v4911 = vpack.c.b16 %v3949, %v3912
        %v4912 = vpack.c.b16 %v3950, %v3913
        %v4913 = vpack.c.b16 %v3951, %v3914
        %v4914 = vpack.c.b16 %v3952, %v3915
        %v4915 = vpack.c.b16 %v3953, %v3916
        %v4916 = vpack.c.b16 %v3954, %v3917
        %v4917 = vpack.c.b16 %v3955, %v3918
        %v4918 = vpack.c.b16 %v3956, %v3919
        %v4919 = vpack.c.b16 %v3957, %v3920
        %v4920 = vpack.c.b16 %v3958, %v3921
        %v4921 = vpack.c.b16 %v3959, %v3922
        %v4922 = vpack.c.b16 %v3960, %v3923
        %v4923 = vpack.c.b16 %v3961, %v3924
        %v4924 = vpack.c.b16 %v3962, %v3925
        %v4925 = vpack.c.b16 %v3963, %v3926
        %v4926 = vpack.c.b16 %v3964, %v3927
        %v4927 = vpack.c.b16 %v3965, %v3928
        %v4928 = vpack.c.b16 %v3966, %v3929
        %v4929 = vpack.c.b16 %v3967, %v3930
        %v4930 = vpack.c.b16 %v4005, %v3968
        %v4931 = vpack.c.b16 %v4006, %v3969
        %v4932 = vpack.c.b16 %v4007, %v3970
        %v4933 = vpack.c.b16 %v4008, %v3971
        %v4934 = vpack.c.b16 %v4009, %v3972
        %v4935 = vpack.c.b16 %v4010, %v3973
        %v4936 = vpack.c.b16 %v4011, %v3974
        %v4937 = vpack.c.b16 %v4012, %v3975
        %v4938 = vpack.c.b16 %v4013, %v3976
        %v4939 = vpack.c.b16 %v4014, %v3977
        %v4940 = vpack.c.b16 %v4015, %v3978
        %v4941 = vpack.c.b16 %v4016, %v3979
        %v4942 = vpack.c.b16 %v4017, %v3980
        %v4943 = vpack.c.b16 %v4018, %v3981
        %v4944 = vpack.c.b16 %v4019, %v3982
        %v4945 = vpack.c.b16 %v4020, %v3983
        %v4946 = vpack.c.b16 %v4021, %v3984
        %v4947 = vpack.c.b16 %v4022, %v3985
        %v4948 = vpack.c.b16 %v4023, %v3986
        %v4949 = vpack.c.b16 %v4024, %v3987
        %v4950 = vpack.c.b16 %v4025, %v3988
        %v4951 = vpack.c.b16 %v4026, %v3989
        %v4952 = vpack.c.b16 %v4027, %v3990
        %v4953 = vpack.c.b16 %v4028, %v3991
        %v4954 = vpack.c.b16 %v4029, %v3992
        %v4955 = vpack.c.b16 %v4030, %v3993
        %v4956 = vpack.c.b16 %v4031, %v3994
        %v4957 = vpack.c.b16 %v4032, %v3995
        %v4958 = vpack.c.b16 %v4033, %v3996
        %v4959 = vpack.c.b16 %v4034, %v3997
        %v4960 = vpack.c.b16 %v4035, %v3998
        %v4961 = vpack.c.b16 %v4036, %v3999
        %v4962 = vpack.c.b16 %v4037, %v4000
        %v4963 = vpack.c.b16 %v4038, %v4001
        %v4964 = vpack.c.b16 %v4039, %v4002
        %v4965 = vpack.c.b16 %v4040, %v4003
        %v4966 = vpack.c.b16 %v4041, %v4004
        %v4967 = vpack.c.b16 %v4079, %v4042
        %v4968 = vpack.c.b16 %v4080, %v4043
        %v4969 = vpack.c.b16 %v4081, %v4044
        %v4970 = vpack.c.b16 %v4082, %v4045
        %v4971 = vpack.c.b16 %v4083, %v4046
        %v4972 = vpack.c.b16 %v4084, %v4047
        %v4973 = vpack.c.b16 %v4085, %v4048
        %v4974 = vpack.c.b16 %v4086, %v4049
        %v4975 = vpack.c.b16 %v4087, %v4050
        %v4976 = vpack.c.b16 %v4088, %v4051
        %v4977 = vpack.c.b16 %v4089, %v4052
        %v4978 = vpack.c.b16 %v4090, %v4053
        %v4979 = vpack.c.b16 %v4091, %v4054
        %v4980 = vpack.c.b16 %v4092, %v4055
        %v4981 = vpack.c.b16 %v4093, %v4056
        %v4982 = vpack.c.b16 %v4094, %v4057
        %v4983 = vpack.c.b16 %v4095, %v4058
        %v4984 = vpack.c.b16 %v4096, %v4059
        %v4985 = vpack.c.b16 %v4097, %v4060
        %v4986 = vpack.c.b16 %v4098, %v4061
        %v4987 = vpack.c.b16 %v4099, %v4062
        %v4988 = vpack.c.b16 %v4100, %v4063
        %v4989 = vpack.c.b16 %v4101, %v4064
        %v4990 = vpack.c.b16 %v4102, %v4065
        %v4991 = vpack.c.b16 %v4103, %v4066
        %v4992 = vpack.c.b16 %v4104, %v4067
        %v4993 = vpack.c.b16 %v4105, %v4068
        %v4994 = vpack.c.b16 %v4106, %v4069
        %v4995 = vpack.c.b16 %v4107, %v4070
        %v4996 = vpack.c.b16 %v4108, %v4071
        %v4997 = vpack.c.b16 %v4109, %v4072
        %v4998 = vpack.c.b16 %v4110, %v4073
        %v4999 = vpack.c.b16 %v4111, %v4074
        %v5000 = vpack.c.b16 %v4112, %v4075
        %v5001 = vpack.c.b16 %v4113, %v4076
        %v5002 = vpack.c.b16 %v4114, %v4077
        %v5003 = vpack.c.b16 %v4115, %v4078
        %v5004 = vpack.c.b16 %v4153, %v4116
        %v5005 = vpack.c.b16 %v4154, %v4117
        %v5006 = vpack.c.b16 %v4155, %v4118
        %v5007 = vpack.c.b16 %v4156, %v4119
        %v5008 = vpack.c.b16 %v4157, %v4120
        %v5009 = vpack.c.b16 %v4158, %v4121
        %v5010 = vpack.c.b16 %v4159, %v4122
        %v5011 = vpack.c.b16 %v4160, %v4123
        %v5012 = vpack.c.b16 %v4161, %v4124
        %v5013 = vpack.c.b16 %v4162, %v4125
        %v5014 = vpack.c.b16 %v4163, %v4126
        %v5015 = vpack.c.b16 %v4164, %v4127
        %v5016 = vpack.c.b16 %v4165, %v4128
        %v5017 = vpack.c.b16 %v4166, %v4129
        %v5018 = vpack.c.b16 %v4167, %v4130
        %v5019 = vpack.c.b16 %v4168, %v4131
        %v5020 = vpack.c.b16 %v4169, %v4132
        %v5021 = vpack.c.b16 %v4170, %v4133
        %v5022 = vpack.c.b16 %v4171, %v4134
        %v5023 = vpack.c.b16 %v4172, %v4135
        %v5024 = vpack.c.b16 %v4173, %v4136
        %v5025 = vpack.c.b16 %v4174, %v4137
        %v5026 = vpack.c.b16 %v4175, %v4138
        %v5027 = vpack.c.b16 %v4176, %v4139
        %v5028 = vpack.c.b16 %v4177, %v4140
        %v5029 = vpack.c.b16 %v4178, %v4141
        %v5030 = vpack.c.b16 %v4179, %v4142
        %v5031 = vpack.c.b16 %v4180, %v4143
        %v5032 = vpack.c.b16 %v4181, %v4144
        %v5033 = vpack.c.b16 %v4182, %v4145
        %v5034 = vpack.c.b16 %v4183, %v4146
        %v5035 = vpack.c.b16 %v4184, %v4147
        %v5036 = vpack.c.b16 %v4185, %v4148
        %v5037 = vpack.c.b16 %v4186, %v4149
        %v5038 = vpack.c.b16 %v4187, %v4150
        %v5039 = vpack.c.b16 %v4188, %v4151
        %v5040 = vpack.c.b16 %v4189, %v4152
        %v5041 = vpack.c.b16 %v4227, %v4190
        %v5042 = vpack.c.b16 %v4228, %v4191
        %v5043 = vpack.c.b16 %v4229, %v4192
        %v5044 = vpack.c.b16 %v4230, %v4193
        %v5045 = vpack.c.b16 %v4231, %v4194
        %v5046 = vpack.c.b16 %v4232, %v4195
        %v5047 = vpack.c.b16 %v4233, %v4196
        %v5048 = vpack.c.b16 %v4234, %v4197
        %v5049 = vpack.c.b16 %v4235, %v4198
        %v5050 = vpack.c.b16 %v4236, %v4199
        %v5051 = vpack.c.b16 %v4237, %v4200
        %v5052 = vpack.c.b16 %v4238, %v4201
        %v5053 = vpack.c.b16 %v4239, %v4202
        %v5054 = vpack.c.b16 %v4240, %v4203
        %v5055 = vpack.c.b16 %v4241, %v4204
        %v5056 = vpack.c.b16 %v4242, %v4205
        %v5057 = vpack.c.b16 %v4243, %v4206
        %v5058 = vpack.c.b16 %v4244, %v4207
        %v5059 = vpack.c.b16 %v4245, %v4208
        %v5060 = vpack.c.b16 %v4246, %v4209
        %v5061 = vpack.c.b16 %v4247, %v4210
        %v5062 = vpack.c.b16 %v4248, %v4211
        %v5063 = vpack.c.b16 %v4249, %v4212
        %v5064 = vpack.c.b16 %v4250, %v4213
        %v5065 = vpack.c.b16 %v4251, %v4214
        %v5066 = vpack.c.b16 %v4252, %v4215
        %v5067 = vpack.c.b16 %v4253, %v4216
        %v5068 = vpack.c.b16 %v4254, %v4217
        %v5069 = vpack.c.b16 %v4255, %v4218
        %v5070 = vpack.c.b16 %v4256, %v4219
        %v5071 = vpack.c.b16 %v4257, %v4220
        %v5072 = vpack.c.b16 %v4258, %v4221
        %v5073 = vpack.c.b16 %v4259, %v4222
        %v5074 = vpack.c.b16 %v4260, %v4223
        %v5075 = vpack.c.b16 %v4261, %v4224
        %v5076 = vpack.c.b16 %v4262, %v4225
        %v5077 = vpack.c.b16 %v4263, %v4226
        %v5078 = vpack.c.b16 %v4301, %v4264
        %v5079 = vpack.c.b16 %v4302, %v4265
        %v5080 = vpack.c.b16 %v4303, %v4266
        %v5081 = vpack.c.b16 %v4304, %v4267
        %v5082 = vpack.c.b16 %v4305, %v4268
        %v5083 = vpack.c.b16 %v4306, %v4269
        %v5084 = vpack.c.b16 %v4307, %v4270
        %v5085 = vpack.c.b16 %v4308, %v4271
        %v5086 = vpack.c.b16 %v4309, %v4272
        %v5087 = vpack.c.b16 %v4310, %v4273
        %v5088 = vpack.c.b16 %v4311, %v4274
        %v5089 = vpack.c.b16 %v4312, %v4275
        %v5090 = vpack.c.b16 %v4313, %v4276
        %v5091 = vpack.c.b16 %v4314, %v4277
        %v5092 = vpack.c.b16 %v4315, %v4278
        %v5093 = vpack.c.b16 %v4316, %v4279
        %v5094 = vpack.c.b16 %v4317, %v4280
        %v5095 = vpack.c.b16 %v4318, %v4281
        %v5096 = vpack.c.b16 %v4319, %v4282
        %v5097 = vpack.c.b16 %v4320, %v4283
        %v5098 = vpack.c.b16 %v4321, %v4284
        %v5099 = vpack.c.b16 %v4322, %v4285
        %v5100 = vpack.c.b16 %v4323, %v4286
        %v5101 = vpack.c.b16 %v4324, %v4287
        %v5102 = vpack.c.b16 %v4325, %v4288
        %v5103 = vpack.c.b16 %v4326, %v4289
        %v5104 = vpack.c.b16 %v4327, %v4290
        %v5105 = vpack.c.b16 %v4328, %v4291
        %v5106 = vpack.c.b16 %v4329, %v4292
        %v5107 = vpack.c.b16 %v4330, %v4293
        %v5108 = vpack.c.b16 %v4331, %v4294
        %v5109 = vpack.c.b16 %v4332, %v4295
        %v5110 = vpack.c.b16 %v4333, %v4296
        %v5111 = vpack.c.b16 %v4334, %v4297
        %v5112 = vpack.c.b16 %v4335, %v4298
        %v5113 = vpack.c.b16 %v4336, %v4299
        %v5114 = vpack.c.b16 %v4337, %v4300
        %v5115 = vpack.c.b16 %v4375, %v4338
        %v5116 = vpack.c.b16 %v4376, %v4339
        %v5117 = vpack.c.b16 %v4377, %v4340
        %v5118 = vpack.c.b16 %v4378, %v4341
        %v5119 = vpack.c.b16 %v4379, %v4342
        %v5120 = vpack.c.b16 %v4380, %v4343
        %v5121 = vpack.c.b16 %v4381, %v4344
        %v5122 = vpack.c.b16 %v4382, %v4345
        %v5123 = vpack.c.b16 %v4383, %v4346
        %v5124 = vpack.c.b16 %v4384, %v4347
        %v5125 = vpack.c.b16 %v4385, %v4348
        %v5126 = vpack.c.b16 %v4386, %v4349
        %v5127 = vpack.c.b16 %v4387, %v4350
        %v5128 = vpack.c.b16 %v4388, %v4351
        %v5129 = vpack.c.b16 %v4389, %v4352
        %v5130 = vpack.c.b16 %v4390, %v4353
        %v5131 = vpack.c.b16 %v4391, %v4354
        %v5132 = vpack.c.b16 %v4392, %v4355
        %v5133 = vpack.c.b16 %v4393, %v4356
        %v5134 = vpack.c.b16 %v4394, %v4357
        %v5135 = vpack.c.b16 %v4395, %v4358
        %v5136 = vpack.c.b16 %v4396, %v4359
        %v5137 = vpack.c.b16 %v4397, %v4360
        %v5138 = vpack.c.b16 %v4398, %v4361
        %v5139 = vpack.c.b16 %v4399, %v4362
        %v5140 = vpack.c.b16 %v4400, %v4363
        %v5141 = vpack.c.b16 %v4401, %v4364
        %v5142 = vpack.c.b16 %v4402, %v4365
        %v5143 = vpack.c.b16 %v4403, %v4366
        %v5144 = vpack.c.b16 %v4404, %v4367
        %v5145 = vpack.c.b16 %v4405, %v4368
        %v5146 = vpack.c.b16 %v4406, %v4369
        %v5147 = vpack.c.b16 %v4407, %v4370
        %v5148 = vpack.c.b16 %v4408, %v4371
        %v5149 = vpack.c.b16 %v4409, %v4372
        %v5150 = vpack.c.b16 %v4410, %v4373
        %v5151 = vpack.c.b16 %v4411, %v4374
        %v5152 = vpack.c.b16 %v4449, %v4412
        %v5153 = vpack.c.b16 %v4450, %v4413
        %v5154 = vpack.c.b16 %v4451, %v4414
        %v5155 = vpack.c.b16 %v4452, %v4415
        %v5156 = vpack.c.b16 %v4453, %v4416
        %v5157 = vpack.c.b16 %v4454, %v4417
        %v5158 = vpack.c.b16 %v4455, %v4418
        %v5159 = vpack.c.b16 %v4456, %v4419
        %v5160 = vpack.c.b16 %v4457, %v4420
        %v5161 = vpack.c.b16 %v4458, %v4421
        %v5162 = vpack.c.b16 %v4459, %v4422
        %v5163 = vpack.c.b16 %v4460, %v4423
        %v5164 = vpack.c.b16 %v4461, %v4424
        %v5165 = vpack.c.b16 %v4462, %v4425
        %v5166 = vpack.c.b16 %v4463, %v4426
        %v5167 = vpack.c.b16 %v4464, %v4427
        %v5168 = vpack.c.b16 %v4465, %v4428
        %v5169 = vpack.c.b16 %v4466, %v4429
        %v5170 = vpack.c.b16 %v4467, %v4430
        %v5171 = vpack.c.b16 %v4468, %v4431
        %v5172 = vpack.c.b16 %v4469, %v4432
        %v5173 = vpack.c.b16 %v4470, %v4433
        %v5174 = vpack.c.b16 %v4471, %v4434
        %v5175 = vpack.c.b16 %v4472, %v4435
        %v5176 = vpack.c.b16 %v4473, %v4436
        %v5177 = vpack.c.b16 %v4474, %v4437
        %v5178 = vpack.c.b16 %v4475, %v4438
        %v5179 = vpack.c.b16 %v4476, %v4439
        %v5180 = vpack.c.b16 %v4477, %v4440
        %v5181 = vpack.c.b16 %v4478, %v4441
        %v5182 = vpack.c.b16 %v4479, %v4442
        %v5183 = vpack.c.b16 %v4480, %v4443
        %v5184 = vpack.c.b16 %v4481, %v4444
        %v5185 = vpack.c.b16 %v4482, %v4445
        %v5186 = vpack.c.b16 %v4483, %v4446
        %v5187 = vpack.c.b16 %v4484, %v4447
        %v5188 = vpack.c.b16 %v4485, %v4448
        %v5189 = vpack.c.b16 %v4523, %v4486
        %v5190 = vpack.c.b16 %v4524, %v4487
        %v5191 = vpack.c.b16 %v4525, %v4488
        %v5192 = vpack.c.b16 %v4526, %v4489
        %v5193 = vpack.c.b16 %v4527, %v4490
        %v5194 = vpack.c.b16 %v4528, %v4491
        %v5195 = vpack.c.b16 %v4529, %v4492
        %v5196 = vpack.c.b16 %v4530, %v4493
        %v5197 = vpack.c.b16 %v4531, %v4494
        %v5198 = vpack.c.b16 %v4532, %v4495
        %v5199 = vpack.c.b16 %v4533, %v4496
        %v5200 = vpack.c.b16 %v4534, %v4497
        %v5201 = vpack.c.b16 %v4535, %v4498
        %v5202 = vpack.c.b16 %v4536, %v4499
        %v5203 = vpack.c.b16 %v4537, %v4500
        %v5204 = vpack.c.b16 %v4538, %v4501
        %v5205 = vpack.c.b16 %v4539, %v4502
        %v5206 = vpack.c.b16 %v4540, %v4503
        %v5207 = vpack.c.b16 %v4541, %v4504
        %v5208 = vpack.c.b16 %v4542, %v4505
        %v5209 = vpack.c.b16 %v4543, %v4506
        %v5210 = vpack.c.b16 %v4544, %v4507
        %v5211 = vpack.c.b16 %v4545, %v4508
        %v5212 = vpack.c.b16 %v4546, %v4509
        %v5213 = vpack.c.b16 %v4547, %v4510
        %v5214 = vpack.c.b16 %v4548, %v4511
        %v5215 = vpack.c.b16 %v4549, %v4512
        %v5216 = vpack.c.b16 %v4550, %v4513
        %v5217 = vpack.c.b16 %v4551, %v4514
        %v5218 = vpack.c.b16 %v4552, %v4515
        %v5219 = vpack.c.b16 %v4553, %v4516
        %v5220 = vpack.c.b16 %v4554, %v4517
        %v5221 = vpack.c.b16 %v4555, %v4518
        %v5222 = vpack.c.b16 %v4556, %v4519
        %v5223 = vpack.c.b16 %v4557, %v4520
        %v5224 = vpack.c.b16 %v4558, %v4521
        %v5225 = vpack.c.b16 %v4559, %v4522
        %v5226 = vpack.c.b16 %v4597, %v4560
        %v5227 = vpack.c.b16 %v4598, %v4561
        %v5228 = vpack.c.b16 %v4599, %v4562
        %v5229 = vpack.c.b16 %v4600, %v4563
        %v5230 = vpack.c.b16 %v4601, %v4564
        %v5231 = vpack.c.b16 %v4602, %v4565
        %v5232 = vpack.c.b16 %v4603, %v4566
        %v5233 = vpack.c.b16 %v4604, %v4567
        %v5234 = vpack.c.b16 %v4605, %v4568
        %v5235 = vpack.c.b16 %v4606, %v4569
        %v5236 = vpack.c.b16 %v4607, %v4570
        %v5237 = vpack.c.b16 %v4608, %v4571
        %v5238 = vpack.c.b16 %v4609, %v4572
        %v5239 = vpack.c.b16 %v4610, %v4573
        %v5240 = vpack.c.b16 %v4611, %v4574
        %v5241 = vpack.c.b16 %v4612, %v4575
        %v5242 = vpack.c.b16 %v4613, %v4576
        %v5243 = vpack.c.b16 %v4614, %v4577
        %v5244 = vpack.c.b16 %v4615, %v4578
        %v5245 = vpack.c.b16 %v4616, %v4579
        %v5246 = vpack.c.b16 %v4617, %v4580
        %v5247 = vpack.c.b16 %v4618, %v4581
        %v5248 = vpack.c.b16 %v4619, %v4582
        %v5249 = vpack.c.b16 %v4620, %v4583
        %v5250 = vpack.c.b16 %v4621, %v4584
        %v5251 = vpack.c.b16 %v4622, %v4585
        %v5252 = vpack.c.b16 %v4623, %v4586
        %v5253 = vpack.c.b16 %v4624, %v4587
        %v5254 = vpack.c.b16 %v4625, %v4588
        %v5255 = vpack.c.b16 %v4626, %v4589
        %v5256 = vpack.c.b16 %v4627, %v4590
        %v5257 = vpack.c.b16 %v4628, %v4591
        %v5258 = vpack.c.b16 %v4629, %v4592
        %v5259 = vpack.c.b16 %v4630, %v4593
        %v5260 = vpack.c.b16 %v4631, %v4594
        %v5261 = vpack.c.b16 %v4632, %v4595
        %v5262 = vpack.c.b16 %v4633, %v4596
        %v5263 = vpack.c.b16 %v4671, %v4634
        %v5264 = vpack.c.b16 %v4672, %v4635
        %v5265 = vpack.c.b16 %v4673, %v4636
        %v5266 = vpack.c.b16 %v4674, %v4637
        %v5267 = vpack.c.b16 %v4675, %v4638
        %v5268 = vpack.c.b16 %v4676, %v4639
        %v5269 = vpack.c.b16 %v4677, %v4640
        %v5270 = vpack.c.b16 %v4678, %v4641
        %v5271 = vpack.c.b16 %v4679, %v4642
        %v5272 = vpack.c.b16 %v4680, %v4643
        %v5273 = vpack.c.b16 %v4681, %v4644
        %v5274 = vpack.c.b16 %v4682, %v4645
        %v5275 = vpack.c.b16 %v4683, %v4646
        %v5276 = vpack.c.b16 %v4684, %v4647
        %v5277 = vpack.c.b16 %v4685, %v4648
        %v5278 = vpack.c.b16 %v4686, %v4649
        %v5279 = vpack.c.b16 %v4687, %v4650
        %v5280 = vpack.c.b16 %v4688, %v4651
        %v5281 = vpack.c.b16 %v4689, %v4652
        %v5282 = vpack.c.b16 %v4690, %v4653
        %v5283 = vpack.c.b16 %v4691, %v4654
        %v5284 = vpack.c.b16 %v4692, %v4655
        %v5285 = vpack.c.b16 %v4693, %v4656
        %v5286 = vpack.c.b16 %v4694, %v4657
        %v5287 = vpack.c.b16 %v4695, %v4658
        %v5288 = vpack.c.b16 %v4696, %v4659
        %v5289 = vpack.c.b16 %v4697, %v4660
        %v5290 = vpack.c.b16 %v4698, %v4661
        %v5291 = vpack.c.b16 %v4699, %v4662
        %v5292 = vpack.c.b16 %v4700, %v4663
        %v5293 = vpack.c.b16 %v4701, %v4664
        %v5294 = vpack.c.b16 %v4702, %v4665
        %v5295 = vpack.c.b16 %v4703, %v4666
        %v5296 = vpack.c.b16 %v4704, %v4667
        %v5297 = vpack.c.b16 %v4705, %v4668
        %v5298 = vpack.c.b16 %v4706, %v4669
        %v5299 = vpack.c.b16 %v4707, %v4670
        %5892 = vmatpush.bf16.msra.mxu0 %v4967
        %5893 = vmatpush.bf16.msra.mxu0 %v4930
        %5894 = vmatpush.bf16.msra.mxu0 %v4893
        %5895 = vmatpush.bf16.msra.mxu0 %v4856
        %5896 = vmatpush.bf16.msra.mxu0 %v4819
        %5897 = vmatpush.bf16.msra.mxu0 %v4782
        %5898 = vmatpush.bf16.msra.mxu0 %v4745
        %5899 = vmatpush.bf16.msra.mxu0 %v4708
        %5900 = vmatmul.bf16.gmra.mxu0 %v2208
        %v5901 = vpop.f32.mrf.mxu0
        %v5902 = vadd.f32 %v2842, %v5901
        %v5903 = vpop.f32.mrf.mxu0
        %v5904 = vadd.f32 %v2842, %v5903
        %5905 = vmatmul.bf16.gmra.mxu0 %v2210
        %v5906 = vpop.f32.mrf.mxu0
        %v5907 = vadd.f32 %v2842, %v5906
        %v5908 = vpop.f32.mrf.mxu0
        %v5909 = vadd.f32 %v2842, %v5908
        %5910 = vmatmul.bf16.gmra.mxu0 %v2212
        %v5911 = vpop.f32.mrf.mxu0
        %v5912 = vadd.f32 %v2842, %v5911
        %v5913 = vpop.f32.mrf.mxu0
        %v5914 = vadd.f32 %v2842, %v5913
        %5915 = vmatmul.bf16.gmra.mxu0 %v2214
        %v5916 = vpop.f32.mrf.mxu0
        %v5917 = vadd.f32 %v2842, %v5916
        %v5918 = vpop.f32.mrf.mxu0
        %v5919 = vadd.f32 %v2842, %v5918
        %5920 = vmatmul.bf16.gmra.mxu0 %v2216
        %v5921 = vpop.f32.mrf.mxu0
        %v5922 = vadd.f32 %v2842, %v5921
        %v5923 = vpop.f32.mrf.mxu0
        %v5924 = vadd.f32 %v2842, %v5923
        %5925 = vmatmul.bf16.gmra.mxu0 %v2218
        %v5926 = vpop.f32.mrf.mxu0
        %v5927 = vadd.f32 %v2842, %v5926
        %v5928 = vpop.f32.mrf.mxu0
        %v5929 = vadd.f32 %v2842, %v5928
        %5930 = vmatmul.bf16.gmra.mxu0 %v2220
        %v5931 = vpop.f32.mrf.mxu0
        %v5932 = vadd.f32 %v2842, %v5931
        %v5933 = vpop.f32.mrf.mxu0
        %v5934 = vadd.f32 %v2842, %v5933
        %5935 = vmatmul.bf16.gmra.mxu0 %v2222
        %v5936 = vpop.f32.mrf.mxu0
        %v5937 = vadd.f32 %v2842, %v5936
        %v5938 = vpop.f32.mrf.mxu0
        %v5939 = vadd.f32 %v2842, %v5938
        %5940 = vdwg.mxu0
        %5941 = vmatpush.bf16.msra.mxu0 %v5263
        %5942 = vmatpush.bf16.msra.mxu0 %v5226
        %5943 = vmatpush.bf16.msra.mxu0 %v5189
        %5944 = vmatpush.bf16.msra.mxu0 %v5152
        %5945 = vmatpush.bf16.msra.mxu0 %v5115
        %5946 = vmatpush.bf16.msra.mxu0 %v5078
        %5947 = vmatpush.bf16.msra.mxu0 %v5041
        %5948 = vmatpush.bf16.msra.mxu0 %v5004
        %5949 = vmatmul.bf16.gmra.mxu0 %v2209
        %v5950 = vpop.f32.mrf.mxu0
        %v5951 = vadd.f32 %v5902, %v5950
        %v5952 = vpop.f32.mrf.mxu0
        %v5953 = vadd.f32 %v5904, %v5952
        %5954 = vmatmul.bf16.gmra.mxu0 %v2211
        %v5955 = vpop.f32.mrf.mxu0
        %v5956 = vadd.f32 %v5907, %v5955
        %v5957 = vpop.f32.mrf.mxu0
        %v5958 = vadd.f32 %v5909, %v5957
        %5959 = vmatmul.bf16.gmra.mxu0 %v2213
        %v5960 = vpop.f32.mrf.mxu0
        %v5961 = vadd.f32 %v5912, %v5960
        %v5962 = vpop.f32.mrf.mxu0
        %v5963 = vadd.f32 %v5914, %v5962
        %5964 = vmatmul.bf16.gmra.mxu0 %v2215
        %v5965 = vpop.f32.mrf.mxu0
        %v5966 = vadd.f32 %v5917, %v5965
        %v5967 = vpop.f32.mrf.mxu0
        %v5968 = vadd.f32 %v5919, %v5967
        %5969 = vmatmul.bf16.gmra.mxu0 %v2217
        %v5970 = vpop.f32.mrf.mxu0
        %v5971 = vadd.f32 %v5922, %v5970
        %v5972 = vpop.f32.mrf.mxu0
        %v5973 = vadd.f32 %v5924, %v5972
        %5974 = vmatmul.bf16.gmra.mxu0 %v2219
        %v5975 = vpop.f32.mrf.mxu0
        %v5976 = vadd.f32 %v5927, %v5975
        %v5977 = vpop.f32.mrf.mxu0
        %v5978 = vadd.f32 %v5929, %v5977
        %5979 = vmatmul.bf16.gmra.mxu0 %v2221
        %v5980 = vpop.f32.mrf.mxu0
        %v5981 = vadd.f32 %v5932, %v5980
        %v5982 = vpop.f32.mrf.mxu0
        %v5983 = vadd.f32 %v5934, %v5982
        %5984 = vmatmul.bf16.gmra.mxu0 %v2223
        %v5985 = vpop.f32.mrf.mxu0
        %v5986 = vadd.f32 %v5937, %v5985
        %v5987 = vpop.f32.mrf.mxu0
        %v5988 = vadd.f32 %v5939, %v5987
        %5989 = vdwg.mxu0
        %5990 = vmatpush.bf16.msra.mxu0 %v4968
        %5991 = vmatpush.bf16.msra.mxu0 %v4931
        %5992 = vmatpush.bf16.msra.mxu0 %v4894
        %5993 = vmatpush.bf16.msra.mxu0 %v4857
        %5994 = vmatpush.bf16.msra.mxu0 %v4820
        %5995 = vmatpush.bf16.msra.mxu0 %v4783
        %5996 = vmatpush.bf16.msra.mxu0 %v4746
        %5997 = vmatpush.bf16.msra.mxu0 %v4709
        %5998 = vmatmul.bf16.gmra.mxu0 %v2208
        %v5999 = vpop.f32.mrf.mxu0
        %v6000 = vadd.f32 %v2843, %v5999
        %v6001 = vpop.f32.mrf.mxu0
        %v6002 = vadd.f32 %v2843, %v6001
        %6003 = vmatmul.bf16.gmra.mxu0 %v2210
        %v6004 = vpop.f32.mrf.mxu0
        %v6005 = vadd.f32 %v2843, %v6004
        %v6006 = vpop.f32.mrf.mxu0
        %v6007 = vadd.f32 %v2843, %v6006
        %6008 = vmatmul.bf16.gmra.mxu0 %v2212
        %v6009 = vpop.f32.mrf.mxu0
        %v6010 = vadd.f32 %v2843, %v6009
        %v6011 = vpop.f32.mrf.mxu0
        %v6012 = vadd.f32 %v2843, %v6011
        %6013 = vmatmul.bf16.gmra.mxu0 %v2214
        %v6014 = vpop.f32.mrf.mxu0
        %v6015 = vadd.f32 %v2843, %v6014
        %v6016 = vpop.f32.mrf.mxu0
        %v6017 = vadd.f32 %v2843, %v6016
        %6018 = vmatmul.bf16.gmra.mxu0 %v2216
        %v6019 = vpop.f32.mrf.mxu0
        %v6020 = vadd.f32 %v2843, %v6019
        %v6021 = vpop.f32.mrf.mxu0
        %v6022 = vadd.f32 %v2843, %v6021
        %6023 = vmatmul.bf16.gmra.mxu0 %v2218
        %v6024 = vpop.f32.mrf.mxu0
        %v6025 = vadd.f32 %v2843, %v6024
        %v6026 = vpop.f32.mrf.mxu0
        %v6027 = vadd.f32 %v2843, %v6026
        %6028 = vmatmul.bf16.gmra.mxu0 %v2220
        %v6029 = vpop.f32.mrf.mxu0
        %v6030 = vadd.f32 %v2843, %v6029
        %v6031 = vpop.f32.mrf.mxu0
        %v6032 = vadd.f32 %v2843, %v6031
        %6033 = vmatmul.bf16.gmra.mxu0 %v2222
        %v6034 = vpop.f32.mrf.mxu0
        %v6035 = vadd.f32 %v2843, %v6034
        %v6036 = vpop.f32.mrf.mxu0
        %v6037 = vadd.f32 %v2843, %v6036
        %6038 = vdwg.mxu0
        %6039 = vmatpush.bf16.msra.mxu0 %v5264
        %6040 = vmatpush.bf16.msra.mxu0 %v5227
        %6041 = vmatpush.bf16.msra.mxu0 %v5190
        %6042 = vmatpush.bf16.msra.mxu0 %v5153
        %6043 = vmatpush.bf16.msra.mxu0 %v5116
        %6044 = vmatpush.bf16.msra.mxu0 %v5079
        %6045 = vmatpush.bf16.msra.mxu0 %v5042
        %6046 = vmatpush.bf16.msra.mxu0 %v5005
        %6047 = vmatmul.bf16.gmra.mxu0 %v2209
        %v6048 = vpop.f32.mrf.mxu0
        %v6049 = vadd.f32 %v6000, %v6048
        %v6050 = vpop.f32.mrf.mxu0
        %v6051 = vadd.f32 %v6002, %v6050
        %6052 = vmatmul.bf16.gmra.mxu0 %v2211
        %v6053 = vpop.f32.mrf.mxu0
        %v6054 = vadd.f32 %v6005, %v6053
        %v6055 = vpop.f32.mrf.mxu0
        %v6056 = vadd.f32 %v6007, %v6055
        %6057 = vmatmul.bf16.gmra.mxu0 %v2213
        %v6058 = vpop.f32.mrf.mxu0
        %v6059 = vadd.f32 %v6010, %v6058
        %v6060 = vpop.f32.mrf.mxu0
        %v6061 = vadd.f32 %v6012, %v6060
        %6062 = vmatmul.bf16.gmra.mxu0 %v2215
        %v6063 = vpop.f32.mrf.mxu0
        %v6064 = vadd.f32 %v6015, %v6063
        %v6065 = vpop.f32.mrf.mxu0
        %v6066 = vadd.f32 %v6017, %v6065
        %6067 = vmatmul.bf16.gmra.mxu0 %v2217
        %v6068 = vpop.f32.mrf.mxu0
        %v6069 = vadd.f32 %v6020, %v6068
        %v6070 = vpop.f32.mrf.mxu0
        %v6071 = vadd.f32 %v6022, %v6070
        %6072 = vmatmul.bf16.gmra.mxu0 %v2219
        %v6073 = vpop.f32.mrf.mxu0
        %v6074 = vadd.f32 %v6025, %v6073
        %v6075 = vpop.f32.mrf.mxu0
        %v6076 = vadd.f32 %v6027, %v6075
        %6077 = vmatmul.bf16.gmra.mxu0 %v2221
        %v6078 = vpop.f32.mrf.mxu0
        %v6079 = vadd.f32 %v6030, %v6078
        %v6080 = vpop.f32.mrf.mxu0
        %v6081 = vadd.f32 %v6032, %v6080
        %6082 = vmatmul.bf16.gmra.mxu0 %v2223
        %v6083 = vpop.f32.mrf.mxu0
        %v6084 = vadd.f32 %v6035, %v6083
        %v6085 = vpop.f32.mrf.mxu0
        %v6086 = vadd.f32 %v6037, %v6085
        %6087 = vdwg.mxu0
        %6088 = vmatpush.bf16.msra.mxu0 %v4969
        %6089 = vmatpush.bf16.msra.mxu0 %v4932
        %6090 = vmatpush.bf16.msra.mxu0 %v4895
        %6091 = vmatpush.bf16.msra.mxu0 %v4858
        %6092 = vmatpush.bf16.msra.mxu0 %v4821
        %6093 = vmatpush.bf16.msra.mxu0 %v4784
        %6094 = vmatpush.bf16.msra.mxu0 %v4747
        %6095 = vmatpush.bf16.msra.mxu0 %v4710
        %6096 = vmatmul.bf16.gmra.mxu0 %v2208
        %v6097 = vpop.f32.mrf.mxu0
        %v6098 = vadd.f32 %v2844, %v6097
        %v6099 = vpop.f32.mrf.mxu0
        %v6100 = vadd.f32 %v2844, %v6099
        %6101 = vmatmul.bf16.gmra.mxu0 %v2210
        %v6102 = vpop.f32.mrf.mxu0
        %v6103 = vadd.f32 %v2844, %v6102
        %v6104 = vpop.f32.mrf.mxu0
        %v6105 = vadd.f32 %v2844, %v6104
        %6106 = vmatmul.bf16.gmra.mxu0 %v2212
        %v6107 = vpop.f32.mrf.mxu0
        %v6108 = vadd.f32 %v2844, %v6107
        %v6109 = vpop.f32.mrf.mxu0
        %v6110 = vadd.f32 %v2844, %v6109
        %6111 = vmatmul.bf16.gmra.mxu0 %v2214
        %v6112 = vpop.f32.mrf.mxu0
        %v6113 = vadd.f32 %v2844, %v6112
        %v6114 = vpop.f32.mrf.mxu0
        %v6115 = vadd.f32 %v2844, %v6114
        %6116 = vmatmul.bf16.gmra.mxu0 %v2216
        %v6117 = vpop.f32.mrf.mxu0
        %v6118 = vadd.f32 %v2844, %v6117
        %v6119 = vpop.f32.mrf.mxu0
        %v6120 = vadd.f32 %v2844, %v6119
        %6121 = vmatmul.bf16.gmra.mxu0 %v2218
        %v6122 = vpop.f32.mrf.mxu0
        %v6123 = vadd.f32 %v2844, %v6122
        %v6124 = vpop.f32.mrf.mxu0
        %v6125 = vadd.f32 %v2844, %v6124
        %6126 = vmatmul.bf16.gmra.mxu0 %v2220
        %v6127 = vpop.f32.mrf.mxu0
        %v6128 = vadd.f32 %v2844, %v6127
        %v6129 = vpop.f32.mrf.mxu0
        %v6130 = vadd.f32 %v2844, %v6129
        %6131 = vmatmul.bf16.gmra.mxu0 %v2222
        %v6132 = vpop.f32.mrf.mxu0
        %v6133 = vadd.f32 %v2844, %v6132
        %v6134 = vpop.f32.mrf.mxu0
        %v6135 = vadd.f32 %v2844, %v6134
        %6136 = vdwg.mxu0
        %6137 = vmatpush.bf16.msra.mxu0 %v5265
        %6138 = vmatpush.bf16.msra.mxu0 %v5228
        %6139 = vmatpush.bf16.msra.mxu0 %v5191
        %6140 = vmatpush.bf16.msra.mxu0 %v5154
        %6141 = vmatpush.bf16.msra.mxu0 %v5117
        %6142 = vmatpush.bf16.msra.mxu0 %v5080
        %6143 = vmatpush.bf16.msra.mxu0 %v5043
        %6144 = vmatpush.bf16.msra.mxu0 %v5006
        %6145 = vmatmul.bf16.gmra.mxu0 %v2209
        %v6146 = vpop.f32.mrf.mxu0
        %v6147 = vadd.f32 %v6098, %v6146
        %v6148 = vpop.f32.mrf.mxu0
        %v6149 = vadd.f32 %v6100, %v6148
        %6150 = vmatmul.bf16.gmra.mxu0 %v2211
        %v6151 = vpop.f32.mrf.mxu0
        %v6152 = vadd.f32 %v6103, %v6151
        %v6153 = vpop.f32.mrf.mxu0
        %v6154 = vadd.f32 %v6105, %v6153
        %6155 = vmatmul.bf16.gmra.mxu0 %v2213
        %v6156 = vpop.f32.mrf.mxu0
        %v6157 = vadd.f32 %v6108, %v6156
        %v6158 = vpop.f32.mrf.mxu0
        %v6159 = vadd.f32 %v6110, %v6158
        %6160 = vmatmul.bf16.gmra.mxu0 %v2215
        %v6161 = vpop.f32.mrf.mxu0
        %v6162 = vadd.f32 %v6113, %v6161
        %v6163 = vpop.f32.mrf.mxu0
        %v6164 = vadd.f32 %v6115, %v6163
        %6165 = vmatmul.bf16.gmra.mxu0 %v2217
        %v6166 = vpop.f32.mrf.mxu0
        %v6167 = vadd.f32 %v6118, %v6166
        %v6168 = vpop.f32.mrf.mxu0
        %v6169 = vadd.f32 %v6120, %v6168
        %6170 = vmatmul.bf16.gmra.mxu0 %v2219
        %v6171 = vpop.f32.mrf.mxu0
        %v6172 = vadd.f32 %v6123, %v6171
        %v6173 = vpop.f32.mrf.mxu0
        %v6174 = vadd.f32 %v6125, %v6173
        %6175 = vmatmul.bf16.gmra.mxu0 %v2221
        %v6176 = vpop.f32.mrf.mxu0
        %v6177 = vadd.f32 %v6128, %v6176
        %v6178 = vpop.f32.mrf.mxu0
        %v6179 = vadd.f32 %v6130, %v6178
        %6180 = vmatmul.bf16.gmra.mxu0 %v2223
        %v6181 = vpop.f32.mrf.mxu0
        %v6182 = vadd.f32 %v6133, %v6181
        %v6183 = vpop.f32.mrf.mxu0
        %v6184 = vadd.f32 %v6135, %v6183
        %6185 = vdwg.mxu0
        %6186 = vmatpush.bf16.msra.mxu0 %v4970
        %6187 = vmatpush.bf16.msra.mxu0 %v4933
        %6188 = vmatpush.bf16.msra.mxu0 %v4896
        %6189 = vmatpush.bf16.msra.mxu0 %v4859
        %6190 = vmatpush.bf16.msra.mxu0 %v4822
        %6191 = vmatpush.bf16.msra.mxu0 %v4785
        %6192 = vmatpush.bf16.msra.mxu0 %v4748
        %6193 = vmatpush.bf16.msra.mxu0 %v4711
        %6194 = vmatmul.bf16.gmra.mxu0 %v2208
        %v6195 = vpop.f32.mrf.mxu0
        %v6196 = vadd.f32 %v2845, %v6195
        %v6197 = vpop.f32.mrf.mxu0
        %v6198 = vadd.f32 %v2845, %v6197
        %6199 = vmatmul.bf16.gmra.mxu0 %v2210
        %v6200 = vpop.f32.mrf.mxu0
        %v6201 = vadd.f32 %v2845, %v6200
        %v6202 = vpop.f32.mrf.mxu0
        %v6203 = vadd.f32 %v2845, %v6202
        %6204 = vmatmul.bf16.gmra.mxu0 %v2212
        %v6205 = vpop.f32.mrf.mxu0
        %v6206 = vadd.f32 %v2845, %v6205
        %v6207 = vpop.f32.mrf.mxu0
        %v6208 = vadd.f32 %v2845, %v6207
        %6209 = vmatmul.bf16.gmra.mxu0 %v2214
        %v6210 = vpop.f32.mrf.mxu0
        %v6211 = vadd.f32 %v2845, %v6210
        %v6212 = vpop.f32.mrf.mxu0
        %v6213 = vadd.f32 %v2845, %v6212
        %6214 = vmatmul.bf16.gmra.mxu0 %v2216
        %v6215 = vpop.f32.mrf.mxu0
        %v6216 = vadd.f32 %v2845, %v6215
        %v6217 = vpop.f32.mrf.mxu0
        %v6218 = vadd.f32 %v2845, %v6217
        %6219 = vmatmul.bf16.gmra.mxu0 %v2218
        %v6220 = vpop.f32.mrf.mxu0
        %v6221 = vadd.f32 %v2845, %v6220
        %v6222 = vpop.f32.mrf.mxu0
        %v6223 = vadd.f32 %v2845, %v6222
        %6224 = vmatmul.bf16.gmra.mxu0 %v2220
        %v6225 = vpop.f32.mrf.mxu0
        %v6226 = vadd.f32 %v2845, %v6225
        %v6227 = vpop.f32.mrf.mxu0
        %v6228 = vadd.f32 %v2845, %v6227
        %6229 = vmatmul.bf16.gmra.mxu0 %v2222
        %v6230 = vpop.f32.mrf.mxu0
        %v6231 = vadd.f32 %v2845, %v6230
        %v6232 = vpop.f32.mrf.mxu0
        %v6233 = vadd.f32 %v2845, %v6232
        %6234 = vdwg.mxu0
        %6235 = vmatpush.bf16.msra.mxu0 %v5266
        %6236 = vmatpush.bf16.msra.mxu0 %v5229
        %6237 = vmatpush.bf16.msra.mxu0 %v5192
        %6238 = vmatpush.bf16.msra.mxu0 %v5155
        %6239 = vmatpush.bf16.msra.mxu0 %v5118
        %6240 = vmatpush.bf16.msra.mxu0 %v5081
        %6241 = vmatpush.bf16.msra.mxu0 %v5044
        %6242 = vmatpush.bf16.msra.mxu0 %v5007
        %6243 = vmatmul.bf16.gmra.mxu0 %v2209
        %v6244 = vpop.f32.mrf.mxu0
        %v6245 = vadd.f32 %v6196, %v6244
        %v6246 = vpop.f32.mrf.mxu0
        %v6247 = vadd.f32 %v6198, %v6246
        %6248 = vmatmul.bf16.gmra.mxu0 %v2211
        %v6249 = vpop.f32.mrf.mxu0
        %v6250 = vadd.f32 %v6201, %v6249
        %v6251 = vpop.f32.mrf.mxu0
        %v6252 = vadd.f32 %v6203, %v6251
        %6253 = vmatmul.bf16.gmra.mxu0 %v2213
        %v6254 = vpop.f32.mrf.mxu0
        %v6255 = vadd.f32 %v6206, %v6254
        %v6256 = vpop.f32.mrf.mxu0
        %v6257 = vadd.f32 %v6208, %v6256
        %6258 = vmatmul.bf16.gmra.mxu0 %v2215
        %v6259 = vpop.f32.mrf.mxu0
        %v6260 = vadd.f32 %v6211, %v6259
        %v6261 = vpop.f32.mrf.mxu0
        %v6262 = vadd.f32 %v6213, %v6261
        %6263 = vmatmul.bf16.gmra.mxu0 %v2217
        %v6264 = vpop.f32.mrf.mxu0
        %v6265 = vadd.f32 %v6216, %v6264
        %v6266 = vpop.f32.mrf.mxu0
        %v6267 = vadd.f32 %v6218, %v6266
        %6268 = vmatmul.bf16.gmra.mxu0 %v2219
        %v6269 = vpop.f32.mrf.mxu0
        %v6270 = vadd.f32 %v6221, %v6269
        %v6271 = vpop.f32.mrf.mxu0
        %v6272 = vadd.f32 %v6223, %v6271
        %6273 = vmatmul.bf16.gmra.mxu0 %v2221
        %v6274 = vpop.f32.mrf.mxu0
        %v6275 = vadd.f32 %v6226, %v6274
        %v6276 = vpop.f32.mrf.mxu0
        %v6277 = vadd.f32 %v6228, %v6276
        %6278 = vmatmul.bf16.gmra.mxu0 %v2223
        %v6279 = vpop.f32.mrf.mxu0
        %v6280 = vadd.f32 %v6231, %v6279
        %v6281 = vpop.f32.mrf.mxu0
        %v6282 = vadd.f32 %v6233, %v6281
        %6283 = vdwg.mxu0
        %6284 = vmatpush.bf16.msra.mxu0 %v4971
        %6285 = vmatpush.bf16.msra.mxu0 %v4934
        %6286 = vmatpush.bf16.msra.mxu0 %v4897
        %6287 = vmatpush.bf16.msra.mxu0 %v4860
        %6288 = vmatpush.bf16.msra.mxu0 %v4823
        %6289 = vmatpush.bf16.msra.mxu0 %v4786
        %6290 = vmatpush.bf16.msra.mxu0 %v4749
        %6291 = vmatpush.bf16.msra.mxu0 %v4712
        %6292 = vmatmul.bf16.gmra.mxu0 %v2208
        %v6293 = vpop.f32.mrf.mxu0
        %v6294 = vadd.f32 %v2846, %v6293
        %v6295 = vpop.f32.mrf.mxu0
        %v6296 = vadd.f32 %v2846, %v6295
        %6297 = vmatmul.bf16.gmra.mxu0 %v2210
        %v6298 = vpop.f32.mrf.mxu0
        %v6299 = vadd.f32 %v2846, %v6298
        %v6300 = vpop.f32.mrf.mxu0
        %v6301 = vadd.f32 %v2846, %v6300
        %6302 = vmatmul.bf16.gmra.mxu0 %v2212
        %v6303 = vpop.f32.mrf.mxu0
        %v6304 = vadd.f32 %v2846, %v6303
        %v6305 = vpop.f32.mrf.mxu0
        %v6306 = vadd.f32 %v2846, %v6305
        %6307 = vmatmul.bf16.gmra.mxu0 %v2214
        %v6308 = vpop.f32.mrf.mxu0
        %v6309 = vadd.f32 %v2846, %v6308
        %v6310 = vpop.f32.mrf.mxu0
        %v6311 = vadd.f32 %v2846, %v6310
        %6312 = vmatmul.bf16.gmra.mxu0 %v2216
        %v6313 = vpop.f32.mrf.mxu0
        %v6314 = vadd.f32 %v2846, %v6313
        %v6315 = vpop.f32.mrf.mxu0
        %v6316 = vadd.f32 %v2846, %v6315
        %6317 = vmatmul.bf16.gmra.mxu0 %v2218
        %v6318 = vpop.f32.mrf.mxu0
        %v6319 = vadd.f32 %v2846, %v6318
        %v6320 = vpop.f32.mrf.mxu0
        %v6321 = vadd.f32 %v2846, %v6320
        %6322 = vmatmul.bf16.gmra.mxu0 %v2220
        %v6323 = vpop.f32.mrf.mxu0
        %v6324 = vadd.f32 %v2846, %v6323
        %v6325 = vpop.f32.mrf.mxu0
        %v6326 = vadd.f32 %v2846, %v6325
        %6327 = vmatmul.bf16.gmra.mxu0 %v2222
        %v6328 = vpop.f32.mrf.mxu0
        %v6329 = vadd.f32 %v2846, %v6328
        %v6330 = vpop.f32.mrf.mxu0
        %v6331 = vadd.f32 %v2846, %v6330
        %6332 = vdwg.mxu0
        %6333 = vmatpush.bf16.msra.mxu0 %v5267
        %6334 = vmatpush.bf16.msra.mxu0 %v5230
        %6335 = vmatpush.bf16.msra.mxu0 %v5193
        %6336 = vmatpush.bf16.msra.mxu0 %v5156
        %6337 = vmatpush.bf16.msra.mxu0 %v5119
        %6338 = vmatpush.bf16.msra.mxu0 %v5082
        %6339 = vmatpush.bf16.msra.mxu0 %v5045
        %6340 = vmatpush.bf16.msra.mxu0 %v5008
        %6341 = vmatmul.bf16.gmra.mxu0 %v2209
        %v6342 = vpop.f32.mrf.mxu0
        %v6343 = vadd.f32 %v6294, %v6342
        %v6344 = vpop.f32.mrf.mxu0
        %v6345 = vadd.f32 %v6296, %v6344
        %6346 = vmatmul.bf16.gmra.mxu0 %v2211
        %v6347 = vpop.f32.mrf.mxu0
        %v6348 = vadd.f32 %v6299, %v6347
        %v6349 = vpop.f32.mrf.mxu0
        %v6350 = vadd.f32 %v6301, %v6349
        %6351 = vmatmul.bf16.gmra.mxu0 %v2213
        %v6352 = vpop.f32.mrf.mxu0
        %v6353 = vadd.f32 %v6304, %v6352
        %v6354 = vpop.f32.mrf.mxu0
        %v6355 = vadd.f32 %v6306, %v6354
        %6356 = vmatmul.bf16.gmra.mxu0 %v2215
        %v6357 = vpop.f32.mrf.mxu0
        %v6358 = vadd.f32 %v6309, %v6357
        %v6359 = vpop.f32.mrf.mxu0
        %v6360 = vadd.f32 %v6311, %v6359
        %6361 = vmatmul.bf16.gmra.mxu0 %v2217
        %v6362 = vpop.f32.mrf.mxu0
        %v6363 = vadd.f32 %v6314, %v6362
        %v6364 = vpop.f32.mrf.mxu0
        %v6365 = vadd.f32 %v6316, %v6364
        %6366 = vmatmul.bf16.gmra.mxu0 %v2219
        %v6367 = vpop.f32.mrf.mxu0
        %v6368 = vadd.f32 %v6319, %v6367
        %v6369 = vpop.f32.mrf.mxu0
        %v6370 = vadd.f32 %v6321, %v6369
        %6371 = vmatmul.bf16.gmra.mxu0 %v2221
        %v6372 = vpop.f32.mrf.mxu0
        %v6373 = vadd.f32 %v6324, %v6372
        %v6374 = vpop.f32.mrf.mxu0
        %v6375 = vadd.f32 %v6326, %v6374
        %6376 = vmatmul.bf16.gmra.mxu0 %v2223
        %v6377 = vpop.f32.mrf.mxu0
        %v6378 = vadd.f32 %v6329, %v6377
        %v6379 = vpop.f32.mrf.mxu0
        %v6380 = vadd.f32 %v6331, %v6379
        %6381 = vdwg.mxu0
        %6382 = vmatpush.bf16.msra.mxu0 %v4972
        %6383 = vmatpush.bf16.msra.mxu0 %v4935
        %6384 = vmatpush.bf16.msra.mxu0 %v4898
        %6385 = vmatpush.bf16.msra.mxu0 %v4861
        %6386 = vmatpush.bf16.msra.mxu0 %v4824
        %6387 = vmatpush.bf16.msra.mxu0 %v4787
        %6388 = vmatpush.bf16.msra.mxu0 %v4750
        %6389 = vmatpush.bf16.msra.mxu0 %v4713
        %6390 = vmatmul.bf16.gmra.mxu0 %v2208
        %v6391 = vpop.f32.mrf.mxu0
        %v6392 = vadd.f32 %v2847, %v6391
        %v6393 = vpop.f32.mrf.mxu0
        %v6394 = vadd.f32 %v2847, %v6393
        %6395 = vmatmul.bf16.gmra.mxu0 %v2210
        %v6396 = vpop.f32.mrf.mxu0
        %v6397 = vadd.f32 %v2847, %v6396
        %v6398 = vpop.f32.mrf.mxu0
        %v6399 = vadd.f32 %v2847, %v6398
        %6400 = vmatmul.bf16.gmra.mxu0 %v2212
        %v6401 = vpop.f32.mrf.mxu0
        %v6402 = vadd.f32 %v2847, %v6401
        %v6403 = vpop.f32.mrf.mxu0
        %v6404 = vadd.f32 %v2847, %v6403
        %6405 = vmatmul.bf16.gmra.mxu0 %v2214
        %v6406 = vpop.f32.mrf.mxu0
        %v6407 = vadd.f32 %v2847, %v6406
        %v6408 = vpop.f32.mrf.mxu0
        %v6409 = vadd.f32 %v2847, %v6408
        %6410 = vmatmul.bf16.gmra.mxu0 %v2216
        %v6411 = vpop.f32.mrf.mxu0
        %v6412 = vadd.f32 %v2847, %v6411
        %v6413 = vpop.f32.mrf.mxu0
        %v6414 = vadd.f32 %v2847, %v6413
        %6415 = vmatmul.bf16.gmra.mxu0 %v2218
        %v6416 = vpop.f32.mrf.mxu0
        %v6417 = vadd.f32 %v2847, %v6416
        %v6418 = vpop.f32.mrf.mxu0
        %v6419 = vadd.f32 %v2847, %v6418
        %6420 = vmatmul.bf16.gmra.mxu0 %v2220
        %v6421 = vpop.f32.mrf.mxu0
        %v6422 = vadd.f32 %v2847, %v6421
        %v6423 = vpop.f32.mrf.mxu0
        %v6424 = vadd.f32 %v2847, %v6423
        %6425 = vmatmul.bf16.gmra.mxu0 %v2222
        %v6426 = vpop.f32.mrf.mxu0
        %v6427 = vadd.f32 %v2847, %v6426
        %v6428 = vpop.f32.mrf.mxu0
        %v6429 = vadd.f32 %v2847, %v6428
        %6430 = vdwg.mxu0
        %6431 = vmatpush.bf16.msra.mxu0 %v5268
        %6432 = vmatpush.bf16.msra.mxu0 %v5231
        %6433 = vmatpush.bf16.msra.mxu0 %v5194
        %6434 = vmatpush.bf16.msra.mxu0 %v5157
        %6435 = vmatpush.bf16.msra.mxu0 %v5120
        %6436 = vmatpush.bf16.msra.mxu0 %v5083
        %6437 = vmatpush.bf16.msra.mxu0 %v5046
        %6438 = vmatpush.bf16.msra.mxu0 %v5009
        %6439 = vmatmul.bf16.gmra.mxu0 %v2209
        %v6440 = vpop.f32.mrf.mxu0
        %v6441 = vadd.f32 %v6392, %v6440
        %v6442 = vpop.f32.mrf.mxu0
        %v6443 = vadd.f32 %v6394, %v6442
        %6444 = vmatmul.bf16.gmra.mxu0 %v2211
        %v6445 = vpop.f32.mrf.mxu0
        %v6446 = vadd.f32 %v6397, %v6445
        %v6447 = vpop.f32.mrf.mxu0
        %v6448 = vadd.f32 %v6399, %v6447
        %6449 = vmatmul.bf16.gmra.mxu0 %v2213
        %v6450 = vpop.f32.mrf.mxu0
        %v6451 = vadd.f32 %v6402, %v6450
        %v6452 = vpop.f32.mrf.mxu0
        %v6453 = vadd.f32 %v6404, %v6452
        %6454 = vmatmul.bf16.gmra.mxu0 %v2215
        %v6455 = vpop.f32.mrf.mxu0
        %v6456 = vadd.f32 %v6407, %v6455
        %v6457 = vpop.f32.mrf.mxu0
        %v6458 = vadd.f32 %v6409, %v6457
        %6459 = vmatmul.bf16.gmra.mxu0 %v2217
        %v6460 = vpop.f32.mrf.mxu0
        %v6461 = vadd.f32 %v6412, %v6460
        %v6462 = vpop.f32.mrf.mxu0
        %v6463 = vadd.f32 %v6414, %v6462
        %6464 = vmatmul.bf16.gmra.mxu0 %v2219
        %v6465 = vpop.f32.mrf.mxu0
        %v6466 = vadd.f32 %v6417, %v6465
        %v6467 = vpop.f32.mrf.mxu0
        %v6468 = vadd.f32 %v6419, %v6467
        %6469 = vmatmul.bf16.gmra.mxu0 %v2221
        %v6470 = vpop.f32.mrf.mxu0
        %v6471 = vadd.f32 %v6422, %v6470
        %v6472 = vpop.f32.mrf.mxu0
        %v6473 = vadd.f32 %v6424, %v6472
        %6474 = vmatmul.bf16.gmra.mxu0 %v2223
        %v6475 = vpop.f32.mrf.mxu0
        %v6476 = vadd.f32 %v6427, %v6475
        %v6477 = vpop.f32.mrf.mxu0
        %v6478 = vadd.f32 %v6429, %v6477
        %6479 = vdwg.mxu0
        %6480 = vmatpush.bf16.msra.mxu0 %v4973
        %6481 = vmatpush.bf16.msra.mxu0 %v4936
        %6482 = vmatpush.bf16.msra.mxu0 %v4899
        %6483 = vmatpush.bf16.msra.mxu0 %v4862
        %6484 = vmatpush.bf16.msra.mxu0 %v4825
        %6485 = vmatpush.bf16.msra.mxu0 %v4788
        %6486 = vmatpush.bf16.msra.mxu0 %v4751
        %6487 = vmatpush.bf16.msra.mxu0 %v4714
        %6488 = vmatmul.bf16.gmra.mxu0 %v2208
        %v6489 = vpop.f32.mrf.mxu0
        %v6490 = vadd.f32 %v2848, %v6489
        %v6491 = vpop.f32.mrf.mxu0
        %v6492 = vadd.f32 %v2848, %v6491
        %6493 = vmatmul.bf16.gmra.mxu0 %v2210
        %v6494 = vpop.f32.mrf.mxu0
        %v6495 = vadd.f32 %v2848, %v6494
        %v6496 = vpop.f32.mrf.mxu0
        %v6497 = vadd.f32 %v2848, %v6496
        %6498 = vmatmul.bf16.gmra.mxu0 %v2212
        %v6499 = vpop.f32.mrf.mxu0
        %v6500 = vadd.f32 %v2848, %v6499
        %v6501 = vpop.f32.mrf.mxu0
        %v6502 = vadd.f32 %v2848, %v6501
        %6503 = vmatmul.bf16.gmra.mxu0 %v2214
        %v6504 = vpop.f32.mrf.mxu0
        %v6505 = vadd.f32 %v2848, %v6504
        %v6506 = vpop.f32.mrf.mxu0
        %v6507 = vadd.f32 %v2848, %v6506
        %6508 = vmatmul.bf16.gmra.mxu0 %v2216
        %v6509 = vpop.f32.mrf.mxu0
        %v6510 = vadd.f32 %v2848, %v6509
        %v6511 = vpop.f32.mrf.mxu0
        %v6512 = vadd.f32 %v2848, %v6511
        %6513 = vmatmul.bf16.gmra.mxu0 %v2218
        %v6514 = vpop.f32.mrf.mxu0
        %v6515 = vadd.f32 %v2848, %v6514
        %v6516 = vpop.f32.mrf.mxu0
        %v6517 = vadd.f32 %v2848, %v6516
        %6518 = vmatmul.bf16.gmra.mxu0 %v2220
        %v6519 = vpop.f32.mrf.mxu0
        %v6520 = vadd.f32 %v2848, %v6519
        %v6521 = vpop.f32.mrf.mxu0
        %v6522 = vadd.f32 %v2848, %v6521
        %6523 = vmatmul.bf16.gmra.mxu0 %v2222
        %v6524 = vpop.f32.mrf.mxu0
        %v6525 = vadd.f32 %v2848, %v6524
        %v6526 = vpop.f32.mrf.mxu0
        %v6527 = vadd.f32 %v2848, %v6526
        %6528 = vdwg.mxu0
        %6529 = vmatpush.bf16.msra.mxu0 %v5269
        %6530 = vmatpush.bf16.msra.mxu0 %v5232
        %6531 = vmatpush.bf16.msra.mxu0 %v5195
        %6532 = vmatpush.bf16.msra.mxu0 %v5158
        %6533 = vmatpush.bf16.msra.mxu0 %v5121
        %6534 = vmatpush.bf16.msra.mxu0 %v5084
        %6535 = vmatpush.bf16.msra.mxu0 %v5047
        %6536 = vmatpush.bf16.msra.mxu0 %v5010
        %6537 = vmatmul.bf16.gmra.mxu0 %v2209
        %v6538 = vpop.f32.mrf.mxu0
        %v6539 = vadd.f32 %v6490, %v6538
        %v6540 = vpop.f32.mrf.mxu0
        %v6541 = vadd.f32 %v6492, %v6540
        %6542 = vmatmul.bf16.gmra.mxu0 %v2211
        %v6543 = vpop.f32.mrf.mxu0
        %v6544 = vadd.f32 %v6495, %v6543
        %v6545 = vpop.f32.mrf.mxu0
        %v6546 = vadd.f32 %v6497, %v6545
        %6547 = vmatmul.bf16.gmra.mxu0 %v2213
        %v6548 = vpop.f32.mrf.mxu0
        %v6549 = vadd.f32 %v6500, %v6548
        %v6550 = vpop.f32.mrf.mxu0
        %v6551 = vadd.f32 %v6502, %v6550
        %6552 = vmatmul.bf16.gmra.mxu0 %v2215
        %v6553 = vpop.f32.mrf.mxu0
        %v6554 = vadd.f32 %v6505, %v6553
        %v6555 = vpop.f32.mrf.mxu0
        %v6556 = vadd.f32 %v6507, %v6555
        %6557 = vmatmul.bf16.gmra.mxu0 %v2217
        %v6558 = vpop.f32.mrf.mxu0
        %v6559 = vadd.f32 %v6510, %v6558
        %v6560 = vpop.f32.mrf.mxu0
        %v6561 = vadd.f32 %v6512, %v6560
        %6562 = vmatmul.bf16.gmra.mxu0 %v2219
        %v6563 = vpop.f32.mrf.mxu0
        %v6564 = vadd.f32 %v6515, %v6563
        %v6565 = vpop.f32.mrf.mxu0
        %v6566 = vadd.f32 %v6517, %v6565
        %6567 = vmatmul.bf16.gmra.mxu0 %v2221
        %v6568 = vpop.f32.mrf.mxu0
        %v6569 = vadd.f32 %v6520, %v6568
        %v6570 = vpop.f32.mrf.mxu0
        %v6571 = vadd.f32 %v6522, %v6570
        %6572 = vmatmul.bf16.gmra.mxu0 %v2223
        %v6573 = vpop.f32.mrf.mxu0
        %v6574 = vadd.f32 %v6525, %v6573
        %v6575 = vpop.f32.mrf.mxu0
        %v6576 = vadd.f32 %v6527, %v6575
        %6577 = vdwg.mxu0
        %6578 = vmatpush.bf16.msra.mxu0 %v4974
        %6579 = vmatpush.bf16.msra.mxu0 %v4937
        %6580 = vmatpush.bf16.msra.mxu0 %v4900
        %6581 = vmatpush.bf16.msra.mxu0 %v4863
        %6582 = vmatpush.bf16.msra.mxu0 %v4826
        %6583 = vmatpush.bf16.msra.mxu0 %v4789
        %6584 = vmatpush.bf16.msra.mxu0 %v4752
        %6585 = vmatpush.bf16.msra.mxu0 %v4715
        %6586 = vmatmul.bf16.gmra.mxu0 %v2208
        %v6587 = vpop.f32.mrf.mxu0
        %v6588 = vadd.f32 %v2849, %v6587
        %v6589 = vpop.f32.mrf.mxu0
        %v6590 = vadd.f32 %v2849, %v6589
        %6591 = vmatmul.bf16.gmra.mxu0 %v2210
        %v6592 = vpop.f32.mrf.mxu0
        %v6593 = vadd.f32 %v2849, %v6592
        %v6594 = vpop.f32.mrf.mxu0
        %v6595 = vadd.f32 %v2849, %v6594
        %6596 = vmatmul.bf16.gmra.mxu0 %v2212
        %v6597 = vpop.f32.mrf.mxu0
        %v6598 = vadd.f32 %v2849, %v6597
        %v6599 = vpop.f32.mrf.mxu0
        %v6600 = vadd.f32 %v2849, %v6599
        %6601 = vmatmul.bf16.gmra.mxu0 %v2214
        %v6602 = vpop.f32.mrf.mxu0
        %v6603 = vadd.f32 %v2849, %v6602
        %v6604 = vpop.f32.mrf.mxu0
        %v6605 = vadd.f32 %v2849, %v6604
        %6606 = vmatmul.bf16.gmra.mxu0 %v2216
        %v6607 = vpop.f32.mrf.mxu0
        %v6608 = vadd.f32 %v2849, %v6607
        %v6609 = vpop.f32.mrf.mxu0
        %v6610 = vadd.f32 %v2849, %v6609
        %6611 = vmatmul.bf16.gmra.mxu0 %v2218
        %v6612 = vpop.f32.mrf.mxu0
        %v6613 = vadd.f32 %v2849, %v6612
        %v6614 = vpop.f32.mrf.mxu0
        %v6615 = vadd.f32 %v2849, %v6614
        %6616 = vmatmul.bf16.gmra.mxu0 %v2220
        %v6617 = vpop.f32.mrf.mxu0
        %v6618 = vadd.f32 %v2849, %v6617
        %v6619 = vpop.f32.mrf.mxu0
        %v6620 = vadd.f32 %v2849, %v6619
        %6621 = vmatmul.bf16.gmra.mxu0 %v2222
        %v6622 = vpop.f32.mrf.mxu0
        %v6623 = vadd.f32 %v2849, %v6622
        %v6624 = vpop.f32.mrf.mxu0
        %v6625 = vadd.f32 %v2849, %v6624
        %6626 = vdwg.mxu0
        %6627 = vmatpush.bf16.msra.mxu0 %v5270
        %6628 = vmatpush.bf16.msra.mxu0 %v5233
        %6629 = vmatpush.bf16.msra.mxu0 %v5196
        %6630 = vmatpush.bf16.msra.mxu0 %v5159
        %6631 = vmatpush.bf16.msra.mxu0 %v5122
        %6632 = vmatpush.bf16.msra.mxu0 %v5085
        %6633 = vmatpush.bf16.msra.mxu0 %v5048
        %6634 = vmatpush.bf16.msra.mxu0 %v5011
        %6635 = vmatmul.bf16.gmra.mxu0 %v2209
        %v6636 = vpop.f32.mrf.mxu0
        %v6637 = vadd.f32 %v6588, %v6636
        %v6638 = vpop.f32.mrf.mxu0
        %v6639 = vadd.f32 %v6590, %v6638
        %6640 = vmatmul.bf16.gmra.mxu0 %v2211
        %v6641 = vpop.f32.mrf.mxu0
        %v6642 = vadd.f32 %v6593, %v6641
        %v6643 = vpop.f32.mrf.mxu0
        %v6644 = vadd.f32 %v6595, %v6643
        %6645 = vmatmul.bf16.gmra.mxu0 %v2213
        %v6646 = vpop.f32.mrf.mxu0
        %v6647 = vadd.f32 %v6598, %v6646
        %v6648 = vpop.f32.mrf.mxu0
        %v6649 = vadd.f32 %v6600, %v6648
        %6650 = vmatmul.bf16.gmra.mxu0 %v2215
        %v6651 = vpop.f32.mrf.mxu0
        %v6652 = vadd.f32 %v6603, %v6651
        %v6653 = vpop.f32.mrf.mxu0
        %v6654 = vadd.f32 %v6605, %v6653
        %6655 = vmatmul.bf16.gmra.mxu0 %v2217
        %v6656 = vpop.f32.mrf.mxu0
        %v6657 = vadd.f32 %v6608, %v6656
        %v6658 = vpop.f32.mrf.mxu0
        %v6659 = vadd.f32 %v6610, %v6658
        %6660 = vmatmul.bf16.gmra.mxu0 %v2219
        %v6661 = vpop.f32.mrf.mxu0
        %v6662 = vadd.f32 %v6613, %v6661
        %v6663 = vpop.f32.mrf.mxu0
        %v6664 = vadd.f32 %v6615, %v6663
        %6665 = vmatmul.bf16.gmra.mxu0 %v2221
        %v6666 = vpop.f32.mrf.mxu0
        %v6667 = vadd.f32 %v6618, %v6666
        %v6668 = vpop.f32.mrf.mxu0
        %v6669 = vadd.f32 %v6620, %v6668
        %6670 = vmatmul.bf16.gmra.mxu0 %v2223
        %v6671 = vpop.f32.mrf.mxu0
        %v6672 = vadd.f32 %v6623, %v6671
        %v6673 = vpop.f32.mrf.mxu0
        %v6674 = vadd.f32 %v6625, %v6673
        %6675 = vdwg.mxu0
        %6676 = vmatpush.bf16.msra.mxu0 %v4975
        %6677 = vmatpush.bf16.msra.mxu0 %v4938
        %6678 = vmatpush.bf16.msra.mxu0 %v4901
        %6679 = vmatpush.bf16.msra.mxu0 %v4864
        %6680 = vmatpush.bf16.msra.mxu0 %v4827
        %6681 = vmatpush.bf16.msra.mxu0 %v4790
        %6682 = vmatpush.bf16.msra.mxu0 %v4753
        %6683 = vmatpush.bf16.msra.mxu0 %v4716
        %6684 = vmatmul.bf16.gmra.mxu0 %v2208
        %v6685 = vpop.f32.mrf.mxu0
        %v6686 = vadd.f32 %v2850, %v6685
        %v6687 = vpop.f32.mrf.mxu0
        %v6688 = vadd.f32 %v2850, %v6687
        %6689 = vmatmul.bf16.gmra.mxu0 %v2210
        %v6690 = vpop.f32.mrf.mxu0
        %v6691 = vadd.f32 %v2850, %v6690
        %v6692 = vpop.f32.mrf.mxu0
        %v6693 = vadd.f32 %v2850, %v6692
        %6694 = vmatmul.bf16.gmra.mxu0 %v2212
        %v6695 = vpop.f32.mrf.mxu0
        %v6696 = vadd.f32 %v2850, %v6695
        %v6697 = vpop.f32.mrf.mxu0
        %v6698 = vadd.f32 %v2850, %v6697
        %6699 = vmatmul.bf16.gmra.mxu0 %v2214
        %v6700 = vpop.f32.mrf.mxu0
        %v6701 = vadd.f32 %v2850, %v6700
        %v6702 = vpop.f32.mrf.mxu0
        %v6703 = vadd.f32 %v2850, %v6702
        %6704 = vmatmul.bf16.gmra.mxu0 %v2216
        %v6705 = vpop.f32.mrf.mxu0
        %v6706 = vadd.f32 %v2850, %v6705
        %v6707 = vpop.f32.mrf.mxu0
        %v6708 = vadd.f32 %v2850, %v6707
        %6709 = vmatmul.bf16.gmra.mxu0 %v2218
        %v6710 = vpop.f32.mrf.mxu0
        %v6711 = vadd.f32 %v2850, %v6710
        %v6712 = vpop.f32.mrf.mxu0
        %v6713 = vadd.f32 %v2850, %v6712
        %6714 = vmatmul.bf16.gmra.mxu0 %v2220
        %v6715 = vpop.f32.mrf.mxu0
        %v6716 = vadd.f32 %v2850, %v6715
        %v6717 = vpop.f32.mrf.mxu0
        %v6718 = vadd.f32 %v2850, %v6717
        %6719 = vmatmul.bf16.gmra.mxu0 %v2222
        %v6720 = vpop.f32.mrf.mxu0
        %v6721 = vadd.f32 %v2850, %v6720
        %v6722 = vpop.f32.mrf.mxu0
        %v6723 = vadd.f32 %v2850, %v6722
        %6724 = vdwg.mxu0
        %6725 = vmatpush.bf16.msra.mxu0 %v5271
        %6726 = vmatpush.bf16.msra.mxu0 %v5234
        %6727 = vmatpush.bf16.msra.mxu0 %v5197
        %6728 = vmatpush.bf16.msra.mxu0 %v5160
        %6729 = vmatpush.bf16.msra.mxu0 %v5123
        %6730 = vmatpush.bf16.msra.mxu0 %v5086
        %6731 = vmatpush.bf16.msra.mxu0 %v5049
        %6732 = vmatpush.bf16.msra.mxu0 %v5012
        %6733 = vmatmul.bf16.gmra.mxu0 %v2209
        %v6734 = vpop.f32.mrf.mxu0
        %v6735 = vadd.f32 %v6686, %v6734
        %v6736 = vpop.f32.mrf.mxu0
        %v6737 = vadd.f32 %v6688, %v6736
        %6738 = vmatmul.bf16.gmra.mxu0 %v2211
        %v6739 = vpop.f32.mrf.mxu0
        %v6740 = vadd.f32 %v6691, %v6739
        %v6741 = vpop.f32.mrf.mxu0
        %v6742 = vadd.f32 %v6693, %v6741
        %6743 = vmatmul.bf16.gmra.mxu0 %v2213
        %v6744 = vpop.f32.mrf.mxu0
        %v6745 = vadd.f32 %v6696, %v6744
        %v6746 = vpop.f32.mrf.mxu0
        %v6747 = vadd.f32 %v6698, %v6746
        %6748 = vmatmul.bf16.gmra.mxu0 %v2215
        %v6749 = vpop.f32.mrf.mxu0
        %v6750 = vadd.f32 %v6701, %v6749
        %v6751 = vpop.f32.mrf.mxu0
        %v6752 = vadd.f32 %v6703, %v6751
        %6753 = vmatmul.bf16.gmra.mxu0 %v2217
        %v6754 = vpop.f32.mrf.mxu0
        %v6755 = vadd.f32 %v6706, %v6754
        %v6756 = vpop.f32.mrf.mxu0
        %v6757 = vadd.f32 %v6708, %v6756
        %6758 = vmatmul.bf16.gmra.mxu0 %v2219
        %v6759 = vpop.f32.mrf.mxu0
        %v6760 = vadd.f32 %v6711, %v6759
        %v6761 = vpop.f32.mrf.mxu0
        %v6762 = vadd.f32 %v6713, %v6761
        %6763 = vmatmul.bf16.gmra.mxu0 %v2221
        %v6764 = vpop.f32.mrf.mxu0
        %v6765 = vadd.f32 %v6716, %v6764
        %v6766 = vpop.f32.mrf.mxu0
        %v6767 = vadd.f32 %v6718, %v6766
        %6768 = vmatmul.bf16.gmra.mxu0 %v2223
        %v6769 = vpop.f32.mrf.mxu0
        %v6770 = vadd.f32 %v6721, %v6769
        %v6771 = vpop.f32.mrf.mxu0
        %v6772 = vadd.f32 %v6723, %v6771
        %6773 = vdwg.mxu0
        %6774 = vmatpush.bf16.msra.mxu0 %v4976
        %6775 = vmatpush.bf16.msra.mxu0 %v4939
        %6776 = vmatpush.bf16.msra.mxu0 %v4902
        %6777 = vmatpush.bf16.msra.mxu0 %v4865
        %6778 = vmatpush.bf16.msra.mxu0 %v4828
        %6779 = vmatpush.bf16.msra.mxu0 %v4791
        %6780 = vmatpush.bf16.msra.mxu0 %v4754
        %6781 = vmatpush.bf16.msra.mxu0 %v4717
        %6782 = vmatmul.bf16.gmra.mxu0 %v2208
        %v6783 = vpop.f32.mrf.mxu0
        %v6784 = vadd.f32 %v2851, %v6783
        %v6785 = vpop.f32.mrf.mxu0
        %v6786 = vadd.f32 %v2851, %v6785
        %6787 = vmatmul.bf16.gmra.mxu0 %v2210
        %v6788 = vpop.f32.mrf.mxu0
        %v6789 = vadd.f32 %v2851, %v6788
        %v6790 = vpop.f32.mrf.mxu0
        %v6791 = vadd.f32 %v2851, %v6790
        %6792 = vmatmul.bf16.gmra.mxu0 %v2212
        %v6793 = vpop.f32.mrf.mxu0
        %v6794 = vadd.f32 %v2851, %v6793
        %v6795 = vpop.f32.mrf.mxu0
        %v6796 = vadd.f32 %v2851, %v6795
        %6797 = vmatmul.bf16.gmra.mxu0 %v2214
        %v6798 = vpop.f32.mrf.mxu0
        %v6799 = vadd.f32 %v2851, %v6798
        %v6800 = vpop.f32.mrf.mxu0
        %v6801 = vadd.f32 %v2851, %v6800
        %6802 = vmatmul.bf16.gmra.mxu0 %v2216
        %v6803 = vpop.f32.mrf.mxu0
        %v6804 = vadd.f32 %v2851, %v6803
        %v6805 = vpop.f32.mrf.mxu0
        %v6806 = vadd.f32 %v2851, %v6805
        %6807 = vmatmul.bf16.gmra.mxu0 %v2218
        %v6808 = vpop.f32.mrf.mxu0
        %v6809 = vadd.f32 %v2851, %v6808
        %v6810 = vpop.f32.mrf.mxu0
        %v6811 = vadd.f32 %v2851, %v6810
        %6812 = vmatmul.bf16.gmra.mxu0 %v2220
        %v6813 = vpop.f32.mrf.mxu0
        %v6814 = vadd.f32 %v2851, %v6813
        %v6815 = vpop.f32.mrf.mxu0
        %v6816 = vadd.f32 %v2851, %v6815
        %6817 = vmatmul.bf16.gmra.mxu0 %v2222
        %v6818 = vpop.f32.mrf.mxu0
        %v6819 = vadd.f32 %v2851, %v6818
        %v6820 = vpop.f32.mrf.mxu0
        %v6821 = vadd.f32 %v2851, %v6820
        %6822 = vdwg.mxu0
        %6823 = vmatpush.bf16.msra.mxu0 %v5272
        %6824 = vmatpush.bf16.msra.mxu0 %v5235
        %6825 = vmatpush.bf16.msra.mxu0 %v5198
        %6826 = vmatpush.bf16.msra.mxu0 %v5161
        %6827 = vmatpush.bf16.msra.mxu0 %v5124
        %6828 = vmatpush.bf16.msra.mxu0 %v5087
        %6829 = vmatpush.bf16.msra.mxu0 %v5050
        %6830 = vmatpush.bf16.msra.mxu0 %v5013
        %6831 = vmatmul.bf16.gmra.mxu0 %v2209
        %v6832 = vpop.f32.mrf.mxu0
        %v6833 = vadd.f32 %v6784, %v6832
        %v6834 = vpop.f32.mrf.mxu0
        %v6835 = vadd.f32 %v6786, %v6834
        %6836 = vmatmul.bf16.gmra.mxu0 %v2211
        %v6837 = vpop.f32.mrf.mxu0
        %v6838 = vadd.f32 %v6789, %v6837
        %v6839 = vpop.f32.mrf.mxu0
        %v6840 = vadd.f32 %v6791, %v6839
        %6841 = vmatmul.bf16.gmra.mxu0 %v2213
        %v6842 = vpop.f32.mrf.mxu0
        %v6843 = vadd.f32 %v6794, %v6842
        %v6844 = vpop.f32.mrf.mxu0
        %v6845 = vadd.f32 %v6796, %v6844
        %6846 = vmatmul.bf16.gmra.mxu0 %v2215
        %v6847 = vpop.f32.mrf.mxu0
        %v6848 = vadd.f32 %v6799, %v6847
        %v6849 = vpop.f32.mrf.mxu0
        %v6850 = vadd.f32 %v6801, %v6849
        %6851 = vmatmul.bf16.gmra.mxu0 %v2217
        %v6852 = vpop.f32.mrf.mxu0
        %v6853 = vadd.f32 %v6804, %v6852
        %v6854 = vpop.f32.mrf.mxu0
        %v6855 = vadd.f32 %v6806, %v6854
        %6856 = vmatmul.bf16.gmra.mxu0 %v2219
        %v6857 = vpop.f32.mrf.mxu0
        %v6858 = vadd.f32 %v6809, %v6857
        %v6859 = vpop.f32.mrf.mxu0
        %v6860 = vadd.f32 %v6811, %v6859
        %6861 = vmatmul.bf16.gmra.mxu0 %v2221
        %v6862 = vpop.f32.mrf.mxu0
        %v6863 = vadd.f32 %v6814, %v6862
        %v6864 = vpop.f32.mrf.mxu0
        %v6865 = vadd.f32 %v6816, %v6864
        %6866 = vmatmul.bf16.gmra.mxu0 %v2223
        %v6867 = vpop.f32.mrf.mxu0
        %v6868 = vadd.f32 %v6819, %v6867
        %v6869 = vpop.f32.mrf.mxu0
        %v6870 = vadd.f32 %v6821, %v6869
        %6871 = vdwg.mxu0
        %6872 = vmatpush.bf16.msra.mxu0 %v4977
        %6873 = vmatpush.bf16.msra.mxu0 %v4940
        %6874 = vmatpush.bf16.msra.mxu0 %v4903
        %6875 = vmatpush.bf16.msra.mxu0 %v4866
        %6876 = vmatpush.bf16.msra.mxu0 %v4829
        %6877 = vmatpush.bf16.msra.mxu0 %v4792
        %6878 = vmatpush.bf16.msra.mxu0 %v4755
        %6879 = vmatpush.bf16.msra.mxu0 %v4718
        %6880 = vmatmul.bf16.gmra.mxu0 %v2208
        %v6881 = vpop.f32.mrf.mxu0
        %v6882 = vadd.f32 %v2852, %v6881
        %v6883 = vpop.f32.mrf.mxu0
        %v6884 = vadd.f32 %v2852, %v6883
        %6885 = vmatmul.bf16.gmra.mxu0 %v2210
        %v6886 = vpop.f32.mrf.mxu0
        %v6887 = vadd.f32 %v2852, %v6886
        %v6888 = vpop.f32.mrf.mxu0
        %v6889 = vadd.f32 %v2852, %v6888
        %6890 = vmatmul.bf16.gmra.mxu0 %v2212
        %v6891 = vpop.f32.mrf.mxu0
        %v6892 = vadd.f32 %v2852, %v6891
        %v6893 = vpop.f32.mrf.mxu0
        %v6894 = vadd.f32 %v2852, %v6893
        %6895 = vmatmul.bf16.gmra.mxu0 %v2214
        %v6896 = vpop.f32.mrf.mxu0
        %v6897 = vadd.f32 %v2852, %v6896
        %v6898 = vpop.f32.mrf.mxu0
        %v6899 = vadd.f32 %v2852, %v6898
        %6900 = vmatmul.bf16.gmra.mxu0 %v2216
        %v6901 = vpop.f32.mrf.mxu0
        %v6902 = vadd.f32 %v2852, %v6901
        %v6903 = vpop.f32.mrf.mxu0
        %v6904 = vadd.f32 %v2852, %v6903
        %6905 = vmatmul.bf16.gmra.mxu0 %v2218
        %v6906 = vpop.f32.mrf.mxu0
        %v6907 = vadd.f32 %v2852, %v6906
        %v6908 = vpop.f32.mrf.mxu0
        %v6909 = vadd.f32 %v2852, %v6908
        %6910 = vmatmul.bf16.gmra.mxu0 %v2220
        %v6911 = vpop.f32.mrf.mxu0
        %v6912 = vadd.f32 %v2852, %v6911
        %v6913 = vpop.f32.mrf.mxu0
        %v6914 = vadd.f32 %v2852, %v6913
        %6915 = vmatmul.bf16.gmra.mxu0 %v2222
        %v6916 = vpop.f32.mrf.mxu0
        %v6917 = vadd.f32 %v2852, %v6916
        %v6918 = vpop.f32.mrf.mxu0
        %v6919 = vadd.f32 %v2852, %v6918
        %6920 = vdwg.mxu0
        %6921 = vmatpush.bf16.msra.mxu0 %v5273
        %6922 = vmatpush.bf16.msra.mxu0 %v5236
        %6923 = vmatpush.bf16.msra.mxu0 %v5199
        %6924 = vmatpush.bf16.msra.mxu0 %v5162
        %6925 = vmatpush.bf16.msra.mxu0 %v5125
        %6926 = vmatpush.bf16.msra.mxu0 %v5088
        %6927 = vmatpush.bf16.msra.mxu0 %v5051
        %6928 = vmatpush.bf16.msra.mxu0 %v5014
        %6929 = vmatmul.bf16.gmra.mxu0 %v2209
        %v6930 = vpop.f32.mrf.mxu0
        %v6931 = vadd.f32 %v6882, %v6930
        %v6932 = vpop.f32.mrf.mxu0
        %v6933 = vadd.f32 %v6884, %v6932
        %6934 = vmatmul.bf16.gmra.mxu0 %v2211
        %v6935 = vpop.f32.mrf.mxu0
        %v6936 = vadd.f32 %v6887, %v6935
        %v6937 = vpop.f32.mrf.mxu0
        %v6938 = vadd.f32 %v6889, %v6937
        %6939 = vmatmul.bf16.gmra.mxu0 %v2213
        %v6940 = vpop.f32.mrf.mxu0
        %v6941 = vadd.f32 %v6892, %v6940
        %v6942 = vpop.f32.mrf.mxu0
        %v6943 = vadd.f32 %v6894, %v6942
        %6944 = vmatmul.bf16.gmra.mxu0 %v2215
        %v6945 = vpop.f32.mrf.mxu0
        %v6946 = vadd.f32 %v6897, %v6945
        %v6947 = vpop.f32.mrf.mxu0
        %v6948 = vadd.f32 %v6899, %v6947
        %6949 = vmatmul.bf16.gmra.mxu0 %v2217
        %v6950 = vpop.f32.mrf.mxu0
        %v6951 = vadd.f32 %v6902, %v6950
        %v6952 = vpop.f32.mrf.mxu0
        %v6953 = vadd.f32 %v6904, %v6952
        %6954 = vmatmul.bf16.gmra.mxu0 %v2219
        %v6955 = vpop.f32.mrf.mxu0
        %v6956 = vadd.f32 %v6907, %v6955
        %v6957 = vpop.f32.mrf.mxu0
        %v6958 = vadd.f32 %v6909, %v6957
        %6959 = vmatmul.bf16.gmra.mxu0 %v2221
        %v6960 = vpop.f32.mrf.mxu0
        %v6961 = vadd.f32 %v6912, %v6960
        %v6962 = vpop.f32.mrf.mxu0
        %v6963 = vadd.f32 %v6914, %v6962
        %6964 = vmatmul.bf16.gmra.mxu0 %v2223
        %v6965 = vpop.f32.mrf.mxu0
        %v6966 = vadd.f32 %v6917, %v6965
        %v6967 = vpop.f32.mrf.mxu0
        %v6968 = vadd.f32 %v6919, %v6967
        %6969 = vdwg.mxu0
        %6970 = vmatpush.bf16.msra.mxu0 %v4978
        %6971 = vmatpush.bf16.msra.mxu0 %v4941
        %6972 = vmatpush.bf16.msra.mxu0 %v4904
        %6973 = vmatpush.bf16.msra.mxu0 %v4867
        %6974 = vmatpush.bf16.msra.mxu0 %v4830
        %6975 = vmatpush.bf16.msra.mxu0 %v4793
        %6976 = vmatpush.bf16.msra.mxu0 %v4756
        %6977 = vmatpush.bf16.msra.mxu0 %v4719
        %6978 = vmatmul.bf16.gmra.mxu0 %v2208
        %v6979 = vpop.f32.mrf.mxu0
        %v6980 = vadd.f32 %v2853, %v6979
        %v6981 = vpop.f32.mrf.mxu0
        %v6982 = vadd.f32 %v2853, %v6981
        %6983 = vmatmul.bf16.gmra.mxu0 %v2210
        %v6984 = vpop.f32.mrf.mxu0
        %v6985 = vadd.f32 %v2853, %v6984
        %v6986 = vpop.f32.mrf.mxu0
        %v6987 = vadd.f32 %v2853, %v6986
        %6988 = vmatmul.bf16.gmra.mxu0 %v2212
        %v6989 = vpop.f32.mrf.mxu0
        %v6990 = vadd.f32 %v2853, %v6989
        %v6991 = vpop.f32.mrf.mxu0
        %v6992 = vadd.f32 %v2853, %v6991
        %6993 = vmatmul.bf16.gmra.mxu0 %v2214
        %v6994 = vpop.f32.mrf.mxu0
        %v6995 = vadd.f32 %v2853, %v6994
        %v6996 = vpop.f32.mrf.mxu0
        %v6997 = vadd.f32 %v2853, %v6996
        %6998 = vmatmul.bf16.gmra.mxu0 %v2216
        %v6999 = vpop.f32.mrf.mxu0
        %v7000 = vadd.f32 %v2853, %v6999
        %v7001 = vpop.f32.mrf.mxu0
        %v7002 = vadd.f32 %v2853, %v7001
        %7003 = vmatmul.bf16.gmra.mxu0 %v2218
        %v7004 = vpop.f32.mrf.mxu0
        %v7005 = vadd.f32 %v2853, %v7004
        %v7006 = vpop.f32.mrf.mxu0
        %v7007 = vadd.f32 %v2853, %v7006
        %7008 = vmatmul.bf16.gmra.mxu0 %v2220
        %v7009 = vpop.f32.mrf.mxu0
        %v7010 = vadd.f32 %v2853, %v7009
        %v7011 = vpop.f32.mrf.mxu0
        %v7012 = vadd.f32 %v2853, %v7011
        %7013 = vmatmul.bf16.gmra.mxu0 %v2222
        %v7014 = vpop.f32.mrf.mxu0
        %v7015 = vadd.f32 %v2853, %v7014
        %v7016 = vpop.f32.mrf.mxu0
        %v7017 = vadd.f32 %v2853, %v7016
        %7018 = vdwg.mxu0
        %7019 = vmatpush.bf16.msra.mxu0 %v5274
        %7020 = vmatpush.bf16.msra.mxu0 %v5237
        %7021 = vmatpush.bf16.msra.mxu0 %v5200
        %7022 = vmatpush.bf16.msra.mxu0 %v5163
        %7023 = vmatpush.bf16.msra.mxu0 %v5126
        %7024 = vmatpush.bf16.msra.mxu0 %v5089
        %7025 = vmatpush.bf16.msra.mxu0 %v5052
        %7026 = vmatpush.bf16.msra.mxu0 %v5015
        %7027 = vmatmul.bf16.gmra.mxu0 %v2209
        %v7028 = vpop.f32.mrf.mxu0
        %v7029 = vadd.f32 %v6980, %v7028
        %v7030 = vpop.f32.mrf.mxu0
        %v7031 = vadd.f32 %v6982, %v7030
        %7032 = vmatmul.bf16.gmra.mxu0 %v2211
        %v7033 = vpop.f32.mrf.mxu0
        %v7034 = vadd.f32 %v6985, %v7033
        %v7035 = vpop.f32.mrf.mxu0
        %v7036 = vadd.f32 %v6987, %v7035
        %7037 = vmatmul.bf16.gmra.mxu0 %v2213
        %v7038 = vpop.f32.mrf.mxu0
        %v7039 = vadd.f32 %v6990, %v7038
        %v7040 = vpop.f32.mrf.mxu0
        %v7041 = vadd.f32 %v6992, %v7040
        %7042 = vmatmul.bf16.gmra.mxu0 %v2215
        %v7043 = vpop.f32.mrf.mxu0
        %v7044 = vadd.f32 %v6995, %v7043
        %v7045 = vpop.f32.mrf.mxu0
        %v7046 = vadd.f32 %v6997, %v7045
        %7047 = vmatmul.bf16.gmra.mxu0 %v2217
        %v7048 = vpop.f32.mrf.mxu0
        %v7049 = vadd.f32 %v7000, %v7048
        %v7050 = vpop.f32.mrf.mxu0
        %v7051 = vadd.f32 %v7002, %v7050
        %7052 = vmatmul.bf16.gmra.mxu0 %v2219
        %v7053 = vpop.f32.mrf.mxu0
        %v7054 = vadd.f32 %v7005, %v7053
        %v7055 = vpop.f32.mrf.mxu0
        %v7056 = vadd.f32 %v7007, %v7055
        %7057 = vmatmul.bf16.gmra.mxu0 %v2221
        %v7058 = vpop.f32.mrf.mxu0
        %v7059 = vadd.f32 %v7010, %v7058
        %v7060 = vpop.f32.mrf.mxu0
        %v7061 = vadd.f32 %v7012, %v7060
        %7062 = vmatmul.bf16.gmra.mxu0 %v2223
        %v7063 = vpop.f32.mrf.mxu0
        %v7064 = vadd.f32 %v7015, %v7063
        %v7065 = vpop.f32.mrf.mxu0
        %v7066 = vadd.f32 %v7017, %v7065
        %7067 = vdwg.mxu0
        %7068 = vmatpush.bf16.msra.mxu0 %v4979
        %7069 = vmatpush.bf16.msra.mxu0 %v4942
        %7070 = vmatpush.bf16.msra.mxu0 %v4905
        %7071 = vmatpush.bf16.msra.mxu0 %v4868
        %7072 = vmatpush.bf16.msra.mxu0 %v4831
        %7073 = vmatpush.bf16.msra.mxu0 %v4794
        %7074 = vmatpush.bf16.msra.mxu0 %v4757
        %7075 = vmatpush.bf16.msra.mxu0 %v4720
        %7076 = vmatmul.bf16.gmra.mxu0 %v2208
        %v7077 = vpop.f32.mrf.mxu0
        %v7078 = vadd.f32 %v2854, %v7077
        %v7079 = vpop.f32.mrf.mxu0
        %v7080 = vadd.f32 %v2854, %v7079
        %7081 = vmatmul.bf16.gmra.mxu0 %v2210
        %v7082 = vpop.f32.mrf.mxu0
        %v7083 = vadd.f32 %v2854, %v7082
        %v7084 = vpop.f32.mrf.mxu0
        %v7085 = vadd.f32 %v2854, %v7084
        %7086 = vmatmul.bf16.gmra.mxu0 %v2212
        %v7087 = vpop.f32.mrf.mxu0
        %v7088 = vadd.f32 %v2854, %v7087
        %v7089 = vpop.f32.mrf.mxu0
        %v7090 = vadd.f32 %v2854, %v7089
        %7091 = vmatmul.bf16.gmra.mxu0 %v2214
        %v7092 = vpop.f32.mrf.mxu0
        %v7093 = vadd.f32 %v2854, %v7092
        %v7094 = vpop.f32.mrf.mxu0
        %v7095 = vadd.f32 %v2854, %v7094
        %7096 = vmatmul.bf16.gmra.mxu0 %v2216
        %v7097 = vpop.f32.mrf.mxu0
        %v7098 = vadd.f32 %v2854, %v7097
        %v7099 = vpop.f32.mrf.mxu0
        %v7100 = vadd.f32 %v2854, %v7099
        %7101 = vmatmul.bf16.gmra.mxu0 %v2218
        %v7102 = vpop.f32.mrf.mxu0
        %v7103 = vadd.f32 %v2854, %v7102
        %v7104 = vpop.f32.mrf.mxu0
        %v7105 = vadd.f32 %v2854, %v7104
        %7106 = vmatmul.bf16.gmra.mxu0 %v2220
        %v7107 = vpop.f32.mrf.mxu0
        %v7108 = vadd.f32 %v2854, %v7107
        %v7109 = vpop.f32.mrf.mxu0
        %v7110 = vadd.f32 %v2854, %v7109
        %7111 = vmatmul.bf16.gmra.mxu0 %v2222
        %v7112 = vpop.f32.mrf.mxu0
        %v7113 = vadd.f32 %v2854, %v7112
        %v7114 = vpop.f32.mrf.mxu0
        %v7115 = vadd.f32 %v2854, %v7114
        %7116 = vdwg.mxu0
        %7117 = vmatpush.bf16.msra.mxu0 %v5275
        %7118 = vmatpush.bf16.msra.mxu0 %v5238
        %7119 = vmatpush.bf16.msra.mxu0 %v5201
        %7120 = vmatpush.bf16.msra.mxu0 %v5164
        %7121 = vmatpush.bf16.msra.mxu0 %v5127
        %7122 = vmatpush.bf16.msra.mxu0 %v5090
        %7123 = vmatpush.bf16.msra.mxu0 %v5053
        %7124 = vmatpush.bf16.msra.mxu0 %v5016
        %7125 = vmatmul.bf16.gmra.mxu0 %v2209
        %v7126 = vpop.f32.mrf.mxu0
        %v7127 = vadd.f32 %v7078, %v7126
        %v7128 = vpop.f32.mrf.mxu0
        %v7129 = vadd.f32 %v7080, %v7128
        %7130 = vmatmul.bf16.gmra.mxu0 %v2211
        %v7131 = vpop.f32.mrf.mxu0
        %v7132 = vadd.f32 %v7083, %v7131
        %v7133 = vpop.f32.mrf.mxu0
        %v7134 = vadd.f32 %v7085, %v7133
        %7135 = vmatmul.bf16.gmra.mxu0 %v2213
        %v7136 = vpop.f32.mrf.mxu0
        %v7137 = vadd.f32 %v7088, %v7136
        %v7138 = vpop.f32.mrf.mxu0
        %v7139 = vadd.f32 %v7090, %v7138
        %7140 = vmatmul.bf16.gmra.mxu0 %v2215
        %v7141 = vpop.f32.mrf.mxu0
        %v7142 = vadd.f32 %v7093, %v7141
        %v7143 = vpop.f32.mrf.mxu0
        %v7144 = vadd.f32 %v7095, %v7143
        %7145 = vmatmul.bf16.gmra.mxu0 %v2217
        %v7146 = vpop.f32.mrf.mxu0
        %v7147 = vadd.f32 %v7098, %v7146
        %v7148 = vpop.f32.mrf.mxu0
        %v7149 = vadd.f32 %v7100, %v7148
        %7150 = vmatmul.bf16.gmra.mxu0 %v2219
        %v7151 = vpop.f32.mrf.mxu0
        %v7152 = vadd.f32 %v7103, %v7151
        %v7153 = vpop.f32.mrf.mxu0
        %v7154 = vadd.f32 %v7105, %v7153
        %7155 = vmatmul.bf16.gmra.mxu0 %v2221
        %v7156 = vpop.f32.mrf.mxu0
        %v7157 = vadd.f32 %v7108, %v7156
        %v7158 = vpop.f32.mrf.mxu0
        %v7159 = vadd.f32 %v7110, %v7158
        %7160 = vmatmul.bf16.gmra.mxu0 %v2223
        %v7161 = vpop.f32.mrf.mxu0
        %v7162 = vadd.f32 %v7113, %v7161
        %v7163 = vpop.f32.mrf.mxu0
        %v7164 = vadd.f32 %v7115, %v7163
        %7165 = vdwg.mxu0
        %7166 = vmatpush.bf16.msra.mxu0 %v4980
        %7167 = vmatpush.bf16.msra.mxu0 %v4943
        %7168 = vmatpush.bf16.msra.mxu0 %v4906
        %7169 = vmatpush.bf16.msra.mxu0 %v4869
        %7170 = vmatpush.bf16.msra.mxu0 %v4832
        %7171 = vmatpush.bf16.msra.mxu0 %v4795
        %7172 = vmatpush.bf16.msra.mxu0 %v4758
        %7173 = vmatpush.bf16.msra.mxu0 %v4721
        %7174 = vmatmul.bf16.gmra.mxu0 %v2208
        %v7175 = vpop.f32.mrf.mxu0
        %v7176 = vadd.f32 %v2855, %v7175
        %v7177 = vpop.f32.mrf.mxu0
        %v7178 = vadd.f32 %v2855, %v7177
        %7179 = vmatmul.bf16.gmra.mxu0 %v2210
        %v7180 = vpop.f32.mrf.mxu0
        %v7181 = vadd.f32 %v2855, %v7180
        %v7182 = vpop.f32.mrf.mxu0
        %v7183 = vadd.f32 %v2855, %v7182
        %7184 = vmatmul.bf16.gmra.mxu0 %v2212
        %v7185 = vpop.f32.mrf.mxu0
        %v7186 = vadd.f32 %v2855, %v7185
        %v7187 = vpop.f32.mrf.mxu0
        %v7188 = vadd.f32 %v2855, %v7187
        %7189 = vmatmul.bf16.gmra.mxu0 %v2214
        %v7190 = vpop.f32.mrf.mxu0
        %v7191 = vadd.f32 %v2855, %v7190
        %v7192 = vpop.f32.mrf.mxu0
        %v7193 = vadd.f32 %v2855, %v7192
        %7194 = vmatmul.bf16.gmra.mxu0 %v2216
        %v7195 = vpop.f32.mrf.mxu0
        %v7196 = vadd.f32 %v2855, %v7195
        %v7197 = vpop.f32.mrf.mxu0
        %v7198 = vadd.f32 %v2855, %v7197
        %7199 = vmatmul.bf16.gmra.mxu0 %v2218
        %v7200 = vpop.f32.mrf.mxu0
        %v7201 = vadd.f32 %v2855, %v7200
        %v7202 = vpop.f32.mrf.mxu0
        %v7203 = vadd.f32 %v2855, %v7202
        %7204 = vmatmul.bf16.gmra.mxu0 %v2220
        %v7205 = vpop.f32.mrf.mxu0
        %v7206 = vadd.f32 %v2855, %v7205
        %v7207 = vpop.f32.mrf.mxu0
        %v7208 = vadd.f32 %v2855, %v7207
        %7209 = vmatmul.bf16.gmra.mxu0 %v2222
        %v7210 = vpop.f32.mrf.mxu0
        %v7211 = vadd.f32 %v2855, %v7210
        %v7212 = vpop.f32.mrf.mxu0
        %v7213 = vadd.f32 %v2855, %v7212
        %7214 = vdwg.mxu0
        %7215 = vmatpush.bf16.msra.mxu0 %v5276
        %7216 = vmatpush.bf16.msra.mxu0 %v5239
        %7217 = vmatpush.bf16.msra.mxu0 %v5202
        %7218 = vmatpush.bf16.msra.mxu0 %v5165
        %7219 = vmatpush.bf16.msra.mxu0 %v5128
        %7220 = vmatpush.bf16.msra.mxu0 %v5091
        %7221 = vmatpush.bf16.msra.mxu0 %v5054
        %7222 = vmatpush.bf16.msra.mxu0 %v5017
        %7223 = vmatmul.bf16.gmra.mxu0 %v2209
        %v7224 = vpop.f32.mrf.mxu0
        %v7225 = vadd.f32 %v7176, %v7224
        %v7226 = vpop.f32.mrf.mxu0
        %v7227 = vadd.f32 %v7178, %v7226
        %7228 = vmatmul.bf16.gmra.mxu0 %v2211
        %v7229 = vpop.f32.mrf.mxu0
        %v7230 = vadd.f32 %v7181, %v7229
        %v7231 = vpop.f32.mrf.mxu0
        %v7232 = vadd.f32 %v7183, %v7231
        %7233 = vmatmul.bf16.gmra.mxu0 %v2213
        %v7234 = vpop.f32.mrf.mxu0
        %v7235 = vadd.f32 %v7186, %v7234
        %v7236 = vpop.f32.mrf.mxu0
        %v7237 = vadd.f32 %v7188, %v7236
        %7238 = vmatmul.bf16.gmra.mxu0 %v2215
        %v7239 = vpop.f32.mrf.mxu0
        %v7240 = vadd.f32 %v7191, %v7239
        %v7241 = vpop.f32.mrf.mxu0
        %v7242 = vadd.f32 %v7193, %v7241
        %7243 = vmatmul.bf16.gmra.mxu0 %v2217
        %v7244 = vpop.f32.mrf.mxu0
        %v7245 = vadd.f32 %v7196, %v7244
        %v7246 = vpop.f32.mrf.mxu0
        %v7247 = vadd.f32 %v7198, %v7246
        %7248 = vmatmul.bf16.gmra.mxu0 %v2219
        %v7249 = vpop.f32.mrf.mxu0
        %v7250 = vadd.f32 %v7201, %v7249
        %v7251 = vpop.f32.mrf.mxu0
        %v7252 = vadd.f32 %v7203, %v7251
        %7253 = vmatmul.bf16.gmra.mxu0 %v2221
        %v7254 = vpop.f32.mrf.mxu0
        %v7255 = vadd.f32 %v7206, %v7254
        %v7256 = vpop.f32.mrf.mxu0
        %v7257 = vadd.f32 %v7208, %v7256
        %7258 = vmatmul.bf16.gmra.mxu0 %v2223
        %v7259 = vpop.f32.mrf.mxu0
        %v7260 = vadd.f32 %v7211, %v7259
        %v7261 = vpop.f32.mrf.mxu0
        %v7262 = vadd.f32 %v7213, %v7261
        %7263 = vdwg.mxu0
        %7264 = vmatpush.bf16.msra.mxu0 %v4981
        %7265 = vmatpush.bf16.msra.mxu0 %v4944
        %7266 = vmatpush.bf16.msra.mxu0 %v4907
        %7267 = vmatpush.bf16.msra.mxu0 %v4870
        %7268 = vmatpush.bf16.msra.mxu0 %v4833
        %7269 = vmatpush.bf16.msra.mxu0 %v4796
        %7270 = vmatpush.bf16.msra.mxu0 %v4759
        %7271 = vmatpush.bf16.msra.mxu0 %v4722
        %7272 = vmatmul.bf16.gmra.mxu0 %v2208
        %v7273 = vpop.f32.mrf.mxu0
        %v7274 = vadd.f32 %v2856, %v7273
        %v7275 = vpop.f32.mrf.mxu0
        %v7276 = vadd.f32 %v2856, %v7275
        %7277 = vmatmul.bf16.gmra.mxu0 %v2210
        %v7278 = vpop.f32.mrf.mxu0
        %v7279 = vadd.f32 %v2856, %v7278
        %v7280 = vpop.f32.mrf.mxu0
        %v7281 = vadd.f32 %v2856, %v7280
        %7282 = vmatmul.bf16.gmra.mxu0 %v2212
        %v7283 = vpop.f32.mrf.mxu0
        %v7284 = vadd.f32 %v2856, %v7283
        %v7285 = vpop.f32.mrf.mxu0
        %v7286 = vadd.f32 %v2856, %v7285
        %7287 = vmatmul.bf16.gmra.mxu0 %v2214
        %v7288 = vpop.f32.mrf.mxu0
        %v7289 = vadd.f32 %v2856, %v7288
        %v7290 = vpop.f32.mrf.mxu0
        %v7291 = vadd.f32 %v2856, %v7290
        %7292 = vmatmul.bf16.gmra.mxu0 %v2216
        %v7293 = vpop.f32.mrf.mxu0
        %v7294 = vadd.f32 %v2856, %v7293
        %v7295 = vpop.f32.mrf.mxu0
        %v7296 = vadd.f32 %v2856, %v7295
        %7297 = vmatmul.bf16.gmra.mxu0 %v2218
        %v7298 = vpop.f32.mrf.mxu0
        %v7299 = vadd.f32 %v2856, %v7298
        %v7300 = vpop.f32.mrf.mxu0
        %v7301 = vadd.f32 %v2856, %v7300
        %7302 = vmatmul.bf16.gmra.mxu0 %v2220
        %v7303 = vpop.f32.mrf.mxu0
        %v7304 = vadd.f32 %v2856, %v7303
        %v7305 = vpop.f32.mrf.mxu0
        %v7306 = vadd.f32 %v2856, %v7305
        %7307 = vmatmul.bf16.gmra.mxu0 %v2222
        %v7308 = vpop.f32.mrf.mxu0
        %v7309 = vadd.f32 %v2856, %v7308
        %v7310 = vpop.f32.mrf.mxu0
        %v7311 = vadd.f32 %v2856, %v7310
        %7312 = vdwg.mxu0
        %7313 = vmatpush.bf16.msra.mxu0 %v5277
        %7314 = vmatpush.bf16.msra.mxu0 %v5240
        %7315 = vmatpush.bf16.msra.mxu0 %v5203
        %7316 = vmatpush.bf16.msra.mxu0 %v5166
        %7317 = vmatpush.bf16.msra.mxu0 %v5129
        %7318 = vmatpush.bf16.msra.mxu0 %v5092
        %7319 = vmatpush.bf16.msra.mxu0 %v5055
        %7320 = vmatpush.bf16.msra.mxu0 %v5018
        %7321 = vmatmul.bf16.gmra.mxu0 %v2209
        %v7322 = vpop.f32.mrf.mxu0
        %v7323 = vadd.f32 %v7274, %v7322
        %v7324 = vpop.f32.mrf.mxu0
        %v7325 = vadd.f32 %v7276, %v7324
        %7326 = vmatmul.bf16.gmra.mxu0 %v2211
        %v7327 = vpop.f32.mrf.mxu0
        %v7328 = vadd.f32 %v7279, %v7327
        %v7329 = vpop.f32.mrf.mxu0
        %v7330 = vadd.f32 %v7281, %v7329
        %7331 = vmatmul.bf16.gmra.mxu0 %v2213
        %v7332 = vpop.f32.mrf.mxu0
        %v7333 = vadd.f32 %v7284, %v7332
        %v7334 = vpop.f32.mrf.mxu0
        %v7335 = vadd.f32 %v7286, %v7334
        %7336 = vmatmul.bf16.gmra.mxu0 %v2215
        %v7337 = vpop.f32.mrf.mxu0
        %v7338 = vadd.f32 %v7289, %v7337
        %v7339 = vpop.f32.mrf.mxu0
        %v7340 = vadd.f32 %v7291, %v7339
        %7341 = vmatmul.bf16.gmra.mxu0 %v2217
        %v7342 = vpop.f32.mrf.mxu0
        %v7343 = vadd.f32 %v7294, %v7342
        %v7344 = vpop.f32.mrf.mxu0
        %v7345 = vadd.f32 %v7296, %v7344
        %7346 = vmatmul.bf16.gmra.mxu0 %v2219
        %v7347 = vpop.f32.mrf.mxu0
        %v7348 = vadd.f32 %v7299, %v7347
        %v7349 = vpop.f32.mrf.mxu0
        %v7350 = vadd.f32 %v7301, %v7349
        %7351 = vmatmul.bf16.gmra.mxu0 %v2221
        %v7352 = vpop.f32.mrf.mxu0
        %v7353 = vadd.f32 %v7304, %v7352
        %v7354 = vpop.f32.mrf.mxu0
        %v7355 = vadd.f32 %v7306, %v7354
        %7356 = vmatmul.bf16.gmra.mxu0 %v2223
        %v7357 = vpop.f32.mrf.mxu0
        %v7358 = vadd.f32 %v7309, %v7357
        %v7359 = vpop.f32.mrf.mxu0
        %v7360 = vadd.f32 %v7311, %v7359
        %7361 = vdwg.mxu0
        %7362 = vmatpush.bf16.msra.mxu0 %v4982
        %7363 = vmatpush.bf16.msra.mxu0 %v4945
        %7364 = vmatpush.bf16.msra.mxu0 %v4908
        %7365 = vmatpush.bf16.msra.mxu0 %v4871
        %7366 = vmatpush.bf16.msra.mxu0 %v4834
        %7367 = vmatpush.bf16.msra.mxu0 %v4797
        %7368 = vmatpush.bf16.msra.mxu0 %v4760
        %7369 = vmatpush.bf16.msra.mxu0 %v4723
        %7370 = vmatmul.bf16.gmra.mxu0 %v2208
        %v7371 = vpop.f32.mrf.mxu0
        %v7372 = vadd.f32 %v2857, %v7371
        %v7373 = vpop.f32.mrf.mxu0
        %v7374 = vadd.f32 %v2857, %v7373
        %7375 = vmatmul.bf16.gmra.mxu0 %v2210
        %v7376 = vpop.f32.mrf.mxu0
        %v7377 = vadd.f32 %v2857, %v7376
        %v7378 = vpop.f32.mrf.mxu0
        %v7379 = vadd.f32 %v2857, %v7378
        %7380 = vmatmul.bf16.gmra.mxu0 %v2212
        %v7381 = vpop.f32.mrf.mxu0
        %v7382 = vadd.f32 %v2857, %v7381
        %v7383 = vpop.f32.mrf.mxu0
        %v7384 = vadd.f32 %v2857, %v7383
        %7385 = vmatmul.bf16.gmra.mxu0 %v2214
        %v7386 = vpop.f32.mrf.mxu0
        %v7387 = vadd.f32 %v2857, %v7386
        %v7388 = vpop.f32.mrf.mxu0
        %v7389 = vadd.f32 %v2857, %v7388
        %7390 = vmatmul.bf16.gmra.mxu0 %v2216
        %v7391 = vpop.f32.mrf.mxu0
        %v7392 = vadd.f32 %v2857, %v7391
        %v7393 = vpop.f32.mrf.mxu0
        %v7394 = vadd.f32 %v2857, %v7393
        %7395 = vmatmul.bf16.gmra.mxu0 %v2218
        %v7396 = vpop.f32.mrf.mxu0
        %v7397 = vadd.f32 %v2857, %v7396
        %v7398 = vpop.f32.mrf.mxu0
        %v7399 = vadd.f32 %v2857, %v7398
        %7400 = vmatmul.bf16.gmra.mxu0 %v2220
        %v7401 = vpop.f32.mrf.mxu0
        %v7402 = vadd.f32 %v2857, %v7401
        %v7403 = vpop.f32.mrf.mxu0
        %v7404 = vadd.f32 %v2857, %v7403
        %7405 = vmatmul.bf16.gmra.mxu0 %v2222
        %v7406 = vpop.f32.mrf.mxu0
        %v7407 = vadd.f32 %v2857, %v7406
        %v7408 = vpop.f32.mrf.mxu0
        %v7409 = vadd.f32 %v2857, %v7408
        %7410 = vdwg.mxu0
        %7411 = vmatpush.bf16.msra.mxu0 %v5278
        %7412 = vmatpush.bf16.msra.mxu0 %v5241
        %7413 = vmatpush.bf16.msra.mxu0 %v5204
        %7414 = vmatpush.bf16.msra.mxu0 %v5167
        %7415 = vmatpush.bf16.msra.mxu0 %v5130
        %7416 = vmatpush.bf16.msra.mxu0 %v5093
        %7417 = vmatpush.bf16.msra.mxu0 %v5056
        %7418 = vmatpush.bf16.msra.mxu0 %v5019
        %7419 = vmatmul.bf16.gmra.mxu0 %v2209
        %v7420 = vpop.f32.mrf.mxu0
        %v7421 = vadd.f32 %v7372, %v7420
        %v7422 = vpop.f32.mrf.mxu0
        %v7423 = vadd.f32 %v7374, %v7422
        %7424 = vmatmul.bf16.gmra.mxu0 %v2211
        %v7425 = vpop.f32.mrf.mxu0
        %v7426 = vadd.f32 %v7377, %v7425
        %v7427 = vpop.f32.mrf.mxu0
        %v7428 = vadd.f32 %v7379, %v7427
        %7429 = vmatmul.bf16.gmra.mxu0 %v2213
        %v7430 = vpop.f32.mrf.mxu0
        %v7431 = vadd.f32 %v7382, %v7430
        %v7432 = vpop.f32.mrf.mxu0
        %v7433 = vadd.f32 %v7384, %v7432
        %7434 = vmatmul.bf16.gmra.mxu0 %v2215
        %v7435 = vpop.f32.mrf.mxu0
        %v7436 = vadd.f32 %v7387, %v7435
        %v7437 = vpop.f32.mrf.mxu0
        %v7438 = vadd.f32 %v7389, %v7437
        %7439 = vmatmul.bf16.gmra.mxu0 %v2217
        %v7440 = vpop.f32.mrf.mxu0
        %v7441 = vadd.f32 %v7392, %v7440
        %v7442 = vpop.f32.mrf.mxu0
        %v7443 = vadd.f32 %v7394, %v7442
        %7444 = vmatmul.bf16.gmra.mxu0 %v2219
        %v7445 = vpop.f32.mrf.mxu0
        %v7446 = vadd.f32 %v7397, %v7445
        %v7447 = vpop.f32.mrf.mxu0
        %v7448 = vadd.f32 %v7399, %v7447
        %7449 = vmatmul.bf16.gmra.mxu0 %v2221
        %v7450 = vpop.f32.mrf.mxu0
        %v7451 = vadd.f32 %v7402, %v7450
        %v7452 = vpop.f32.mrf.mxu0
        %v7453 = vadd.f32 %v7404, %v7452
        %7454 = vmatmul.bf16.gmra.mxu0 %v2223
        %v7455 = vpop.f32.mrf.mxu0
        %v7456 = vadd.f32 %v7407, %v7455
        %v7457 = vpop.f32.mrf.mxu0
        %v7458 = vadd.f32 %v7409, %v7457
        %7459 = vdwg.mxu0
        %7460 = vmatpush.bf16.msra.mxu0 %v4983
        %7461 = vmatpush.bf16.msra.mxu0 %v4946
        %7462 = vmatpush.bf16.msra.mxu0 %v4909
        %7463 = vmatpush.bf16.msra.mxu0 %v4872
        %7464 = vmatpush.bf16.msra.mxu0 %v4835
        %7465 = vmatpush.bf16.msra.mxu0 %v4798
        %7466 = vmatpush.bf16.msra.mxu0 %v4761
        %7467 = vmatpush.bf16.msra.mxu0 %v4724
        %7468 = vmatmul.bf16.gmra.mxu0 %v2208
        %v7469 = vpop.f32.mrf.mxu0
        %v7470 = vadd.f32 %v2858, %v7469
        %v7471 = vpop.f32.mrf.mxu0
        %v7472 = vadd.f32 %v2858, %v7471
        %7473 = vmatmul.bf16.gmra.mxu0 %v2210
        %v7474 = vpop.f32.mrf.mxu0
        %v7475 = vadd.f32 %v2858, %v7474
        %v7476 = vpop.f32.mrf.mxu0
        %v7477 = vadd.f32 %v2858, %v7476
        %7478 = vmatmul.bf16.gmra.mxu0 %v2212
        %v7479 = vpop.f32.mrf.mxu0
        %v7480 = vadd.f32 %v2858, %v7479
        %v7481 = vpop.f32.mrf.mxu0
        %v7482 = vadd.f32 %v2858, %v7481
        %7483 = vmatmul.bf16.gmra.mxu0 %v2214
        %v7484 = vpop.f32.mrf.mxu0
        %v7485 = vadd.f32 %v2858, %v7484
        %v7486 = vpop.f32.mrf.mxu0
        %v7487 = vadd.f32 %v2858, %v7486
        %7488 = vmatmul.bf16.gmra.mxu0 %v2216
        %v7489 = vpop.f32.mrf.mxu0
        %v7490 = vadd.f32 %v2858, %v7489
        %v7491 = vpop.f32.mrf.mxu0
        %v7492 = vadd.f32 %v2858, %v7491
        %7493 = vmatmul.bf16.gmra.mxu0 %v2218
        %v7494 = vpop.f32.mrf.mxu0
        %v7495 = vadd.f32 %v2858, %v7494
        %v7496 = vpop.f32.mrf.mxu0
        %v7497 = vadd.f32 %v2858, %v7496
        %7498 = vmatmul.bf16.gmra.mxu0 %v2220
        %v7499 = vpop.f32.mrf.mxu0
        %v7500 = vadd.f32 %v2858, %v7499
        %v7501 = vpop.f32.mrf.mxu0
        %v7502 = vadd.f32 %v2858, %v7501
        %7503 = vmatmul.bf16.gmra.mxu0 %v2222
        %v7504 = vpop.f32.mrf.mxu0
        %v7505 = vadd.f32 %v2858, %v7504
        %v7506 = vpop.f32.mrf.mxu0
        %v7507 = vadd.f32 %v2858, %v7506
        %7508 = vdwg.mxu0
        %7509 = vmatpush.bf16.msra.mxu0 %v5279
        %7510 = vmatpush.bf16.msra.mxu0 %v5242
        %7511 = vmatpush.bf16.msra.mxu0 %v5205
        %7512 = vmatpush.bf16.msra.mxu0 %v5168
        %7513 = vmatpush.bf16.msra.mxu0 %v5131
        %7514 = vmatpush.bf16.msra.mxu0 %v5094
        %7515 = vmatpush.bf16.msra.mxu0 %v5057
        %7516 = vmatpush.bf16.msra.mxu0 %v5020
        %7517 = vmatmul.bf16.gmra.mxu0 %v2209
        %v7518 = vpop.f32.mrf.mxu0
        %v7519 = vadd.f32 %v7470, %v7518
        %v7520 = vpop.f32.mrf.mxu0
        %v7521 = vadd.f32 %v7472, %v7520
        %7522 = vmatmul.bf16.gmra.mxu0 %v2211
        %v7523 = vpop.f32.mrf.mxu0
        %v7524 = vadd.f32 %v7475, %v7523
        %v7525 = vpop.f32.mrf.mxu0
        %v7526 = vadd.f32 %v7477, %v7525
        %7527 = vmatmul.bf16.gmra.mxu0 %v2213
        %v7528 = vpop.f32.mrf.mxu0
        %v7529 = vadd.f32 %v7480, %v7528
        %v7530 = vpop.f32.mrf.mxu0
        %v7531 = vadd.f32 %v7482, %v7530
        %7532 = vmatmul.bf16.gmra.mxu0 %v2215
        %v7533 = vpop.f32.mrf.mxu0
        %v7534 = vadd.f32 %v7485, %v7533
        %v7535 = vpop.f32.mrf.mxu0
        %v7536 = vadd.f32 %v7487, %v7535
        %7537 = vmatmul.bf16.gmra.mxu0 %v2217
        %v7538 = vpop.f32.mrf.mxu0
        %v7539 = vadd.f32 %v7490, %v7538
        %v7540 = vpop.f32.mrf.mxu0
        %v7541 = vadd.f32 %v7492, %v7540
        %7542 = vmatmul.bf16.gmra.mxu0 %v2219
        %v7543 = vpop.f32.mrf.mxu0
        %v7544 = vadd.f32 %v7495, %v7543
        %v7545 = vpop.f32.mrf.mxu0
        %v7546 = vadd.f32 %v7497, %v7545
        %7547 = vmatmul.bf16.gmra.mxu0 %v2221
        %v7548 = vpop.f32.mrf.mxu0
        %v7549 = vadd.f32 %v7500, %v7548
        %v7550 = vpop.f32.mrf.mxu0
        %v7551 = vadd.f32 %v7502, %v7550
        %7552 = vmatmul.bf16.gmra.mxu0 %v2223
        %v7553 = vpop.f32.mrf.mxu0
        %v7554 = vadd.f32 %v7505, %v7553
        %v7555 = vpop.f32.mrf.mxu0
        %v7556 = vadd.f32 %v7507, %v7555
        %7557 = vdwg.mxu0
        %7558 = vmatpush.bf16.msra.mxu0 %v4984
        %7559 = vmatpush.bf16.msra.mxu0 %v4947
        %7560 = vmatpush.bf16.msra.mxu0 %v4910
        %7561 = vmatpush.bf16.msra.mxu0 %v4873
        %7562 = vmatpush.bf16.msra.mxu0 %v4836
        %7563 = vmatpush.bf16.msra.mxu0 %v4799
        %7564 = vmatpush.bf16.msra.mxu0 %v4762
        %7565 = vmatpush.bf16.msra.mxu0 %v4725
        %7566 = vmatmul.bf16.gmra.mxu0 %v2208
        %v7567 = vpop.f32.mrf.mxu0
        %v7568 = vadd.f32 %v2859, %v7567
        %v7569 = vpop.f32.mrf.mxu0
        %v7570 = vadd.f32 %v2859, %v7569
        %7571 = vmatmul.bf16.gmra.mxu0 %v2210
        %v7572 = vpop.f32.mrf.mxu0
        %v7573 = vadd.f32 %v2859, %v7572
        %v7574 = vpop.f32.mrf.mxu0
        %v7575 = vadd.f32 %v2859, %v7574
        %7576 = vmatmul.bf16.gmra.mxu0 %v2212
        %v7577 = vpop.f32.mrf.mxu0
        %v7578 = vadd.f32 %v2859, %v7577
        %v7579 = vpop.f32.mrf.mxu0
        %v7580 = vadd.f32 %v2859, %v7579
        %7581 = vmatmul.bf16.gmra.mxu0 %v2214
        %v7582 = vpop.f32.mrf.mxu0
        %v7583 = vadd.f32 %v2859, %v7582
        %v7584 = vpop.f32.mrf.mxu0
        %v7585 = vadd.f32 %v2859, %v7584
        %7586 = vmatmul.bf16.gmra.mxu0 %v2216
        %v7587 = vpop.f32.mrf.mxu0
        %v7588 = vadd.f32 %v2859, %v7587
        %v7589 = vpop.f32.mrf.mxu0
        %v7590 = vadd.f32 %v2859, %v7589
        %7591 = vmatmul.bf16.gmra.mxu0 %v2218
        %v7592 = vpop.f32.mrf.mxu0
        %v7593 = vadd.f32 %v2859, %v7592
        %v7594 = vpop.f32.mrf.mxu0
        %v7595 = vadd.f32 %v2859, %v7594
        %7596 = vmatmul.bf16.gmra.mxu0 %v2220
        %v7597 = vpop.f32.mrf.mxu0
        %v7598 = vadd.f32 %v2859, %v7597
        %v7599 = vpop.f32.mrf.mxu0
        %v7600 = vadd.f32 %v2859, %v7599
        %7601 = vmatmul.bf16.gmra.mxu0 %v2222
        %v7602 = vpop.f32.mrf.mxu0
        %v7603 = vadd.f32 %v2859, %v7602
        %v7604 = vpop.f32.mrf.mxu0
        %v7605 = vadd.f32 %v2859, %v7604
        %7606 = vdwg.mxu0
        %7607 = vmatpush.bf16.msra.mxu0 %v5280
        %7608 = vmatpush.bf16.msra.mxu0 %v5243
        %7609 = vmatpush.bf16.msra.mxu0 %v5206
        %7610 = vmatpush.bf16.msra.mxu0 %v5169
        %7611 = vmatpush.bf16.msra.mxu0 %v5132
        %7612 = vmatpush.bf16.msra.mxu0 %v5095
        %7613 = vmatpush.bf16.msra.mxu0 %v5058
        %7614 = vmatpush.bf16.msra.mxu0 %v5021
        %7615 = vmatmul.bf16.gmra.mxu0 %v2209
        %v7616 = vpop.f32.mrf.mxu0
        %v7617 = vadd.f32 %v7568, %v7616
        %v7618 = vpop.f32.mrf.mxu0
        %v7619 = vadd.f32 %v7570, %v7618
        %7620 = vmatmul.bf16.gmra.mxu0 %v2211
        %v7621 = vpop.f32.mrf.mxu0
        %v7622 = vadd.f32 %v7573, %v7621
        %v7623 = vpop.f32.mrf.mxu0
        %v7624 = vadd.f32 %v7575, %v7623
        %7625 = vmatmul.bf16.gmra.mxu0 %v2213
        %v7626 = vpop.f32.mrf.mxu0
        %v7627 = vadd.f32 %v7578, %v7626
        %v7628 = vpop.f32.mrf.mxu0
        %v7629 = vadd.f32 %v7580, %v7628
        %7630 = vmatmul.bf16.gmra.mxu0 %v2215
        %v7631 = vpop.f32.mrf.mxu0
        %v7632 = vadd.f32 %v7583, %v7631
        %v7633 = vpop.f32.mrf.mxu0
        %v7634 = vadd.f32 %v7585, %v7633
        %7635 = vmatmul.bf16.gmra.mxu0 %v2217
        %v7636 = vpop.f32.mrf.mxu0
        %v7637 = vadd.f32 %v7588, %v7636
        %v7638 = vpop.f32.mrf.mxu0
        %v7639 = vadd.f32 %v7590, %v7638
        %7640 = vmatmul.bf16.gmra.mxu0 %v2219
        %v7641 = vpop.f32.mrf.mxu0
        %v7642 = vadd.f32 %v7593, %v7641
        %v7643 = vpop.f32.mrf.mxu0
        %v7644 = vadd.f32 %v7595, %v7643
        %7645 = vmatmul.bf16.gmra.mxu0 %v2221
        %v7646 = vpop.f32.mrf.mxu0
        %v7647 = vadd.f32 %v7598, %v7646
        %v7648 = vpop.f32.mrf.mxu0
        %v7649 = vadd.f32 %v7600, %v7648
        %7650 = vmatmul.bf16.gmra.mxu0 %v2223
        %v7651 = vpop.f32.mrf.mxu0
        %v7652 = vadd.f32 %v7603, %v7651
        %v7653 = vpop.f32.mrf.mxu0
        %v7654 = vadd.f32 %v7605, %v7653
        %7655 = vdwg.mxu0
        %7656 = vmatpush.bf16.msra.mxu0 %v4985
        %7657 = vmatpush.bf16.msra.mxu0 %v4948
        %7658 = vmatpush.bf16.msra.mxu0 %v4911
        %7659 = vmatpush.bf16.msra.mxu0 %v4874
        %7660 = vmatpush.bf16.msra.mxu0 %v4837
        %7661 = vmatpush.bf16.msra.mxu0 %v4800
        %7662 = vmatpush.bf16.msra.mxu0 %v4763
        %7663 = vmatpush.bf16.msra.mxu0 %v4726
        %7664 = vmatmul.bf16.gmra.mxu0 %v2208
        %v7665 = vpop.f32.mrf.mxu0
        %v7666 = vadd.f32 %v2860, %v7665
        %v7667 = vpop.f32.mrf.mxu0
        %v7668 = vadd.f32 %v2860, %v7667
        %7669 = vmatmul.bf16.gmra.mxu0 %v2210
        %v7670 = vpop.f32.mrf.mxu0
        %v7671 = vadd.f32 %v2860, %v7670
        %v7672 = vpop.f32.mrf.mxu0
        %v7673 = vadd.f32 %v2860, %v7672
        %7674 = vmatmul.bf16.gmra.mxu0 %v2212
        %v7675 = vpop.f32.mrf.mxu0
        %v7676 = vadd.f32 %v2860, %v7675
        %v7677 = vpop.f32.mrf.mxu0
        %v7678 = vadd.f32 %v2860, %v7677
        %7679 = vmatmul.bf16.gmra.mxu0 %v2214
        %v7680 = vpop.f32.mrf.mxu0
        %v7681 = vadd.f32 %v2860, %v7680
        %v7682 = vpop.f32.mrf.mxu0
        %v7683 = vadd.f32 %v2860, %v7682
        %7684 = vmatmul.bf16.gmra.mxu0 %v2216
        %v7685 = vpop.f32.mrf.mxu0
        %v7686 = vadd.f32 %v2860, %v7685
        %v7687 = vpop.f32.mrf.mxu0
        %v7688 = vadd.f32 %v2860, %v7687
        %7689 = vmatmul.bf16.gmra.mxu0 %v2218
        %v7690 = vpop.f32.mrf.mxu0
        %v7691 = vadd.f32 %v2860, %v7690
        %v7692 = vpop.f32.mrf.mxu0
        %v7693 = vadd.f32 %v2860, %v7692
        %7694 = vmatmul.bf16.gmra.mxu0 %v2220
        %v7695 = vpop.f32.mrf.mxu0
        %v7696 = vadd.f32 %v2860, %v7695
        %v7697 = vpop.f32.mrf.mxu0
        %v7698 = vadd.f32 %v2860, %v7697
        %7699 = vmatmul.bf16.gmra.mxu0 %v2222
        %v7700 = vpop.f32.mrf.mxu0
        %v7701 = vadd.f32 %v2860, %v7700
        %v7702 = vpop.f32.mrf.mxu0
        %v7703 = vadd.f32 %v2860, %v7702
        %7704 = vdwg.mxu0
        %7705 = vmatpush.bf16.msra.mxu0 %v5281
        %7706 = vmatpush.bf16.msra.mxu0 %v5244
        %7707 = vmatpush.bf16.msra.mxu0 %v5207
        %7708 = vmatpush.bf16.msra.mxu0 %v5170
        %7709 = vmatpush.bf16.msra.mxu0 %v5133
        %7710 = vmatpush.bf16.msra.mxu0 %v5096
        %7711 = vmatpush.bf16.msra.mxu0 %v5059
        %7712 = vmatpush.bf16.msra.mxu0 %v5022
        %7713 = vmatmul.bf16.gmra.mxu0 %v2209
        %v7714 = vpop.f32.mrf.mxu0
        %v7715 = vadd.f32 %v7666, %v7714
        %v7716 = vpop.f32.mrf.mxu0
        %v7717 = vadd.f32 %v7668, %v7716
        %7718 = vmatmul.bf16.gmra.mxu0 %v2211
        %v7719 = vpop.f32.mrf.mxu0
        %v7720 = vadd.f32 %v7671, %v7719
        %v7721 = vpop.f32.mrf.mxu0
        %v7722 = vadd.f32 %v7673, %v7721
        %7723 = vmatmul.bf16.gmra.mxu0 %v2213
        %v7724 = vpop.f32.mrf.mxu0
        %v7725 = vadd.f32 %v7676, %v7724
        %v7726 = vpop.f32.mrf.mxu0
        %v7727 = vadd.f32 %v7678, %v7726
        %7728 = vmatmul.bf16.gmra.mxu0 %v2215
        %v7729 = vpop.f32.mrf.mxu0
        %v7730 = vadd.f32 %v7681, %v7729
        %v7731 = vpop.f32.mrf.mxu0
        %v7732 = vadd.f32 %v7683, %v7731
        %7733 = vmatmul.bf16.gmra.mxu0 %v2217
        %v7734 = vpop.f32.mrf.mxu0
        %v7735 = vadd.f32 %v7686, %v7734
        %v7736 = vpop.f32.mrf.mxu0
        %v7737 = vadd.f32 %v7688, %v7736
        %7738 = vmatmul.bf16.gmra.mxu0 %v2219
        %v7739 = vpop.f32.mrf.mxu0
        %v7740 = vadd.f32 %v7691, %v7739
        %v7741 = vpop.f32.mrf.mxu0
        %v7742 = vadd.f32 %v7693, %v7741
        %7743 = vmatmul.bf16.gmra.mxu0 %v2221
        %v7744 = vpop.f32.mrf.mxu0
        %v7745 = vadd.f32 %v7696, %v7744
        %v7746 = vpop.f32.mrf.mxu0
        %v7747 = vadd.f32 %v7698, %v7746
        %7748 = vmatmul.bf16.gmra.mxu0 %v2223
        %v7749 = vpop.f32.mrf.mxu0
        %v7750 = vadd.f32 %v7701, %v7749
        %v7751 = vpop.f32.mrf.mxu0
        %v7752 = vadd.f32 %v7703, %v7751
        %7753 = vdwg.mxu0
        %7754 = vmatpush.bf16.msra.mxu0 %v4986
        %7755 = vmatpush.bf16.msra.mxu0 %v4949
        %7756 = vmatpush.bf16.msra.mxu0 %v4912
        %7757 = vmatpush.bf16.msra.mxu0 %v4875
        %7758 = vmatpush.bf16.msra.mxu0 %v4838
        %7759 = vmatpush.bf16.msra.mxu0 %v4801
        %7760 = vmatpush.bf16.msra.mxu0 %v4764
        %7761 = vmatpush.bf16.msra.mxu0 %v4727
        %7762 = vmatmul.bf16.gmra.mxu0 %v2208
        %v7763 = vpop.f32.mrf.mxu0
        %v7764 = vadd.f32 %v2861, %v7763
        %v7765 = vpop.f32.mrf.mxu0
        %v7766 = vadd.f32 %v2861, %v7765
        %7767 = vmatmul.bf16.gmra.mxu0 %v2210
        %v7768 = vpop.f32.mrf.mxu0
        %v7769 = vadd.f32 %v2861, %v7768
        %v7770 = vpop.f32.mrf.mxu0
        %v7771 = vadd.f32 %v2861, %v7770
        %7772 = vmatmul.bf16.gmra.mxu0 %v2212
        %v7773 = vpop.f32.mrf.mxu0
        %v7774 = vadd.f32 %v2861, %v7773
        %v7775 = vpop.f32.mrf.mxu0
        %v7776 = vadd.f32 %v2861, %v7775
        %7777 = vmatmul.bf16.gmra.mxu0 %v2214
        %v7778 = vpop.f32.mrf.mxu0
        %v7779 = vadd.f32 %v2861, %v7778
        %v7780 = vpop.f32.mrf.mxu0
        %v7781 = vadd.f32 %v2861, %v7780
        %7782 = vmatmul.bf16.gmra.mxu0 %v2216
        %v7783 = vpop.f32.mrf.mxu0
        %v7784 = vadd.f32 %v2861, %v7783
        %v7785 = vpop.f32.mrf.mxu0
        %v7786 = vadd.f32 %v2861, %v7785
        %7787 = vmatmul.bf16.gmra.mxu0 %v2218
        %v7788 = vpop.f32.mrf.mxu0
        %v7789 = vadd.f32 %v2861, %v7788
        %v7790 = vpop.f32.mrf.mxu0
        %v7791 = vadd.f32 %v2861, %v7790
        %7792 = vmatmul.bf16.gmra.mxu0 %v2220
        %v7793 = vpop.f32.mrf.mxu0
        %v7794 = vadd.f32 %v2861, %v7793
        %v7795 = vpop.f32.mrf.mxu0
        %v7796 = vadd.f32 %v2861, %v7795
        %7797 = vmatmul.bf16.gmra.mxu0 %v2222
        %v7798 = vpop.f32.mrf.mxu0
        %v7799 = vadd.f32 %v2861, %v7798
        %v7800 = vpop.f32.mrf.mxu0
        %v7801 = vadd.f32 %v2861, %v7800
        %7802 = vdwg.mxu0
        %7803 = vmatpush.bf16.msra.mxu0 %v5282
        %7804 = vmatpush.bf16.msra.mxu0 %v5245
        %7805 = vmatpush.bf16.msra.mxu0 %v5208
        %7806 = vmatpush.bf16.msra.mxu0 %v5171
        %7807 = vmatpush.bf16.msra.mxu0 %v5134
        %7808 = vmatpush.bf16.msra.mxu0 %v5097
        %7809 = vmatpush.bf16.msra.mxu0 %v5060
        %7810 = vmatpush.bf16.msra.mxu0 %v5023
        %7811 = vmatmul.bf16.gmra.mxu0 %v2209
        %v7812 = vpop.f32.mrf.mxu0
        %v7813 = vadd.f32 %v7764, %v7812
        %v7814 = vpop.f32.mrf.mxu0
        %v7815 = vadd.f32 %v7766, %v7814
        %7816 = vmatmul.bf16.gmra.mxu0 %v2211
        %v7817 = vpop.f32.mrf.mxu0
        %v7818 = vadd.f32 %v7769, %v7817
        %v7819 = vpop.f32.mrf.mxu0
        %v7820 = vadd.f32 %v7771, %v7819
        %7821 = vmatmul.bf16.gmra.mxu0 %v2213
        %v7822 = vpop.f32.mrf.mxu0
        %v7823 = vadd.f32 %v7774, %v7822
        %v7824 = vpop.f32.mrf.mxu0
        %v7825 = vadd.f32 %v7776, %v7824
        %7826 = vmatmul.bf16.gmra.mxu0 %v2215
        %v7827 = vpop.f32.mrf.mxu0
        %v7828 = vadd.f32 %v7779, %v7827
        %v7829 = vpop.f32.mrf.mxu0
        %v7830 = vadd.f32 %v7781, %v7829
        %7831 = vmatmul.bf16.gmra.mxu0 %v2217
        %v7832 = vpop.f32.mrf.mxu0
        %v7833 = vadd.f32 %v7784, %v7832
        %v7834 = vpop.f32.mrf.mxu0
        %v7835 = vadd.f32 %v7786, %v7834
        %7836 = vmatmul.bf16.gmra.mxu0 %v2219
        %v7837 = vpop.f32.mrf.mxu0
        %v7838 = vadd.f32 %v7789, %v7837
        %v7839 = vpop.f32.mrf.mxu0
        %v7840 = vadd.f32 %v7791, %v7839
        %7841 = vmatmul.bf16.gmra.mxu0 %v2221
        %v7842 = vpop.f32.mrf.mxu0
        %v7843 = vadd.f32 %v7794, %v7842
        %v7844 = vpop.f32.mrf.mxu0
        %v7845 = vadd.f32 %v7796, %v7844
        %7846 = vmatmul.bf16.gmra.mxu0 %v2223
        %v7847 = vpop.f32.mrf.mxu0
        %v7848 = vadd.f32 %v7799, %v7847
        %v7849 = vpop.f32.mrf.mxu0
        %v7850 = vadd.f32 %v7801, %v7849
        %7851 = vdwg.mxu0
        %7852 = vmatpush.bf16.msra.mxu0 %v4987
        %7853 = vmatpush.bf16.msra.mxu0 %v4950
        %7854 = vmatpush.bf16.msra.mxu0 %v4913
        %7855 = vmatpush.bf16.msra.mxu0 %v4876
        %7856 = vmatpush.bf16.msra.mxu0 %v4839
        %7857 = vmatpush.bf16.msra.mxu0 %v4802
        %7858 = vmatpush.bf16.msra.mxu0 %v4765
        %7859 = vmatpush.bf16.msra.mxu0 %v4728
        %7860 = vmatmul.bf16.gmra.mxu0 %v2208
        %v7861 = vpop.f32.mrf.mxu0
        %v7862 = vadd.f32 %v2862, %v7861
        %v7863 = vpop.f32.mrf.mxu0
        %v7864 = vadd.f32 %v2862, %v7863
        %7865 = vmatmul.bf16.gmra.mxu0 %v2210
        %v7866 = vpop.f32.mrf.mxu0
        %v7867 = vadd.f32 %v2862, %v7866
        %v7868 = vpop.f32.mrf.mxu0
        %v7869 = vadd.f32 %v2862, %v7868
        %7870 = vmatmul.bf16.gmra.mxu0 %v2212
        %v7871 = vpop.f32.mrf.mxu0
        %v7872 = vadd.f32 %v2862, %v7871
        %v7873 = vpop.f32.mrf.mxu0
        %v7874 = vadd.f32 %v2862, %v7873
        %7875 = vmatmul.bf16.gmra.mxu0 %v2214
        %v7876 = vpop.f32.mrf.mxu0
        %v7877 = vadd.f32 %v2862, %v7876
        %v7878 = vpop.f32.mrf.mxu0
        %v7879 = vadd.f32 %v2862, %v7878
        %7880 = vmatmul.bf16.gmra.mxu0 %v2216
        %v7881 = vpop.f32.mrf.mxu0
        %v7882 = vadd.f32 %v2862, %v7881
        %v7883 = vpop.f32.mrf.mxu0
        %v7884 = vadd.f32 %v2862, %v7883
        %7885 = vmatmul.bf16.gmra.mxu0 %v2218
        %v7886 = vpop.f32.mrf.mxu0
        %v7887 = vadd.f32 %v2862, %v7886
        %v7888 = vpop.f32.mrf.mxu0
        %v7889 = vadd.f32 %v2862, %v7888
        %7890 = vmatmul.bf16.gmra.mxu0 %v2220
        %v7891 = vpop.f32.mrf.mxu0
        %v7892 = vadd.f32 %v2862, %v7891
        %v7893 = vpop.f32.mrf.mxu0
        %v7894 = vadd.f32 %v2862, %v7893
        %7895 = vmatmul.bf16.gmra.mxu0 %v2222
        %v7896 = vpop.f32.mrf.mxu0
        %v7897 = vadd.f32 %v2862, %v7896
        %v7898 = vpop.f32.mrf.mxu0
        %v7899 = vadd.f32 %v2862, %v7898
        %7900 = vdwg.mxu0
        %7901 = vmatpush.bf16.msra.mxu0 %v5283
        %7902 = vmatpush.bf16.msra.mxu0 %v5246
        %7903 = vmatpush.bf16.msra.mxu0 %v5209
        %7904 = vmatpush.bf16.msra.mxu0 %v5172
        %7905 = vmatpush.bf16.msra.mxu0 %v5135
        %7906 = vmatpush.bf16.msra.mxu0 %v5098
        %7907 = vmatpush.bf16.msra.mxu0 %v5061
        %7908 = vmatpush.bf16.msra.mxu0 %v5024
        %7909 = vmatmul.bf16.gmra.mxu0 %v2209
        %v7910 = vpop.f32.mrf.mxu0
        %v7911 = vadd.f32 %v7862, %v7910
        %v7912 = vpop.f32.mrf.mxu0
        %v7913 = vadd.f32 %v7864, %v7912
        %7914 = vmatmul.bf16.gmra.mxu0 %v2211
        %v7915 = vpop.f32.mrf.mxu0
        %v7916 = vadd.f32 %v7867, %v7915
        %v7917 = vpop.f32.mrf.mxu0
        %v7918 = vadd.f32 %v7869, %v7917
        %7919 = vmatmul.bf16.gmra.mxu0 %v2213
        %v7920 = vpop.f32.mrf.mxu0
        %v7921 = vadd.f32 %v7872, %v7920
        %v7922 = vpop.f32.mrf.mxu0
        %v7923 = vadd.f32 %v7874, %v7922
        %7924 = vmatmul.bf16.gmra.mxu0 %v2215
        %v7925 = vpop.f32.mrf.mxu0
        %v7926 = vadd.f32 %v7877, %v7925
        %v7927 = vpop.f32.mrf.mxu0
        %v7928 = vadd.f32 %v7879, %v7927
        %7929 = vmatmul.bf16.gmra.mxu0 %v2217
        %v7930 = vpop.f32.mrf.mxu0
        %v7931 = vadd.f32 %v7882, %v7930
        %v7932 = vpop.f32.mrf.mxu0
        %v7933 = vadd.f32 %v7884, %v7932
        %7934 = vmatmul.bf16.gmra.mxu0 %v2219
        %v7935 = vpop.f32.mrf.mxu0
        %v7936 = vadd.f32 %v7887, %v7935
        %v7937 = vpop.f32.mrf.mxu0
        %v7938 = vadd.f32 %v7889, %v7937
        %7939 = vmatmul.bf16.gmra.mxu0 %v2221
        %v7940 = vpop.f32.mrf.mxu0
        %v7941 = vadd.f32 %v7892, %v7940
        %v7942 = vpop.f32.mrf.mxu0
        %v7943 = vadd.f32 %v7894, %v7942
        %7944 = vmatmul.bf16.gmra.mxu0 %v2223
        %v7945 = vpop.f32.mrf.mxu0
        %v7946 = vadd.f32 %v7897, %v7945
        %v7947 = vpop.f32.mrf.mxu0
        %v7948 = vadd.f32 %v7899, %v7947
        %7949 = vdwg.mxu0
        %7950 = vmatpush.bf16.msra.mxu0 %v4988
        %7951 = vmatpush.bf16.msra.mxu0 %v4951
        %7952 = vmatpush.bf16.msra.mxu0 %v4914
        %7953 = vmatpush.bf16.msra.mxu0 %v4877
        %7954 = vmatpush.bf16.msra.mxu0 %v4840
        %7955 = vmatpush.bf16.msra.mxu0 %v4803
        %7956 = vmatpush.bf16.msra.mxu0 %v4766
        %7957 = vmatpush.bf16.msra.mxu0 %v4729
        %7958 = vmatmul.bf16.gmra.mxu0 %v2208
        %v7959 = vpop.f32.mrf.mxu0
        %v7960 = vadd.f32 %v2863, %v7959
        %v7961 = vpop.f32.mrf.mxu0
        %v7962 = vadd.f32 %v2863, %v7961
        %7963 = vmatmul.bf16.gmra.mxu0 %v2210
        %v7964 = vpop.f32.mrf.mxu0
        %v7965 = vadd.f32 %v2863, %v7964
        %v7966 = vpop.f32.mrf.mxu0
        %v7967 = vadd.f32 %v2863, %v7966
        %7968 = vmatmul.bf16.gmra.mxu0 %v2212
        %v7969 = vpop.f32.mrf.mxu0
        %v7970 = vadd.f32 %v2863, %v7969
        %v7971 = vpop.f32.mrf.mxu0
        %v7972 = vadd.f32 %v2863, %v7971
        %7973 = vmatmul.bf16.gmra.mxu0 %v2214
        %v7974 = vpop.f32.mrf.mxu0
        %v7975 = vadd.f32 %v2863, %v7974
        %v7976 = vpop.f32.mrf.mxu0
        %v7977 = vadd.f32 %v2863, %v7976
        %7978 = vmatmul.bf16.gmra.mxu0 %v2216
        %v7979 = vpop.f32.mrf.mxu0
        %v7980 = vadd.f32 %v2863, %v7979
        %v7981 = vpop.f32.mrf.mxu0
        %v7982 = vadd.f32 %v2863, %v7981
        %7983 = vmatmul.bf16.gmra.mxu0 %v2218
        %v7984 = vpop.f32.mrf.mxu0
        %v7985 = vadd.f32 %v2863, %v7984
        %v7986 = vpop.f32.mrf.mxu0
        %v7987 = vadd.f32 %v2863, %v7986
        %7988 = vmatmul.bf16.gmra.mxu0 %v2220
        %v7989 = vpop.f32.mrf.mxu0
        %v7990 = vadd.f32 %v2863, %v7989
        %v7991 = vpop.f32.mrf.mxu0
        %v7992 = vadd.f32 %v2863, %v7991
        %7993 = vmatmul.bf16.gmra.mxu0 %v2222
        %v7994 = vpop.f32.mrf.mxu0
        %v7995 = vadd.f32 %v2863, %v7994
        %v7996 = vpop.f32.mrf.mxu0
        %v7997 = vadd.f32 %v2863, %v7996
        %7998 = vdwg.mxu0
        %7999 = vmatpush.bf16.msra.mxu0 %v5284
        %8000 = vmatpush.bf16.msra.mxu0 %v5247
        %8001 = vmatpush.bf16.msra.mxu0 %v5210
        %8002 = vmatpush.bf16.msra.mxu0 %v5173
        %8003 = vmatpush.bf16.msra.mxu0 %v5136
        %8004 = vmatpush.bf16.msra.mxu0 %v5099
        %8005 = vmatpush.bf16.msra.mxu0 %v5062
        %8006 = vmatpush.bf16.msra.mxu0 %v5025
        %8007 = vmatmul.bf16.gmra.mxu0 %v2209
        %v8008 = vpop.f32.mrf.mxu0
        %v8009 = vadd.f32 %v7960, %v8008
        %v8010 = vpop.f32.mrf.mxu0
        %v8011 = vadd.f32 %v7962, %v8010
        %8012 = vmatmul.bf16.gmra.mxu0 %v2211
        %v8013 = vpop.f32.mrf.mxu0
        %v8014 = vadd.f32 %v7965, %v8013
        %v8015 = vpop.f32.mrf.mxu0
        %v8016 = vadd.f32 %v7967, %v8015
        %8017 = vmatmul.bf16.gmra.mxu0 %v2213
        %v8018 = vpop.f32.mrf.mxu0
        %v8019 = vadd.f32 %v7970, %v8018
        %v8020 = vpop.f32.mrf.mxu0
        %v8021 = vadd.f32 %v7972, %v8020
        %8022 = vmatmul.bf16.gmra.mxu0 %v2215
        %v8023 = vpop.f32.mrf.mxu0
        %v8024 = vadd.f32 %v7975, %v8023
        %v8025 = vpop.f32.mrf.mxu0
        %v8026 = vadd.f32 %v7977, %v8025
        %8027 = vmatmul.bf16.gmra.mxu0 %v2217
        %v8028 = vpop.f32.mrf.mxu0
        %v8029 = vadd.f32 %v7980, %v8028
        %v8030 = vpop.f32.mrf.mxu0
        %v8031 = vadd.f32 %v7982, %v8030
        %8032 = vmatmul.bf16.gmra.mxu0 %v2219
        %v8033 = vpop.f32.mrf.mxu0
        %v8034 = vadd.f32 %v7985, %v8033
        %v8035 = vpop.f32.mrf.mxu0
        %v8036 = vadd.f32 %v7987, %v8035
        %8037 = vmatmul.bf16.gmra.mxu0 %v2221
        %v8038 = vpop.f32.mrf.mxu0
        %v8039 = vadd.f32 %v7990, %v8038
        %v8040 = vpop.f32.mrf.mxu0
        %v8041 = vadd.f32 %v7992, %v8040
        %8042 = vmatmul.bf16.gmra.mxu0 %v2223
        %v8043 = vpop.f32.mrf.mxu0
        %v8044 = vadd.f32 %v7995, %v8043
        %v8045 = vpop.f32.mrf.mxu0
        %v8046 = vadd.f32 %v7997, %v8045
        %8047 = vdwg.mxu0
        %8048 = vmatpush.bf16.msra.mxu0 %v4989
        %8049 = vmatpush.bf16.msra.mxu0 %v4952
        %8050 = vmatpush.bf16.msra.mxu0 %v4915
        %8051 = vmatpush.bf16.msra.mxu0 %v4878
        %8052 = vmatpush.bf16.msra.mxu0 %v4841
        %8053 = vmatpush.bf16.msra.mxu0 %v4804
        %8054 = vmatpush.bf16.msra.mxu0 %v4767
        %8055 = vmatpush.bf16.msra.mxu0 %v4730
        %8056 = vmatmul.bf16.gmra.mxu0 %v2208
        %v8057 = vpop.f32.mrf.mxu0
        %v8058 = vadd.f32 %v2864, %v8057
        %v8059 = vpop.f32.mrf.mxu0
        %v8060 = vadd.f32 %v2864, %v8059
        %8061 = vmatmul.bf16.gmra.mxu0 %v2210
        %v8062 = vpop.f32.mrf.mxu0
        %v8063 = vadd.f32 %v2864, %v8062
        %v8064 = vpop.f32.mrf.mxu0
        %v8065 = vadd.f32 %v2864, %v8064
        %8066 = vmatmul.bf16.gmra.mxu0 %v2212
        %v8067 = vpop.f32.mrf.mxu0
        %v8068 = vadd.f32 %v2864, %v8067
        %v8069 = vpop.f32.mrf.mxu0
        %v8070 = vadd.f32 %v2864, %v8069
        %8071 = vmatmul.bf16.gmra.mxu0 %v2214
        %v8072 = vpop.f32.mrf.mxu0
        %v8073 = vadd.f32 %v2864, %v8072
        %v8074 = vpop.f32.mrf.mxu0
        %v8075 = vadd.f32 %v2864, %v8074
        %8076 = vmatmul.bf16.gmra.mxu0 %v2216
        %v8077 = vpop.f32.mrf.mxu0
        %v8078 = vadd.f32 %v2864, %v8077
        %v8079 = vpop.f32.mrf.mxu0
        %v8080 = vadd.f32 %v2864, %v8079
        %8081 = vmatmul.bf16.gmra.mxu0 %v2218
        %v8082 = vpop.f32.mrf.mxu0
        %v8083 = vadd.f32 %v2864, %v8082
        %v8084 = vpop.f32.mrf.mxu0
        %v8085 = vadd.f32 %v2864, %v8084
        %8086 = vmatmul.bf16.gmra.mxu0 %v2220
        %v8087 = vpop.f32.mrf.mxu0
        %v8088 = vadd.f32 %v2864, %v8087
        %v8089 = vpop.f32.mrf.mxu0
        %v8090 = vadd.f32 %v2864, %v8089
        %8091 = vmatmul.bf16.gmra.mxu0 %v2222
        %v8092 = vpop.f32.mrf.mxu0
        %v8093 = vadd.f32 %v2864, %v8092
        %v8094 = vpop.f32.mrf.mxu0
        %v8095 = vadd.f32 %v2864, %v8094
        %8096 = vdwg.mxu0
        %8097 = vmatpush.bf16.msra.mxu0 %v5285
        %8098 = vmatpush.bf16.msra.mxu0 %v5248
        %8099 = vmatpush.bf16.msra.mxu0 %v5211
        %8100 = vmatpush.bf16.msra.mxu0 %v5174
        %8101 = vmatpush.bf16.msra.mxu0 %v5137
        %8102 = vmatpush.bf16.msra.mxu0 %v5100
        %8103 = vmatpush.bf16.msra.mxu0 %v5063
        %8104 = vmatpush.bf16.msra.mxu0 %v5026
        %8105 = vmatmul.bf16.gmra.mxu0 %v2209
        %v8106 = vpop.f32.mrf.mxu0
        %v8107 = vadd.f32 %v8058, %v8106
        %v8108 = vpop.f32.mrf.mxu0
        %v8109 = vadd.f32 %v8060, %v8108
        %8110 = vmatmul.bf16.gmra.mxu0 %v2211
        %v8111 = vpop.f32.mrf.mxu0
        %v8112 = vadd.f32 %v8063, %v8111
        %v8113 = vpop.f32.mrf.mxu0
        %v8114 = vadd.f32 %v8065, %v8113
        %8115 = vmatmul.bf16.gmra.mxu0 %v2213
        %v8116 = vpop.f32.mrf.mxu0
        %v8117 = vadd.f32 %v8068, %v8116
        %v8118 = vpop.f32.mrf.mxu0
        %v8119 = vadd.f32 %v8070, %v8118
        %8120 = vmatmul.bf16.gmra.mxu0 %v2215
        %v8121 = vpop.f32.mrf.mxu0
        %v8122 = vadd.f32 %v8073, %v8121
        %v8123 = vpop.f32.mrf.mxu0
        %v8124 = vadd.f32 %v8075, %v8123
        %8125 = vmatmul.bf16.gmra.mxu0 %v2217
        %v8126 = vpop.f32.mrf.mxu0
        %v8127 = vadd.f32 %v8078, %v8126
        %v8128 = vpop.f32.mrf.mxu0
        %v8129 = vadd.f32 %v8080, %v8128
        %8130 = vmatmul.bf16.gmra.mxu0 %v2219
        %v8131 = vpop.f32.mrf.mxu0
        %v8132 = vadd.f32 %v8083, %v8131
        %v8133 = vpop.f32.mrf.mxu0
        %v8134 = vadd.f32 %v8085, %v8133
        %8135 = vmatmul.bf16.gmra.mxu0 %v2221
        %v8136 = vpop.f32.mrf.mxu0
        %v8137 = vadd.f32 %v8088, %v8136
        %v8138 = vpop.f32.mrf.mxu0
        %v8139 = vadd.f32 %v8090, %v8138
        %8140 = vmatmul.bf16.gmra.mxu0 %v2223
        %v8141 = vpop.f32.mrf.mxu0
        %v8142 = vadd.f32 %v8093, %v8141
        %v8143 = vpop.f32.mrf.mxu0
        %v8144 = vadd.f32 %v8095, %v8143
        %8145 = vdwg.mxu0
        %8146 = vmatpush.bf16.msra.mxu0 %v4990
        %8147 = vmatpush.bf16.msra.mxu0 %v4953
        %8148 = vmatpush.bf16.msra.mxu0 %v4916
        %8149 = vmatpush.bf16.msra.mxu0 %v4879
        %8150 = vmatpush.bf16.msra.mxu0 %v4842
        %8151 = vmatpush.bf16.msra.mxu0 %v4805
        %8152 = vmatpush.bf16.msra.mxu0 %v4768
        %8153 = vmatpush.bf16.msra.mxu0 %v4731
        %8154 = vmatmul.bf16.gmra.mxu0 %v2208
        %v8155 = vpop.f32.mrf.mxu0
        %v8156 = vadd.f32 %v2865, %v8155
        %v8157 = vpop.f32.mrf.mxu0
        %v8158 = vadd.f32 %v2865, %v8157
        %8159 = vmatmul.bf16.gmra.mxu0 %v2210
        %v8160 = vpop.f32.mrf.mxu0
        %v8161 = vadd.f32 %v2865, %v8160
        %v8162 = vpop.f32.mrf.mxu0
        %v8163 = vadd.f32 %v2865, %v8162
        %8164 = vmatmul.bf16.gmra.mxu0 %v2212
        %v8165 = vpop.f32.mrf.mxu0
        %v8166 = vadd.f32 %v2865, %v8165
        %v8167 = vpop.f32.mrf.mxu0
        %v8168 = vadd.f32 %v2865, %v8167
        %8169 = vmatmul.bf16.gmra.mxu0 %v2214
        %v8170 = vpop.f32.mrf.mxu0
        %v8171 = vadd.f32 %v2865, %v8170
        %v8172 = vpop.f32.mrf.mxu0
        %v8173 = vadd.f32 %v2865, %v8172
        %8174 = vmatmul.bf16.gmra.mxu0 %v2216
        %v8175 = vpop.f32.mrf.mxu0
        %v8176 = vadd.f32 %v2865, %v8175
        %v8177 = vpop.f32.mrf.mxu0
        %v8178 = vadd.f32 %v2865, %v8177
        %8179 = vmatmul.bf16.gmra.mxu0 %v2218
        %v8180 = vpop.f32.mrf.mxu0
        %v8181 = vadd.f32 %v2865, %v8180
        %v8182 = vpop.f32.mrf.mxu0
        %v8183 = vadd.f32 %v2865, %v8182
        %8184 = vmatmul.bf16.gmra.mxu0 %v2220
        %v8185 = vpop.f32.mrf.mxu0
        %v8186 = vadd.f32 %v2865, %v8185
        %v8187 = vpop.f32.mrf.mxu0
        %v8188 = vadd.f32 %v2865, %v8187
        %8189 = vmatmul.bf16.gmra.mxu0 %v2222
        %v8190 = vpop.f32.mrf.mxu0
        %v8191 = vadd.f32 %v2865, %v8190
        %v8192 = vpop.f32.mrf.mxu0
        %v8193 = vadd.f32 %v2865, %v8192
        %8194 = vdwg.mxu0
        %8195 = vmatpush.bf16.msra.mxu0 %v5286
        %8196 = vmatpush.bf16.msra.mxu0 %v5249
        %8197 = vmatpush.bf16.msra.mxu0 %v5212
        %8198 = vmatpush.bf16.msra.mxu0 %v5175
        %8199 = vmatpush.bf16.msra.mxu0 %v5138
        %8200 = vmatpush.bf16.msra.mxu0 %v5101
        %8201 = vmatpush.bf16.msra.mxu0 %v5064
        %8202 = vmatpush.bf16.msra.mxu0 %v5027
        %8203 = vmatmul.bf16.gmra.mxu0 %v2209
        %v8204 = vpop.f32.mrf.mxu0
        %v8205 = vadd.f32 %v8156, %v8204
        %v8206 = vpop.f32.mrf.mxu0
        %v8207 = vadd.f32 %v8158, %v8206
        %8208 = vmatmul.bf16.gmra.mxu0 %v2211
        %v8209 = vpop.f32.mrf.mxu0
        %v8210 = vadd.f32 %v8161, %v8209
        %v8211 = vpop.f32.mrf.mxu0
        %v8212 = vadd.f32 %v8163, %v8211
        %8213 = vmatmul.bf16.gmra.mxu0 %v2213
        %v8214 = vpop.f32.mrf.mxu0
        %v8215 = vadd.f32 %v8166, %v8214
        %v8216 = vpop.f32.mrf.mxu0
        %v8217 = vadd.f32 %v8168, %v8216
        %8218 = vmatmul.bf16.gmra.mxu0 %v2215
        %v8219 = vpop.f32.mrf.mxu0
        %v8220 = vadd.f32 %v8171, %v8219
        %v8221 = vpop.f32.mrf.mxu0
        %v8222 = vadd.f32 %v8173, %v8221
        %8223 = vmatmul.bf16.gmra.mxu0 %v2217
        %v8224 = vpop.f32.mrf.mxu0
        %v8225 = vadd.f32 %v8176, %v8224
        %v8226 = vpop.f32.mrf.mxu0
        %v8227 = vadd.f32 %v8178, %v8226
        %8228 = vmatmul.bf16.gmra.mxu0 %v2219
        %v8229 = vpop.f32.mrf.mxu0
        %v8230 = vadd.f32 %v8181, %v8229
        %v8231 = vpop.f32.mrf.mxu0
        %v8232 = vadd.f32 %v8183, %v8231
        %8233 = vmatmul.bf16.gmra.mxu0 %v2221
        %v8234 = vpop.f32.mrf.mxu0
        %v8235 = vadd.f32 %v8186, %v8234
        %v8236 = vpop.f32.mrf.mxu0
        %v8237 = vadd.f32 %v8188, %v8236
        %8238 = vmatmul.bf16.gmra.mxu0 %v2223
        %v8239 = vpop.f32.mrf.mxu0
        %v8240 = vadd.f32 %v8191, %v8239
        %v8241 = vpop.f32.mrf.mxu0
        %v8242 = vadd.f32 %v8193, %v8241
        %8243 = vdwg.mxu0
        %8244 = vmatpush.bf16.msra.mxu0 %v4991
        %8245 = vmatpush.bf16.msra.mxu0 %v4954
        %8246 = vmatpush.bf16.msra.mxu0 %v4917
        %8247 = vmatpush.bf16.msra.mxu0 %v4880
        %8248 = vmatpush.bf16.msra.mxu0 %v4843
        %8249 = vmatpush.bf16.msra.mxu0 %v4806
        %8250 = vmatpush.bf16.msra.mxu0 %v4769
        %8251 = vmatpush.bf16.msra.mxu0 %v4732
        %8252 = vmatmul.bf16.gmra.mxu0 %v2208
        %v8253 = vpop.f32.mrf.mxu0
        %v8254 = vadd.f32 %v2866, %v8253
        %v8255 = vpop.f32.mrf.mxu0
        %v8256 = vadd.f32 %v2866, %v8255
        %8257 = vmatmul.bf16.gmra.mxu0 %v2210
        %v8258 = vpop.f32.mrf.mxu0
        %v8259 = vadd.f32 %v2866, %v8258
        %v8260 = vpop.f32.mrf.mxu0
        %v8261 = vadd.f32 %v2866, %v8260
        %8262 = vmatmul.bf16.gmra.mxu0 %v2212
        %v8263 = vpop.f32.mrf.mxu0
        %v8264 = vadd.f32 %v2866, %v8263
        %v8265 = vpop.f32.mrf.mxu0
        %v8266 = vadd.f32 %v2866, %v8265
        %8267 = vmatmul.bf16.gmra.mxu0 %v2214
        %v8268 = vpop.f32.mrf.mxu0
        %v8269 = vadd.f32 %v2866, %v8268
        %v8270 = vpop.f32.mrf.mxu0
        %v8271 = vadd.f32 %v2866, %v8270
        %8272 = vmatmul.bf16.gmra.mxu0 %v2216
        %v8273 = vpop.f32.mrf.mxu0
        %v8274 = vadd.f32 %v2866, %v8273
        %v8275 = vpop.f32.mrf.mxu0
        %v8276 = vadd.f32 %v2866, %v8275
        %8277 = vmatmul.bf16.gmra.mxu0 %v2218
        %v8278 = vpop.f32.mrf.mxu0
        %v8279 = vadd.f32 %v2866, %v8278
        %v8280 = vpop.f32.mrf.mxu0
        %v8281 = vadd.f32 %v2866, %v8280
        %8282 = vmatmul.bf16.gmra.mxu0 %v2220
        %v8283 = vpop.f32.mrf.mxu0
        %v8284 = vadd.f32 %v2866, %v8283
        %v8285 = vpop.f32.mrf.mxu0
        %v8286 = vadd.f32 %v2866, %v8285
        %8287 = vmatmul.bf16.gmra.mxu0 %v2222
        %v8288 = vpop.f32.mrf.mxu0
        %v8289 = vadd.f32 %v2866, %v8288
        %v8290 = vpop.f32.mrf.mxu0
        %v8291 = vadd.f32 %v2866, %v8290
        %8292 = vdwg.mxu0
        %8293 = vmatpush.bf16.msra.mxu0 %v5287
        %8294 = vmatpush.bf16.msra.mxu0 %v5250
        %8295 = vmatpush.bf16.msra.mxu0 %v5213
        %8296 = vmatpush.bf16.msra.mxu0 %v5176
        %8297 = vmatpush.bf16.msra.mxu0 %v5139
        %8298 = vmatpush.bf16.msra.mxu0 %v5102
        %8299 = vmatpush.bf16.msra.mxu0 %v5065
        %8300 = vmatpush.bf16.msra.mxu0 %v5028
        %8301 = vmatmul.bf16.gmra.mxu0 %v2209
        %v8302 = vpop.f32.mrf.mxu0
        %v8303 = vadd.f32 %v8254, %v8302
        %v8304 = vpop.f32.mrf.mxu0
        %v8305 = vadd.f32 %v8256, %v8304
        %8306 = vmatmul.bf16.gmra.mxu0 %v2211
        %v8307 = vpop.f32.mrf.mxu0
        %v8308 = vadd.f32 %v8259, %v8307
        %v8309 = vpop.f32.mrf.mxu0
        %v8310 = vadd.f32 %v8261, %v8309
        %8311 = vmatmul.bf16.gmra.mxu0 %v2213
        %v8312 = vpop.f32.mrf.mxu0
        %v8313 = vadd.f32 %v8264, %v8312
        %v8314 = vpop.f32.mrf.mxu0
        %v8315 = vadd.f32 %v8266, %v8314
        %8316 = vmatmul.bf16.gmra.mxu0 %v2215
        %v8317 = vpop.f32.mrf.mxu0
        %v8318 = vadd.f32 %v8269, %v8317
        %v8319 = vpop.f32.mrf.mxu0
        %v8320 = vadd.f32 %v8271, %v8319
        %8321 = vmatmul.bf16.gmra.mxu0 %v2217
        %v8322 = vpop.f32.mrf.mxu0
        %v8323 = vadd.f32 %v8274, %v8322
        %v8324 = vpop.f32.mrf.mxu0
        %v8325 = vadd.f32 %v8276, %v8324
        %8326 = vmatmul.bf16.gmra.mxu0 %v2219
        %v8327 = vpop.f32.mrf.mxu0
        %v8328 = vadd.f32 %v8279, %v8327
        %v8329 = vpop.f32.mrf.mxu0
        %v8330 = vadd.f32 %v8281, %v8329
        %8331 = vmatmul.bf16.gmra.mxu0 %v2221
        %v8332 = vpop.f32.mrf.mxu0
        %v8333 = vadd.f32 %v8284, %v8332
        %v8334 = vpop.f32.mrf.mxu0
        %v8335 = vadd.f32 %v8286, %v8334
        %8336 = vmatmul.bf16.gmra.mxu0 %v2223
        %v8337 = vpop.f32.mrf.mxu0
        %v8338 = vadd.f32 %v8289, %v8337
        %v8339 = vpop.f32.mrf.mxu0
        %v8340 = vadd.f32 %v8291, %v8339
        %8341 = vdwg.mxu0
        %8342 = vmatpush.bf16.msra.mxu0 %v4992
        %8343 = vmatpush.bf16.msra.mxu0 %v4955
        %8344 = vmatpush.bf16.msra.mxu0 %v4918
        %8345 = vmatpush.bf16.msra.mxu0 %v4881
        %8346 = vmatpush.bf16.msra.mxu0 %v4844
        %8347 = vmatpush.bf16.msra.mxu0 %v4807
        %8348 = vmatpush.bf16.msra.mxu0 %v4770
        %8349 = vmatpush.bf16.msra.mxu0 %v4733
        %8350 = vmatmul.bf16.gmra.mxu0 %v2208
        %v8351 = vpop.f32.mrf.mxu0
        %v8352 = vadd.f32 %v2867, %v8351
        %v8353 = vpop.f32.mrf.mxu0
        %v8354 = vadd.f32 %v2867, %v8353
        %8355 = vmatmul.bf16.gmra.mxu0 %v2210
        %v8356 = vpop.f32.mrf.mxu0
        %v8357 = vadd.f32 %v2867, %v8356
        %v8358 = vpop.f32.mrf.mxu0
        %v8359 = vadd.f32 %v2867, %v8358
        %8360 = vmatmul.bf16.gmra.mxu0 %v2212
        %v8361 = vpop.f32.mrf.mxu0
        %v8362 = vadd.f32 %v2867, %v8361
        %v8363 = vpop.f32.mrf.mxu0
        %v8364 = vadd.f32 %v2867, %v8363
        %8365 = vmatmul.bf16.gmra.mxu0 %v2214
        %v8366 = vpop.f32.mrf.mxu0
        %v8367 = vadd.f32 %v2867, %v8366
        %v8368 = vpop.f32.mrf.mxu0
        %v8369 = vadd.f32 %v2867, %v8368
        %8370 = vmatmul.bf16.gmra.mxu0 %v2216
        %v8371 = vpop.f32.mrf.mxu0
        %v8372 = vadd.f32 %v2867, %v8371
        %v8373 = vpop.f32.mrf.mxu0
        %v8374 = vadd.f32 %v2867, %v8373
        %8375 = vmatmul.bf16.gmra.mxu0 %v2218
        %v8376 = vpop.f32.mrf.mxu0
        %v8377 = vadd.f32 %v2867, %v8376
        %v8378 = vpop.f32.mrf.mxu0
        %v8379 = vadd.f32 %v2867, %v8378
        %8380 = vmatmul.bf16.gmra.mxu0 %v2220
        %v8381 = vpop.f32.mrf.mxu0
        %v8382 = vadd.f32 %v2867, %v8381
        %v8383 = vpop.f32.mrf.mxu0
        %v8384 = vadd.f32 %v2867, %v8383
        %8385 = vmatmul.bf16.gmra.mxu0 %v2222
        %v8386 = vpop.f32.mrf.mxu0
        %v8387 = vadd.f32 %v2867, %v8386
        %v8388 = vpop.f32.mrf.mxu0
        %v8389 = vadd.f32 %v2867, %v8388
        %8390 = vdwg.mxu0
        %8391 = vmatpush.bf16.msra.mxu0 %v5288
        %8392 = vmatpush.bf16.msra.mxu0 %v5251
        %8393 = vmatpush.bf16.msra.mxu0 %v5214
        %8394 = vmatpush.bf16.msra.mxu0 %v5177
        %8395 = vmatpush.bf16.msra.mxu0 %v5140
        %8396 = vmatpush.bf16.msra.mxu0 %v5103
        %8397 = vmatpush.bf16.msra.mxu0 %v5066
        %8398 = vmatpush.bf16.msra.mxu0 %v5029
        %8399 = vmatmul.bf16.gmra.mxu0 %v2209
        %v8400 = vpop.f32.mrf.mxu0
        %v8401 = vadd.f32 %v8352, %v8400
        %v8402 = vpop.f32.mrf.mxu0
        %v8403 = vadd.f32 %v8354, %v8402
        %8404 = vmatmul.bf16.gmra.mxu0 %v2211
        %v8405 = vpop.f32.mrf.mxu0
        %v8406 = vadd.f32 %v8357, %v8405
        %v8407 = vpop.f32.mrf.mxu0
        %v8408 = vadd.f32 %v8359, %v8407
        %8409 = vmatmul.bf16.gmra.mxu0 %v2213
        %v8410 = vpop.f32.mrf.mxu0
        %v8411 = vadd.f32 %v8362, %v8410
        %v8412 = vpop.f32.mrf.mxu0
        %v8413 = vadd.f32 %v8364, %v8412
        %8414 = vmatmul.bf16.gmra.mxu0 %v2215
        %v8415 = vpop.f32.mrf.mxu0
        %v8416 = vadd.f32 %v8367, %v8415
        %v8417 = vpop.f32.mrf.mxu0
        %v8418 = vadd.f32 %v8369, %v8417
        %8419 = vmatmul.bf16.gmra.mxu0 %v2217
        %v8420 = vpop.f32.mrf.mxu0
        %v8421 = vadd.f32 %v8372, %v8420
        %v8422 = vpop.f32.mrf.mxu0
        %v8423 = vadd.f32 %v8374, %v8422
        %8424 = vmatmul.bf16.gmra.mxu0 %v2219
        %v8425 = vpop.f32.mrf.mxu0
        %v8426 = vadd.f32 %v8377, %v8425
        %v8427 = vpop.f32.mrf.mxu0
        %v8428 = vadd.f32 %v8379, %v8427
        %8429 = vmatmul.bf16.gmra.mxu0 %v2221
        %v8430 = vpop.f32.mrf.mxu0
        %v8431 = vadd.f32 %v8382, %v8430
        %v8432 = vpop.f32.mrf.mxu0
        %v8433 = vadd.f32 %v8384, %v8432
        %8434 = vmatmul.bf16.gmra.mxu0 %v2223
        %v8435 = vpop.f32.mrf.mxu0
        %v8436 = vadd.f32 %v8387, %v8435
        %v8437 = vpop.f32.mrf.mxu0
        %v8438 = vadd.f32 %v8389, %v8437
        %8439 = vdwg.mxu0
        %8440 = vmatpush.bf16.msra.mxu0 %v4993
        %8441 = vmatpush.bf16.msra.mxu0 %v4956
        %8442 = vmatpush.bf16.msra.mxu0 %v4919
        %8443 = vmatpush.bf16.msra.mxu0 %v4882
        %8444 = vmatpush.bf16.msra.mxu0 %v4845
        %8445 = vmatpush.bf16.msra.mxu0 %v4808
        %8446 = vmatpush.bf16.msra.mxu0 %v4771
        %8447 = vmatpush.bf16.msra.mxu0 %v4734
        %8448 = vmatmul.bf16.gmra.mxu0 %v2208
        %v8449 = vpop.f32.mrf.mxu0
        %v8450 = vadd.f32 %v2868, %v8449
        %v8451 = vpop.f32.mrf.mxu0
        %v8452 = vadd.f32 %v2868, %v8451
        %8453 = vmatmul.bf16.gmra.mxu0 %v2210
        %v8454 = vpop.f32.mrf.mxu0
        %v8455 = vadd.f32 %v2868, %v8454
        %v8456 = vpop.f32.mrf.mxu0
        %v8457 = vadd.f32 %v2868, %v8456
        %8458 = vmatmul.bf16.gmra.mxu0 %v2212
        %v8459 = vpop.f32.mrf.mxu0
        %v8460 = vadd.f32 %v2868, %v8459
        %v8461 = vpop.f32.mrf.mxu0
        %v8462 = vadd.f32 %v2868, %v8461
        %8463 = vmatmul.bf16.gmra.mxu0 %v2214
        %v8464 = vpop.f32.mrf.mxu0
        %v8465 = vadd.f32 %v2868, %v8464
        %v8466 = vpop.f32.mrf.mxu0
        %v8467 = vadd.f32 %v2868, %v8466
        %8468 = vmatmul.bf16.gmra.mxu0 %v2216
        %v8469 = vpop.f32.mrf.mxu0
        %v8470 = vadd.f32 %v2868, %v8469
        %v8471 = vpop.f32.mrf.mxu0
        %v8472 = vadd.f32 %v2868, %v8471
        %8473 = vmatmul.bf16.gmra.mxu0 %v2218
        %v8474 = vpop.f32.mrf.mxu0
        %v8475 = vadd.f32 %v2868, %v8474
        %v8476 = vpop.f32.mrf.mxu0
        %v8477 = vadd.f32 %v2868, %v8476
        %8478 = vmatmul.bf16.gmra.mxu0 %v2220
        %v8479 = vpop.f32.mrf.mxu0
        %v8480 = vadd.f32 %v2868, %v8479
        %v8481 = vpop.f32.mrf.mxu0
        %v8482 = vadd.f32 %v2868, %v8481
        %8483 = vmatmul.bf16.gmra.mxu0 %v2222
        %v8484 = vpop.f32.mrf.mxu0
        %v8485 = vadd.f32 %v2868, %v8484
        %v8486 = vpop.f32.mrf.mxu0
        %v8487 = vadd.f32 %v2868, %v8486
        %8488 = vdwg.mxu0
        %8489 = vmatpush.bf16.msra.mxu0 %v5289
        %8490 = vmatpush.bf16.msra.mxu0 %v5252
        %8491 = vmatpush.bf16.msra.mxu0 %v5215
        %8492 = vmatpush.bf16.msra.mxu0 %v5178
        %8493 = vmatpush.bf16.msra.mxu0 %v5141
        %8494 = vmatpush.bf16.msra.mxu0 %v5104
        %8495 = vmatpush.bf16.msra.mxu0 %v5067
        %8496 = vmatpush.bf16.msra.mxu0 %v5030
        %8497 = vmatmul.bf16.gmra.mxu0 %v2209
        %v8498 = vpop.f32.mrf.mxu0
        %v8499 = vadd.f32 %v8450, %v8498
        %v8500 = vpop.f32.mrf.mxu0
        %v8501 = vadd.f32 %v8452, %v8500
        %8502 = vmatmul.bf16.gmra.mxu0 %v2211
        %v8503 = vpop.f32.mrf.mxu0
        %v8504 = vadd.f32 %v8455, %v8503
        %v8505 = vpop.f32.mrf.mxu0
        %v8506 = vadd.f32 %v8457, %v8505
        %8507 = vmatmul.bf16.gmra.mxu0 %v2213
        %v8508 = vpop.f32.mrf.mxu0
        %v8509 = vadd.f32 %v8460, %v8508
        %v8510 = vpop.f32.mrf.mxu0
        %v8511 = vadd.f32 %v8462, %v8510
        %8512 = vmatmul.bf16.gmra.mxu0 %v2215
        %v8513 = vpop.f32.mrf.mxu0
        %v8514 = vadd.f32 %v8465, %v8513
        %v8515 = vpop.f32.mrf.mxu0
        %v8516 = vadd.f32 %v8467, %v8515
        %8517 = vmatmul.bf16.gmra.mxu0 %v2217
        %v8518 = vpop.f32.mrf.mxu0
        %v8519 = vadd.f32 %v8470, %v8518
        %v8520 = vpop.f32.mrf.mxu0
        %v8521 = vadd.f32 %v8472, %v8520
        %8522 = vmatmul.bf16.gmra.mxu0 %v2219
        %v8523 = vpop.f32.mrf.mxu0
        %v8524 = vadd.f32 %v8475, %v8523
        %v8525 = vpop.f32.mrf.mxu0
        %v8526 = vadd.f32 %v8477, %v8525
        %8527 = vmatmul.bf16.gmra.mxu0 %v2221
        %v8528 = vpop.f32.mrf.mxu0
        %v8529 = vadd.f32 %v8480, %v8528
        %v8530 = vpop.f32.mrf.mxu0
        %v8531 = vadd.f32 %v8482, %v8530
        %8532 = vmatmul.bf16.gmra.mxu0 %v2223
        %v8533 = vpop.f32.mrf.mxu0
        %v8534 = vadd.f32 %v8485, %v8533
        %v8535 = vpop.f32.mrf.mxu0
        %v8536 = vadd.f32 %v8487, %v8535
        %8537 = vdwg.mxu0
        %8538 = vmatpush.bf16.msra.mxu0 %v4994
        %8539 = vmatpush.bf16.msra.mxu0 %v4957
        %8540 = vmatpush.bf16.msra.mxu0 %v4920
        %8541 = vmatpush.bf16.msra.mxu0 %v4883
        %8542 = vmatpush.bf16.msra.mxu0 %v4846
        %8543 = vmatpush.bf16.msra.mxu0 %v4809
        %8544 = vmatpush.bf16.msra.mxu0 %v4772
        %8545 = vmatpush.bf16.msra.mxu0 %v4735
        %8546 = vmatmul.bf16.gmra.mxu0 %v2208
        %v8547 = vpop.f32.mrf.mxu0
        %v8548 = vadd.f32 %v2869, %v8547
        %v8549 = vpop.f32.mrf.mxu0
        %v8550 = vadd.f32 %v2869, %v8549
        %8551 = vmatmul.bf16.gmra.mxu0 %v2210
        %v8552 = vpop.f32.mrf.mxu0
        %v8553 = vadd.f32 %v2869, %v8552
        %v8554 = vpop.f32.mrf.mxu0
        %v8555 = vadd.f32 %v2869, %v8554
        %8556 = vmatmul.bf16.gmra.mxu0 %v2212
        %v8557 = vpop.f32.mrf.mxu0
        %v8558 = vadd.f32 %v2869, %v8557
        %v8559 = vpop.f32.mrf.mxu0
        %v8560 = vadd.f32 %v2869, %v8559
        %8561 = vmatmul.bf16.gmra.mxu0 %v2214
        %v8562 = vpop.f32.mrf.mxu0
        %v8563 = vadd.f32 %v2869, %v8562
        %v8564 = vpop.f32.mrf.mxu0
        %v8565 = vadd.f32 %v2869, %v8564
        %8566 = vmatmul.bf16.gmra.mxu0 %v2216
        %v8567 = vpop.f32.mrf.mxu0
        %v8568 = vadd.f32 %v2869, %v8567
        %v8569 = vpop.f32.mrf.mxu0
        %v8570 = vadd.f32 %v2869, %v8569
        %8571 = vmatmul.bf16.gmra.mxu0 %v2218
        %v8572 = vpop.f32.mrf.mxu0
        %v8573 = vadd.f32 %v2869, %v8572
        %v8574 = vpop.f32.mrf.mxu0
        %v8575 = vadd.f32 %v2869, %v8574
        %8576 = vmatmul.bf16.gmra.mxu0 %v2220
        %v8577 = vpop.f32.mrf.mxu0
        %v8578 = vadd.f32 %v2869, %v8577
        %v8579 = vpop.f32.mrf.mxu0
        %v8580 = vadd.f32 %v2869, %v8579
        %8581 = vmatmul.bf16.gmra.mxu0 %v2222
        %v8582 = vpop.f32.mrf.mxu0
        %v8583 = vadd.f32 %v2869, %v8582
        %v8584 = vpop.f32.mrf.mxu0
        %v8585 = vadd.f32 %v2869, %v8584
        %8586 = vdwg.mxu0
        %8587 = vmatpush.bf16.msra.mxu0 %v5290
        %8588 = vmatpush.bf16.msra.mxu0 %v5253
        %8589 = vmatpush.bf16.msra.mxu0 %v5216
        %8590 = vmatpush.bf16.msra.mxu0 %v5179
        %8591 = vmatpush.bf16.msra.mxu0 %v5142
        %8592 = vmatpush.bf16.msra.mxu0 %v5105
        %8593 = vmatpush.bf16.msra.mxu0 %v5068
        %8594 = vmatpush.bf16.msra.mxu0 %v5031
        %8595 = vmatmul.bf16.gmra.mxu0 %v2209
        %v8596 = vpop.f32.mrf.mxu0
        %v8597 = vadd.f32 %v8548, %v8596
        %v8598 = vpop.f32.mrf.mxu0
        %v8599 = vadd.f32 %v8550, %v8598
        %8600 = vmatmul.bf16.gmra.mxu0 %v2211
        %v8601 = vpop.f32.mrf.mxu0
        %v8602 = vadd.f32 %v8553, %v8601
        %v8603 = vpop.f32.mrf.mxu0
        %v8604 = vadd.f32 %v8555, %v8603
        %8605 = vmatmul.bf16.gmra.mxu0 %v2213
        %v8606 = vpop.f32.mrf.mxu0
        %v8607 = vadd.f32 %v8558, %v8606
        %v8608 = vpop.f32.mrf.mxu0
        %v8609 = vadd.f32 %v8560, %v8608
        %8610 = vmatmul.bf16.gmra.mxu0 %v2215
        %v8611 = vpop.f32.mrf.mxu0
        %v8612 = vadd.f32 %v8563, %v8611
        %v8613 = vpop.f32.mrf.mxu0
        %v8614 = vadd.f32 %v8565, %v8613
        %8615 = vmatmul.bf16.gmra.mxu0 %v2217
        %v8616 = vpop.f32.mrf.mxu0
        %v8617 = vadd.f32 %v8568, %v8616
        %v8618 = vpop.f32.mrf.mxu0
        %v8619 = vadd.f32 %v8570, %v8618
        %8620 = vmatmul.bf16.gmra.mxu0 %v2219
        %v8621 = vpop.f32.mrf.mxu0
        %v8622 = vadd.f32 %v8573, %v8621
        %v8623 = vpop.f32.mrf.mxu0
        %v8624 = vadd.f32 %v8575, %v8623
        %8625 = vmatmul.bf16.gmra.mxu0 %v2221
        %v8626 = vpop.f32.mrf.mxu0
        %v8627 = vadd.f32 %v8578, %v8626
        %v8628 = vpop.f32.mrf.mxu0
        %v8629 = vadd.f32 %v8580, %v8628
        %8630 = vmatmul.bf16.gmra.mxu0 %v2223
        %v8631 = vpop.f32.mrf.mxu0
        %v8632 = vadd.f32 %v8583, %v8631
        %v8633 = vpop.f32.mrf.mxu0
        %v8634 = vadd.f32 %v8585, %v8633
        %8635 = vdwg.mxu0
        %8636 = vmatpush.bf16.msra.mxu0 %v4995
        %8637 = vmatpush.bf16.msra.mxu0 %v4958
        %8638 = vmatpush.bf16.msra.mxu0 %v4921
        %8639 = vmatpush.bf16.msra.mxu0 %v4884
        %8640 = vmatpush.bf16.msra.mxu0 %v4847
        %8641 = vmatpush.bf16.msra.mxu0 %v4810
        %8642 = vmatpush.bf16.msra.mxu0 %v4773
        %8643 = vmatpush.bf16.msra.mxu0 %v4736
        %8644 = vmatmul.bf16.gmra.mxu0 %v2208
        %v8645 = vpop.f32.mrf.mxu0
        %v8646 = vadd.f32 %v2870, %v8645
        %v8647 = vpop.f32.mrf.mxu0
        %v8648 = vadd.f32 %v2870, %v8647
        %8649 = vmatmul.bf16.gmra.mxu0 %v2210
        %v8650 = vpop.f32.mrf.mxu0
        %v8651 = vadd.f32 %v2870, %v8650
        %v8652 = vpop.f32.mrf.mxu0
        %v8653 = vadd.f32 %v2870, %v8652
        %8654 = vmatmul.bf16.gmra.mxu0 %v2212
        %v8655 = vpop.f32.mrf.mxu0
        %v8656 = vadd.f32 %v2870, %v8655
        %v8657 = vpop.f32.mrf.mxu0
        %v8658 = vadd.f32 %v2870, %v8657
        %8659 = vmatmul.bf16.gmra.mxu0 %v2214
        %v8660 = vpop.f32.mrf.mxu0
        %v8661 = vadd.f32 %v2870, %v8660
        %v8662 = vpop.f32.mrf.mxu0
        %v8663 = vadd.f32 %v2870, %v8662
        %8664 = vmatmul.bf16.gmra.mxu0 %v2216
        %v8665 = vpop.f32.mrf.mxu0
        %v8666 = vadd.f32 %v2870, %v8665
        %v8667 = vpop.f32.mrf.mxu0
        %v8668 = vadd.f32 %v2870, %v8667
        %8669 = vmatmul.bf16.gmra.mxu0 %v2218
        %v8670 = vpop.f32.mrf.mxu0
        %v8671 = vadd.f32 %v2870, %v8670
        %v8672 = vpop.f32.mrf.mxu0
        %v8673 = vadd.f32 %v2870, %v8672
        %8674 = vmatmul.bf16.gmra.mxu0 %v2220
        %v8675 = vpop.f32.mrf.mxu0
        %v8676 = vadd.f32 %v2870, %v8675
        %v8677 = vpop.f32.mrf.mxu0
        %v8678 = vadd.f32 %v2870, %v8677
        %8679 = vmatmul.bf16.gmra.mxu0 %v2222
        %v8680 = vpop.f32.mrf.mxu0
        %v8681 = vadd.f32 %v2870, %v8680
        %v8682 = vpop.f32.mrf.mxu0
        %v8683 = vadd.f32 %v2870, %v8682
        %8684 = vdwg.mxu0
        %8685 = vmatpush.bf16.msra.mxu0 %v5291
        %8686 = vmatpush.bf16.msra.mxu0 %v5254
        %8687 = vmatpush.bf16.msra.mxu0 %v5217
        %8688 = vmatpush.bf16.msra.mxu0 %v5180
        %8689 = vmatpush.bf16.msra.mxu0 %v5143
        %8690 = vmatpush.bf16.msra.mxu0 %v5106
        %8691 = vmatpush.bf16.msra.mxu0 %v5069
        %8692 = vmatpush.bf16.msra.mxu0 %v5032
        %8693 = vmatmul.bf16.gmra.mxu0 %v2209
        %v8694 = vpop.f32.mrf.mxu0
        %v8695 = vadd.f32 %v8646, %v8694
        %v8696 = vpop.f32.mrf.mxu0
        %v8697 = vadd.f32 %v8648, %v8696
        %8698 = vmatmul.bf16.gmra.mxu0 %v2211
        %v8699 = vpop.f32.mrf.mxu0
        %v8700 = vadd.f32 %v8651, %v8699
        %v8701 = vpop.f32.mrf.mxu0
        %v8702 = vadd.f32 %v8653, %v8701
        %8703 = vmatmul.bf16.gmra.mxu0 %v2213
        %v8704 = vpop.f32.mrf.mxu0
        %v8705 = vadd.f32 %v8656, %v8704
        %v8706 = vpop.f32.mrf.mxu0
        %v8707 = vadd.f32 %v8658, %v8706
        %8708 = vmatmul.bf16.gmra.mxu0 %v2215
        %v8709 = vpop.f32.mrf.mxu0
        %v8710 = vadd.f32 %v8661, %v8709
        %v8711 = vpop.f32.mrf.mxu0
        %v8712 = vadd.f32 %v8663, %v8711
        %8713 = vmatmul.bf16.gmra.mxu0 %v2217
        %v8714 = vpop.f32.mrf.mxu0
        %v8715 = vadd.f32 %v8666, %v8714
        %v8716 = vpop.f32.mrf.mxu0
        %v8717 = vadd.f32 %v8668, %v8716
        %8718 = vmatmul.bf16.gmra.mxu0 %v2219
        %v8719 = vpop.f32.mrf.mxu0
        %v8720 = vadd.f32 %v8671, %v8719
        %v8721 = vpop.f32.mrf.mxu0
        %v8722 = vadd.f32 %v8673, %v8721
        %8723 = vmatmul.bf16.gmra.mxu0 %v2221
        %v8724 = vpop.f32.mrf.mxu0
        %v8725 = vadd.f32 %v8676, %v8724
        %v8726 = vpop.f32.mrf.mxu0
        %v8727 = vadd.f32 %v8678, %v8726
        %8728 = vmatmul.bf16.gmra.mxu0 %v2223
        %v8729 = vpop.f32.mrf.mxu0
        %v8730 = vadd.f32 %v8681, %v8729
        %v8731 = vpop.f32.mrf.mxu0
        %v8732 = vadd.f32 %v8683, %v8731
        %8733 = vdwg.mxu0
        %8734 = vmatpush.bf16.msra.mxu0 %v4996
        %8735 = vmatpush.bf16.msra.mxu0 %v4959
        %8736 = vmatpush.bf16.msra.mxu0 %v4922
        %8737 = vmatpush.bf16.msra.mxu0 %v4885
        %8738 = vmatpush.bf16.msra.mxu0 %v4848
        %8739 = vmatpush.bf16.msra.mxu0 %v4811
        %8740 = vmatpush.bf16.msra.mxu0 %v4774
        %8741 = vmatpush.bf16.msra.mxu0 %v4737
        %8742 = vmatmul.bf16.gmra.mxu0 %v2208
        %v8743 = vpop.f32.mrf.mxu0
        %v8744 = vadd.f32 %v2871, %v8743
        %v8745 = vpop.f32.mrf.mxu0
        %v8746 = vadd.f32 %v2871, %v8745
        %8747 = vmatmul.bf16.gmra.mxu0 %v2210
        %v8748 = vpop.f32.mrf.mxu0
        %v8749 = vadd.f32 %v2871, %v8748
        %v8750 = vpop.f32.mrf.mxu0
        %v8751 = vadd.f32 %v2871, %v8750
        %8752 = vmatmul.bf16.gmra.mxu0 %v2212
        %v8753 = vpop.f32.mrf.mxu0
        %v8754 = vadd.f32 %v2871, %v8753
        %v8755 = vpop.f32.mrf.mxu0
        %v8756 = vadd.f32 %v2871, %v8755
        %8757 = vmatmul.bf16.gmra.mxu0 %v2214
        %v8758 = vpop.f32.mrf.mxu0
        %v8759 = vadd.f32 %v2871, %v8758
        %v8760 = vpop.f32.mrf.mxu0
        %v8761 = vadd.f32 %v2871, %v8760
        %8762 = vmatmul.bf16.gmra.mxu0 %v2216
        %v8763 = vpop.f32.mrf.mxu0
        %v8764 = vadd.f32 %v2871, %v8763
        %v8765 = vpop.f32.mrf.mxu0
        %v8766 = vadd.f32 %v2871, %v8765
        %8767 = vmatmul.bf16.gmra.mxu0 %v2218
        %v8768 = vpop.f32.mrf.mxu0
        %v8769 = vadd.f32 %v2871, %v8768
        %v8770 = vpop.f32.mrf.mxu0
        %v8771 = vadd.f32 %v2871, %v8770
        %8772 = vmatmul.bf16.gmra.mxu0 %v2220
        %v8773 = vpop.f32.mrf.mxu0
        %v8774 = vadd.f32 %v2871, %v8773
        %v8775 = vpop.f32.mrf.mxu0
        %v8776 = vadd.f32 %v2871, %v8775
        %8777 = vmatmul.bf16.gmra.mxu0 %v2222
        %v8778 = vpop.f32.mrf.mxu0
        %v8779 = vadd.f32 %v2871, %v8778
        %v8780 = vpop.f32.mrf.mxu0
        %v8781 = vadd.f32 %v2871, %v8780
        %8782 = vdwg.mxu0
        %8783 = vmatpush.bf16.msra.mxu0 %v5292
        %8784 = vmatpush.bf16.msra.mxu0 %v5255
        %8785 = vmatpush.bf16.msra.mxu0 %v5218
        %8786 = vmatpush.bf16.msra.mxu0 %v5181
        %8787 = vmatpush.bf16.msra.mxu0 %v5144
        %8788 = vmatpush.bf16.msra.mxu0 %v5107
        %8789 = vmatpush.bf16.msra.mxu0 %v5070
        %8790 = vmatpush.bf16.msra.mxu0 %v5033
        %8791 = vmatmul.bf16.gmra.mxu0 %v2209
        %v8792 = vpop.f32.mrf.mxu0
        %v8793 = vadd.f32 %v8744, %v8792
        %v8794 = vpop.f32.mrf.mxu0
        %v8795 = vadd.f32 %v8746, %v8794
        %8796 = vmatmul.bf16.gmra.mxu0 %v2211
        %v8797 = vpop.f32.mrf.mxu0
        %v8798 = vadd.f32 %v8749, %v8797
        %v8799 = vpop.f32.mrf.mxu0
        %v8800 = vadd.f32 %v8751, %v8799
        %8801 = vmatmul.bf16.gmra.mxu0 %v2213
        %v8802 = vpop.f32.mrf.mxu0
        %v8803 = vadd.f32 %v8754, %v8802
        %v8804 = vpop.f32.mrf.mxu0
        %v8805 = vadd.f32 %v8756, %v8804
        %8806 = vmatmul.bf16.gmra.mxu0 %v2215
        %v8807 = vpop.f32.mrf.mxu0
        %v8808 = vadd.f32 %v8759, %v8807
        %v8809 = vpop.f32.mrf.mxu0
        %v8810 = vadd.f32 %v8761, %v8809
        %8811 = vmatmul.bf16.gmra.mxu0 %v2217
        %v8812 = vpop.f32.mrf.mxu0
        %v8813 = vadd.f32 %v8764, %v8812
        %v8814 = vpop.f32.mrf.mxu0
        %v8815 = vadd.f32 %v8766, %v8814
        %8816 = vmatmul.bf16.gmra.mxu0 %v2219
        %v8817 = vpop.f32.mrf.mxu0
        %v8818 = vadd.f32 %v8769, %v8817
        %v8819 = vpop.f32.mrf.mxu0
        %v8820 = vadd.f32 %v8771, %v8819
        %8821 = vmatmul.bf16.gmra.mxu0 %v2221
        %v8822 = vpop.f32.mrf.mxu0
        %v8823 = vadd.f32 %v8774, %v8822
        %v8824 = vpop.f32.mrf.mxu0
        %v8825 = vadd.f32 %v8776, %v8824
        %8826 = vmatmul.bf16.gmra.mxu0 %v2223
        %v8827 = vpop.f32.mrf.mxu0
        %v8828 = vadd.f32 %v8779, %v8827
        %v8829 = vpop.f32.mrf.mxu0
        %v8830 = vadd.f32 %v8781, %v8829
        %8831 = vdwg.mxu0
        %8832 = vmatpush.bf16.msra.mxu0 %v4997
        %8833 = vmatpush.bf16.msra.mxu0 %v4960
        %8834 = vmatpush.bf16.msra.mxu0 %v4923
        %8835 = vmatpush.bf16.msra.mxu0 %v4886
        %8836 = vmatpush.bf16.msra.mxu0 %v4849
        %8837 = vmatpush.bf16.msra.mxu0 %v4812
        %8838 = vmatpush.bf16.msra.mxu0 %v4775
        %8839 = vmatpush.bf16.msra.mxu0 %v4738
        %8840 = vmatmul.bf16.gmra.mxu0 %v2208
        %v8841 = vpop.f32.mrf.mxu0
        %v8842 = vadd.f32 %v2872, %v8841
        %v8843 = vpop.f32.mrf.mxu0
        %v8844 = vadd.f32 %v2872, %v8843
        %8845 = vmatmul.bf16.gmra.mxu0 %v2210
        %v8846 = vpop.f32.mrf.mxu0
        %v8847 = vadd.f32 %v2872, %v8846
        %v8848 = vpop.f32.mrf.mxu0
        %v8849 = vadd.f32 %v2872, %v8848
        %8850 = vmatmul.bf16.gmra.mxu0 %v2212
        %v8851 = vpop.f32.mrf.mxu0
        %v8852 = vadd.f32 %v2872, %v8851
        %v8853 = vpop.f32.mrf.mxu0
        %v8854 = vadd.f32 %v2872, %v8853
        %8855 = vmatmul.bf16.gmra.mxu0 %v2214
        %v8856 = vpop.f32.mrf.mxu0
        %v8857 = vadd.f32 %v2872, %v8856
        %v8858 = vpop.f32.mrf.mxu0
        %v8859 = vadd.f32 %v2872, %v8858
        %8860 = vmatmul.bf16.gmra.mxu0 %v2216
        %v8861 = vpop.f32.mrf.mxu0
        %v8862 = vadd.f32 %v2872, %v8861
        %v8863 = vpop.f32.mrf.mxu0
        %v8864 = vadd.f32 %v2872, %v8863
        %8865 = vmatmul.bf16.gmra.mxu0 %v2218
        %v8866 = vpop.f32.mrf.mxu0
        %v8867 = vadd.f32 %v2872, %v8866
        %v8868 = vpop.f32.mrf.mxu0
        %v8869 = vadd.f32 %v2872, %v8868
        %8870 = vmatmul.bf16.gmra.mxu0 %v2220
        %v8871 = vpop.f32.mrf.mxu0
        %v8872 = vadd.f32 %v2872, %v8871
        %v8873 = vpop.f32.mrf.mxu0
        %v8874 = vadd.f32 %v2872, %v8873
        %8875 = vmatmul.bf16.gmra.mxu0 %v2222
        %v8876 = vpop.f32.mrf.mxu0
        %v8877 = vadd.f32 %v2872, %v8876
        %v8878 = vpop.f32.mrf.mxu0
        %v8879 = vadd.f32 %v2872, %v8878
        %8880 = vdwg.mxu0
        %8881 = vmatpush.bf16.msra.mxu0 %v5293
        %8882 = vmatpush.bf16.msra.mxu0 %v5256
        %8883 = vmatpush.bf16.msra.mxu0 %v5219
        %8884 = vmatpush.bf16.msra.mxu0 %v5182
        %8885 = vmatpush.bf16.msra.mxu0 %v5145
        %8886 = vmatpush.bf16.msra.mxu0 %v5108
        %8887 = vmatpush.bf16.msra.mxu0 %v5071
        %8888 = vmatpush.bf16.msra.mxu0 %v5034
        %8889 = vmatmul.bf16.gmra.mxu0 %v2209
        %v8890 = vpop.f32.mrf.mxu0
        %v8891 = vadd.f32 %v8842, %v8890
        %v8892 = vpop.f32.mrf.mxu0
        %v8893 = vadd.f32 %v8844, %v8892
        %8894 = vmatmul.bf16.gmra.mxu0 %v2211
        %v8895 = vpop.f32.mrf.mxu0
        %v8896 = vadd.f32 %v8847, %v8895
        %v8897 = vpop.f32.mrf.mxu0
        %v8898 = vadd.f32 %v8849, %v8897
        %8899 = vmatmul.bf16.gmra.mxu0 %v2213
        %v8900 = vpop.f32.mrf.mxu0
        %v8901 = vadd.f32 %v8852, %v8900
        %v8902 = vpop.f32.mrf.mxu0
        %v8903 = vadd.f32 %v8854, %v8902
        %8904 = vmatmul.bf16.gmra.mxu0 %v2215
        %v8905 = vpop.f32.mrf.mxu0
        %v8906 = vadd.f32 %v8857, %v8905
        %v8907 = vpop.f32.mrf.mxu0
        %v8908 = vadd.f32 %v8859, %v8907
        %8909 = vmatmul.bf16.gmra.mxu0 %v2217
        %v8910 = vpop.f32.mrf.mxu0
        %v8911 = vadd.f32 %v8862, %v8910
        %v8912 = vpop.f32.mrf.mxu0
        %v8913 = vadd.f32 %v8864, %v8912
        %8914 = vmatmul.bf16.gmra.mxu0 %v2219
        %v8915 = vpop.f32.mrf.mxu0
        %v8916 = vadd.f32 %v8867, %v8915
        %v8917 = vpop.f32.mrf.mxu0
        %v8918 = vadd.f32 %v8869, %v8917
        %8919 = vmatmul.bf16.gmra.mxu0 %v2221
        %v8920 = vpop.f32.mrf.mxu0
        %v8921 = vadd.f32 %v8872, %v8920
        %v8922 = vpop.f32.mrf.mxu0
        %v8923 = vadd.f32 %v8874, %v8922
        %8924 = vmatmul.bf16.gmra.mxu0 %v2223
        %v8925 = vpop.f32.mrf.mxu0
        %v8926 = vadd.f32 %v8877, %v8925
        %v8927 = vpop.f32.mrf.mxu0
        %v8928 = vadd.f32 %v8879, %v8927
        %8929 = vdwg.mxu0
        %8930 = vmatpush.bf16.msra.mxu0 %v4998
        %8931 = vmatpush.bf16.msra.mxu0 %v4961
        %8932 = vmatpush.bf16.msra.mxu0 %v4924
        %8933 = vmatpush.bf16.msra.mxu0 %v4887
        %8934 = vmatpush.bf16.msra.mxu0 %v4850
        %8935 = vmatpush.bf16.msra.mxu0 %v4813
        %8936 = vmatpush.bf16.msra.mxu0 %v4776
        %8937 = vmatpush.bf16.msra.mxu0 %v4739
        %8938 = vmatmul.bf16.gmra.mxu0 %v2208
        %v8939 = vpop.f32.mrf.mxu0
        %v8940 = vadd.f32 %v2873, %v8939
        %v8941 = vpop.f32.mrf.mxu0
        %v8942 = vadd.f32 %v2873, %v8941
        %8943 = vmatmul.bf16.gmra.mxu0 %v2210
        %v8944 = vpop.f32.mrf.mxu0
        %v8945 = vadd.f32 %v2873, %v8944
        %v8946 = vpop.f32.mrf.mxu0
        %v8947 = vadd.f32 %v2873, %v8946
        %8948 = vmatmul.bf16.gmra.mxu0 %v2212
        %v8949 = vpop.f32.mrf.mxu0
        %v8950 = vadd.f32 %v2873, %v8949
        %v8951 = vpop.f32.mrf.mxu0
        %v8952 = vadd.f32 %v2873, %v8951
        %8953 = vmatmul.bf16.gmra.mxu0 %v2214
        %v8954 = vpop.f32.mrf.mxu0
        %v8955 = vadd.f32 %v2873, %v8954
        %v8956 = vpop.f32.mrf.mxu0
        %v8957 = vadd.f32 %v2873, %v8956
        %8958 = vmatmul.bf16.gmra.mxu0 %v2216
        %v8959 = vpop.f32.mrf.mxu0
        %v8960 = vadd.f32 %v2873, %v8959
        %v8961 = vpop.f32.mrf.mxu0
        %v8962 = vadd.f32 %v2873, %v8961
        %8963 = vmatmul.bf16.gmra.mxu0 %v2218
        %v8964 = vpop.f32.mrf.mxu0
        %v8965 = vadd.f32 %v2873, %v8964
        %v8966 = vpop.f32.mrf.mxu0
        %v8967 = vadd.f32 %v2873, %v8966
        %8968 = vmatmul.bf16.gmra.mxu0 %v2220
        %v8969 = vpop.f32.mrf.mxu0
        %v8970 = vadd.f32 %v2873, %v8969
        %v8971 = vpop.f32.mrf.mxu0
        %v8972 = vadd.f32 %v2873, %v8971
        %8973 = vmatmul.bf16.gmra.mxu0 %v2222
        %v8974 = vpop.f32.mrf.mxu0
        %v8975 = vadd.f32 %v2873, %v8974
        %v8976 = vpop.f32.mrf.mxu0
        %v8977 = vadd.f32 %v2873, %v8976
        %8978 = vdwg.mxu0
        %8979 = vmatpush.bf16.msra.mxu0 %v5294
        %8980 = vmatpush.bf16.msra.mxu0 %v5257
        %8981 = vmatpush.bf16.msra.mxu0 %v5220
        %8982 = vmatpush.bf16.msra.mxu0 %v5183
        %8983 = vmatpush.bf16.msra.mxu0 %v5146
        %8984 = vmatpush.bf16.msra.mxu0 %v5109
        %8985 = vmatpush.bf16.msra.mxu0 %v5072
        %8986 = vmatpush.bf16.msra.mxu0 %v5035
        %8987 = vmatmul.bf16.gmra.mxu0 %v2209
        %v8988 = vpop.f32.mrf.mxu0
        %v8989 = vadd.f32 %v8940, %v8988
        %v8990 = vpop.f32.mrf.mxu0
        %v8991 = vadd.f32 %v8942, %v8990
        %8992 = vmatmul.bf16.gmra.mxu0 %v2211
        %v8993 = vpop.f32.mrf.mxu0
        %v8994 = vadd.f32 %v8945, %v8993
        %v8995 = vpop.f32.mrf.mxu0
        %v8996 = vadd.f32 %v8947, %v8995
        %8997 = vmatmul.bf16.gmra.mxu0 %v2213
        %v8998 = vpop.f32.mrf.mxu0
        %v8999 = vadd.f32 %v8950, %v8998
        %v9000 = vpop.f32.mrf.mxu0
        %v9001 = vadd.f32 %v8952, %v9000
        %9002 = vmatmul.bf16.gmra.mxu0 %v2215
        %v9003 = vpop.f32.mrf.mxu0
        %v9004 = vadd.f32 %v8955, %v9003
        %v9005 = vpop.f32.mrf.mxu0
        %v9006 = vadd.f32 %v8957, %v9005
        %9007 = vmatmul.bf16.gmra.mxu0 %v2217
        %v9008 = vpop.f32.mrf.mxu0
        %v9009 = vadd.f32 %v8960, %v9008
        %v9010 = vpop.f32.mrf.mxu0
        %v9011 = vadd.f32 %v8962, %v9010
        %9012 = vmatmul.bf16.gmra.mxu0 %v2219
        %v9013 = vpop.f32.mrf.mxu0
        %v9014 = vadd.f32 %v8965, %v9013
        %v9015 = vpop.f32.mrf.mxu0
        %v9016 = vadd.f32 %v8967, %v9015
        %9017 = vmatmul.bf16.gmra.mxu0 %v2221
        %v9018 = vpop.f32.mrf.mxu0
        %v9019 = vadd.f32 %v8970, %v9018
        %v9020 = vpop.f32.mrf.mxu0
        %v9021 = vadd.f32 %v8972, %v9020
        %9022 = vmatmul.bf16.gmra.mxu0 %v2223
        %v9023 = vpop.f32.mrf.mxu0
        %v9024 = vadd.f32 %v8975, %v9023
        %v9025 = vpop.f32.mrf.mxu0
        %v9026 = vadd.f32 %v8977, %v9025
        %9027 = vdwg.mxu0
        %9028 = vmatpush.bf16.msra.mxu0 %v4999
        %9029 = vmatpush.bf16.msra.mxu0 %v4962
        %9030 = vmatpush.bf16.msra.mxu0 %v4925
        %9031 = vmatpush.bf16.msra.mxu0 %v4888
        %9032 = vmatpush.bf16.msra.mxu0 %v4851
        %9033 = vmatpush.bf16.msra.mxu0 %v4814
        %9034 = vmatpush.bf16.msra.mxu0 %v4777
        %9035 = vmatpush.bf16.msra.mxu0 %v4740
        %9036 = vmatmul.bf16.gmra.mxu0 %v2208
        %v9037 = vpop.f32.mrf.mxu0
        %v9038 = vadd.f32 %v2874, %v9037
        %v9039 = vpop.f32.mrf.mxu0
        %v9040 = vadd.f32 %v2874, %v9039
        %9041 = vmatmul.bf16.gmra.mxu0 %v2210
        %v9042 = vpop.f32.mrf.mxu0
        %v9043 = vadd.f32 %v2874, %v9042
        %v9044 = vpop.f32.mrf.mxu0
        %v9045 = vadd.f32 %v2874, %v9044
        %9046 = vmatmul.bf16.gmra.mxu0 %v2212
        %v9047 = vpop.f32.mrf.mxu0
        %v9048 = vadd.f32 %v2874, %v9047
        %v9049 = vpop.f32.mrf.mxu0
        %v9050 = vadd.f32 %v2874, %v9049
        %9051 = vmatmul.bf16.gmra.mxu0 %v2214
        %v9052 = vpop.f32.mrf.mxu0
        %v9053 = vadd.f32 %v2874, %v9052
        %v9054 = vpop.f32.mrf.mxu0
        %v9055 = vadd.f32 %v2874, %v9054
        %9056 = vmatmul.bf16.gmra.mxu0 %v2216
        %v9057 = vpop.f32.mrf.mxu0
        %v9058 = vadd.f32 %v2874, %v9057
        %v9059 = vpop.f32.mrf.mxu0
        %v9060 = vadd.f32 %v2874, %v9059
        %9061 = vmatmul.bf16.gmra.mxu0 %v2218
        %v9062 = vpop.f32.mrf.mxu0
        %v9063 = vadd.f32 %v2874, %v9062
        %v9064 = vpop.f32.mrf.mxu0
        %v9065 = vadd.f32 %v2874, %v9064
        %9066 = vmatmul.bf16.gmra.mxu0 %v2220
        %v9067 = vpop.f32.mrf.mxu0
        %v9068 = vadd.f32 %v2874, %v9067
        %v9069 = vpop.f32.mrf.mxu0
        %v9070 = vadd.f32 %v2874, %v9069
        %9071 = vmatmul.bf16.gmra.mxu0 %v2222
        %v9072 = vpop.f32.mrf.mxu0
        %v9073 = vadd.f32 %v2874, %v9072
        %v9074 = vpop.f32.mrf.mxu0
        %v9075 = vadd.f32 %v2874, %v9074
        %9076 = vdwg.mxu0
        %9077 = vmatpush.bf16.msra.mxu0 %v5295
        %9078 = vmatpush.bf16.msra.mxu0 %v5258
        %9079 = vmatpush.bf16.msra.mxu0 %v5221
        %9080 = vmatpush.bf16.msra.mxu0 %v5184
        %9081 = vmatpush.bf16.msra.mxu0 %v5147
        %9082 = vmatpush.bf16.msra.mxu0 %v5110
        %9083 = vmatpush.bf16.msra.mxu0 %v5073
        %9084 = vmatpush.bf16.msra.mxu0 %v5036
        %9085 = vmatmul.bf16.gmra.mxu0 %v2209
        %v9086 = vpop.f32.mrf.mxu0
        %v9087 = vadd.f32 %v9038, %v9086
        %v9088 = vpop.f32.mrf.mxu0
        %v9089 = vadd.f32 %v9040, %v9088
        %9090 = vmatmul.bf16.gmra.mxu0 %v2211
        %v9091 = vpop.f32.mrf.mxu0
        %v9092 = vadd.f32 %v9043, %v9091
        %v9093 = vpop.f32.mrf.mxu0
        %v9094 = vadd.f32 %v9045, %v9093
        %9095 = vmatmul.bf16.gmra.mxu0 %v2213
        %v9096 = vpop.f32.mrf.mxu0
        %v9097 = vadd.f32 %v9048, %v9096
        %v9098 = vpop.f32.mrf.mxu0
        %v9099 = vadd.f32 %v9050, %v9098
        %9100 = vmatmul.bf16.gmra.mxu0 %v2215
        %v9101 = vpop.f32.mrf.mxu0
        %v9102 = vadd.f32 %v9053, %v9101
        %v9103 = vpop.f32.mrf.mxu0
        %v9104 = vadd.f32 %v9055, %v9103
        %9105 = vmatmul.bf16.gmra.mxu0 %v2217
        %v9106 = vpop.f32.mrf.mxu0
        %v9107 = vadd.f32 %v9058, %v9106
        %v9108 = vpop.f32.mrf.mxu0
        %v9109 = vadd.f32 %v9060, %v9108
        %9110 = vmatmul.bf16.gmra.mxu0 %v2219
        %v9111 = vpop.f32.mrf.mxu0
        %v9112 = vadd.f32 %v9063, %v9111
        %v9113 = vpop.f32.mrf.mxu0
        %v9114 = vadd.f32 %v9065, %v9113
        %9115 = vmatmul.bf16.gmra.mxu0 %v2221
        %v9116 = vpop.f32.mrf.mxu0
        %v9117 = vadd.f32 %v9068, %v9116
        %v9118 = vpop.f32.mrf.mxu0
        %v9119 = vadd.f32 %v9070, %v9118
        %9120 = vmatmul.bf16.gmra.mxu0 %v2223
        %v9121 = vpop.f32.mrf.mxu0
        %v9122 = vadd.f32 %v9073, %v9121
        %v9123 = vpop.f32.mrf.mxu0
        %v9124 = vadd.f32 %v9075, %v9123
        %9125 = vdwg.mxu0
        %9126 = vmatpush.bf16.msra.mxu0 %v5000
        %9127 = vmatpush.bf16.msra.mxu0 %v4963
        %9128 = vmatpush.bf16.msra.mxu0 %v4926
        %9129 = vmatpush.bf16.msra.mxu0 %v4889
        %9130 = vmatpush.bf16.msra.mxu0 %v4852
        %9131 = vmatpush.bf16.msra.mxu0 %v4815
        %9132 = vmatpush.bf16.msra.mxu0 %v4778
        %9133 = vmatpush.bf16.msra.mxu0 %v4741
        %9134 = vmatmul.bf16.gmra.mxu0 %v2208
        %v9135 = vpop.f32.mrf.mxu0
        %v9136 = vadd.f32 %v2875, %v9135
        %v9137 = vpop.f32.mrf.mxu0
        %v9138 = vadd.f32 %v2875, %v9137
        %9139 = vmatmul.bf16.gmra.mxu0 %v2210
        %v9140 = vpop.f32.mrf.mxu0
        %v9141 = vadd.f32 %v2875, %v9140
        %v9142 = vpop.f32.mrf.mxu0
        %v9143 = vadd.f32 %v2875, %v9142
        %9144 = vmatmul.bf16.gmra.mxu0 %v2212
        %v9145 = vpop.f32.mrf.mxu0
        %v9146 = vadd.f32 %v2875, %v9145
        %v9147 = vpop.f32.mrf.mxu0
        %v9148 = vadd.f32 %v2875, %v9147
        %9149 = vmatmul.bf16.gmra.mxu0 %v2214
        %v9150 = vpop.f32.mrf.mxu0
        %v9151 = vadd.f32 %v2875, %v9150
        %v9152 = vpop.f32.mrf.mxu0
        %v9153 = vadd.f32 %v2875, %v9152
        %9154 = vmatmul.bf16.gmra.mxu0 %v2216
        %v9155 = vpop.f32.mrf.mxu0
        %v9156 = vadd.f32 %v2875, %v9155
        %v9157 = vpop.f32.mrf.mxu0
        %v9158 = vadd.f32 %v2875, %v9157
        %9159 = vmatmul.bf16.gmra.mxu0 %v2218
        %v9160 = vpop.f32.mrf.mxu0
        %v9161 = vadd.f32 %v2875, %v9160
        %v9162 = vpop.f32.mrf.mxu0
        %v9163 = vadd.f32 %v2875, %v9162
        %9164 = vmatmul.bf16.gmra.mxu0 %v2220
        %v9165 = vpop.f32.mrf.mxu0
        %v9166 = vadd.f32 %v2875, %v9165
        %v9167 = vpop.f32.mrf.mxu0
        %v9168 = vadd.f32 %v2875, %v9167
        %9169 = vmatmul.bf16.gmra.mxu0 %v2222
        %v9170 = vpop.f32.mrf.mxu0
        %v9171 = vadd.f32 %v2875, %v9170
        %v9172 = vpop.f32.mrf.mxu0
        %v9173 = vadd.f32 %v2875, %v9172
        %9174 = vdwg.mxu0
        %9175 = vmatpush.bf16.msra.mxu0 %v5296
        %9176 = vmatpush.bf16.msra.mxu0 %v5259
        %9177 = vmatpush.bf16.msra.mxu0 %v5222
        %9178 = vmatpush.bf16.msra.mxu0 %v5185
        %9179 = vmatpush.bf16.msra.mxu0 %v5148
        %9180 = vmatpush.bf16.msra.mxu0 %v5111
        %9181 = vmatpush.bf16.msra.mxu0 %v5074
        %9182 = vmatpush.bf16.msra.mxu0 %v5037
        %9183 = vmatmul.bf16.gmra.mxu0 %v2209
        %v9184 = vpop.f32.mrf.mxu0
        %v9185 = vadd.f32 %v9136, %v9184
        %v9186 = vpop.f32.mrf.mxu0
        %v9187 = vadd.f32 %v9138, %v9186
        %9188 = vmatmul.bf16.gmra.mxu0 %v2211
        %v9189 = vpop.f32.mrf.mxu0
        %v9190 = vadd.f32 %v9141, %v9189
        %v9191 = vpop.f32.mrf.mxu0
        %v9192 = vadd.f32 %v9143, %v9191
        %9193 = vmatmul.bf16.gmra.mxu0 %v2213
        %v9194 = vpop.f32.mrf.mxu0
        %v9195 = vadd.f32 %v9146, %v9194
        %v9196 = vpop.f32.mrf.mxu0
        %v9197 = vadd.f32 %v9148, %v9196
        %9198 = vmatmul.bf16.gmra.mxu0 %v2215
        %v9199 = vpop.f32.mrf.mxu0
        %v9200 = vadd.f32 %v9151, %v9199
        %v9201 = vpop.f32.mrf.mxu0
        %v9202 = vadd.f32 %v9153, %v9201
        %9203 = vmatmul.bf16.gmra.mxu0 %v2217
        %v9204 = vpop.f32.mrf.mxu0
        %v9205 = vadd.f32 %v9156, %v9204
        %v9206 = vpop.f32.mrf.mxu0
        %v9207 = vadd.f32 %v9158, %v9206
        %9208 = vmatmul.bf16.gmra.mxu0 %v2219
        %v9209 = vpop.f32.mrf.mxu0
        %v9210 = vadd.f32 %v9161, %v9209
        %v9211 = vpop.f32.mrf.mxu0
        %v9212 = vadd.f32 %v9163, %v9211
        %9213 = vmatmul.bf16.gmra.mxu0 %v2221
        %v9214 = vpop.f32.mrf.mxu0
        %v9215 = vadd.f32 %v9166, %v9214
        %v9216 = vpop.f32.mrf.mxu0
        %v9217 = vadd.f32 %v9168, %v9216
        %9218 = vmatmul.bf16.gmra.mxu0 %v2223
        %v9219 = vpop.f32.mrf.mxu0
        %v9220 = vadd.f32 %v9171, %v9219
        %v9221 = vpop.f32.mrf.mxu0
        %v9222 = vadd.f32 %v9173, %v9221
        %9223 = vdwg.mxu0
        %9224 = vmatpush.bf16.msra.mxu0 %v5001
        %9225 = vmatpush.bf16.msra.mxu0 %v4964
        %9226 = vmatpush.bf16.msra.mxu0 %v4927
        %9227 = vmatpush.bf16.msra.mxu0 %v4890
        %9228 = vmatpush.bf16.msra.mxu0 %v4853
        %9229 = vmatpush.bf16.msra.mxu0 %v4816
        %9230 = vmatpush.bf16.msra.mxu0 %v4779
        %9231 = vmatpush.bf16.msra.mxu0 %v4742
        %9232 = vmatmul.bf16.gmra.mxu0 %v2208
        %v9233 = vpop.f32.mrf.mxu0
        %v9234 = vadd.f32 %v2876, %v9233
        %v9235 = vpop.f32.mrf.mxu0
        %v9236 = vadd.f32 %v2876, %v9235
        %9237 = vmatmul.bf16.gmra.mxu0 %v2210
        %v9238 = vpop.f32.mrf.mxu0
        %v9239 = vadd.f32 %v2876, %v9238
        %v9240 = vpop.f32.mrf.mxu0
        %v9241 = vadd.f32 %v2876, %v9240
        %9242 = vmatmul.bf16.gmra.mxu0 %v2212
        %v9243 = vpop.f32.mrf.mxu0
        %v9244 = vadd.f32 %v2876, %v9243
        %v9245 = vpop.f32.mrf.mxu0
        %v9246 = vadd.f32 %v2876, %v9245
        %9247 = vmatmul.bf16.gmra.mxu0 %v2214
        %v9248 = vpop.f32.mrf.mxu0
        %v9249 = vadd.f32 %v2876, %v9248
        %v9250 = vpop.f32.mrf.mxu0
        %v9251 = vadd.f32 %v2876, %v9250
        %9252 = vmatmul.bf16.gmra.mxu0 %v2216
        %v9253 = vpop.f32.mrf.mxu0
        %v9254 = vadd.f32 %v2876, %v9253
        %v9255 = vpop.f32.mrf.mxu0
        %v9256 = vadd.f32 %v2876, %v9255
        %9257 = vmatmul.bf16.gmra.mxu0 %v2218
        %v9258 = vpop.f32.mrf.mxu0
        %v9259 = vadd.f32 %v2876, %v9258
        %v9260 = vpop.f32.mrf.mxu0
        %v9261 = vadd.f32 %v2876, %v9260
        %9262 = vmatmul.bf16.gmra.mxu0 %v2220
        %v9263 = vpop.f32.mrf.mxu0
        %v9264 = vadd.f32 %v2876, %v9263
        %v9265 = vpop.f32.mrf.mxu0
        %v9266 = vadd.f32 %v2876, %v9265
        %9267 = vmatmul.bf16.gmra.mxu0 %v2222
        %v9268 = vpop.f32.mrf.mxu0
        %v9269 = vadd.f32 %v2876, %v9268
        %v9270 = vpop.f32.mrf.mxu0
        %v9271 = vadd.f32 %v2876, %v9270
        %9272 = vdwg.mxu0
        %9273 = vmatpush.bf16.msra.mxu0 %v5297
        %9274 = vmatpush.bf16.msra.mxu0 %v5260
        %9275 = vmatpush.bf16.msra.mxu0 %v5223
        %9276 = vmatpush.bf16.msra.mxu0 %v5186
        %9277 = vmatpush.bf16.msra.mxu0 %v5149
        %9278 = vmatpush.bf16.msra.mxu0 %v5112
        %9279 = vmatpush.bf16.msra.mxu0 %v5075
        %9280 = vmatpush.bf16.msra.mxu0 %v5038
        %9281 = vmatmul.bf16.gmra.mxu0 %v2209
        %v9282 = vpop.f32.mrf.mxu0
        %v9283 = vadd.f32 %v9234, %v9282
        %v9284 = vpop.f32.mrf.mxu0
        %v9285 = vadd.f32 %v9236, %v9284
        %9286 = vmatmul.bf16.gmra.mxu0 %v2211
        %v9287 = vpop.f32.mrf.mxu0
        %v9288 = vadd.f32 %v9239, %v9287
        %v9289 = vpop.f32.mrf.mxu0
        %v9290 = vadd.f32 %v9241, %v9289
        %9291 = vmatmul.bf16.gmra.mxu0 %v2213
        %v9292 = vpop.f32.mrf.mxu0
        %v9293 = vadd.f32 %v9244, %v9292
        %v9294 = vpop.f32.mrf.mxu0
        %v9295 = vadd.f32 %v9246, %v9294
        %9296 = vmatmul.bf16.gmra.mxu0 %v2215
        %v9297 = vpop.f32.mrf.mxu0
        %v9298 = vadd.f32 %v9249, %v9297
        %v9299 = vpop.f32.mrf.mxu0
        %v9300 = vadd.f32 %v9251, %v9299
        %9301 = vmatmul.bf16.gmra.mxu0 %v2217
        %v9302 = vpop.f32.mrf.mxu0
        %v9303 = vadd.f32 %v9254, %v9302
        %v9304 = vpop.f32.mrf.mxu0
        %v9305 = vadd.f32 %v9256, %v9304
        %9306 = vmatmul.bf16.gmra.mxu0 %v2219
        %v9307 = vpop.f32.mrf.mxu0
        %v9308 = vadd.f32 %v9259, %v9307
        %v9309 = vpop.f32.mrf.mxu0
        %v9310 = vadd.f32 %v9261, %v9309
        %9311 = vmatmul.bf16.gmra.mxu0 %v2221
        %v9312 = vpop.f32.mrf.mxu0
        %v9313 = vadd.f32 %v9264, %v9312
        %v9314 = vpop.f32.mrf.mxu0
        %v9315 = vadd.f32 %v9266, %v9314
        %9316 = vmatmul.bf16.gmra.mxu0 %v2223
        %v9317 = vpop.f32.mrf.mxu0
        %v9318 = vadd.f32 %v9269, %v9317
        %v9319 = vpop.f32.mrf.mxu0
        %v9320 = vadd.f32 %v9271, %v9319
        %9321 = vdwg.mxu0
        %9322 = vmatpush.bf16.msra.mxu0 %v5002
        %9323 = vmatpush.bf16.msra.mxu0 %v4965
        %9324 = vmatpush.bf16.msra.mxu0 %v4928
        %9325 = vmatpush.bf16.msra.mxu0 %v4891
        %9326 = vmatpush.bf16.msra.mxu0 %v4854
        %9327 = vmatpush.bf16.msra.mxu0 %v4817
        %9328 = vmatpush.bf16.msra.mxu0 %v4780
        %9329 = vmatpush.bf16.msra.mxu0 %v4743
        %9330 = vmatmul.bf16.gmra.mxu0 %v2208
        %v9331 = vpop.f32.mrf.mxu0
        %v9332 = vadd.f32 %v2877, %v9331
        %v9333 = vpop.f32.mrf.mxu0
        %v9334 = vadd.f32 %v2877, %v9333
        %9335 = vmatmul.bf16.gmra.mxu0 %v2210
        %v9336 = vpop.f32.mrf.mxu0
        %v9337 = vadd.f32 %v2877, %v9336
        %v9338 = vpop.f32.mrf.mxu0
        %v9339 = vadd.f32 %v2877, %v9338
        %9340 = vmatmul.bf16.gmra.mxu0 %v2212
        %v9341 = vpop.f32.mrf.mxu0
        %v9342 = vadd.f32 %v2877, %v9341
        %v9343 = vpop.f32.mrf.mxu0
        %v9344 = vadd.f32 %v2877, %v9343
        %9345 = vmatmul.bf16.gmra.mxu0 %v2214
        %v9346 = vpop.f32.mrf.mxu0
        %v9347 = vadd.f32 %v2877, %v9346
        %v9348 = vpop.f32.mrf.mxu0
        %v9349 = vadd.f32 %v2877, %v9348
        %9350 = vmatmul.bf16.gmra.mxu0 %v2216
        %v9351 = vpop.f32.mrf.mxu0
        %v9352 = vadd.f32 %v2877, %v9351
        %v9353 = vpop.f32.mrf.mxu0
        %v9354 = vadd.f32 %v2877, %v9353
        %9355 = vmatmul.bf16.gmra.mxu0 %v2218
        %v9356 = vpop.f32.mrf.mxu0
        %v9357 = vadd.f32 %v2877, %v9356
        %v9358 = vpop.f32.mrf.mxu0
        %v9359 = vadd.f32 %v2877, %v9358
        %9360 = vmatmul.bf16.gmra.mxu0 %v2220
        %v9361 = vpop.f32.mrf.mxu0
        %v9362 = vadd.f32 %v2877, %v9361
        %v9363 = vpop.f32.mrf.mxu0
        %v9364 = vadd.f32 %v2877, %v9363
        %9365 = vmatmul.bf16.gmra.mxu0 %v2222
        %v9366 = vpop.f32.mrf.mxu0
        %v9367 = vadd.f32 %v2877, %v9366
        %v9368 = vpop.f32.mrf.mxu0
        %v9369 = vadd.f32 %v2877, %v9368
        %9370 = vdwg.mxu0
        %9371 = vmatpush.bf16.msra.mxu0 %v5298
        %9372 = vmatpush.bf16.msra.mxu0 %v5261
        %9373 = vmatpush.bf16.msra.mxu0 %v5224
        %9374 = vmatpush.bf16.msra.mxu0 %v5187
        %9375 = vmatpush.bf16.msra.mxu0 %v5150
        %9376 = vmatpush.bf16.msra.mxu0 %v5113
        %9377 = vmatpush.bf16.msra.mxu0 %v5076
        %9378 = vmatpush.bf16.msra.mxu0 %v5039
        %9379 = vmatmul.bf16.gmra.mxu0 %v2209
        %v9380 = vpop.f32.mrf.mxu0
        %v9381 = vadd.f32 %v9332, %v9380
        %v9382 = vpop.f32.mrf.mxu0
        %v9383 = vadd.f32 %v9334, %v9382
        %9384 = vmatmul.bf16.gmra.mxu0 %v2211
        %v9385 = vpop.f32.mrf.mxu0
        %v9386 = vadd.f32 %v9337, %v9385
        %v9387 = vpop.f32.mrf.mxu0
        %v9388 = vadd.f32 %v9339, %v9387
        %9389 = vmatmul.bf16.gmra.mxu0 %v2213
        %v9390 = vpop.f32.mrf.mxu0
        %v9391 = vadd.f32 %v9342, %v9390
        %v9392 = vpop.f32.mrf.mxu0
        %v9393 = vadd.f32 %v9344, %v9392
        %9394 = vmatmul.bf16.gmra.mxu0 %v2215
        %v9395 = vpop.f32.mrf.mxu0
        %v9396 = vadd.f32 %v9347, %v9395
        %v9397 = vpop.f32.mrf.mxu0
        %v9398 = vadd.f32 %v9349, %v9397
        %9399 = vmatmul.bf16.gmra.mxu0 %v2217
        %v9400 = vpop.f32.mrf.mxu0
        %v9401 = vadd.f32 %v9352, %v9400
        %v9402 = vpop.f32.mrf.mxu0
        %v9403 = vadd.f32 %v9354, %v9402
        %9404 = vmatmul.bf16.gmra.mxu0 %v2219
        %v9405 = vpop.f32.mrf.mxu0
        %v9406 = vadd.f32 %v9357, %v9405
        %v9407 = vpop.f32.mrf.mxu0
        %v9408 = vadd.f32 %v9359, %v9407
        %9409 = vmatmul.bf16.gmra.mxu0 %v2221
        %v9410 = vpop.f32.mrf.mxu0
        %v9411 = vadd.f32 %v9362, %v9410
        %v9412 = vpop.f32.mrf.mxu0
        %v9413 = vadd.f32 %v9364, %v9412
        %9414 = vmatmul.bf16.gmra.mxu0 %v2223
        %v9415 = vpop.f32.mrf.mxu0
        %v9416 = vadd.f32 %v9367, %v9415
        %v9417 = vpop.f32.mrf.mxu0
        %v9418 = vadd.f32 %v9369, %v9417
        %9419 = vdwg.mxu0
        %9420 = vmatpush.bf16.msra.mxu0 %v5003
        %9421 = vmatpush.bf16.msra.mxu0 %v4966
        %9422 = vmatpush.bf16.msra.mxu0 %v4929
        %9423 = vmatpush.bf16.msra.mxu0 %v4892
        %9424 = vmatpush.bf16.msra.mxu0 %v4855
        %9425 = vmatpush.bf16.msra.mxu0 %v4818
        %9426 = vmatpush.bf16.msra.mxu0 %v4781
        %9427 = vmatpush.bf16.msra.mxu0 %v4744
        %9428 = vmatmul.bf16.gmra.mxu0 %v2208
        %v9429 = vpop.f32.mrf.mxu0
        %v9430 = vadd.f32 %v2878, %v9429
        %v9431 = vpop.f32.mrf.mxu0
        %v9432 = vadd.f32 %v2878, %v9431
        %9433 = vmatmul.bf16.gmra.mxu0 %v2210
        %v9434 = vpop.f32.mrf.mxu0
        %v9435 = vadd.f32 %v2878, %v9434
        %v9436 = vpop.f32.mrf.mxu0
        %v9437 = vadd.f32 %v2878, %v9436
        %9438 = vmatmul.bf16.gmra.mxu0 %v2212
        %v9439 = vpop.f32.mrf.mxu0
        %v9440 = vadd.f32 %v2878, %v9439
        %v9441 = vpop.f32.mrf.mxu0
        %v9442 = vadd.f32 %v2878, %v9441
        %9443 = vmatmul.bf16.gmra.mxu0 %v2214
        %v9444 = vpop.f32.mrf.mxu0
        %v9445 = vadd.f32 %v2878, %v9444
        %v9446 = vpop.f32.mrf.mxu0
        %v9447 = vadd.f32 %v2878, %v9446
        %9448 = vmatmul.bf16.gmra.mxu0 %v2216
        %v9449 = vpop.f32.mrf.mxu0
        %v9450 = vadd.f32 %v2878, %v9449
        %v9451 = vpop.f32.mrf.mxu0
        %v9452 = vadd.f32 %v2878, %v9451
        %9453 = vmatmul.bf16.gmra.mxu0 %v2218
        %v9454 = vpop.f32.mrf.mxu0
        %v9455 = vadd.f32 %v2878, %v9454
        %v9456 = vpop.f32.mrf.mxu0
        %v9457 = vadd.f32 %v2878, %v9456
        %9458 = vmatmul.bf16.gmra.mxu0 %v2220
        %v9459 = vpop.f32.mrf.mxu0
        %v9460 = vadd.f32 %v2878, %v9459
        %v9461 = vpop.f32.mrf.mxu0
        %v9462 = vadd.f32 %v2878, %v9461
        %9463 = vmatmul.bf16.gmra.mxu0 %v2222
        %v9464 = vpop.f32.mrf.mxu0
        %v9465 = vadd.f32 %v2878, %v9464
        %v9466 = vpop.f32.mrf.mxu0
        %v9467 = vadd.f32 %v2878, %v9466
        %9468 = vdwg.mxu0
        %9469 = vmatpush.bf16.msra.mxu0 %v5299
        %9470 = vmatpush.bf16.msra.mxu0 %v5262
        %9471 = vmatpush.bf16.msra.mxu0 %v5225
        %9472 = vmatpush.bf16.msra.mxu0 %v5188
        %9473 = vmatpush.bf16.msra.mxu0 %v5151
        %9474 = vmatpush.bf16.msra.mxu0 %v5114
        %9475 = vmatpush.bf16.msra.mxu0 %v5077
        %9476 = vmatpush.bf16.msra.mxu0 %v5040
        %9477 = vmatmul.bf16.gmra.mxu0 %v2209
        %v9478 = vpop.f32.mrf.mxu0
        %v9479 = vadd.f32 %v9430, %v9478
        %v9480 = vpop.f32.mrf.mxu0
        %v9481 = vadd.f32 %v9432, %v9480
        %9482 = vmatmul.bf16.gmra.mxu0 %v2211
        %v9483 = vpop.f32.mrf.mxu0
        %v9484 = vadd.f32 %v9435, %v9483
        %v9485 = vpop.f32.mrf.mxu0
        %v9486 = vadd.f32 %v9437, %v9485
        %9487 = vmatmul.bf16.gmra.mxu0 %v2213
        %v9488 = vpop.f32.mrf.mxu0
        %v9489 = vadd.f32 %v9440, %v9488
        %v9490 = vpop.f32.mrf.mxu0
        %v9491 = vadd.f32 %v9442, %v9490
        %9492 = vmatmul.bf16.gmra.mxu0 %v2215
        %v9493 = vpop.f32.mrf.mxu0
        %v9494 = vadd.f32 %v9445, %v9493
        %v9495 = vpop.f32.mrf.mxu0
        %v9496 = vadd.f32 %v9447, %v9495
        %9497 = vmatmul.bf16.gmra.mxu0 %v2217
        %v9498 = vpop.f32.mrf.mxu0
        %v9499 = vadd.f32 %v9450, %v9498
        %v9500 = vpop.f32.mrf.mxu0
        %v9501 = vadd.f32 %v9452, %v9500
        %9502 = vmatmul.bf16.gmra.mxu0 %v2219
        %v9503 = vpop.f32.mrf.mxu0
        %v9504 = vadd.f32 %v9455, %v9503
        %v9505 = vpop.f32.mrf.mxu0
        %v9506 = vadd.f32 %v9457, %v9505
        %9507 = vmatmul.bf16.gmra.mxu0 %v2221
        %v9508 = vpop.f32.mrf.mxu0
        %v9509 = vadd.f32 %v9460, %v9508
        %v9510 = vpop.f32.mrf.mxu0
        %v9511 = vadd.f32 %v9462, %v9510
        %9512 = vmatmul.bf16.gmra.mxu0 %v2223
        %v9513 = vpop.f32.mrf.mxu0
        %v9514 = vadd.f32 %v9465, %v9513
        %v9515 = vpop.f32.mrf.mxu0
        %v9516 = vadd.f32 %v9467, %v9515
        %9517 = vdwg.mxu0
        %v9518 = vpack.c.bf16 %v6049, %v5951
        %v9519 = vpack.c.bf16 %v6245, %v6147
        %v9520 = vpack.c.bf16 %v6441, %v6343
        %v9521 = vpack.c.bf16 %v6637, %v6539
        %v9522 = vpack.c.bf16 %v6833, %v6735
        %v9523 = vpack.c.bf16 %v7029, %v6931
        %v9524 = vpack.c.bf16 %v7225, %v7127
        %v9525 = vpack.c.bf16 %v7421, %v7323
        %v9526 = vpack.c.bf16 %v7617, %v7519
        %v9527 = vpack.c.bf16 %v7813, %v7715
        %v9528 = vpack.c.bf16 %v8009, %v7911
        %v9529 = vpack.c.bf16 %v8205, %v8107
        %v9530 = vpack.c.bf16 %v8401, %v8303
        %v9531 = vpack.c.bf16 %v8597, %v8499
        %v9532 = vpack.c.bf16 %v8793, %v8695
        %v9533 = vpack.c.bf16 %v8989, %v8891
        %v9534 = vpack.c.bf16 %v9185, %v9087
        %v9535 = vpack.c.bf16 %v9381, %v9283
        %v9536 = vpack.c.bf16 %v9479, %v9479
        %v9537 = vpack.c.bf16 %v6051, %v5953
        %v9538 = vpack.c.bf16 %v6247, %v6149
        %v9539 = vpack.c.bf16 %v6443, %v6345
        %v9540 = vpack.c.bf16 %v6639, %v6541
        %v9541 = vpack.c.bf16 %v6835, %v6737
        %v9542 = vpack.c.bf16 %v7031, %v6933
        %v9543 = vpack.c.bf16 %v7227, %v7129
        %v9544 = vpack.c.bf16 %v7423, %v7325
        %v9545 = vpack.c.bf16 %v7619, %v7521
        %v9546 = vpack.c.bf16 %v7815, %v7717
        %v9547 = vpack.c.bf16 %v8011, %v7913
        %v9548 = vpack.c.bf16 %v8207, %v8109
        %v9549 = vpack.c.bf16 %v8403, %v8305
        %v9550 = vpack.c.bf16 %v8599, %v8501
        %v9551 = vpack.c.bf16 %v8795, %v8697
        %v9552 = vpack.c.bf16 %v8991, %v8893
        %v9553 = vpack.c.bf16 %v9187, %v9089
        %v9554 = vpack.c.bf16 %v9383, %v9285
        %v9555 = vpack.c.bf16 %v9481, %v9481
        %v9556 = vpack.c.bf16 %v6054, %v5956
        %v9557 = vpack.c.bf16 %v6250, %v6152
        %v9558 = vpack.c.bf16 %v6446, %v6348
        %v9559 = vpack.c.bf16 %v6642, %v6544
        %v9560 = vpack.c.bf16 %v6838, %v6740
        %v9561 = vpack.c.bf16 %v7034, %v6936
        %v9562 = vpack.c.bf16 %v7230, %v7132
        %v9563 = vpack.c.bf16 %v7426, %v7328
        %v9564 = vpack.c.bf16 %v7622, %v7524
        %v9565 = vpack.c.bf16 %v7818, %v7720
        %v9566 = vpack.c.bf16 %v8014, %v7916
        %v9567 = vpack.c.bf16 %v8210, %v8112
        %v9568 = vpack.c.bf16 %v8406, %v8308
        %v9569 = vpack.c.bf16 %v8602, %v8504
        %v9570 = vpack.c.bf16 %v8798, %v8700
        %v9571 = vpack.c.bf16 %v8994, %v8896
        %v9572 = vpack.c.bf16 %v9190, %v9092
        %v9573 = vpack.c.bf16 %v9386, %v9288
        %v9574 = vpack.c.bf16 %v9484, %v9484
        %v9575 = vpack.c.bf16 %v6056, %v5958
        %v9576 = vpack.c.bf16 %v6252, %v6154
        %v9577 = vpack.c.bf16 %v6448, %v6350
        %v9578 = vpack.c.bf16 %v6644, %v6546
        %v9579 = vpack.c.bf16 %v6840, %v6742
        %v9580 = vpack.c.bf16 %v7036, %v6938
        %v9581 = vpack.c.bf16 %v7232, %v7134
        %v9582 = vpack.c.bf16 %v7428, %v7330
        %v9583 = vpack.c.bf16 %v7624, %v7526
        %v9584 = vpack.c.bf16 %v7820, %v7722
        %v9585 = vpack.c.bf16 %v8016, %v7918
        %v9586 = vpack.c.bf16 %v8212, %v8114
        %v9587 = vpack.c.bf16 %v8408, %v8310
        %v9588 = vpack.c.bf16 %v8604, %v8506
        %v9589 = vpack.c.bf16 %v8800, %v8702
        %v9590 = vpack.c.bf16 %v8996, %v8898
        %v9591 = vpack.c.bf16 %v9192, %v9094
        %v9592 = vpack.c.bf16 %v9388, %v9290
        %v9593 = vpack.c.bf16 %v9486, %v9486
        %v9594 = vpack.c.bf16 %v6059, %v5961
        %v9595 = vpack.c.bf16 %v6255, %v6157
        %v9596 = vpack.c.bf16 %v6451, %v6353
        %v9597 = vpack.c.bf16 %v6647, %v6549
        %v9598 = vpack.c.bf16 %v6843, %v6745
        %v9599 = vpack.c.bf16 %v7039, %v6941
        %v9600 = vpack.c.bf16 %v7235, %v7137
        %v9601 = vpack.c.bf16 %v7431, %v7333
        %v9602 = vpack.c.bf16 %v7627, %v7529
        %v9603 = vpack.c.bf16 %v7823, %v7725
        %v9604 = vpack.c.bf16 %v8019, %v7921
        %v9605 = vpack.c.bf16 %v8215, %v8117
        %v9606 = vpack.c.bf16 %v8411, %v8313
        %v9607 = vpack.c.bf16 %v8607, %v8509
        %v9608 = vpack.c.bf16 %v8803, %v8705
        %v9609 = vpack.c.bf16 %v8999, %v8901
        %v9610 = vpack.c.bf16 %v9195, %v9097
        %v9611 = vpack.c.bf16 %v9391, %v9293
        %v9612 = vpack.c.bf16 %v9489, %v9489
        %v9613 = vpack.c.bf16 %v6061, %v5963
        %v9614 = vpack.c.bf16 %v6257, %v6159
        %v9615 = vpack.c.bf16 %v6453, %v6355
        %v9616 = vpack.c.bf16 %v6649, %v6551
        %v9617 = vpack.c.bf16 %v6845, %v6747
        %v9618 = vpack.c.bf16 %v7041, %v6943
        %v9619 = vpack.c.bf16 %v7237, %v7139
        %v9620 = vpack.c.bf16 %v7433, %v7335
        %v9621 = vpack.c.bf16 %v7629, %v7531
        %v9622 = vpack.c.bf16 %v7825, %v7727
        %v9623 = vpack.c.bf16 %v8021, %v7923
        %v9624 = vpack.c.bf16 %v8217, %v8119
        %v9625 = vpack.c.bf16 %v8413, %v8315
        %v9626 = vpack.c.bf16 %v8609, %v8511
        %v9627 = vpack.c.bf16 %v8805, %v8707
        %v9628 = vpack.c.bf16 %v9001, %v8903
        %v9629 = vpack.c.bf16 %v9197, %v9099
        %v9630 = vpack.c.bf16 %v9393, %v9295
        %v9631 = vpack.c.bf16 %v9491, %v9491
        %v9632 = vpack.c.bf16 %v6064, %v5966
        %v9633 = vpack.c.bf16 %v6260, %v6162
        %v9634 = vpack.c.bf16 %v6456, %v6358
        %v9635 = vpack.c.bf16 %v6652, %v6554
        %v9636 = vpack.c.bf16 %v6848, %v6750
        %v9637 = vpack.c.bf16 %v7044, %v6946
        %v9638 = vpack.c.bf16 %v7240, %v7142
        %v9639 = vpack.c.bf16 %v7436, %v7338
        %v9640 = vpack.c.bf16 %v7632, %v7534
        %v9641 = vpack.c.bf16 %v7828, %v7730
        %v9642 = vpack.c.bf16 %v8024, %v7926
        %v9643 = vpack.c.bf16 %v8220, %v8122
        %v9644 = vpack.c.bf16 %v8416, %v8318
        %v9645 = vpack.c.bf16 %v8612, %v8514
        %v9646 = vpack.c.bf16 %v8808, %v8710
        %v9647 = vpack.c.bf16 %v9004, %v8906
        %v9648 = vpack.c.bf16 %v9200, %v9102
        %v9649 = vpack.c.bf16 %v9396, %v9298
        %v9650 = vpack.c.bf16 %v9494, %v9494
        %v9651 = vpack.c.bf16 %v6066, %v5968
        %v9652 = vpack.c.bf16 %v6262, %v6164
        %v9653 = vpack.c.bf16 %v6458, %v6360
        %v9654 = vpack.c.bf16 %v6654, %v6556
        %v9655 = vpack.c.bf16 %v6850, %v6752
        %v9656 = vpack.c.bf16 %v7046, %v6948
        %v9657 = vpack.c.bf16 %v7242, %v7144
        %v9658 = vpack.c.bf16 %v7438, %v7340
        %v9659 = vpack.c.bf16 %v7634, %v7536
        %v9660 = vpack.c.bf16 %v7830, %v7732
        %v9661 = vpack.c.bf16 %v8026, %v7928
        %v9662 = vpack.c.bf16 %v8222, %v8124
        %v9663 = vpack.c.bf16 %v8418, %v8320
        %v9664 = vpack.c.bf16 %v8614, %v8516
        %v9665 = vpack.c.bf16 %v8810, %v8712
        %v9666 = vpack.c.bf16 %v9006, %v8908
        %v9667 = vpack.c.bf16 %v9202, %v9104
        %v9668 = vpack.c.bf16 %v9398, %v9300
        %v9669 = vpack.c.bf16 %v9496, %v9496
        %v9670 = vpack.c.bf16 %v6069, %v5971
        %v9671 = vpack.c.bf16 %v6265, %v6167
        %v9672 = vpack.c.bf16 %v6461, %v6363
        %v9673 = vpack.c.bf16 %v6657, %v6559
        %v9674 = vpack.c.bf16 %v6853, %v6755
        %v9675 = vpack.c.bf16 %v7049, %v6951
        %v9676 = vpack.c.bf16 %v7245, %v7147
        %v9677 = vpack.c.bf16 %v7441, %v7343
        %v9678 = vpack.c.bf16 %v7637, %v7539
        %v9679 = vpack.c.bf16 %v7833, %v7735
        %v9680 = vpack.c.bf16 %v8029, %v7931
        %v9681 = vpack.c.bf16 %v8225, %v8127
        %v9682 = vpack.c.bf16 %v8421, %v8323
        %v9683 = vpack.c.bf16 %v8617, %v8519
        %v9684 = vpack.c.bf16 %v8813, %v8715
        %v9685 = vpack.c.bf16 %v9009, %v8911
        %v9686 = vpack.c.bf16 %v9205, %v9107
        %v9687 = vpack.c.bf16 %v9401, %v9303
        %v9688 = vpack.c.bf16 %v9499, %v9499
        %v9689 = vpack.c.bf16 %v6071, %v5973
        %v9690 = vpack.c.bf16 %v6267, %v6169
        %v9691 = vpack.c.bf16 %v6463, %v6365
        %v9692 = vpack.c.bf16 %v6659, %v6561
        %v9693 = vpack.c.bf16 %v6855, %v6757
        %v9694 = vpack.c.bf16 %v7051, %v6953
        %v9695 = vpack.c.bf16 %v7247, %v7149
        %v9696 = vpack.c.bf16 %v7443, %v7345
        %v9697 = vpack.c.bf16 %v7639, %v7541
        %v9698 = vpack.c.bf16 %v7835, %v7737
        %v9699 = vpack.c.bf16 %v8031, %v7933
        %v9700 = vpack.c.bf16 %v8227, %v8129
        %v9701 = vpack.c.bf16 %v8423, %v8325
        %v9702 = vpack.c.bf16 %v8619, %v8521
        %v9703 = vpack.c.bf16 %v8815, %v8717
        %v9704 = vpack.c.bf16 %v9011, %v8913
        %v9705 = vpack.c.bf16 %v9207, %v9109
        %v9706 = vpack.c.bf16 %v9403, %v9305
        %v9707 = vpack.c.bf16 %v9501, %v9501
        %v9708 = vpack.c.bf16 %v6074, %v5976
        %v9709 = vpack.c.bf16 %v6270, %v6172
        %v9710 = vpack.c.bf16 %v6466, %v6368
        %v9711 = vpack.c.bf16 %v6662, %v6564
        %v9712 = vpack.c.bf16 %v6858, %v6760
        %v9713 = vpack.c.bf16 %v7054, %v6956
        %v9714 = vpack.c.bf16 %v7250, %v7152
        %v9715 = vpack.c.bf16 %v7446, %v7348
        %v9716 = vpack.c.bf16 %v7642, %v7544
        %v9717 = vpack.c.bf16 %v7838, %v7740
        %v9718 = vpack.c.bf16 %v8034, %v7936
        %v9719 = vpack.c.bf16 %v8230, %v8132
        %v9720 = vpack.c.bf16 %v8426, %v8328
        %v9721 = vpack.c.bf16 %v8622, %v8524
        %v9722 = vpack.c.bf16 %v8818, %v8720
        %v9723 = vpack.c.bf16 %v9014, %v8916
        %v9724 = vpack.c.bf16 %v9210, %v9112
        %v9725 = vpack.c.bf16 %v9406, %v9308
        %v9726 = vpack.c.bf16 %v9504, %v9504
        %v9727 = vpack.c.bf16 %v6076, %v5978
        %v9728 = vpack.c.bf16 %v6272, %v6174
        %v9729 = vpack.c.bf16 %v6468, %v6370
        %v9730 = vpack.c.bf16 %v6664, %v6566
        %v9731 = vpack.c.bf16 %v6860, %v6762
        %v9732 = vpack.c.bf16 %v7056, %v6958
        %v9733 = vpack.c.bf16 %v7252, %v7154
        %v9734 = vpack.c.bf16 %v7448, %v7350
        %v9735 = vpack.c.bf16 %v7644, %v7546
        %v9736 = vpack.c.bf16 %v7840, %v7742
        %v9737 = vpack.c.bf16 %v8036, %v7938
        %v9738 = vpack.c.bf16 %v8232, %v8134
        %v9739 = vpack.c.bf16 %v8428, %v8330
        %v9740 = vpack.c.bf16 %v8624, %v8526
        %v9741 = vpack.c.bf16 %v8820, %v8722
        %v9742 = vpack.c.bf16 %v9016, %v8918
        %v9743 = vpack.c.bf16 %v9212, %v9114
        %v9744 = vpack.c.bf16 %v9408, %v9310
        %v9745 = vpack.c.bf16 %v9506, %v9506
        %v9746 = vpack.c.bf16 %v6079, %v5981
        %v9747 = vpack.c.bf16 %v6275, %v6177
        %v9748 = vpack.c.bf16 %v6471, %v6373
        %v9749 = vpack.c.bf16 %v6667, %v6569
        %v9750 = vpack.c.bf16 %v6863, %v6765
        %v9751 = vpack.c.bf16 %v7059, %v6961
        %v9752 = vpack.c.bf16 %v7255, %v7157
        %v9753 = vpack.c.bf16 %v7451, %v7353
        %v9754 = vpack.c.bf16 %v7647, %v7549
        %v9755 = vpack.c.bf16 %v7843, %v7745
        %v9756 = vpack.c.bf16 %v8039, %v7941
        %v9757 = vpack.c.bf16 %v8235, %v8137
        %v9758 = vpack.c.bf16 %v8431, %v8333
        %v9759 = vpack.c.bf16 %v8627, %v8529
        %v9760 = vpack.c.bf16 %v8823, %v8725
        %v9761 = vpack.c.bf16 %v9019, %v8921
        %v9762 = vpack.c.bf16 %v9215, %v9117
        %v9763 = vpack.c.bf16 %v9411, %v9313
        %v9764 = vpack.c.bf16 %v9509, %v9509
        %v9765 = vpack.c.bf16 %v6081, %v5983
        %v9766 = vpack.c.bf16 %v6277, %v6179
        %v9767 = vpack.c.bf16 %v6473, %v6375
        %v9768 = vpack.c.bf16 %v6669, %v6571
        %v9769 = vpack.c.bf16 %v6865, %v6767
        %v9770 = vpack.c.bf16 %v7061, %v6963
        %v9771 = vpack.c.bf16 %v7257, %v7159
        %v9772 = vpack.c.bf16 %v7453, %v7355
        %v9773 = vpack.c.bf16 %v7649, %v7551
        %v9774 = vpack.c.bf16 %v7845, %v7747
        %v9775 = vpack.c.bf16 %v8041, %v7943
        %v9776 = vpack.c.bf16 %v8237, %v8139
        %v9777 = vpack.c.bf16 %v8433, %v8335
        %v9778 = vpack.c.bf16 %v8629, %v8531
        %v9779 = vpack.c.bf16 %v8825, %v8727
        %v9780 = vpack.c.bf16 %v9021, %v8923
        %v9781 = vpack.c.bf16 %v9217, %v9119
        %v9782 = vpack.c.bf16 %v9413, %v9315
        %v9783 = vpack.c.bf16 %v9511, %v9511
        %v9784 = vpack.c.bf16 %v6084, %v5986
        %v9785 = vpack.c.bf16 %v6280, %v6182
        %v9786 = vpack.c.bf16 %v6476, %v6378
        %v9787 = vpack.c.bf16 %v6672, %v6574
        %v9788 = vpack.c.bf16 %v6868, %v6770
        %v9789 = vpack.c.bf16 %v7064, %v6966
        %v9790 = vpack.c.bf16 %v7260, %v7162
        %v9791 = vpack.c.bf16 %v7456, %v7358
        %v9792 = vpack.c.bf16 %v7652, %v7554
        %v9793 = vpack.c.bf16 %v7848, %v7750
        %v9794 = vpack.c.bf16 %v8044, %v7946
        %v9795 = vpack.c.bf16 %v8240, %v8142
        %v9796 = vpack.c.bf16 %v8436, %v8338
        %v9797 = vpack.c.bf16 %v8632, %v8534
        %v9798 = vpack.c.bf16 %v8828, %v8730
        %v9799 = vpack.c.bf16 %v9024, %v8926
        %v9800 = vpack.c.bf16 %v9220, %v9122
        %v9801 = vpack.c.bf16 %v9416, %v9318
        %v9802 = vpack.c.bf16 %v9514, %v9514
        %v9803 = vpack.c.bf16 %v6086, %v5988
        %v9804 = vpack.c.bf16 %v6282, %v6184
        %v9805 = vpack.c.bf16 %v6478, %v6380
        %v9806 = vpack.c.bf16 %v6674, %v6576
        %v9807 = vpack.c.bf16 %v6870, %v6772
        %v9808 = vpack.c.bf16 %v7066, %v6968
        %v9809 = vpack.c.bf16 %v7262, %v7164
        %v9810 = vpack.c.bf16 %v7458, %v7360
        %v9811 = vpack.c.bf16 %v7654, %v7556
        %v9812 = vpack.c.bf16 %v7850, %v7752
        %v9813 = vpack.c.bf16 %v8046, %v7948
        %v9814 = vpack.c.bf16 %v8242, %v8144
        %v9815 = vpack.c.bf16 %v8438, %v8340
        %v9816 = vpack.c.bf16 %v8634, %v8536
        %v9817 = vpack.c.bf16 %v8830, %v8732
        %v9818 = vpack.c.bf16 %v9026, %v8928
        %v9819 = vpack.c.bf16 %v9222, %v9124
        %v9820 = vpack.c.bf16 %v9418, %v9320
        %v9821 = vpack.c.bf16 %v9516, %v9516
        %9822 = vst [vmem:[%s307] sm:$0xff] %v9518
        %9823 = vst [vmem:[%s307 + $0x8] sm:$0xff] %v9519
        %9824 = vst [vmem:[%s307 + $0x10] sm:$0xff] %v9520
        %9825 = vst [vmem:[%s307 + $0x18] sm:$0xff] %v9521
        %9826 = vst [vmem:[%s307 + $0x20] sm:$0xff] %v9522
        %9827 = vst [vmem:[%s307 + $0x28] sm:$0xff] %v9523
        %9828 = vst [vmem:[%s307 + $0x30] sm:$0xff] %v9524
        %9829 = vst [vmem:[%s307 + $0x38] sm:$0xff] %v9525
        %9830 = vst [vmem:[%s307 + $0x40] sm:$0xff] %v9526
        %9831 = vst [vmem:[%s307 + $0x48] sm:$0xff] %v9527
        %9832 = vst [vmem:[%s307 + $0x50] sm:$0xff] %v9528
        %9833 = vst [vmem:[%s307 + $0x58] sm:$0xff] %v9529
        %9834 = vst [vmem:[%s307 + $0x60] sm:$0xff] %v9530
        %9835 = vst [vmem:[%s307 + $0x68] sm:$0xff] %v9531
        %9836 = vst [vmem:[%s307 + $0x70] sm:$0xff] %v9532
        %9837 = vst [vmem:[%s307 + $0x78] sm:$0xff] %v9533
        %9838 = vst [vmem:[%s307 + $0x80] sm:$0xff] %v9534
        %9839 = vst [vmem:[%s307 + $0x88] sm:$0xff] %v9535
        %9840 = vst [vmem:[%s307 + $0x90] sm:$0xf] %v9536
        %9841 = vst [vmem:[%s307 + $0x94] sm:$0xff] %v9537
        %9842 = vst [vmem:[%s307 + $0x9c] sm:$0xff] %v9538
        %9843 = vst [vmem:[%s307 + $0xa4] sm:$0xff] %v9539
        %9844 = vst [vmem:[%s307 + $0xac] sm:$0xff] %v9540
        %9845 = vst [vmem:[%s307 + $0xb4] sm:$0xff] %v9541
        %9846 = vst [vmem:[%s307 + $0xbc] sm:$0xff] %v9542
        %9847 = vst [vmem:[%s307 + $0xc4] sm:$0xff] %v9543
        %9848 = vst [vmem:[%s307 + $0xcc] sm:$0xff] %v9544
        %9849 = vst [vmem:[%s307 + $0xd4] sm:$0xff] %v9545
        %9850 = vst [vmem:[%s307 + $0xdc] sm:$0xff] %v9546
        %9851 = vst [vmem:[%s307 + $0xe4] sm:$0xff] %v9547
        %9852 = vst [vmem:[%s307 + $0xec] sm:$0xff] %v9548
        %9853 = vst [vmem:[%s307 + $0xf4] sm:$0xff] %v9549
        %9854 = vst [vmem:[%s307 + $0xfc] sm:$0xff] %v9550
        %9855 = vst [vmem:[%s307 + $0x104] sm:$0xff] %v9551
        %9856 = vst [vmem:[%s307 + $0x10c] sm:$0xff] %v9552
        %9857 = vst [vmem:[%s307 + $0x114] sm:$0xff] %v9553
        %9858 = vst [vmem:[%s307 + $0x11c] sm:$0xff] %v9554
        %9859 = vst [vmem:[%s307 + $0x124] sm:$0xf] %v9555
        %9860 = vst [vmem:[%s307 + $0x128] sm:$0xff] %v9556
        %9861 = vst [vmem:[%s307 + $0x130] sm:$0xff] %v9557
        %9862 = vst [vmem:[%s307 + $0x138] sm:$0xff] %v9558
        %9863 = vst [vmem:[%s307 + $0x140] sm:$0xff] %v9559
        %9864 = vst [vmem:[%s307 + $0x148] sm:$0xff] %v9560
        %9865 = vst [vmem:[%s307 + $0x150] sm:$0xff] %v9561
        %9866 = vst [vmem:[%s307 + $0x158] sm:$0xff] %v9562
        %9867 = vst [vmem:[%s307 + $0x160] sm:$0xff] %v9563
        %9868 = vst [vmem:[%s307 + $0x168] sm:$0xff] %v9564
        %9869 = vst [vmem:[%s307 + $0x170] sm:$0xff] %v9565
        %9870 = vst [vmem:[%s307 + $0x178] sm:$0xff] %v9566
        %9871 = vst [vmem:[%s307 + $0x180] sm:$0xff] %v9567
        %9872 = vst [vmem:[%s307 + $0x188] sm:$0xff] %v9568
        %9873 = vst [vmem:[%s307 + $0x190] sm:$0xff] %v9569
        %9874 = vst [vmem:[%s307 + $0x198] sm:$0xff] %v9570
        %9875 = vst [vmem:[%s307 + $0x1a0] sm:$0xff] %v9571
        %9876 = vst [vmem:[%s307 + $0x1a8] sm:$0xff] %v9572
        %9877 = vst [vmem:[%s307 + $0x1b0] sm:$0xff] %v9573
        %9878 = vst [vmem:[%s307 + $0x1b8] sm:$0xf] %v9574
        %9879 = vst [vmem:[%s307 + $0x1bc] sm:$0xff] %v9575
        %9880 = vst [vmem:[%s307 + $0x1c4] sm:$0xff] %v9576
        %9881 = vst [vmem:[%s307 + $0x1cc] sm:$0xff] %v9577
        %9882 = vst [vmem:[%s307 + $0x1d4] sm:$0xff] %v9578
        %9883 = vst [vmem:[%s307 + $0x1dc] sm:$0xff] %v9579
        %9884 = vst [vmem:[%s307 + $0x1e4] sm:$0xff] %v9580
        %9885 = vst [vmem:[%s307 + $0x1ec] sm:$0xff] %v9581
        %9886 = vst [vmem:[%s307 + $0x1f4] sm:$0xff] %v9582
        %9887 = vst [vmem:[%s307 + $0x1fc] sm:$0xff] %v9583
        %9888 = vst [vmem:[%s307 + $0x204] sm:$0xff] %v9584
        %9889 = vst [vmem:[%s307 + $0x20c] sm:$0xff] %v9585
        %9890 = vst [vmem:[%s307 + $0x214] sm:$0xff] %v9586
        %9891 = vst [vmem:[%s307 + $0x21c] sm:$0xff] %v9587
        %9892 = vst [vmem:[%s307 + $0x224] sm:$0xff] %v9588
        %9893 = vst [vmem:[%s307 + $0x22c] sm:$0xff] %v9589
        %9894 = vst [vmem:[%s307 + $0x234] sm:$0xff] %v9590
        %9895 = vst [vmem:[%s307 + $0x23c] sm:$0xff] %v9591
        %9896 = vst [vmem:[%s307 + $0x244] sm:$0xff] %v9592
        %9897 = vst [vmem:[%s307 + $0x24c] sm:$0xf] %v9593
        %9898 = vst [vmem:[%s307 + $0x250] sm:$0xff] %v9594
        %9899 = vst [vmem:[%s307 + $0x258] sm:$0xff] %v9595
        %9900 = vst [vmem:[%s307 + $0x260] sm:$0xff] %v9596
        %9901 = vst [vmem:[%s307 + $0x268] sm:$0xff] %v9597
        %9902 = vst [vmem:[%s307 + $0x270] sm:$0xff] %v9598
        %9903 = vst [vmem:[%s307 + $0x278] sm:$0xff] %v9599
        %9904 = vst [vmem:[%s307 + $0x280] sm:$0xff] %v9600
        %9905 = vst [vmem:[%s307 + $0x288] sm:$0xff] %v9601
        %9906 = vst [vmem:[%s307 + $0x290] sm:$0xff] %v9602
        %9907 = vst [vmem:[%s307 + $0x298] sm:$0xff] %v9603
        %9908 = vst [vmem:[%s307 + $0x2a0] sm:$0xff] %v9604
        %9909 = vst [vmem:[%s307 + $0x2a8] sm:$0xff] %v9605
        %9910 = vst [vmem:[%s307 + $0x2b0] sm:$0xff] %v9606
        %9911 = vst [vmem:[%s307 + $0x2b8] sm:$0xff] %v9607
        %9912 = vst [vmem:[%s307 + $0x2c0] sm:$0xff] %v9608
        %9913 = vst [vmem:[%s307 + $0x2c8] sm:$0xff] %v9609
        %9914 = vst [vmem:[%s307 + $0x2d0] sm:$0xff] %v9610
        %9915 = vst [vmem:[%s307 + $0x2d8] sm:$0xff] %v9611
        %9916 = vst [vmem:[%s307 + $0x2e0] sm:$0xf] %v9612
        %9917 = vst [vmem:[%s307 + $0x2e4] sm:$0xff] %v9613
        %9918 = vst [vmem:[%s307 + $0x2ec] sm:$0xff] %v9614
        %9919 = vst [vmem:[%s307 + $0x2f4] sm:$0xff] %v9615
        %9920 = vst [vmem:[%s307 + $0x2fc] sm:$0xff] %v9616
        %9921 = vst [vmem:[%s307 + $0x304] sm:$0xff] %v9617
        %9922 = vst [vmem:[%s307 + $0x30c] sm:$0xff] %v9618
        %9923 = vst [vmem:[%s307 + $0x314] sm:$0xff] %v9619
        %9924 = vst [vmem:[%s307 + $0x31c] sm:$0xff] %v9620
        %9925 = vst [vmem:[%s307 + $0x324] sm:$0xff] %v9621
        %9926 = vst [vmem:[%s307 + $0x32c] sm:$0xff] %v9622
        %9927 = vst [vmem:[%s307 + $0x334] sm:$0xff] %v9623
        %9928 = vst [vmem:[%s307 + $0x33c] sm:$0xff] %v9624
        %9929 = vst [vmem:[%s307 + $0x344] sm:$0xff] %v9625
        %9930 = vst [vmem:[%s307 + $0x34c] sm:$0xff] %v9626
        %9931 = vst [vmem:[%s307 + $0x354] sm:$0xff] %v9627
        %9932 = vst [vmem:[%s307 + $0x35c] sm:$0xff] %v9628
        %9933 = vst [vmem:[%s307 + $0x364] sm:$0xff] %v9629
        %9934 = vst [vmem:[%s307 + $0x36c] sm:$0xff] %v9630
        %9935 = vst [vmem:[%s307 + $0x374] sm:$0xf] %v9631
        %9936 = vst [vmem:[%s307 + $0x378] sm:$0xff] %v9632
        %9937 = vst [vmem:[%s307 + $0x380] sm:$0xff] %v9633
        %9938 = vst [vmem:[%s307 + $0x388] sm:$0xff] %v9634
        %9939 = vst [vmem:[%s307 + $0x390] sm:$0xff] %v9635
        %9940 = vst [vmem:[%s307 + $0x398] sm:$0xff] %v9636
        %9941 = vst [vmem:[%s307 + $0x3a0] sm:$0xff] %v9637
        %9942 = vst [vmem:[%s307 + $0x3a8] sm:$0xff] %v9638
        %9943 = vst [vmem:[%s307 + $0x3b0] sm:$0xff] %v9639
        %9944 = vst [vmem:[%s307 + $0x3b8] sm:$0xff] %v9640
        %9945 = vst [vmem:[%s307 + $0x3c0] sm:$0xff] %v9641
        %9946 = vst [vmem:[%s307 + $0x3c8] sm:$0xff] %v9642
        %9947 = vst [vmem:[%s307 + $0x3d0] sm:$0xff] %v9643
        %9948 = vst [vmem:[%s307 + $0x3d8] sm:$0xff] %v9644
        %9949 = vst [vmem:[%s307 + $0x3e0] sm:$0xff] %v9645
        %9950 = vst [vmem:[%s307 + $0x3e8] sm:$0xff] %v9646
        %9951 = vst [vmem:[%s307 + $0x3f0] sm:$0xff] %v9647
        %9952 = vst [vmem:[%s307 + $0x3f8] sm:$0xff] %v9648
        %9953 = vst [vmem:[%s307 + $0x400] sm:$0xff] %v9649
        %9954 = vst [vmem:[%s307 + $0x408] sm:$0xf] %v9650
        %9955 = vst [vmem:[%s307 + $0x40c] sm:$0xff] %v9651
        %9956 = vst [vmem:[%s307 + $0x414] sm:$0xff] %v9652
        %9957 = vst [vmem:[%s307 + $0x41c] sm:$0xff] %v9653
        %9958 = vst [vmem:[%s307 + $0x424] sm:$0xff] %v9654
        %9959 = vst [vmem:[%s307 + $0x42c] sm:$0xff] %v9655
        %9960 = vst [vmem:[%s307 + $0x434] sm:$0xff] %v9656
        %9961 = vst [vmem:[%s307 + $0x43c] sm:$0xff] %v9657
        %9962 = vst [vmem:[%s307 + $0x444] sm:$0xff] %v9658
        %9963 = vst [vmem:[%s307 + $0x44c] sm:$0xff] %v9659
        %9964 = vst [vmem:[%s307 + $0x454] sm:$0xff] %v9660
        %9965 = vst [vmem:[%s307 + $0x45c] sm:$0xff] %v9661
        %9966 = vst [vmem:[%s307 + $0x464] sm:$0xff] %v9662
        %9967 = vst [vmem:[%s307 + $0x46c] sm:$0xff] %v9663
        %9968 = vst [vmem:[%s307 + $0x474] sm:$0xff] %v9664
        %9969 = vst [vmem:[%s307 + $0x47c] sm:$0xff] %v9665
        %9970 = vst [vmem:[%s307 + $0x484] sm:$0xff] %v9666
        %9971 = vst [vmem:[%s307 + $0x48c] sm:$0xff] %v9667
        %9972 = vst [vmem:[%s307 + $0x494] sm:$0xff] %v9668
        %9973 = vst [vmem:[%s307 + $0x49c] sm:$0xf] %v9669
        %9974 = vst [vmem:[%s307 + $0x4a0] sm:$0xff] %v9670
        %9975 = vst [vmem:[%s307 + $0x4a8] sm:$0xff] %v9671
        %9976 = vst [vmem:[%s307 + $0x4b0] sm:$0xff] %v9672
        %9977 = vst [vmem:[%s307 + $0x4b8] sm:$0xff] %v9673
        %9978 = vst [vmem:[%s307 + $0x4c0] sm:$0xff] %v9674
        %9979 = vst [vmem:[%s307 + $0x4c8] sm:$0xff] %v9675
        %9980 = vst [vmem:[%s307 + $0x4d0] sm:$0xff] %v9676
        %9981 = vst [vmem:[%s307 + $0x4d8] sm:$0xff] %v9677
        %9982 = vst [vmem:[%s307 + $0x4e0] sm:$0xff] %v9678
        %9983 = vst [vmem:[%s307 + $0x4e8] sm:$0xff] %v9679
        %9984 = vst [vmem:[%s307 + $0x4f0] sm:$0xff] %v9680
        %9985 = vst [vmem:[%s307 + $0x4f8] sm:$0xff] %v9681
        %9986 = vst [vmem:[%s307 + $0x500] sm:$0xff] %v9682
        %9987 = vst [vmem:[%s307 + $0x508] sm:$0xff] %v9683
        %9988 = vst [vmem:[%s307 + $0x510] sm:$0xff] %v9684
        %9989 = vst [vmem:[%s307 + $0x518] sm:$0xff] %v9685
        %9990 = vst [vmem:[%s307 + $0x520] sm:$0xff] %v9686
        %9991 = vst [vmem:[%s307 + $0x528] sm:$0xff] %v9687
        %9992 = vst [vmem:[%s307 + $0x530] sm:$0xf] %v9688
        %9993 = vst [vmem:[%s307 + $0x534] sm:$0xff] %v9689
        %9994 = vst [vmem:[%s307 + $0x53c] sm:$0xff] %v9690
        %9995 = vst [vmem:[%s307 + $0x544] sm:$0xff] %v9691
        %9996 = vst [vmem:[%s307 + $0x54c] sm:$0xff] %v9692
        %9997 = vst [vmem:[%s307 + $0x554] sm:$0xff] %v9693
        %9998 = vst [vmem:[%s307 + $0x55c] sm:$0xff] %v9694
        %9999 = vst [vmem:[%s307 + $0x564] sm:$0xff] %v9695
        %10000 = vst [vmem:[%s307 + $0x56c] sm:$0xff] %v9696
        %10001 = vst [vmem:[%s307 + $0x574] sm:$0xff] %v9697
        %10002 = vst [vmem:[%s307 + $0x57c] sm:$0xff] %v9698
        %10003 = vst [vmem:[%s307 + $0x584] sm:$0xff] %v9699
        %10004 = vst [vmem:[%s307 + $0x58c] sm:$0xff] %v9700
        %10005 = vst [vmem:[%s307 + $0x594] sm:$0xff] %v9701
        %10006 = vst [vmem:[%s307 + $0x59c] sm:$0xff] %v9702
        %10007 = vst [vmem:[%s307 + $0x5a4] sm:$0xff] %v9703
        %10008 = vst [vmem:[%s307 + $0x5ac] sm:$0xff] %v9704
        %10009 = vst [vmem:[%s307 + $0x5b4] sm:$0xff] %v9705
        %10010 = vst [vmem:[%s307 + $0x5bc] sm:$0xff] %v9706
        %10011 = vst [vmem:[%s307 + $0x5c4] sm:$0xf] %v9707
        %10012 = vst [vmem:[%s307 + $0x5c8] sm:$0xff] %v9708
        %10013 = vst [vmem:[%s307 + $0x5d0] sm:$0xff] %v9709
        %10014 = vst [vmem:[%s307 + $0x5d8] sm:$0xff] %v9710
        %10015 = vst [vmem:[%s307 + $0x5e0] sm:$0xff] %v9711
        %10016 = vst [vmem:[%s307 + $0x5e8] sm:$0xff] %v9712
        %10017 = vst [vmem:[%s307 + $0x5f0] sm:$0xff] %v9713
        %10018 = vst [vmem:[%s307 + $0x5f8] sm:$0xff] %v9714
        %10019 = vst [vmem:[%s307 + $0x600] sm:$0xff] %v9715
        %10020 = vst [vmem:[%s307 + $0x608] sm:$0xff] %v9716
        %10021 = vst [vmem:[%s307 + $0x610] sm:$0xff] %v9717
        %10022 = vst [vmem:[%s307 + $0x618] sm:$0xff] %v9718
        %10023 = vst [vmem:[%s307 + $0x620] sm:$0xff] %v9719
        %10024 = vst [vmem:[%s307 + $0x628] sm:$0xff] %v9720
        %10025 = vst [vmem:[%s307 + $0x630] sm:$0xff] %v9721
        %10026 = vst [vmem:[%s307 + $0x638] sm:$0xff] %v9722
        %10027 = vst [vmem:[%s307 + $0x640] sm:$0xff] %v9723
        %10028 = vst [vmem:[%s307 + $0x648] sm:$0xff] %v9724
        %10029 = vst [vmem:[%s307 + $0x650] sm:$0xff] %v9725
        %10030 = vst [vmem:[%s307 + $0x658] sm:$0xf] %v9726
        %10031 = vst [vmem:[%s307 + $0x65c] sm:$0xff] %v9727
        %10032 = vst [vmem:[%s307 + $0x664] sm:$0xff] %v9728
        %10033 = vst [vmem:[%s307 + $0x66c] sm:$0xff] %v9729
        %10034 = vst [vmem:[%s307 + $0x674] sm:$0xff] %v9730
        %10035 = vst [vmem:[%s307 + $0x67c] sm:$0xff] %v9731
        %10036 = vst [vmem:[%s307 + $0x684] sm:$0xff] %v9732
        %10037 = vst [vmem:[%s307 + $0x68c] sm:$0xff] %v9733
        %10038 = vst [vmem:[%s307 + $0x694] sm:$0xff] %v9734
        %10039 = vst [vmem:[%s307 + $0x69c] sm:$0xff] %v9735
        %10040 = vst [vmem:[%s307 + $0x6a4] sm:$0xff] %v9736
        %10041 = vst [vmem:[%s307 + $0x6ac] sm:$0xff] %v9737
        %10042 = vst [vmem:[%s307 + $0x6b4] sm:$0xff] %v9738
        %10043 = vst [vmem:[%s307 + $0x6bc] sm:$0xff] %v9739
        %10044 = vst [vmem:[%s307 + $0x6c4] sm:$0xff] %v9740
        %10045 = vst [vmem:[%s307 + $0x6cc] sm:$0xff] %v9741
        %10046 = vst [vmem:[%s307 + $0x6d4] sm:$0xff] %v9742
        %10047 = vst [vmem:[%s307 + $0x6dc] sm:$0xff] %v9743
        %10048 = vst [vmem:[%s307 + $0x6e4] sm:$0xff] %v9744
        %10049 = vst [vmem:[%s307 + $0x6ec] sm:$0xf] %v9745
        %10050 = vst [vmem:[%s307 + $0x6f0] sm:$0xff] %v9746
        %10051 = vst [vmem:[%s307 + $0x6f8] sm:$0xff] %v9747
        %10052 = vst [vmem:[%s307 + $0x700] sm:$0xff] %v9748
        %10053 = vst [vmem:[%s307 + $0x708] sm:$0xff] %v9749
        %10054 = vst [vmem:[%s307 + $0x710] sm:$0xff] %v9750
        %10055 = vst [vmem:[%s307 + $0x718] sm:$0xff] %v9751
        %10056 = vst [vmem:[%s307 + $0x720] sm:$0xff] %v9752
        %10057 = vst [vmem:[%s307 + $0x728] sm:$0xff] %v9753
        %10058 = vst [vmem:[%s307 + $0x730] sm:$0xff] %v9754
        %10059 = vst [vmem:[%s307 + $0x738] sm:$0xff] %v9755
        %10060 = vst [vmem:[%s307 + $0x740] sm:$0xff] %v9756
        %10061 = vst [vmem:[%s307 + $0x748] sm:$0xff] %v9757
        %10062 = vst [vmem:[%s307 + $0x750] sm:$0xff] %v9758
        %10063 = vst [vmem:[%s307 + $0x758] sm:$0xff] %v9759
        %10064 = vst [vmem:[%s307 + $0x760] sm:$0xff] %v9760
        %10065 = vst [vmem:[%s307 + $0x768] sm:$0xff] %v9761
        %10066 = vst [vmem:[%s307 + $0x770] sm:$0xff] %v9762
        %10067 = vst [vmem:[%s307 + $0x778] sm:$0xff] %v9763
        %10068 = vst [vmem:[%s307 + $0x780] sm:$0xf] %v9764
        %10069 = vst [vmem:[%s307 + $0x784] sm:$0xff] %v9765
        %10070 = vst [vmem:[%s307 + $0x78c] sm:$0xff] %v9766
        %10071 = vst [vmem:[%s307 + $0x794] sm:$0xff] %v9767
        %10072 = vst [vmem:[%s307 + $0x79c] sm:$0xff] %v9768
        %10073 = vst [vmem:[%s307 + $0x7a4] sm:$0xff] %v9769
        %10074 = vst [vmem:[%s307 + $0x7ac] sm:$0xff] %v9770
        %10075 = vst [vmem:[%s307 + $0x7b4] sm:$0xff] %v9771
        %10076 = vst [vmem:[%s307 + $0x7bc] sm:$0xff] %v9772
        %10077 = vst [vmem:[%s307 + $0x7c4] sm:$0xff] %v9773
        %10078 = vst [vmem:[%s307 + $0x7cc] sm:$0xff] %v9774
        %10079 = vst [vmem:[%s307 + $0x7d4] sm:$0xff] %v9775
        %10080 = vst [vmem:[%s307 + $0x7dc] sm:$0xff] %v9776
        %10081 = vst [vmem:[%s307 + $0x7e4] sm:$0xff] %v9777
        %10082 = vst [vmem:[%s307 + $0x7ec] sm:$0xff] %v9778
        %10083 = vst [vmem:[%s307 + $0x7f4] sm:$0xff] %v9779
        %10084 = vst [vmem:[%s307 + $0x7fc] sm:$0xff] %v9780
        %10085 = vst [vmem:[%s307 + $0x804] sm:$0xff] %v9781
        %10086 = vst [vmem:[%s307 + $0x80c] sm:$0xff] %v9782
        %10087 = vst [vmem:[%s307 + $0x814] sm:$0xf] %v9783
        %10088 = vst [vmem:[%s307 + $0x818] sm:$0xff] %v9784
        %10089 = vst [vmem:[%s307 + $0x820] sm:$0xff] %v9785
        %10090 = vst [vmem:[%s307 + $0x828] sm:$0xff] %v9786
        %10091 = vst [vmem:[%s307 + $0x830] sm:$0xff] %v9787
        %10092 = vst [vmem:[%s307 + $0x838] sm:$0xff] %v9788
        %10093 = vst [vmem:[%s307 + $0x840] sm:$0xff] %v9789
        %10094 = vst [vmem:[%s307 + $0x848] sm:$0xff] %v9790
        %10095 = vst [vmem:[%s307 + $0x850] sm:$0xff] %v9791
        %10096 = vst [vmem:[%s307 + $0x858] sm:$0xff] %v9792
        %10097 = vst [vmem:[%s307 + $0x860] sm:$0xff] %v9793
        %10098 = vst [vmem:[%s307 + $0x868] sm:$0xff] %v9794
        %10099 = vst [vmem:[%s307 + $0x870] sm:$0xff] %v9795
        %10100 = vst [vmem:[%s307 + $0x878] sm:$0xff] %v9796
        %10101 = vst [vmem:[%s307 + $0x880] sm:$0xff] %v9797
        %10102 = vst [vmem:[%s307 + $0x888] sm:$0xff] %v9798
        %10103 = vst [vmem:[%s307 + $0x890] sm:$0xff] %v9799
        %10104 = vst [vmem:[%s307 + $0x898] sm:$0xff] %v9800
        %10105 = vst [vmem:[%s307 + $0x8a0] sm:$0xff] %v9801
        %10106 = vst [vmem:[%s307 + $0x8a8] sm:$0xf] %v9802
        %10107 = vst [vmem:[%s307 + $0x8ac] sm:$0xff] %v9803
        %10108 = vst [vmem:[%s307 + $0x8b4] sm:$0xff] %v9804
        %10109 = vst [vmem:[%s307 + $0x8bc] sm:$0xff] %v9805
        %10110 = vst [vmem:[%s307 + $0x8c4] sm:$0xff] %v9806
        %10111 = vst [vmem:[%s307 + $0x8cc] sm:$0xff] %v9807
        %10112 = vst [vmem:[%s307 + $0x8d4] sm:$0xff] %v9808
        %10113 = vst [vmem:[%s307 + $0x8dc] sm:$0xff] %v9809
        %10114 = vst [vmem:[%s307 + $0x8e4] sm:$0xff] %v9810
        %10115 = vst [vmem:[%s307 + $0x8ec] sm:$0xff] %v9811
        %10116 = vst [vmem:[%s307 + $0x8f4] sm:$0xff] %v9812
        %10117 = vst [vmem:[%s307 + $0x8fc] sm:$0xff] %v9813
        %10118 = vst [vmem:[%s307 + $0x904] sm:$0xff] %v9814
        %10119 = vst [vmem:[%s307 + $0x90c] sm:$0xff] %v9815
        %10120 = vst [vmem:[%s307 + $0x914] sm:$0xff] %v9816
        %10121 = vst [vmem:[%s307 + $0x91c] sm:$0xff] %v9817
        %10122 = vst [vmem:[%s307 + $0x924] sm:$0xff] %v9818
        %10123 = vst [vmem:[%s307 + $0x92c] sm:$0xff] %v9819
        %10124 = vst [vmem:[%s307 + $0x934] sm:$0xff] %v9820
        %10125 = vst [vmem:[%s307 + $0x93c] sm:$0xf] %v9821
        %s10126 = sand.u32 %s142, 1
        %s10127 = scalar_lea.sflag [#allocation4], %s10126
        %s10128 = sand.u32 %s142, 1
        %s10129 = smul.addr %s10128, 2368
        %s10130 = scalar_lea.vmem [#allocation11], %s10129
        // Predicated region
        $region61: #{tpu_custom_call.1} parent=39 // pred_check
          %p10131 = pneg %p152
        $region62: #{tpu_custom_call.1} parent=39 // pred_check_branch
          %10133 = sbr.rel (%p10131) target = $region64
        $region63: #{tpu_custom_call.1} parent=39 // pred_region
          %s10134 = smul.u32 16, %s24
          %10136 = vsyncadd %s10127, 0
          %s10137 = smul.addr %s10134, 37
          %s10138 = smul.addr %s10137, 4
          %s10139 = scalar_lea.hbm %s5, %s10138
          %s10140 = sshll.u32 %s10130, 4
          %s10141 = int_to_ptr.vmem [resolvable:$true] %s10140
          %s10142 = sshll.u32 %s10139, 4
          %s10143 = int_to_ptr.hbm [resolvable:$true] %s10142
          %10148 = dma.vmem_to_hbm [thread:$0]  %s10141, 37888, %s10143, %s10127, 2368, 2368, 148
        $region64: #{tpu_custom_call.1} parent=39 // pred_fallthru
          _
      $region40: #{tpu_custom_call.1} parent=5 // pred_fallthru
        _
      %p10149 = scmp.le.s32.totalorder 2, %s19
      // Predicated region
      $region65: #{tpu_custom_call.1} parent=5 // pred_check
        %p10150 = pneg %p10149
      $region66: #{tpu_custom_call.1} parent=5 // pred_check_branch
        %10152 = sbr.rel (%p10150) target = $region68
      $region67: #{tpu_custom_call.1} parent=5 // pred_region
        %s10153 = ssub.s32 %s19, 2
        // Predicated region
        $region69: #{tpu_custom_call.1} parent=67 // pred_check
          %p10154 = pneg %p158
        $region70: #{tpu_custom_call.1} parent=67 // pred_check_branch
          %10156 = sbr.rel (%p10154) target = $region72
        $region71: #{tpu_custom_call.1} parent=67 // pred_region
          %s10157 = sand.u32 %s143, 1
          %s10158 = scalar_lea.sflag [#allocation4], %s10157
          %s10159 = sand.u32 %s143, 1
          %s10160 = smul.addr %s10159, 2368
          %s10161 = scalar_lea.vmem [#allocation11], %s10160
          %10163 = dma.done %s10158, 37888
        $region72: #{tpu_custom_call.1} parent=67 // pred_fallthru
          _
      $region68: #{tpu_custom_call.1} parent=5 // pred_fallthru
        _
    $region6: #{tpu_custom_call.1} parent=1 // loop_footer
      %s23 = sadd.s32 1, %s19
    $region7: #{tpu_custom_call.1} parent=1 // loop_footer_branch
      %18 = sbr.rel target = $region3
    $region8: #{tpu_custom_call.1} parent=1 // loop_exit
      _
    %10164 = vsyncpa [#allocation3], 1
    %s10165 = scalar_lea.sflag [#allocation3], 1
    %10166 = vsyncpa %s10165, 1
    %10167 = vsyncpa [#allocation6], 1
    %10168 = vsyncpa [#allocation9], 1
    %10169 = vsyncpa [#allocation4], 1
    %s10170 = scalar_lea.sflag [#allocation4], 1
    %10171 = vsyncpa %s10170, 1

</llo_original>
